<compile_context>
chip_gen: v6e
topology: v6e:2x2x1
jax: 0.10.0
libtpu: 0.0.40
codegen_flags: <defaults>
</compile_context>

<pallas_src>
import functools

import jax
import jax.numpy as jnp
from jax.experimental import pallas as pl
from jax.experimental.pallas import tpu as pltpu


LANES = 128          # lane width used for matmul operands / partial-sum rows
LATENT_CHS = 4
PERCEPTUAL_WEIGHT = 0.5
LOSS_TYPE = "l2"     # matches default loss_type='l2'
# Explicit VMEM guard (v7x: 64 MiB physical / 32 MiB scoped default); per-step
# working set here is < 2 MiB, so 32 MiB leaves ample headroom on all gens.
VMEM_LIMIT_BYTES = 32 * 1024 * 1024


def _round_up(x, m):
    return ((x + m - 1) // m) * m


# --------------------------------------------------------------------------- #
# Pallas kernels                                                               #
# --------------------------------------------------------------------------- #

def _conv_kernel(xt_ref, w_ref, b_ref, o_ref, *, apply_relu):
    """Fused 3x3 conv: one MXU matmul over K = 9*Cin, packed (true-Cout) store.

    xt_ref: (TM, K)     bf16 im2col taps (rows = n*h*w)
    w_ref:  (K, 128)    bf16 weights, Cout zero-padded to 128 lanes
    b_ref:  (1, 128)    f32 bias (zero-padded)
    o_ref:  (TM, Cout)  output with no dead lanes (masked store, minimal bytes)
    """
    acc = jnp.dot(xt_ref[...], w_ref[...], preferred_element_type=jnp.float32)
    acc = acc + b_ref[...]
    if apply_relu:
        acc = jnp.maximum(acc, 0.0)
    o_ref[...] = acc[:, : o_ref.shape[-1]].astype(o_ref.dtype)


def _lpips_stage_kernel(xt_ref, yt_ref, w_ref, b_ref, lin_ref, *out_refs,
                        emit_features):
    """One LPIPS stage: shared-weight conv on x/y, ReLU, distance epilogue.

    xt_ref, yt_ref: (TM, K)    bf16 im2col taps for the two images
    w_ref:          (K, 128)   bf16 shared conv weights (Cout padded to 128)
    b_ref, lin_ref: (1, 128)   f32 bias / non-negative per-channel lin weights
    out_refs (emit_features=True):  fx (TM,Cout) bf16, fy (TM,Cout) bf16,
                                    dpart (1,1,128) f32
    out_refs (emit_features=False): dpart (1,1,128) f32
    dpart holds this tile's per-lane partial sums of lin[c]*(nx-ny)^2; the
    wrapper collapses all tiles (parallel grid, no carried accumulator).
    """
    if emit_features:
        fx_ref, fy_ref, d_ref = out_refs
    else:
        (d_ref,) = out_refs

    fx = jnp.dot(xt_ref[...], w_ref[...], preferred_element_type=jnp.float32)
    fy = jnp.dot(yt_ref[...], w_ref[...], preferred_element_type=jnp.float32)
    fx = jnp.maximum(fx + b_ref[...], 0.0)
    fy = jnp.maximum(fy + b_ref[...], 0.0)
    if emit_features:
        fx_ref[...] = fx[:, : fx_ref.shape[-1]].astype(fx_ref.dtype)
        fy_ref[...] = fy[:, : fy_ref.shape[-1]].astype(fy_ref.dtype)

    # Per-row channel sum-of-squares on the (otherwise idle) MXU: an all-ones
    # matmul leaves the full row sum replicated in every lane, so there is no
    # XLU cross-lane reduce and no lane broadcast on the VPU/XLU path.
    ones = jnp.ones((LANES, LANES), jnp.float32)
    sx = jnp.dot(fx * fx, ones, preferred_element_type=jnp.float32)
    sy = jnp.dot(fy * fy, ones, preferred_element_type=jnp.float32)
    # Matches reference LPIPS normalize_tensor: x / (sqrt(sum x^2) + 1e-10).
    fxn = fx / (jnp.sqrt(sx) + 1e-10)
    fyn = fy / (jnp.sqrt(sy) + 1e-10)
    d = (fxn - fyn) ** 2 * lin_ref[...]
    # Padded rows have identical fx/fy (== relu(bias)) -> contribute exactly 0;
    # padded lanes are 0 in fx, fy and lin.
    d_ref[...] = jnp.sum(d, axis=0, keepdims=True).reshape(d_ref.shape)


def _reduce_diff_kernel(p_ref, g_ref, o_ref, *, use_abs):
    """Per-tile partial sums of |p-g| (l1) or (p-g)^2 (l2); lanes kept."""
    d = p_ref[...].astype(jnp.float32) - g_ref[...].astype(jnp.float32)
    v = jnp.abs(d) if use_abs else d * d
    o_ref[...] = jnp.sum(v, axis=0, keepdims=True).reshape(o_ref.shape)


# --------------------------------------------------------------------------- #
# Wrappers around pallas_call                                                  #
# --------------------------------------------------------------------------- #

def _im2col(x_nhwc, m_pad, sub=None):
    """(N,H,W,C) -> (m_pad, 9*C) bf16 im2col taps, rows zero-padded to m_pad.

    `sub` (shape (C,)) is subtracted before padding; XLA fuses it into the tap
    gather, so a folded ScalingLayer shift costs no extra HBM pass.
    """
    N, H, W, C = x_nhwc.shape
    x = x_nhwc if sub is None else x_nhwc - sub.reshape(1, 1, 1, C)
    xp = jnp.pad(x, ((0, 0), (1, 1), (1, 1), (0, 0)))
    cols = jnp.concatenate(
        [xp[:, dh:dh + H, dw:dw + W, :] for dh in range(3) for dw in range(3)],
        axis=-1,
    ).reshape(N * H * W, 9 * C)
    M = N * H * W
    if m_pad > M:
        cols = jnp.pad(cols, ((0, m_pad - M), (0, 0)))
    return cols.astype(jnp.bfloat16)


def _pad_conv_params(w, b, in_scale=None):
    """(3,3,Cin,Cout) -> (9*Cin,128) bf16 and (1,128) f32, Cout zero-padded.

    If `in_scale` (shape (Cin,)) is given, weights are divided by it, folding a
    per-input-channel scale into the conv (exact under zero padding).
    """
    _, _, cin, cout = w.shape
    w = w.astype(jnp.float32)
    if in_scale is not None:
        w = w / in_scale.reshape(1, 1, cin, 1)
    w2 = w.reshape(9 * cin, cout)
    w2 = jnp.pad(w2, ((0, 0), (0, LANES - cout)))
    b2 = jnp.pad(b.astype(jnp.float32), (0, LANES - cout)).reshape(1, LANES)
    return w2.astype(jnp.bfloat16), b2


def _row_tiling(M):
    """Pick a row tile (multiple of 16, up to 2048) and padded row count."""
    TM = min(2048, _round_up(M, 16))
    return TM, _round_up(M, TM)


def conv3x3(x_nhwc, w, b, *, relu, out_dtype=jnp.bfloat16, in_scale=None):
    """3x3 'same' convolution. x: (N,H,W,Cin), w: (3,3,Cin,Cout), b: (Cout,)."""
    N, H, W, Cin = x_nhwc.shape
    Cout = w.shape[-1]
    M = N * H * W
    TM, M_pad = _row_tiling(M)
    K = 9 * Cin
    taps = _im2col(x_nhwc, M_pad)
    w2, b2 = _pad_conv_params(w, b, in_scale=in_scale)

    out = pl.pallas_call(
        functools.partial(_conv_kernel, apply_relu=relu),
        out_shape=jax.ShapeDtypeStruct((M_pad, Cout), out_dtype),
        grid=(M_pad // TM,),
        in_specs=[
            pl.BlockSpec((TM, K), lambda i: (i, 0)),
            pl.BlockSpec((K, LANES), lambda i: (0, 0)),
            pl.BlockSpec((1, LANES), lambda i: (0, 0)),
        ],
        out_specs=pl.BlockSpec((TM, Cout), lambda i: (i, 0)),
        compiler_params=pltpu.CompilerParams(
            dimension_semantics=("parallel",),
            vmem_limit_bytes=VMEM_LIMIT_BYTES),
    )(taps, w2, b2)
    return out[:M].reshape(N, H, W, Cout)


def lpips_stage(x_nhwc, y_nhwc, w, b, lin, *, in_scale=None, in_shift=None,
                emit_features=True):
    """One fused LPIPS stage on both images; returns (fx, fy, dist_mean)."""
    N, H, W, Cin = x_nhwc.shape
    Cout = w.shape[-1]
    M = N * H * W
    TM, M_pad = _row_tiling(M)
    K = 9 * Cin
    xt = _im2col(x_nhwc, M_pad, sub=in_shift)
    yt = _im2col(y_nhwc, M_pad, sub=in_shift)
    w2, b2 = _pad_conv_params(w, b, in_scale=in_scale)
    lin2 = jnp.pad(lin.astype(jnp.float32), (0, LANES - Cout)).reshape(1, LANES)
    G = M_pad // TM

    part_shape = jax.ShapeDtypeStruct((G, 1, LANES), jnp.float32)
    part_spec = pl.BlockSpec((1, 1, LANES), lambda i: (i, 0, 0))
    if emit_features:
        out_shape = (jax.ShapeDtypeStruct((M_pad, Cout), jnp.bfloat16),
                     jax.ShapeDtypeStruct((M_pad, Cout), jnp.bfloat16),
                     part_shape)
        out_specs = (pl.BlockSpec((TM, Cout), lambda i: (i, 0)),
                     pl.BlockSpec((TM, Cout), lambda i: (i, 0)),
                     part_spec)
    else:
        out_shape = part_shape
        out_specs = part_spec

    res = pl.pallas_call(
        functools.partial(_lpips_stage_kernel, emit_features=emit_features),
        out_shape=out_shape,
        grid=(G,),
        in_specs=[
            pl.BlockSpec((TM, K), lambda i: (i, 0)),
            pl.BlockSpec((TM, K), lambda i: (i, 0)),
            pl.BlockSpec((K, LANES), lambda i: (0, 0)),
            pl.BlockSpec((1, LANES), lambda i: (0, 0)),
            pl.BlockSpec((1, LANES), lambda i: (0, 0)),
        ],
        out_specs=out_specs,
        compiler_params=pltpu.CompilerParams(
            dimension_semantics=("parallel",),
            vmem_limit_bytes=VMEM_LIMIT_BYTES),
    )(xt, yt, w2, b2, lin2)

    if emit_features:
        fx, fy, parts = res
        fx = fx[:M].reshape(N, H, W, Cout)
        fy = fy[:M].reshape(N, H, W, Cout)
    else:
        fx = fy = None
        parts = res
    return fx, fy, jnp.sum(parts) / jnp.float32(M)


def _elementwise_loss(pred, gt, *, use_abs):
    """F.l1_loss / F.mse_loss with reduction='mean'; tiled TPU reduction."""
    p = pred.reshape(-1)
    g = gt.reshape(-1)
    n = p.shape[0]
    rows = _round_up(pl.cdiv(n, LANES), 8)
    TR = min(1024, rows)
    rows_pad = _round_up(rows, TR)
    total = rows_pad * LANES
    if total > n:
        # Zero-padding both operands identically -> padded diffs are exactly 0.
        p = jnp.pad(p, (0, total - n))
        g = jnp.pad(g, (0, total - n))
    p = p.reshape(rows_pad, LANES)
    g = g.reshape(rows_pad, LANES)
    G = rows_pad // TR

    parts = pl.pallas_call(
        functools.partial(_reduce_diff_kernel, use_abs=use_abs),
        out_shape=jax.ShapeDtypeStruct((G, 1, LANES), jnp.float32),
        grid=(G,),
        in_specs=[
            pl.BlockSpec((TR, LANES), lambda i: (i, 0)),
            pl.BlockSpec((TR, LANES), lambda i: (i, 0)),
        ],
        out_specs=pl.BlockSpec((1, 1, LANES), lambda i: (i, 0, 0)),
        compiler_params=pltpu.CompilerParams(
            dimension_semantics=("parallel",),
            vmem_limit_bytes=VMEM_LIMIT_BYTES),
    )(p, g)
    return jnp.sum(parts) / jnp.float32(n)


def l1(pre, gt):
    return _elementwise_loss(pre, gt, use_abs=True)


def l2(pre, gt):
    return _elementwise_loss(pre, gt, use_abs=False)


# --------------------------------------------------------------------------- #
# Synthetic VAE decode + LPIPS, and the LpipsMseLoss forward                   #
# --------------------------------------------------------------------------- #

def init_params(key):
    ks = jax.random.split(key, 6)

    def conv_init(k, cin, cout, scale):
        kw, kb = jax.random.split(k)
        w = jax.random.normal(kw, (3, 3, cin, cout), jnp.float32) * scale
        b = jax.random.normal(kb, (cout,), jnp.float32) * 0.01
        return w, b

    vae_w, vae_b = conv_init(ks[0], LATENT_CHS, 3, 0.10)   # synthetic decoder
    f0_w, f0_b = conv_init(ks[1], 3, 8, 0.20)              # synthetic VGG stage 0
    f1_w, f1_b = conv_init(ks[2], 8, 16, 0.10)             # synthetic VGG stage 1
    lin0 = jnp.abs(jax.random.normal(ks[3], (8,), jnp.float32)) * 0.1
    lin1 = jnp.abs(jax.random.normal(ks[4], (16,), jnp.float32)) * 0.1
    # LPIPS ScalingLayer constants (from the reference implementation).
    shift = jnp.array([-0.030, -0.088, -0.188], jnp.float32)
    scale = jnp.array([0.458, 0.448, 0.450], jnp.float32)
    return dict(vae_w=vae_w, vae_b=vae_b,
                feat0_w=f0_w, feat0_b=f0_b, feat1_w=f1_w, feat1_b=f1_b,
                lin0=lin0, lin1=lin1, lpips_shift=shift, lpips_scale=scale)


def vae_decode(params, latents_nchw):
    """Mirrors vae_decode(): 1/0.18215 scale then decoder; decoder is synthetic.

    The latent scale is folded into the decoder conv weights (exact: zero
    padding is invariant under a per-channel input scale), so there is no
    standalone elementwise scaling pass.
    """
    if latents_nchw.ndim == 5:                       # 'n t c h w -> (n t) c h w'
        n, t, c, h, w = latents_nchw.shape
        latents_nchw = latents_nchw.reshape(n * t, c, h, w)
    lat = jnp.transpose(latents_nchw, (0, 2, 3, 1))                 # -> NHWC
    in_scale = jnp.full((LATENT_CHS,), 0.18215, jnp.float32)        # w / 0.18215
    return conv3x3(lat, params["vae_w"], params["vae_b"], relu=False,
                   out_dtype=jnp.bfloat16, in_scale=in_scale)       # (N,H,W,3)


def lpips(params, x_nhwc, y_nhwc):
    # Stage 0 with the ScalingLayer folded in: per-channel scale divided into
    # the conv weights, shift subtracted inside the tap build (fused by XLA).
    fx, fy, d0 = lpips_stage(
        x_nhwc, y_nhwc, params["feat0_w"], params["feat0_b"], params["lin0"],
        in_scale=params["lpips_scale"], in_shift=params["lpips_shift"],
        emit_features=True)
    # Last stage: features are not written back at all (nothing consumes them).
    # NOTE: fx/fy round-trip HBM as bf16 between stages (see TODO in header).
    _, _, d1 = lpips_stage(fx, fy, params["feat1_w"], params["feat1_b"],
                           params["lin1"], emit_features=False)
    return d0 + d1


def lpips_mse_loss(params, video_gt, zj_pred, v_pred, v_gt,
                   perceptual_weight=PERCEPTUAL_WEIGHT, loss_type=LOSS_TYPE):
    """Forward of LpipsMseLoss.loss(...). Inputs are NCHW (or NTCHW) like torch."""
    video_pre = vae_decode(params, zj_pred)                      # NHWC, 3 channels

    loss_func = l1 if loss_type == "l1" else l2
    rec_loss = loss_func(v_pred, v_gt)

    if video_gt.ndim == 5:                           # 'n t c h w -> (n t) c h w'
        n, t, c, h, w = video_gt.shape
        video_gt = video_gt.reshape(n * t, c, h, w)
    video_gt_nhwc = jnp.transpose(video_gt, (0, 2, 3, 1))

    if perceptual_weight > 0:
        p_loss = lpips(params, video_pre, video_gt_nhwc)
    else:
        p_loss = jnp.zeros_like(rec_loss)

    loss = rec_loss + perceptual_weight * p_loss
    log = {"loss": loss, "rec_loss": rec_loss, "lpips_loss": p_loss}
    return loss, log


# --------------------------------------------------------------------------- #
# Demo                                                                         #
# --------------------------------------------------------------------------- #

if __name__ == "__main__":
    key = jax.random.PRNGKey(0)
    kv, kz, kp, kg = jax.random.split(key, 4)

    N, H, W = 2, 16, 16
    # Inputs in PyTorch NCHW convention (synthetic decoder keeps spatial dims).
    video_gt = jax.random.normal(kv, (N, 3, H, W), jnp.float32)
    zj_pred = jax.random.normal(kz, (N, LATENT_CHS, H, W), jnp.float32)
    v_pred = jax.random.normal(kp, (N, LATENT_CHS, H, W), jnp.float32)
    v_gt = jax.random.normal(kg, (N, LATENT_CHS, H, W), jnp.float32)

    params = init_params(jax.random.PRNGKey(42))

    loss, log = jax.jit(lpips_mse_loss)(params, video_gt, zj_pred, v_pred, v_gt)
    jax.block_until_ready(loss)
    print("KERNEL_OK")
</pallas_src>

<mosaic_0001>
module attributes {stable_mosaic.version = 11 : i64} {
  func.func @_conv_kernel(%arg0: i32, %arg1: memref<512x36xbf16, #tpu.memory_space<vmem>>, %arg2: memref<36x128xbf16, #tpu.memory_space<vmem>>, %arg3: memref<1x128xf32, #tpu.memory_space<vmem>>, %arg4: memref<512x3xbf16, #tpu.memory_space<vmem>>) attributes {dimension_semantics = [#tpu.dimension_semantics<parallel>], iteration_bounds = array<i64: 1>, scalar_prefetch = 0 : i64, scratch_operands = 0 : i64, tpu.core_type = #tpu.core_type<tc>, window_params = [{transform_indices = @transform_0, window_bounds = array<i64: 512, 36>}, {pipeline_mode = #tpu.pipeline_mode<synchronous>, transform_indices = @transform_1, window_bounds = array<i64: 36, 128>}, {pipeline_mode = #tpu.pipeline_mode<synchronous>, transform_indices = @transform_2, window_bounds = array<i64: 1, 128>}, {transform_indices = @transform_3, window_bounds = array<i64: 512, 3>}]} {
    %c0 = arith.constant 0 : index
    %c0_0 = arith.constant 0 : index
    %0 = vector.load %arg1[%c0, %c0_0] : memref<512x36xbf16, #tpu.memory_space<vmem>>, vector<512x36xbf16>
    %c0_1 = arith.constant 0 : index
    %c0_2 = arith.constant 0 : index
    %1 = vector.load %arg2[%c0_1, %c0_2] : memref<36x128xbf16, #tpu.memory_space<vmem>>, vector<36x128xbf16>
    %cst = arith.constant dense<0.000000e+00> : vector<512x128xf32>
    %2 = tpu.matmul %0, %1, %cst {dimension_numbers = #tpu.dot_dimension_numbers<[1], [0], [0], [1], [0, 0, 1, 1], [], []>} : vector<512x36xbf16>, vector<36x128xbf16>, vector<512x128xf32> -> vector<512x128xf32>
    %c0_3 = arith.constant 0 : index
    %c0_4 = arith.constant 0 : index
    %3 = vector.load %arg3[%c0_3, %c0_4] : memref<1x128xf32, #tpu.memory_space<vmem>>, vector<1x128xf32>
    %4 = vector.broadcast %3 : vector<1x128xf32> to vector<512x128xf32>
    %5 = arith.addf %2, %4 : vector<512x128xf32>
    %6 = vector.extract_strided_slice %5 {offsets = [0, 0], sizes = [512, 3], strides = [1, 1]} : vector<512x128xf32> to vector<512x3xf32>
    %7 = arith.truncf %6 : vector<512x3xf32> to vector<512x3xbf16>
    %c0_5 = arith.constant 0 : index
    %c0_6 = arith.constant 0 : index
    %8 = vector.load %arg4[%c0_5, %c0_6] : memref<512x3xbf16, #tpu.memory_space<vmem>>, vector<512x3xbf16>
    tpu.vector_store %arg4[%c0_5, %c0_6], %7 {strides = array<i32>} : memref<512x3xbf16, #tpu.memory_space<vmem>>, vector<512x3xbf16>,
    return
  }
  func.func @transform_0(%arg0: i32) -> (i32, i32) {
    %c0_i32 = arith.constant 0 : i32
    %c0_i32_0 = arith.constant 0 : i32
    return %arg0, %c0_i32 : i32, i32
  }
  func.func @transform_1(%arg0: i32) -> (i32, i32) {
    %c0_i32 = arith.constant 0 : i32
    %c0_i32_0 = arith.constant 0 : i32
    %c0_i32_1 = arith.constant 0 : i32
    return %c0_i32, %c0_i32_0 : i32, i32
  }
  func.func @transform_2(%arg0: i32) -> (i32, i32) {
    %c0_i32 = arith.constant 0 : i32
    %c0_i32_0 = arith.constant 0 : i32
    %c0_i32_1 = arith.constant 0 : i32
    return %c0_i32, %c0_i32_0 : i32, i32
  }
  func.func @transform_3(%arg0: i32) -> (i32, i32) {
    %c0_i32 = arith.constant 0 : i32
    %c0_i32_0 = arith.constant 0 : i32
    return %arg0, %c0_i32 : i32, i32
  }
}

module attributes {stable_mosaic.version = 11 : i64} {
  func.func @_lpips_stage_kernel(%arg0: i32, %arg1: memref<512x27xbf16, #tpu.memory_space<vmem>>, %arg2: memref<512x27xbf16, #tpu.memory_space<vmem>>, %arg3: memref<27x128xbf16, #tpu.memory_space<vmem>>, %arg4: memref<1x128xf32, #tpu.memory_space<vmem>>, %arg5: memref<1x128xf32, #tpu.memory_space<vmem>>, %arg6: memref<512x8xbf16, #tpu.memory_space<vmem>>, %arg7: memref<512x8xbf16, #tpu.memory_space<vmem>>, %arg8: memref<1x1x128xf32, #tpu.memory_space<vmem>>) attributes {dimension_semantics = [#tpu.dimension_semantics<parallel>], iteration_bounds = array<i64: 1>, scalar_prefetch = 0 : i64, scratch_operands = 0 : i64, tpu.core_type = #tpu.core_type<tc>, window_params = [{transform_indices = @transform_0, window_bounds = array<i64: 512, 27>}, {transform_indices = @transform_1, window_bounds = array<i64: 512, 27>}, {pipeline_mode = #tpu.pipeline_mode<synchronous>, transform_indices = @transform_2, window_bounds = array<i64: 27, 128>}, {pipeline_mode = #tpu.pipeline_mode<synchronous>, transform_indices = @transform_3, window_bounds = array<i64: 1, 128>}, {pipeline_mode = #tpu.pipeline_mode<synchronous>, transform_indices = @transform_4, window_bounds = array<i64: 1, 128>}, {transform_indices = @transform_5, window_bounds = array<i64: 512, 8>}, {transform_indices = @transform_6, window_bounds = array<i64: 512, 8>}, {transform_indices = @transform_7, window_bounds = array<i64: 1, 1, 128>}]} {
    %c0 = arith.constant 0 : index
    %c0_0 = arith.constant 0 : index
    %0 = vector.load %arg1[%c0, %c0_0] : memref<512x27xbf16, #tpu.memory_space<vmem>>, vector<512x27xbf16>
    %c0_1 = arith.constant 0 : index
    %c0_2 = arith.constant 0 : index
    %1 = vector.load %arg3[%c0_1, %c0_2] : memref<27x128xbf16, #tpu.memory_space<vmem>>, vector<27x128xbf16>
    %cst = arith.constant dense<0.000000e+00> : vector<512x128xf32>
    %2 = tpu.matmul %0, %1, %cst {dimension_numbers = #tpu.dot_dimension_numbers<[1], [0], [0], [1], [0, 0, 1, 1], [], []>} : vector<512x27xbf16>, vector<27x128xbf16>, vector<512x128xf32> -> vector<512x128xf32>
    %c0_3 = arith.constant 0 : index
    %c0_4 = arith.constant 0 : index
    %3 = vector.load %arg2[%c0_3, %c0_4] : memref<512x27xbf16, #tpu.memory_space<vmem>>, vector<512x27xbf16>
    %c0_5 = arith.constant 0 : index
    %c0_6 = arith.constant 0 : index
    %4 = vector.load %arg3[%c0_5, %c0_6] : memref<27x128xbf16, #tpu.memory_space<vmem>>, vector<27x128xbf16>
    %cst_7 = arith.constant dense<0.000000e+00> : vector<512x128xf32>
    %5 = tpu.matmul %3, %4, %cst_7 {dimension_numbers = #tpu.dot_dimension_numbers<[1], [0], [0], [1], [0, 0, 1, 1], [], []>} : vector<512x27xbf16>, vector<27x128xbf16>, vector<512x128xf32> -> vector<512x128xf32>
    %c0_8 = arith.constant 0 : index
    %c0_9 = arith.constant 0 : index
    %6 = vector.load %arg4[%c0_8, %c0_9] : memref<1x128xf32, #tpu.memory_space<vmem>>, vector<1x128xf32>
    %7 = vector.broadcast %6 : vector<1x128xf32> to vector<512x128xf32>
    %8 = arith.addf %2, %7 : vector<512x128xf32>
    %cst_10 = arith.constant 0.000000e+00 : f32
    %9 = vector.broadcast %cst_10 : f32 to vector<512x128xf32>
    %10 = arith.maximumf %8, %9 : vector<512x128xf32>
    %c0_11 = arith.constant 0 : index
    %c0_12 = arith.constant 0 : index
    %11 = vector.load %arg4[%c0_11, %c0_12] : memref<1x128xf32, #tpu.memory_space<vmem>>, vector<1x128xf32>
    %12 = vector.broadcast %11 : vector<1x128xf32> to vector<512x128xf32>
    %13 = arith.addf %5, %12 : vector<512x128xf32>
    %cst_13 = arith.constant 0.000000e+00 : f32
    %14 = vector.broadcast %cst_13 : f32 to vector<512x128xf32>
    %15 = arith.maximumf %13, %14 : vector<512x128xf32>
    %16 = vector.extract_strided_slice %10 {offsets = [0, 0], sizes = [512, 8], strides = [1, 1]} : vector<512x128xf32> to vector<512x8xf32>
    %17 = arith.truncf %16 : vector<512x8xf32> to vector<512x8xbf16>
    %c0_14 = arith.constant 0 : index
    %c0_15 = arith.constant 0 : index
    %18 = vector.load %arg6[%c0_14, %c0_15] : memref<512x8xbf16, #tpu.memory_space<vmem>>, vector<512x8xbf16>
    tpu.vector_store %arg6[%c0_14, %c0_15], %17 {strides = array<i32>} : memref<512x8xbf16, #tpu.memory_space<vmem>>, vector<512x8xbf16>,
    %19 = vector.extract_strided_slice %15 {offsets = [0, 0], sizes = [512, 8], strides = [1, 1]} : vector<512x128xf32> to vector<512x8xf32>
    %20 = arith.truncf %19 : vector<512x8xf32> to vector<512x8xbf16>
    %c0_16 = arith.constant 0 : index
    %c0_17 = arith.constant 0 : index
    %21 = vector.load %arg7[%c0_16, %c0_17] : memref<512x8xbf16, #tpu.memory_space<vmem>>, vector<512x8xbf16>
    tpu.vector_store %arg7[%c0_16, %c0_17], %20 {strides = array<i32>} : memref<512x8xbf16, #tpu.memory_space<vmem>>, vector<512x8xbf16>,
    %cst_18 = arith.constant 1.000000e+00 : f32
    %22 = vector.broadcast %cst_18 : f32 to vector<128x128xf32>
    %23 = arith.mulf %10, %10 : vector<512x128xf32>
    %cst_19 = arith.constant dense<0.000000e+00> : vector<512x128xf32>
    %24 = tpu.matmul %23, %22, %cst_19 {dimension_numbers = #tpu.dot_dimension_numbers<[1], [0], [0], [1], [0, 0, 1, 1], [], []>} : vector<512x128xf32>, vector<128x128xf32>, vector<512x128xf32> -> vector<512x128xf32>
    %25 = arith.mulf %15, %15 : vector<512x128xf32>
    %cst_20 = arith.constant dense<0.000000e+00> : vector<512x128xf32>
    %26 = tpu.matmul %25, %22, %cst_20 {dimension_numbers = #tpu.dot_dimension_numbers<[1], [0], [0], [1], [0, 0, 1, 1], [], []>} : vector<512x128xf32>, vector<128x128xf32>, vector<512x128xf32> -> vector<512x128xf32>
    %27 = math.sqrt %24 : vector<512x128xf32>
    %cst_21 = arith.constant 1.000000e-10 : f32
    %28 = vector.broadcast %cst_21 : f32 to vector<512x128xf32>
    %29 = arith.addf %27, %28 : vector<512x128xf32>
    %30 = arith.divf %10, %29 : vector<512x128xf32>
    %31 = math.sqrt %26 : vector<512x128xf32>
    %cst_22 = arith.constant 1.000000e-10 : f32
    %32 = vector.broadcast %cst_22 : f32 to vector<512x128xf32>
    %33 = arith.addf %31, %32 : vector<512x128xf32>
    %34 = arith.divf %15, %33 : vector<512x128xf32>
    %35 = arith.subf %30, %34 : vector<512x128xf32>
    %36 = arith.mulf %35, %35 : vector<512x128xf32>
    %c0_23 = arith.constant 0 : index
    %c0_24 = arith.constant 0 : index
    %37 = vector.load %arg5[%c0_23, %c0_24] : memref<1x128xf32, #tpu.memory_space<vmem>>, vector<1x128xf32>
    %38 = vector.broadcast %37 : vector<1x128xf32> to vector<512x128xf32>
    %39 = arith.mulf %36, %38 : vector<512x128xf32>
    %cst_25 = arith.constant dense<0.000000e+00> : vector<128xf32>
    %40 = vector.multi_reduction <add>, %39, %cst_25 [0] : vector<512x128xf32> to vector<128xf32>
    %41 = vector.shape_cast %40 : vector<128xf32> to vector<1x128xf32>
    %42 = vector.shape_cast %41 : vector<1x128xf32> to vector<1x1x128xf32>
    %c0_26 = arith.constant 0 : index
    %c0_27 = arith.constant 0 : index
    %c0_28 = arith.constant 0 : index
    %43 = vector.load %arg8[%c0_26, %c0_27, %c0_28] : memref<1x1x128xf32, #tpu.memory_space<vmem>>, vector<1x1x128xf32>
    tpu.vector_store %arg8[%c0_26, %c0_27, %c0_28], %42 {strides = array<i32>} : memref<1x1x128xf32, #tpu.memory_space<vmem>>, vector<1x1x128xf32>,
    return
  }
  func.func @transform_0(%arg0: i32) -> (i32, i32) {
    %c0_i32 = arith.constant 0 : i32
    %c0_i32_0 = arith.constant 0 : i32
    return %arg0, %c0_i32 : i32, i32
  }
  func.func @transform_1(%arg0: i32) -> (i32, i32) {
    %c0_i32 = arith.constant 0 : i32
    %c0_i32_0 = arith.constant 0 : i32
    return %arg0, %c0_i32 : i32, i32
  }
  func.func @transform_2(%arg0: i32) -> (i32, i32) {
    %c0_i32 = arith.constant 0 : i32
    %c0_i32_0 = arith.constant 0 : i32
    %c0_i32_1 = arith.constant 0 : i32
    return %c0_i32, %c0_i32_0 : i32, i32
  }
  func.func @transform_3(%arg0: i32) -> (i32, i32) {
    %c0_i32 = arith.constant 0 : i32
    %c0_i32_0 = arith.constant 0 : i32
    %c0_i32_1 = arith.constant 0 : i32
    return %c0_i32, %c0_i32_0 : i32, i32
  }
  func.func @transform_4(%arg0: i32) -> (i32, i32) {
    %c0_i32 = arith.constant 0 : i32
    %c0_i32_0 = arith.constant 0 : i32
    %c0_i32_1 = arith.constant 0 : i32
    return %c0_i32, %c0_i32_0 : i32, i32
  }
  func.func @transform_5(%arg0: i32) -> (i32, i32) {
    %c0_i32 = arith.constant 0 : i32
    %c0_i32_0 = arith.constant 0 : i32
    return %arg0, %c0_i32 : i32, i32
  }
  func.func @transform_6(%arg0: i32) -> (i32, i32) {
    %c0_i32 = arith.constant 0 : i32
    %c0_i32_0 = arith.constant 0 : i32
    return %arg0, %c0_i32 : i32, i32
  }
  func.func @transform_7(%arg0: i32) -> (i32, i32, i32) {
    %c0_i32 = arith.constant 0 : i32
    %c0_i32_0 = arith.constant 0 : i32
    %c0_i32_1 = arith.constant 0 : i32
    return %arg0, %c0_i32, %c0_i32_0 : i32, i32, i32
  }
}

module attributes {stable_mosaic.version = 11 : i64} {
  func.func @_lpips_stage_kernel(%arg0: i32, %arg1: memref<512x72xbf16, #tpu.memory_space<vmem>>, %arg2: memref<512x72xbf16, #tpu.memory_space<vmem>>, %arg3: memref<72x128xbf16, #tpu.memory_space<vmem>>, %arg4: memref<1x128xf32, #tpu.memory_space<vmem>>, %arg5: memref<1x128xf32, #tpu.memory_space<vmem>>, %arg6: memref<1x1x128xf32, #tpu.memory_space<vmem>>) attributes {dimension_semantics = [#tpu.dimension_semantics<parallel>], iteration_bounds = array<i64: 1>, scalar_prefetch = 0 : i64, scratch_operands = 0 : i64, tpu.core_type = #tpu.core_type<tc>, window_params = [{transform_indices = @transform_0, window_bounds = array<i64: 512, 72>}, {transform_indices = @transform_1, window_bounds = array<i64: 512, 72>}, {pipeline_mode = #tpu.pipeline_mode<synchronous>, transform_indices = @transform_2, window_bounds = array<i64: 72, 128>}, {pipeline_mode = #tpu.pipeline_mode<synchronous>, transform_indices = @transform_3, window_bounds = array<i64: 1, 128>}, {pipeline_mode = #tpu.pipeline_mode<synchronous>, transform_indices = @transform_4, window_bounds = array<i64: 1, 128>}, {transform_indices = @transform_5, window_bounds = array<i64: 1, 1, 128>}]} {
    %c0 = arith.constant 0 : index
    %c0_0 = arith.constant 0 : index
    %0 = vector.load %arg1[%c0, %c0_0] : memref<512x72xbf16, #tpu.memory_space<vmem>>, vector<512x72xbf16>
    %c0_1 = arith.constant 0 : index
    %c0_2 = arith.constant 0 : index
    %1 = vector.load %arg3[%c0_1, %c0_2] : memref<72x128xbf16, #tpu.memory_space<vmem>>, vector<72x128xbf16>
    %cst = arith.constant dense<0.000000e+00> : vector<512x128xf32>
    %2 = tpu.matmul %0, %1, %cst {dimension_numbers = #tpu.dot_dimension_numbers<[1], [0], [0], [1], [0, 0, 1, 1], [], []>} : vector<512x72xbf16>, vector<72x128xbf16>, vector<512x128xf32> -> vector<512x128xf32>
    %c0_3 = arith.constant 0 : index
    %c0_4 = arith.constant 0 : index
    %3 = vector.load %arg2[%c0_3, %c0_4] : memref<512x72xbf16, #tpu.memory_space<vmem>>, vector<512x72xbf16>
    %c0_5 = arith.constant 0 : index
    %c0_6 = arith.constant 0 : index
    %4 = vector.load %arg3[%c0_5, %c0_6] : memref<72x128xbf16, #tpu.memory_space<vmem>>, vector<72x128xbf16>
    %cst_7 = arith.constant dense<0.000000e+00> : vector<512x128xf32>
    %5 = tpu.matmul %3, %4, %cst_7 {dimension_numbers = #tpu.dot_dimension_numbers<[1], [0], [0], [1], [0, 0, 1, 1], [], []>} : vector<512x72xbf16>, vector<72x128xbf16>, vector<512x128xf32> -> vector<512x128xf32>
    %c0_8 = arith.constant 0 : index
    %c0_9 = arith.constant 0 : index
    %6 = vector.load %arg4[%c0_8, %c0_9] : memref<1x128xf32, #tpu.memory_space<vmem>>, vector<1x128xf32>
    %7 = vector.broadcast %6 : vector<1x128xf32> to vector<512x128xf32>
    %8 = arith.addf %2, %7 : vector<512x128xf32>
    %cst_10 = arith.constant 0.000000e+00 : f32
    %9 = vector.broadcast %cst_10 : f32 to vector<512x128xf32>
    %10 = arith.maximumf %8, %9 : vector<512x128xf32>
    %c0_11 = arith.constant 0 : index
    %c0_12 = arith.constant 0 : index
    %11 = vector.load %arg4[%c0_11, %c0_12] : memref<1x128xf32, #tpu.memory_space<vmem>>, vector<1x128xf32>
    %12 = vector.broadcast %11 : vector<1x128xf32> to vector<512x128xf32>
    %13 = arith.addf %5, %12 : vector<512x128xf32>
    %cst_13 = arith.constant 0.000000e+00 : f32
    %14 = vector.broadcast %cst_13 : f32 to vector<512x128xf32>
    %15 = arith.maximumf %13, %14 : vector<512x128xf32>
    %cst_14 = arith.constant 1.000000e+00 : f32
    %16 = vector.broadcast %cst_14 : f32 to vector<128x128xf32>
    %17 = arith.mulf %10, %10 : vector<512x128xf32>
    %cst_15 = arith.constant dense<0.000000e+00> : vector<512x128xf32>
    %18 = tpu.matmul %17, %16, %cst_15 {dimension_numbers = #tpu.dot_dimension_numbers<[1], [0], [0], [1], [0, 0, 1, 1], [], []>} : vector<512x128xf32>, vector<128x128xf32>, vector<512x128xf32> -> vector<512x128xf32>
    %19 = arith.mulf %15, %15 : vector<512x128xf32>
    %cst_16 = arith.constant dense<0.000000e+00> : vector<512x128xf32>
    %20 = tpu.matmul %19, %16, %cst_16 {dimension_numbers = #tpu.dot_dimension_numbers<[1], [0], [0], [1], [0, 0, 1, 1], [], []>} : vector<512x128xf32>, vector<128x128xf32>, vector<512x128xf32> -> vector<512x128xf32>
    %21 = math.sqrt %18 : vector<512x128xf32>
    %cst_17 = arith.constant 1.000000e-10 : f32
    %22 = vector.broadcast %cst_17 : f32 to vector<512x128xf32>
    %23 = arith.addf %21, %22 : vector<512x128xf32>
    %24 = arith.divf %10, %23 : vector<512x128xf32>
    %25 = math.sqrt %20 : vector<512x128xf32>
    %cst_18 = arith.constant 1.000000e-10 : f32
    %26 = vector.broadcast %cst_18 : f32 to vector<512x128xf32>
    %27 = arith.addf %25, %26 : vector<512x128xf32>
    %28 = arith.divf %15, %27 : vector<512x128xf32>
    %29 = arith.subf %24, %28 : vector<512x128xf32>
    %30 = arith.mulf %29, %29 : vector<512x128xf32>
    %c0_19 = arith.constant 0 : index
    %c0_20 = arith.constant 0 : index
    %31 = vector.load %arg5[%c0_19, %c0_20] : memref<1x128xf32, #tpu.memory_space<vmem>>, vector<1x128xf32>
    %32 = vector.broadcast %31 : vector<1x128xf32> to vector<512x128xf32>
    %33 = arith.mulf %30, %32 : vector<512x128xf32>
    %cst_21 = arith.constant dense<0.000000e+00> : vector<128xf32>
    %34 = vector.multi_reduction <add>, %33, %cst_21 [0] : vector<512x128xf32> to vector<128xf32>
    %35 = vector.shape_cast %34 : vector<128xf32> to vector<1x128xf32>
    %36 = vector.shape_cast %35 : vector<1x128xf32> to vector<1x1x128xf32>
    %c0_22 = arith.constant 0 : index
    %c0_23 = arith.constant 0 : index
    %c0_24 = arith.constant 0 : index
    %37 = vector.load %arg6[%c0_22, %c0_23, %c0_24] : memref<1x1x128xf32, #tpu.memory_space<vmem>>, vector<1x1x128xf32>
    tpu.vector_store %arg6[%c0_22, %c0_23, %c0_24], %36 {strides = array<i32>} : memref<1x1x128xf32, #tpu.memory_space<vmem>>, vector<1x1x128xf32>,
    return
  }
  func.func @transform_0(%arg0: i32) -> (i32, i32) {
    %c0_i32 = arith.constant 0 : i32
    %c0_i32_0 = arith.constant 0 : i32
    return %arg0, %c0_i32 : i32, i32
  }
  func.func @transform_1(%arg0: i32) -> (i32, i32) {
    %c0_i32 = arith.constant 0 : i32
    %c0_i32_0 = arith.constant 0 : i32
    return %arg0, %c0_i32 : i32, i32
  }
  func.func @transform_2(%arg0: i32) -> (i32, i32) {
    %c0_i32 = arith.constant 0 : i32
    %c0_i32_0 = arith.constant 0 : i32
    %c0_i32_1 = arith.constant 0 : i32
    return %c0_i32, %c0_i32_0 : i32, i32
  }
  func.func @transform_3(%arg0: i32) -> (i32, i32) {
    %c0_i32 = arith.constant 0 : i32
    %c0_i32_0 = arith.constant 0 : i32
    %c0_i32_1 = arith.constant 0 : i32
    return %c0_i32, %c0_i32_0 : i32, i32
  }
  func.func @transform_4(%arg0: i32) -> (i32, i32) {
    %c0_i32 = arith.constant 0 : i32
    %c0_i32_0 = arith.constant 0 : i32
    %c0_i32_1 = arith.constant 0 : i32
    return %c0_i32, %c0_i32_0 : i32, i32
  }
  func.func @transform_5(%arg0: i32) -> (i32, i32, i32) {
    %c0_i32 = arith.constant 0 : i32
    %c0_i32_0 = arith.constant 0 : i32
    %c0_i32_1 = arith.constant 0 : i32
    return %arg0, %c0_i32, %c0_i32_0 : i32, i32, i32
  }
}

module attributes {stable_mosaic.version = 11 : i64} {
  func.func @_reduce_diff_kernel(%arg0: i32, %arg1: memref<16x128xf32, #tpu.memory_space<vmem>>, %arg2: memref<16x128xf32, #tpu.memory_space<vmem>>, %arg3: memref<1x1x128xf32, #tpu.memory_space<vmem>>) attributes {dimension_semantics = [#tpu.dimension_semantics<parallel>], iteration_bounds = array<i64: 1>, scalar_prefetch = 0 : i64, scratch_operands = 0 : i64, tpu.core_type = #tpu.core_type<tc>, window_params = [{transform_indices = @transform_0, window_bounds = array<i64: 16, 128>}, {transform_indices = @transform_1, window_bounds = array<i64: 16, 128>}, {transform_indices = @transform_2, window_bounds = array<i64: 1, 1, 128>}]} {
    %c0 = arith.constant 0 : index
    %c0_0 = arith.constant 0 : index
    %0 = vector.load %arg1[%c0, %c0_0] : memref<16x128xf32, #tpu.memory_space<vmem>>, vector<16x128xf32>
    %c0_1 = arith.constant 0 : index
    %c0_2 = arith.constant 0 : index
    %1 = vector.load %arg2[%c0_1, %c0_2] : memref<16x128xf32, #tpu.memory_space<vmem>>, vector<16x128xf32>
    %2 = arith.subf %0, %1 : vector<16x128xf32>
    %3 = arith.mulf %2, %2 : vector<16x128xf32>
    %cst = arith.constant dense<0.000000e+00> : vector<128xf32>
    %4 = vector.multi_reduction <add>, %3, %cst [0] : vector<16x128xf32> to vector<128xf32>
    %5 = vector.shape_cast %4 : vector<128xf32> to vector<1x128xf32>
    %6 = vector.shape_cast %5 : vector<1x128xf32> to vector<1x1x128xf32>
    %c0_3 = arith.constant 0 : index
    %c0_4 = arith.constant 0 : index
    %c0_5 = arith.constant 0 : index
    %7 = vector.load %arg3[%c0_3, %c0_4, %c0_5] : memref<1x1x128xf32, #tpu.memory_space<vmem>>, vector<1x1x128xf32>
    tpu.vector_store %arg3[%c0_3, %c0_4, %c0_5], %6 {strides = array<i32>} : memref<1x1x128xf32, #tpu.memory_space<vmem>>, vector<1x1x128xf32>,
    return
  }
  func.func @transform_0(%arg0: i32) -> (i32, i32) {
    %c0_i32 = arith.constant 0 : i32
    %c0_i32_0 = arith.constant 0 : i32
    return %arg0, %c0_i32 : i32, i32
  }
  func.func @transform_1(%arg0: i32) -> (i32, i32) {
    %c0_i32 = arith.constant 0 : i32
    %c0_i32_0 = arith.constant 0 : i32
    return %arg0, %c0_i32 : i32, i32
  }
  func.func @transform_2(%arg0: i32) -> (i32, i32, i32) {
    %c0_i32 = arith.constant 0 : i32
    %c0_i32_0 = arith.constant 0 : i32
    %c0_i32_1 = arith.constant 0 : i32
    return %arg0, %c0_i32, %c0_i32_0 : i32, i32, i32
  }
}

</mosaic_0001>

<llo_original>
// kernel: lpips_mse_loss.4
$region0: #{lpips_mse_loss.4}
  #allocation0 [shape = 'u32[]', space=smem, size = 0x4, offset = 0x4, fixed_abs, tag = 'smem constant byte address 0x4 - core index']
  #allocation1 [shape = 'u32[144,128]{1,0:T(1,128)}', space=vmem, size = 0x12000, scoped, tag = 'internal scratch']
  %s0 = inlined_call_operand.vmem [shape: bf16[512,36], index: 0, kind: input, shape index: {}]
  %s1 = inlined_call_operand.vmem [shape: bf16[36,128], index: 1, kind: input, shape index: {}]
  %s2 = inlined_call_operand.vmem [shape: f32[1,128], index: 2, kind: input, shape index: {}]
  %s3 = inlined_call_operand.vmem [shape: bf16[512,3], index: 3, kind: output, shape index: {}]
  %s4 = sld [smem:[#allocation0]]
  $region22: #{lpips_mse_loss.4} parent=0
    _
  %s6 = ssub.s32 1, %s4
  %s7 = scalar_select 0, %s6, %s4
  // Predicated region
  $region2: #{lpips_mse_loss.4} parent=0 // pred_check
    _
  $region3: #{lpips_mse_loss.4} parent=0 // pred_check_branch
    %9 = sbr.rel (0) target = $region5
  $region4: #{lpips_mse_loss.4} parent=0 // pred_region
    _
  $region5: #{lpips_mse_loss.4} parent=0 // pred_fallthru
    _
  // Predicated region
  $region6: #{lpips_mse_loss.4} parent=0 // pred_check
    _
  $region7: #{lpips_mse_loss.4} parent=0 // pred_check_branch
    %11 = sbr.rel (0) target = $region9
  $region8: #{lpips_mse_loss.4} parent=0 // pred_region
    _
  $region9: #{lpips_mse_loss.4} parent=0 // pred_fallthru
    _
  // Predicated region
  $region10: #{lpips_mse_loss.4} parent=0 // pred_check
    _
  $region11: #{lpips_mse_loss.4} parent=0 // pred_check_branch
    %13 = sbr.rel (0) target = $region13
  $region12: #{lpips_mse_loss.4} parent=0 // pred_region
    _
  $region13: #{lpips_mse_loss.4} parent=0 // pred_fallthru
    _
  %v15 = vld [vmem:[%s0] sm:$0xf]
  %v16 = vld [vmem:[%s0 + $0x4] sm:$0xf]
  %v17 = vld [vmem:[%s0 + $0x8] sm:$0xf]
  %v18 = vld [vmem:[%s0 + $0xc] sm:$0xf]
  %v19 = vld [vmem:[%s0 + $0x10] sm:$0xf]
  %v20 = vld [vmem:[%s0 + $0x14] sm:$0xf]
  %v21 = vld [vmem:[%s0 + $0x18] sm:$0xf]
  %v22 = vld [vmem:[%s0 + $0x1c] sm:$0xf]
  %v23 = vld [vmem:[%s0 + $0x20] sm:$0xf]
  %v24 = vld [vmem:[%s0 + $0x24] sm:$0xf]
  %v25 = vld [vmem:[%s0 + $0x28] sm:$0xf]
  %v26 = vld [vmem:[%s0 + $0x2c] sm:$0xf]
  %v27 = vld [vmem:[%s0 + $0x30] sm:$0xf]
  %v28 = vld [vmem:[%s0 + $0x34] sm:$0xf]
  %v29 = vld [vmem:[%s0 + $0x38] sm:$0xf]
  %v30 = vld [vmem:[%s0 + $0x3c] sm:$0xf]
  %v31 = vld [vmem:[%s0 + $0x40] sm:$0xf]
  %v32 = vld [vmem:[%s0 + $0x44] sm:$0xf]
  %v33 = vld [vmem:[%s0 + $0x48] sm:$0xf]
  %v34 = vld [vmem:[%s0 + $0x4c] sm:$0xf]
  %v35 = vld [vmem:[%s0 + $0x50] sm:$0xf]
  %v36 = vld [vmem:[%s0 + $0x54] sm:$0xf]
  %v37 = vld [vmem:[%s0 + $0x58] sm:$0xf]
  %v38 = vld [vmem:[%s0 + $0x5c] sm:$0xf]
  %v39 = vld [vmem:[%s0 + $0x60] sm:$0xf]
  %v40 = vld [vmem:[%s0 + $0x64] sm:$0xf]
  %v41 = vld [vmem:[%s0 + $0x68] sm:$0xf]
  %v42 = vld [vmem:[%s0 + $0x6c] sm:$0xf]
  %v43 = vld [vmem:[%s0 + $0x70] sm:$0xf]
  %v44 = vld [vmem:[%s0 + $0x74] sm:$0xf]
  %v45 = vld [vmem:[%s0 + $0x78] sm:$0xf]
  %v46 = vld [vmem:[%s0 + $0x7c] sm:$0xf]
  %v47 = vld [vmem:[%s0 + $0x80] sm:$0xf]
  %v48 = vld [vmem:[%s0 + $0x84] sm:$0xf]
  %v49 = vld [vmem:[%s0 + $0x88] sm:$0xf]
  %v50 = vld [vmem:[%s0 + $0x8c] sm:$0xf]
  %v51 = vld [vmem:[%s0 + $0x90] sm:$0xf]
  %v52 = vld [vmem:[%s0 + $0x94] sm:$0xf]
  %v53 = vld [vmem:[%s0 + $0x98] sm:$0xf]
  %v54 = vld [vmem:[%s0 + $0x9c] sm:$0xf]
  %v55 = vld [vmem:[%s0 + $0xa0] sm:$0xf]
  %v56 = vld [vmem:[%s0 + $0xa4] sm:$0xf]
  %v57 = vld [vmem:[%s0 + $0xa8] sm:$0xf]
  %v58 = vld [vmem:[%s0 + $0xac] sm:$0xf]
  %v59 = vld [vmem:[%s0 + $0xb0] sm:$0xf]
  %v60 = vld [vmem:[%s0 + $0xb4] sm:$0xf]
  %v61 = vld [vmem:[%s0 + $0xb8] sm:$0xf]
  %v62 = vld [vmem:[%s0 + $0xbc] sm:$0xf]
  %v63 = vld [vmem:[%s0 + $0xc0] sm:$0xf]
  %v64 = vld [vmem:[%s0 + $0xc4] sm:$0xf]
  %v65 = vld [vmem:[%s0 + $0xc8] sm:$0xf]
  %v66 = vld [vmem:[%s0 + $0xcc] sm:$0xf]
  %v67 = vld [vmem:[%s0 + $0xd0] sm:$0xf]
  %v68 = vld [vmem:[%s0 + $0xd4] sm:$0xf]
  %v69 = vld [vmem:[%s0 + $0xd8] sm:$0xf]
  %v70 = vld [vmem:[%s0 + $0xdc] sm:$0xf]
  %v71 = vld [vmem:[%s0 + $0xe0] sm:$0xf]
  %v72 = vld [vmem:[%s0 + $0xe4] sm:$0xf]
  %v73 = vld [vmem:[%s0 + $0xe8] sm:$0xf]
  %v74 = vld [vmem:[%s0 + $0xec] sm:$0xf]
  %v75 = vld [vmem:[%s0 + $0xf0] sm:$0xf]
  %v76 = vld [vmem:[%s0 + $0xf4] sm:$0xf]
  %v77 = vld [vmem:[%s0 + $0xf8] sm:$0xf]
  %v78 = vld [vmem:[%s0 + $0xfc] sm:$0xf]
  %v79 = vld [vmem:[%s1] sm:$0xf]
  %v80 = vld [vmem:[%s1 + $0x4] sm:$0xf]
  %v81 = vld [vmem:[%s1 + $0x8] sm:$0xf]
  %v82 = vld [vmem:[%s1 + $0xc] sm:$0xf]
  %v83 = vld [vmem:[%s1 + $0x10] sm:$0x3]
  %v84 = vld [vmem:[%s2] sm:$0x1]
  %v86 = vlaneseq
  %v87 = vshrl.u32 %v86, 7
  %v88 = vsub.s32 0, %v87
  %v89 = vrot.slane %v84, %v88
  %v155 = vunpack.c.l.b16 %v15
  %v156 = vunpack.c.l.b16 %v16
  %v157 = vunpack.c.l.b16 %v17
  %v158 = vunpack.c.l.b16 %v18
  %v159 = vunpack.c.l.b16 %v19
  %v160 = vunpack.c.l.b16 %v20
  %v161 = vunpack.c.l.b16 %v21
  %v162 = vunpack.c.l.b16 %v22
  %v163 = vunpack.c.l.b16 %v23
  %v164 = vunpack.c.l.b16 %v24
  %v165 = vunpack.c.l.b16 %v25
  %v166 = vunpack.c.l.b16 %v26
  %v167 = vunpack.c.l.b16 %v27
  %v168 = vunpack.c.l.b16 %v28
  %v169 = vunpack.c.l.b16 %v29
  %v170 = vunpack.c.l.b16 %v30
  %v171 = vunpack.c.l.b16 %v31
  %v172 = vunpack.c.l.b16 %v32
  %v173 = vunpack.c.l.b16 %v33
  %v174 = vunpack.c.l.b16 %v34
  %v175 = vunpack.c.l.b16 %v35
  %v176 = vunpack.c.l.b16 %v36
  %v177 = vunpack.c.l.b16 %v37
  %v178 = vunpack.c.l.b16 %v38
  %v179 = vunpack.c.l.b16 %v39
  %v180 = vunpack.c.l.b16 %v40
  %v181 = vunpack.c.l.b16 %v41
  %v182 = vunpack.c.l.b16 %v42
  %v183 = vunpack.c.l.b16 %v43
  %v184 = vunpack.c.l.b16 %v44
  %v185 = vunpack.c.l.b16 %v45
  %v186 = vunpack.c.l.b16 %v46
  %v187 = vunpack.c.l.b16 %v47
  %v188 = vunpack.c.l.b16 %v48
  %v189 = vunpack.c.l.b16 %v49
  %v190 = vunpack.c.l.b16 %v50
  %v191 = vunpack.c.l.b16 %v51
  %v192 = vunpack.c.l.b16 %v52
  %v193 = vunpack.c.l.b16 %v53
  %v194 = vunpack.c.l.b16 %v54
  %v195 = vunpack.c.l.b16 %v55
  %v196 = vunpack.c.l.b16 %v56
  %v197 = vunpack.c.l.b16 %v57
  %v198 = vunpack.c.l.b16 %v58
  %v199 = vunpack.c.l.b16 %v59
  %v200 = vunpack.c.l.b16 %v60
  %v201 = vunpack.c.l.b16 %v61
  %v202 = vunpack.c.l.b16 %v62
  %v203 = vunpack.c.l.b16 %v63
  %v204 = vunpack.c.l.b16 %v64
  %v205 = vunpack.c.l.b16 %v65
  %v206 = vunpack.c.l.b16 %v66
  %v207 = vunpack.c.l.b16 %v67
  %v208 = vunpack.c.l.b16 %v68
  %v209 = vunpack.c.l.b16 %v69
  %v210 = vunpack.c.l.b16 %v70
  %v211 = vunpack.c.l.b16 %v71
  %v212 = vunpack.c.l.b16 %v72
  %v213 = vunpack.c.l.b16 %v73
  %v214 = vunpack.c.l.b16 %v74
  %v215 = vunpack.c.l.b16 %v75
  %v216 = vunpack.c.l.b16 %v76
  %v217 = vunpack.c.l.b16 %v77
  %v218 = vunpack.c.l.b16 %v78
  %v219 = vpack.c.b16 %v156, %v155
  %v220 = vpack.c.b16 %v158, %v157
  %v221 = vpack.c.b16 %v160, %v159
  %v222 = vpack.c.b16 %v162, %v161
  %v223 = vpack.c.b16 %v164, %v163
  %v224 = vpack.c.b16 %v166, %v165
  %v225 = vpack.c.b16 %v168, %v167
  %v226 = vpack.c.b16 %v170, %v169
  %v227 = vpack.c.b16 %v172, %v171
  %v228 = vpack.c.b16 %v174, %v173
  %v229 = vpack.c.b16 %v176, %v175
  %v230 = vpack.c.b16 %v178, %v177
  %v231 = vpack.c.b16 %v180, %v179
  %v232 = vpack.c.b16 %v182, %v181
  %v233 = vpack.c.b16 %v184, %v183
  %v234 = vpack.c.b16 %v186, %v185
  %v235 = vpack.c.b16 %v188, %v187
  %v236 = vpack.c.b16 %v190, %v189
  %v237 = vpack.c.b16 %v192, %v191
  %v238 = vpack.c.b16 %v194, %v193
  %v239 = vpack.c.b16 %v196, %v195
  %v240 = vpack.c.b16 %v198, %v197
  %v241 = vpack.c.b16 %v200, %v199
  %v242 = vpack.c.b16 %v202, %v201
  %v243 = vpack.c.b16 %v204, %v203
  %v244 = vpack.c.b16 %v206, %v205
  %v245 = vpack.c.b16 %v208, %v207
  %v246 = vpack.c.b16 %v210, %v209
  %v247 = vpack.c.b16 %v212, %v211
  %v248 = vpack.c.b16 %v214, %v213
  %v249 = vpack.c.b16 %v216, %v215
  %v250 = vpack.c.b16 %v218, %v217
  %v256 = vunpack.c.l.b16 %v79
  %v257 = vunpack.c.l.b16 %v80
  %v258 = vunpack.c.l.b16 %v81
  %v259 = vunpack.c.l.b16 %v82
  %v260 = vunpack.c.l.b16 %v83
  %v261 = vpack.c.b16 %v257, %v256
  %v262 = vpack.c.b16 %v259, %v258
  %v263 = vpack.c.b16 %v260, %v260
  %vm266 = vcmask 293888
  %v268 = vsel %vm266, %v219, 0
  %v271 = vsel %vm266, %v220, 0
  %v274 = vsel %vm266, %v221, 0
  %v277 = vsel %vm266, %v222, 0
  %v280 = vsel %vm266, %v223, 0
  %v283 = vsel %vm266, %v224, 0
  %v286 = vsel %vm266, %v225, 0
  %v289 = vsel %vm266, %v226, 0
  %v292 = vsel %vm266, %v227, 0
  %v295 = vsel %vm266, %v228, 0
  %v298 = vsel %vm266, %v229, 0
  %v301 = vsel %vm266, %v230, 0
  %v304 = vsel %vm266, %v231, 0
  %v307 = vsel %vm266, %v232, 0
  %v310 = vsel %vm266, %v233, 0
  %v313 = vsel %vm266, %v234, 0
  %v316 = vsel %vm266, %v235, 0
  %v319 = vsel %vm266, %v236, 0
  %v322 = vsel %vm266, %v237, 0
  %v325 = vsel %vm266, %v238, 0
  %v328 = vsel %vm266, %v239, 0
  %v331 = vsel %vm266, %v240, 0
  %v334 = vsel %vm266, %v241, 0
  %v337 = vsel %vm266, %v242, 0
  %v340 = vsel %vm266, %v243, 0
  %v343 = vsel %vm266, %v244, 0
  %v346 = vsel %vm266, %v245, 0
  %v349 = vsel %vm266, %v246, 0
  %v352 = vsel %vm266, %v247, 0
  %v355 = vsel %vm266, %v248, 0
  %v358 = vsel %vm266, %v249, 0
  %v361 = vsel %vm266, %v250, 0
  %vm363 = vcmask 1041408
  %v365 = vsel %vm363, %v263, 0
  %367 = vmatprep.subr.bf16.mxu0 0
  %368 = vmatpush1.bf16.msra.mxu0 0
  %369 = vmatprep.subr.bf16.mxu0 0
  %370 = vmatpush1.bf16.msra.mxu0 0
  %371 = vmatprep.subr.bf16.mxu0 0
  %372 = vmatpush1.bf16.msra.mxu0 0
  %373 = vmatprep.subr.bf16.mxu0 0
  %374 = vmatpush1.bf16.msra.mxu0 0
  %375 = vmatprep.subr.bf16.mxu0 0
  %376 = vmatpush1.bf16.msra.mxu0 0
  %377 = vmatprep.subr.bf16.mxu0 0
  %378 = vmatpush1.bf16.msra.mxu0 %v365
  %379 = vmatprep.subr.bf16.mxu0 0
  %380 = vmatpush1.bf16.msra.mxu0 %v262
  %381 = vmatprep.subr.bf16.mxu0 0
  %382 = vmatpush1.bf16.msra.mxu0 %v261
  %383 = vmatprep.subr.bf16.mxu0 0
  %384 = vmatpush2.bf16.msra.mxu0 0
  %385 = vmatprep.subr.bf16.mxu0 0
  %386 = vmatpush2.bf16.msra.mxu0 0
  %387 = vmatprep.subr.bf16.mxu0 0
  %388 = vmatpush2.bf16.msra.mxu0 0
  %389 = vmatprep.subr.bf16.mxu0 0
  %390 = vmatpush2.bf16.msra.mxu0 0
  %391 = vmatprep.subr.bf16.mxu0 0
  %392 = vmatpush2.bf16.msra.mxu0 0
  %393 = vmatprep.subr.bf16.mxu0 0
  %394 = vmatpush2.bf16.msra.mxu0 0
  %395 = vmatprep.subr.bf16.mxu0 0
  %396 = vmatpush2.bf16.msra.mxu0 0
  %397 = vmatprep.subr.bf16.mxu0 0
  %398 = vmatpush2.bf16.msra.mxu0 0
  %399 = vmatprep.mubr.bf16.mxu0 0
  %400 = vmatmul.mubr.bf16.gmra.mxu0 %v268
  %v401 = vpop.f32.mrf.mxu0
  %v402 = vadd.f32 %v89, %v401
  %v403 = vpop.f32.mrf.mxu0
  %v404 = vpop.f32.mrf.mxu0
  %v405 = vadd.f32 %v89, %v404
  %v406 = vpop.f32.mrf.mxu0
  %407 = vmatprep.mubr.bf16.mxu0 0
  %408 = vmatmul.mubr.bf16.gmra.mxu0 %v271
  %v409 = vpop.f32.mrf.mxu0
  %v410 = vadd.f32 %v89, %v409
  %v411 = vpop.f32.mrf.mxu0
  %v412 = vpop.f32.mrf.mxu0
  %v413 = vadd.f32 %v89, %v412
  %v414 = vpop.f32.mrf.mxu0
  %415 = vmatprep.mubr.bf16.mxu0 0
  %416 = vmatmul.mubr.bf16.gmra.mxu0 %v274
  %v417 = vpop.f32.mrf.mxu0
  %v418 = vadd.f32 %v89, %v417
  %v419 = vpop.f32.mrf.mxu0
  %v420 = vpop.f32.mrf.mxu0
  %v421 = vadd.f32 %v89, %v420
  %v422 = vpop.f32.mrf.mxu0
  %423 = vmatprep.mubr.bf16.mxu0 0
  %424 = vmatmul.mubr.bf16.gmra.mxu0 %v277
  %v425 = vpop.f32.mrf.mxu0
  %v426 = vadd.f32 %v89, %v425
  %v427 = vpop.f32.mrf.mxu0
  %v428 = vpop.f32.mrf.mxu0
  %v429 = vadd.f32 %v89, %v428
  %v430 = vpop.f32.mrf.mxu0
  %431 = vmatprep.mubr.bf16.mxu0 0
  %432 = vmatmul.mubr.bf16.gmra.mxu0 %v280
  %v433 = vpop.f32.mrf.mxu0
  %v434 = vadd.f32 %v89, %v433
  %v435 = vpop.f32.mrf.mxu0
  %v436 = vpop.f32.mrf.mxu0
  %v437 = vadd.f32 %v89, %v436
  %v438 = vpop.f32.mrf.mxu0
  %439 = vmatprep.mubr.bf16.mxu0 0
  %440 = vmatmul.mubr.bf16.gmra.mxu0 %v283
  %v441 = vpop.f32.mrf.mxu0
  %v442 = vadd.f32 %v89, %v441
  %v443 = vpop.f32.mrf.mxu0
  %v444 = vpop.f32.mrf.mxu0
  %v445 = vadd.f32 %v89, %v444
  %v446 = vpop.f32.mrf.mxu0
  %447 = vmatprep.mubr.bf16.mxu0 0
  %448 = vmatmul.mubr.bf16.gmra.mxu0 %v286
  %v449 = vpop.f32.mrf.mxu0
  %v450 = vadd.f32 %v89, %v449
  %v451 = vpop.f32.mrf.mxu0
  %v452 = vpop.f32.mrf.mxu0
  %v453 = vadd.f32 %v89, %v452
  %v454 = vpop.f32.mrf.mxu0
  %455 = vmatprep.mubr.bf16.mxu0 0
  %456 = vmatmul.mubr.bf16.gmra.mxu0 %v289
  %v457 = vpop.f32.mrf.mxu0
  %v458 = vadd.f32 %v89, %v457
  %v459 = vpop.f32.mrf.mxu0
  %v460 = vpop.f32.mrf.mxu0
  %v461 = vadd.f32 %v89, %v460
  %v462 = vpop.f32.mrf.mxu0
  %463 = vmatprep.mubr.bf16.mxu0 0
  %464 = vmatmul.mubr.bf16.gmra.mxu0 %v292
  %v465 = vpop.f32.mrf.mxu0
  %v466 = vadd.f32 %v89, %v465
  %v467 = vpop.f32.mrf.mxu0
  %v468 = vpop.f32.mrf.mxu0
  %v469 = vadd.f32 %v89, %v468
  %v470 = vpop.f32.mrf.mxu0
  %471 = vmatprep.mubr.bf16.mxu0 0
  %472 = vmatmul.mubr.bf16.gmra.mxu0 %v295
  %v473 = vpop.f32.mrf.mxu0
  %v474 = vadd.f32 %v89, %v473
  %v475 = vpop.f32.mrf.mxu0
  %v476 = vpop.f32.mrf.mxu0
  %v477 = vadd.f32 %v89, %v476
  %v478 = vpop.f32.mrf.mxu0
  %479 = vmatprep.mubr.bf16.mxu0 0
  %480 = vmatmul.mubr.bf16.gmra.mxu0 %v298
  %v481 = vpop.f32.mrf.mxu0
  %v482 = vadd.f32 %v89, %v481
  %v483 = vpop.f32.mrf.mxu0
  %v484 = vpop.f32.mrf.mxu0
  %v485 = vadd.f32 %v89, %v484
  %v486 = vpop.f32.mrf.mxu0
  %487 = vmatprep.mubr.bf16.mxu0 0
  %488 = vmatmul.mubr.bf16.gmra.mxu0 %v301
  %v489 = vpop.f32.mrf.mxu0
  %v490 = vadd.f32 %v89, %v489
  %v491 = vpop.f32.mrf.mxu0
  %v492 = vpop.f32.mrf.mxu0
  %v493 = vadd.f32 %v89, %v492
  %v494 = vpop.f32.mrf.mxu0
  %495 = vmatprep.mubr.bf16.mxu0 0
  %496 = vmatmul.mubr.bf16.gmra.mxu0 %v304
  %v497 = vpop.f32.mrf.mxu0
  %v498 = vadd.f32 %v89, %v497
  %v499 = vpop.f32.mrf.mxu0
  %v500 = vpop.f32.mrf.mxu0
  %v501 = vadd.f32 %v89, %v500
  %v502 = vpop.f32.mrf.mxu0
  %503 = vmatprep.mubr.bf16.mxu0 0
  %504 = vmatmul.mubr.bf16.gmra.mxu0 %v307
  %v505 = vpop.f32.mrf.mxu0
  %v506 = vadd.f32 %v89, %v505
  %v507 = vpop.f32.mrf.mxu0
  %v508 = vpop.f32.mrf.mxu0
  %v509 = vadd.f32 %v89, %v508
  %v510 = vpop.f32.mrf.mxu0
  %511 = vmatprep.mubr.bf16.mxu0 0
  %512 = vmatmul.mubr.bf16.gmra.mxu0 %v310
  %v513 = vpop.f32.mrf.mxu0
  %v514 = vadd.f32 %v89, %v513
  %v515 = vpop.f32.mrf.mxu0
  %v516 = vpop.f32.mrf.mxu0
  %v517 = vadd.f32 %v89, %v516
  %v518 = vpop.f32.mrf.mxu0
  %519 = vmatprep.mubr.bf16.mxu0 0
  %520 = vmatmul.mubr.bf16.gmra.mxu0 %v313
  %v521 = vpop.f32.mrf.mxu0
  %v522 = vadd.f32 %v89, %v521
  %v523 = vpop.f32.mrf.mxu0
  %v524 = vpop.f32.mrf.mxu0
  %v525 = vadd.f32 %v89, %v524
  %v526 = vpop.f32.mrf.mxu0
  %527 = vmatprep.mubr.bf16.mxu0 0
  %528 = vmatmul.mubr.bf16.gmra.mxu0 %v316
  %v529 = vpop.f32.mrf.mxu0
  %v530 = vadd.f32 %v89, %v529
  %v531 = vpop.f32.mrf.mxu0
  %v532 = vpop.f32.mrf.mxu0
  %v533 = vadd.f32 %v89, %v532
  %v534 = vpop.f32.mrf.mxu0
  %535 = vmatprep.mubr.bf16.mxu0 0
  %536 = vmatmul.mubr.bf16.gmra.mxu0 %v319
  %v537 = vpop.f32.mrf.mxu0
  %v538 = vadd.f32 %v89, %v537
  %v539 = vpop.f32.mrf.mxu0
  %v540 = vpop.f32.mrf.mxu0
  %v541 = vadd.f32 %v89, %v540
  %v542 = vpop.f32.mrf.mxu0
  %543 = vmatprep.mubr.bf16.mxu0 0
  %544 = vmatmul.mubr.bf16.gmra.mxu0 %v322
  %v545 = vpop.f32.mrf.mxu0
  %v546 = vadd.f32 %v89, %v545
  %v547 = vpop.f32.mrf.mxu0
  %v548 = vpop.f32.mrf.mxu0
  %v549 = vadd.f32 %v89, %v548
  %v550 = vpop.f32.mrf.mxu0
  %551 = vmatprep.mubr.bf16.mxu0 0
  %552 = vmatmul.mubr.bf16.gmra.mxu0 %v325
  %v553 = vpop.f32.mrf.mxu0
  %v554 = vadd.f32 %v89, %v553
  %v555 = vpop.f32.mrf.mxu0
  %v556 = vpop.f32.mrf.mxu0
  %v557 = vadd.f32 %v89, %v556
  %v558 = vpop.f32.mrf.mxu0
  %559 = vmatprep.mubr.bf16.mxu0 0
  %560 = vmatmul.mubr.bf16.gmra.mxu0 %v328
  %v561 = vpop.f32.mrf.mxu0
  %v562 = vadd.f32 %v89, %v561
  %v563 = vpop.f32.mrf.mxu0
  %v564 = vpop.f32.mrf.mxu0
  %v565 = vadd.f32 %v89, %v564
  %v566 = vpop.f32.mrf.mxu0
  %567 = vmatprep.mubr.bf16.mxu0 0
  %568 = vmatmul.mubr.bf16.gmra.mxu0 %v331
  %v569 = vpop.f32.mrf.mxu0
  %v570 = vadd.f32 %v89, %v569
  %v571 = vpop.f32.mrf.mxu0
  %v572 = vpop.f32.mrf.mxu0
  %v573 = vadd.f32 %v89, %v572
  %v574 = vpop.f32.mrf.mxu0
  %575 = vmatprep.mubr.bf16.mxu0 0
  %576 = vmatmul.mubr.bf16.gmra.mxu0 %v334
  %v577 = vpop.f32.mrf.mxu0
  %v578 = vadd.f32 %v89, %v577
  %v579 = vpop.f32.mrf.mxu0
  %v580 = vpop.f32.mrf.mxu0
  %v581 = vadd.f32 %v89, %v580
  %v582 = vpop.f32.mrf.mxu0
  %583 = vmatprep.mubr.bf16.mxu0 0
  %584 = vmatmul.mubr.bf16.gmra.mxu0 %v337
  %v585 = vpop.f32.mrf.mxu0
  %v586 = vadd.f32 %v89, %v585
  %v587 = vpop.f32.mrf.mxu0
  %v588 = vpop.f32.mrf.mxu0
  %v589 = vadd.f32 %v89, %v588
  %v590 = vpop.f32.mrf.mxu0
  %591 = vmatprep.mubr.bf16.mxu0 0
  %592 = vmatmul.mubr.bf16.gmra.mxu0 %v340
  %v593 = vpop.f32.mrf.mxu0
  %v594 = vadd.f32 %v89, %v593
  %v595 = vpop.f32.mrf.mxu0
  %v596 = vpop.f32.mrf.mxu0
  %v597 = vadd.f32 %v89, %v596
  %v598 = vpop.f32.mrf.mxu0
  %599 = vmatprep.mubr.bf16.mxu0 0
  %600 = vmatmul.mubr.bf16.gmra.mxu0 %v343
  %v601 = vpop.f32.mrf.mxu0
  %v602 = vadd.f32 %v89, %v601
  %v603 = vpop.f32.mrf.mxu0
  %v604 = vpop.f32.mrf.mxu0
  %v605 = vadd.f32 %v89, %v604
  %v606 = vpop.f32.mrf.mxu0
  %607 = vmatprep.mubr.bf16.mxu0 0
  %608 = vmatmul.mubr.bf16.gmra.mxu0 %v346
  %v609 = vpop.f32.mrf.mxu0
  %v610 = vadd.f32 %v89, %v609
  %v611 = vpop.f32.mrf.mxu0
  %v612 = vpop.f32.mrf.mxu0
  %v613 = vadd.f32 %v89, %v612
  %v614 = vpop.f32.mrf.mxu0
  %615 = vmatprep.mubr.bf16.mxu0 0
  %616 = vmatmul.mubr.bf16.gmra.mxu0 %v349
  %v617 = vpop.f32.mrf.mxu0
  %v618 = vadd.f32 %v89, %v617
  %v619 = vpop.f32.mrf.mxu0
  %v620 = vpop.f32.mrf.mxu0
  %v621 = vadd.f32 %v89, %v620
  %v622 = vpop.f32.mrf.mxu0
  %623 = vmatprep.mubr.bf16.mxu0 0
  %624 = vmatmul.mubr.bf16.gmra.mxu0 %v352
  %v625 = vpop.f32.mrf.mxu0
  %v626 = vadd.f32 %v89, %v625
  %v627 = vpop.f32.mrf.mxu0
  %v628 = vpop.f32.mrf.mxu0
  %v629 = vadd.f32 %v89, %v628
  %v630 = vpop.f32.mrf.mxu0
  %631 = vmatprep.mubr.bf16.mxu0 0
  %632 = vmatmul.mubr.bf16.gmra.mxu0 %v355
  %v633 = vpop.f32.mrf.mxu0
  %v634 = vadd.f32 %v89, %v633
  %v635 = vpop.f32.mrf.mxu0
  %v636 = vpop.f32.mrf.mxu0
  %v637 = vadd.f32 %v89, %v636
  %v638 = vpop.f32.mrf.mxu0
  %639 = vmatprep.mubr.bf16.mxu0 0
  %640 = vmatmul.mubr.bf16.gmra.mxu0 %v358
  %v641 = vpop.f32.mrf.mxu0
  %v642 = vadd.f32 %v89, %v641
  %v643 = vpop.f32.mrf.mxu0
  %v644 = vpop.f32.mrf.mxu0
  %v645 = vadd.f32 %v89, %v644
  %v646 = vpop.f32.mrf.mxu0
  %647 = vmatprep.mubr.bf16.mxu0 0
  %648 = vmatmul.mubr.bf16.gmra.mxu0 %v361
  %v649 = vpop.f32.mrf.mxu0
  %v650 = vadd.f32 %v89, %v649
  %v651 = vpop.f32.mrf.mxu0
  %v652 = vpop.f32.mrf.mxu0
  %v653 = vadd.f32 %v89, %v652
  %v654 = vpop.f32.mrf.mxu0
  %655 = vdwg.mxu0
  %v656 = vpack.c.bf16 %v405, %v402
  %v657 = vpack.c.bf16 %v413, %v410
  %v658 = vpack.c.bf16 %v421, %v418
  %v659 = vpack.c.bf16 %v429, %v426
  %v660 = vpack.c.bf16 %v437, %v434
  %v661 = vpack.c.bf16 %v445, %v442
  %v662 = vpack.c.bf16 %v453, %v450
  %v663 = vpack.c.bf16 %v461, %v458
  %v664 = vpack.c.bf16 %v469, %v466
  %v665 = vpack.c.bf16 %v477, %v474
  %v666 = vpack.c.bf16 %v485, %v482
  %v667 = vpack.c.bf16 %v493, %v490
  %v668 = vpack.c.bf16 %v501, %v498
  %v669 = vpack.c.bf16 %v509, %v506
  %v670 = vpack.c.bf16 %v517, %v514
  %v671 = vpack.c.bf16 %v525, %v522
  %v672 = vpack.c.bf16 %v533, %v530
  %v673 = vpack.c.bf16 %v541, %v538
  %v674 = vpack.c.bf16 %v549, %v546
  %v675 = vpack.c.bf16 %v557, %v554
  %v676 = vpack.c.bf16 %v565, %v562
  %v677 = vpack.c.bf16 %v573, %v570
  %v678 = vpack.c.bf16 %v581, %v578
  %v679 = vpack.c.bf16 %v589, %v586
  %v680 = vpack.c.bf16 %v597, %v594
  %v681 = vpack.c.bf16 %v605, %v602
  %v682 = vpack.c.bf16 %v613, %v610
  %v683 = vpack.c.bf16 %v621, %v618
  %v684 = vpack.c.bf16 %v629, %v626
  %v685 = vpack.c.bf16 %v637, %v634
  %v686 = vpack.c.bf16 %v645, %v642
  %v687 = vpack.c.bf16 %v653, %v650
  %v720 = vunpack.c.l.b16 %v656
  %v721 = vunpack.c.h.b16 %v656
  %v722 = vunpack.c.l.b16 %v657
  %v723 = vunpack.c.h.b16 %v657
  %v724 = vunpack.c.l.b16 %v658
  %v725 = vunpack.c.h.b16 %v658
  %v726 = vunpack.c.l.b16 %v659
  %v727 = vunpack.c.h.b16 %v659
  %v728 = vunpack.c.l.b16 %v660
  %v729 = vunpack.c.h.b16 %v660
  %v730 = vunpack.c.l.b16 %v661
  %v731 = vunpack.c.h.b16 %v661
  %v732 = vunpack.c.l.b16 %v662
  %v733 = vunpack.c.h.b16 %v662
  %v734 = vunpack.c.l.b16 %v663
  %v735 = vunpack.c.h.b16 %v663
  %v736 = vunpack.c.l.b16 %v664
  %v737 = vunpack.c.h.b16 %v664
  %v738 = vunpack.c.l.b16 %v665
  %v739 = vunpack.c.h.b16 %v665
  %v740 = vunpack.c.l.b16 %v666
  %v741 = vunpack.c.h.b16 %v666
  %v742 = vunpack.c.l.b16 %v667
  %v743 = vunpack.c.h.b16 %v667
  %v744 = vunpack.c.l.b16 %v668
  %v745 = vunpack.c.h.b16 %v668
  %v746 = vunpack.c.l.b16 %v669
  %v747 = vunpack.c.h.b16 %v669
  %v748 = vunpack.c.l.b16 %v670
  %v749 = vunpack.c.h.b16 %v670
  %v750 = vunpack.c.l.b16 %v671
  %v751 = vunpack.c.h.b16 %v671
  %v752 = vunpack.c.l.b16 %v672
  %v753 = vunpack.c.h.b16 %v672
  %v754 = vunpack.c.l.b16 %v673
  %v755 = vunpack.c.h.b16 %v673
  %v756 = vunpack.c.l.b16 %v674
  %v757 = vunpack.c.h.b16 %v674
  %v758 = vunpack.c.l.b16 %v675
  %v759 = vunpack.c.h.b16 %v675
  %v760 = vunpack.c.l.b16 %v676
  %v761 = vunpack.c.h.b16 %v676
  %v762 = vunpack.c.l.b16 %v677
  %v763 = vunpack.c.h.b16 %v677
  %v764 = vunpack.c.l.b16 %v678
  %v765 = vunpack.c.h.b16 %v678
  %v766 = vunpack.c.l.b16 %v679
  %v767 = vunpack.c.h.b16 %v679
  %v768 = vunpack.c.l.b16 %v680
  %v769 = vunpack.c.h.b16 %v680
  %v770 = vunpack.c.l.b16 %v681
  %v771 = vunpack.c.h.b16 %v681
  %v772 = vunpack.c.l.b16 %v682
  %v773 = vunpack.c.h.b16 %v682
  %v774 = vunpack.c.l.b16 %v683
  %v775 = vunpack.c.h.b16 %v683
  %v776 = vunpack.c.l.b16 %v684
  %v777 = vunpack.c.h.b16 %v684
  %v778 = vunpack.c.l.b16 %v685
  %v779 = vunpack.c.h.b16 %v685
  %v780 = vunpack.c.l.b16 %v686
  %v781 = vunpack.c.h.b16 %v686
  %v782 = vunpack.c.l.b16 %v687
  %v783 = vunpack.c.h.b16 %v687
  %v784 = vpack.c.b16 %v720, %v720
  %v785 = vpack.c.b16 %v721, %v721
  %v786 = vpack.c.b16 %v722, %v722
  %v787 = vpack.c.b16 %v723, %v723
  %v788 = vpack.c.b16 %v724, %v724
  %v789 = vpack.c.b16 %v725, %v725
  %v790 = vpack.c.b16 %v726, %v726
  %v791 = vpack.c.b16 %v727, %v727
  %v792 = vpack.c.b16 %v728, %v728
  %v793 = vpack.c.b16 %v729, %v729
  %v794 = vpack.c.b16 %v730, %v730
  %v795 = vpack.c.b16 %v731, %v731
  %v796 = vpack.c.b16 %v732, %v732
  %v797 = vpack.c.b16 %v733, %v733
  %v798 = vpack.c.b16 %v734, %v734
  %v799 = vpack.c.b16 %v735, %v735
  %v800 = vpack.c.b16 %v736, %v736
  %v801 = vpack.c.b16 %v737, %v737
  %v802 = vpack.c.b16 %v738, %v738
  %v803 = vpack.c.b16 %v739, %v739
  %v804 = vpack.c.b16 %v740, %v740
  %v805 = vpack.c.b16 %v741, %v741
  %v806 = vpack.c.b16 %v742, %v742
  %v807 = vpack.c.b16 %v743, %v743
  %v808 = vpack.c.b16 %v744, %v744
  %v809 = vpack.c.b16 %v745, %v745
  %v810 = vpack.c.b16 %v746, %v746
  %v811 = vpack.c.b16 %v747, %v747
  %v812 = vpack.c.b16 %v748, %v748
  %v813 = vpack.c.b16 %v749, %v749
  %v814 = vpack.c.b16 %v750, %v750
  %v815 = vpack.c.b16 %v751, %v751
  %v816 = vpack.c.b16 %v752, %v752
  %v817 = vpack.c.b16 %v753, %v753
  %v818 = vpack.c.b16 %v754, %v754
  %v819 = vpack.c.b16 %v755, %v755
  %v820 = vpack.c.b16 %v756, %v756
  %v821 = vpack.c.b16 %v757, %v757
  %v822 = vpack.c.b16 %v758, %v758
  %v823 = vpack.c.b16 %v759, %v759
  %v824 = vpack.c.b16 %v760, %v760
  %v825 = vpack.c.b16 %v761, %v761
  %v826 = vpack.c.b16 %v762, %v762
  %v827 = vpack.c.b16 %v763, %v763
  %v828 = vpack.c.b16 %v764, %v764
  %v829 = vpack.c.b16 %v765, %v765
  %v830 = vpack.c.b16 %v766, %v766
  %v831 = vpack.c.b16 %v767, %v767
  %v832 = vpack.c.b16 %v768, %v768
  %v833 = vpack.c.b16 %v769, %v769
  %v834 = vpack.c.b16 %v770, %v770
  %v835 = vpack.c.b16 %v771, %v771
  %v836 = vpack.c.b16 %v772, %v772
  %v837 = vpack.c.b16 %v773, %v773
  %v838 = vpack.c.b16 %v774, %v774
  %v839 = vpack.c.b16 %v775, %v775
  %v840 = vpack.c.b16 %v776, %v776
  %v841 = vpack.c.b16 %v777, %v777
  %v842 = vpack.c.b16 %v778, %v778
  %v843 = vpack.c.b16 %v779, %v779
  %v844 = vpack.c.b16 %v780, %v780
  %v845 = vpack.c.b16 %v781, %v781
  %v846 = vpack.c.b16 %v782, %v782
  %v847 = vpack.c.b16 %v783, %v783
  %vm912 = vcmask 19456
  %913 = vst.msk [vmem:[%s3] sm:$0xf] %vm912, %v784
  %914 = vst.msk [vmem:[%s3 + $0x4] sm:$0xf] %vm912, %v785
  %915 = vst.msk [vmem:[%s3 + $0x8] sm:$0xf] %vm912, %v786
  %916 = vst.msk [vmem:[%s3 + $0xc] sm:$0xf] %vm912, %v787
  %917 = vst.msk [vmem:[%s3 + $0x10] sm:$0xf] %vm912, %v788
  %918 = vst.msk [vmem:[%s3 + $0x14] sm:$0xf] %vm912, %v789
  %919 = vst.msk [vmem:[%s3 + $0x18] sm:$0xf] %vm912, %v790
  %920 = vst.msk [vmem:[%s3 + $0x1c] sm:$0xf] %vm912, %v791
  %921 = vst.msk [vmem:[%s3 + $0x20] sm:$0xf] %vm912, %v792
  %922 = vst.msk [vmem:[%s3 + $0x24] sm:$0xf] %vm912, %v793
  %923 = vst.msk [vmem:[%s3 + $0x28] sm:$0xf] %vm912, %v794
  %924 = vst.msk [vmem:[%s3 + $0x2c] sm:$0xf] %vm912, %v795
  %925 = vst.msk [vmem:[%s3 + $0x30] sm:$0xf] %vm912, %v796
  %926 = vst.msk [vmem:[%s3 + $0x34] sm:$0xf] %vm912, %v797
  %927 = vst.msk [vmem:[%s3 + $0x38] sm:$0xf] %vm912, %v798
  %928 = vst.msk [vmem:[%s3 + $0x3c] sm:$0xf] %vm912, %v799
  %929 = vst.msk [vmem:[%s3 + $0x40] sm:$0xf] %vm912, %v800
  %930 = vst.msk [vmem:[%s3 + $0x44] sm:$0xf] %vm912, %v801
  %931 = vst.msk [vmem:[%s3 + $0x48] sm:$0xf] %vm912, %v802
  %932 = vst.msk [vmem:[%s3 + $0x4c] sm:$0xf] %vm912, %v803
  %933 = vst.msk [vmem:[%s3 + $0x50] sm:$0xf] %vm912, %v804
  %934 = vst.msk [vmem:[%s3 + $0x54] sm:$0xf] %vm912, %v805
  %935 = vst.msk [vmem:[%s3 + $0x58] sm:$0xf] %vm912, %v806
  %936 = vst.msk [vmem:[%s3 + $0x5c] sm:$0xf] %vm912, %v807
  %937 = vst.msk [vmem:[%s3 + $0x60] sm:$0xf] %vm912, %v808
  %938 = vst.msk [vmem:[%s3 + $0x64] sm:$0xf] %vm912, %v809
  %939 = vst.msk [vmem:[%s3 + $0x68] sm:$0xf] %vm912, %v810
  %940 = vst.msk [vmem:[%s3 + $0x6c] sm:$0xf] %vm912, %v811
  %941 = vst.msk [vmem:[%s3 + $0x70] sm:$0xf] %vm912, %v812
  %942 = vst.msk [vmem:[%s3 + $0x74] sm:$0xf] %vm912, %v813
  %943 = vst.msk [vmem:[%s3 + $0x78] sm:$0xf] %vm912, %v814
  %944 = vst.msk [vmem:[%s3 + $0x7c] sm:$0xf] %vm912, %v815
  %945 = vst.msk [vmem:[%s3 + $0x80] sm:$0xf] %vm912, %v816
  %946 = vst.msk [vmem:[%s3 + $0x84] sm:$0xf] %vm912, %v817
  %947 = vst.msk [vmem:[%s3 + $0x88] sm:$0xf] %vm912, %v818
  %948 = vst.msk [vmem:[%s3 + $0x8c] sm:$0xf] %vm912, %v819
  %949 = vst.msk [vmem:[%s3 + $0x90] sm:$0xf] %vm912, %v820
  %950 = vst.msk [vmem:[%s3 + $0x94] sm:$0xf] %vm912, %v821
  %951 = vst.msk [vmem:[%s3 + $0x98] sm:$0xf] %vm912, %v822
  %952 = vst.msk [vmem:[%s3 + $0x9c] sm:$0xf] %vm912, %v823
  %953 = vst.msk [vmem:[%s3 + $0xa0] sm:$0xf] %vm912, %v824
  %954 = vst.msk [vmem:[%s3 + $0xa4] sm:$0xf] %vm912, %v825
  %955 = vst.msk [vmem:[%s3 + $0xa8] sm:$0xf] %vm912, %v826
  %956 = vst.msk [vmem:[%s3 + $0xac] sm:$0xf] %vm912, %v827
  %957 = vst.msk [vmem:[%s3 + $0xb0] sm:$0xf] %vm912, %v828
  %958 = vst.msk [vmem:[%s3 + $0xb4] sm:$0xf] %vm912, %v829
  %959 = vst.msk [vmem:[%s3 + $0xb8] sm:$0xf] %vm912, %v830
  %960 = vst.msk [vmem:[%s3 + $0xbc] sm:$0xf] %vm912, %v831
  %961 = vst.msk [vmem:[%s3 + $0xc0] sm:$0xf] %vm912, %v832
  %962 = vst.msk [vmem:[%s3 + $0xc4] sm:$0xf] %vm912, %v833
  %963 = vst.msk [vmem:[%s3 + $0xc8] sm:$0xf] %vm912, %v834
  %964 = vst.msk [vmem:[%s3 + $0xcc] sm:$0xf] %vm912, %v835
  %965 = vst.msk [vmem:[%s3 + $0xd0] sm:$0xf] %vm912, %v836
  %966 = vst.msk [vmem:[%s3 + $0xd4] sm:$0xf] %vm912, %v837
  %967 = vst.msk [vmem:[%s3 + $0xd8] sm:$0xf] %vm912, %v838
  %968 = vst.msk [vmem:[%s3 + $0xdc] sm:$0xf] %vm912, %v839
  %969 = vst.msk [vmem:[%s3 + $0xe0] sm:$0xf] %vm912, %v840
  %970 = vst.msk [vmem:[%s3 + $0xe4] sm:$0xf] %vm912, %v841
  %971 = vst.msk [vmem:[%s3 + $0xe8] sm:$0xf] %vm912, %v842
  %972 = vst.msk [vmem:[%s3 + $0xec] sm:$0xf] %vm912, %v843
  %973 = vst.msk [vmem:[%s3 + $0xf0] sm:$0xf] %vm912, %v844
  %974 = vst.msk [vmem:[%s3 + $0xf4] sm:$0xf] %vm912, %v845
  %975 = vst.msk [vmem:[%s3 + $0xf8] sm:$0xf] %vm912, %v846
  %976 = vst.msk [vmem:[%s3 + $0xfc] sm:$0xf] %vm912, %v847
  // Predicated region
  $region14: #{lpips_mse_loss.4} parent=0 // pred_check
    _
  $region15: #{lpips_mse_loss.4} parent=0 // pred_check_branch
    %978 = sbr.rel (0) target = $region17
  $region16: #{lpips_mse_loss.4} parent=0 // pred_region
    _
  $region17: #{lpips_mse_loss.4} parent=0 // pred_fallthru
    _
  // Predicated region
  $region18: #{lpips_mse_loss.4} parent=0 // pred_check
    _
  $region19: #{lpips_mse_loss.4} parent=0 // pred_check_branch
    %980 = sbr.rel (0) target = $region21
  $region20: #{lpips_mse_loss.4} parent=0 // pred_region
    _
  $region21: #{lpips_mse_loss.4} parent=0 // pred_fallthru
    _

// kernel: lpips_mse_loss.6
$region0: #{lpips_mse_loss.6}
  #allocation0 [shape = 'u32[]', space=smem, size = 0x4, offset = 0x4, fixed_abs, tag = 'smem constant byte address 0x4 - core index']
  #allocation1 [shape = 'u32[144,128]{1,0:T(1,128)}', space=vmem, size = 0x12000, scoped, tag = 'internal scratch']
  %s0 = inlined_call_operand.vmem [shape: bf16[512,27], index: 0, kind: input, shape index: {}]
  %s1 = inlined_call_operand.vmem [shape: bf16[512,27], index: 1, kind: input, shape index: {}]
  %s2 = inlined_call_operand.vmem [shape: bf16[27,128], index: 2, kind: input, shape index: {}]
  %s3 = inlined_call_operand.vmem [shape: f32[1,128], index: 3, kind: input, shape index: {}]
  %s4 = inlined_call_operand.vmem [shape: f32[1,128], index: 4, kind: input, shape index: {}]
  %s5 = inlined_call_operand.vmem [shape: bf16[512,8], index: 5, kind: output, shape index: {0}]
  %s6 = inlined_call_operand.vmem [shape: bf16[512,8], index: 6, kind: output, shape index: {1}]
  %s7 = inlined_call_operand.vmem [shape: f32[1,1,128], index: 7, kind: output, shape index: {2}]
  %8 = xla_tuple %s5, %s6, %s7
  %s9 = sld [smem:[#allocation0]]
  $region46: #{lpips_mse_loss.6} parent=0
    _
  %s11 = ssub.s32 1, %s9
  %s12 = scalar_select 0, %s11, %s9
  // Predicated region
  $region2: #{lpips_mse_loss.6} parent=0 // pred_check
    _
  $region3: #{lpips_mse_loss.6} parent=0 // pred_check_branch
    %14 = sbr.rel (0) target = $region5
  $region4: #{lpips_mse_loss.6} parent=0 // pred_region
    _
  $region5: #{lpips_mse_loss.6} parent=0 // pred_fallthru
    _
  // Predicated region
  $region6: #{lpips_mse_loss.6} parent=0 // pred_check
    _
  $region7: #{lpips_mse_loss.6} parent=0 // pred_check_branch
    %16 = sbr.rel (0) target = $region9
  $region8: #{lpips_mse_loss.6} parent=0 // pred_region
    _
  $region9: #{lpips_mse_loss.6} parent=0 // pred_fallthru
    _
  // Predicated region
  $region10: #{lpips_mse_loss.6} parent=0 // pred_check
    _
  $region11: #{lpips_mse_loss.6} parent=0 // pred_check_branch
    %18 = sbr.rel (0) target = $region13
  $region12: #{lpips_mse_loss.6} parent=0 // pred_region
    _
  $region13: #{lpips_mse_loss.6} parent=0 // pred_fallthru
    _
  // Predicated region
  $region14: #{lpips_mse_loss.6} parent=0 // pred_check
    _
  $region15: #{lpips_mse_loss.6} parent=0 // pred_check_branch
    %20 = sbr.rel (0) target = $region17
  $region16: #{lpips_mse_loss.6} parent=0 // pred_region
    _
  $region17: #{lpips_mse_loss.6} parent=0 // pred_fallthru
    _
  // Predicated region
  $region18: #{lpips_mse_loss.6} parent=0 // pred_check
    _
  $region19: #{lpips_mse_loss.6} parent=0 // pred_check_branch
    %22 = sbr.rel (0) target = $region21
  $region20: #{lpips_mse_loss.6} parent=0 // pred_region
    _
  $region21: #{lpips_mse_loss.6} parent=0 // pred_fallthru
    _
  %v24 = vld [vmem:[%s0] sm:$0xf]
  %v25 = vld [vmem:[%s0 + $0x4] sm:$0xf]
  %v26 = vld [vmem:[%s0 + $0x8] sm:$0xf]
  %v27 = vld [vmem:[%s0 + $0xc] sm:$0xf]
  %v28 = vld [vmem:[%s0 + $0x10] sm:$0xf]
  %v29 = vld [vmem:[%s0 + $0x14] sm:$0xf]
  %v30 = vld [vmem:[%s0 + $0x18] sm:$0xf]
  %v31 = vld [vmem:[%s0 + $0x1c] sm:$0xf]
  %v32 = vld [vmem:[%s0 + $0x20] sm:$0xf]
  %v33 = vld [vmem:[%s0 + $0x24] sm:$0xf]
  %v34 = vld [vmem:[%s0 + $0x28] sm:$0xf]
  %v35 = vld [vmem:[%s0 + $0x2c] sm:$0xf]
  %v36 = vld [vmem:[%s0 + $0x30] sm:$0xf]
  %v37 = vld [vmem:[%s0 + $0x34] sm:$0xf]
  %v38 = vld [vmem:[%s0 + $0x38] sm:$0xf]
  %v39 = vld [vmem:[%s0 + $0x3c] sm:$0xf]
  %v40 = vld [vmem:[%s0 + $0x40] sm:$0xf]
  %v41 = vld [vmem:[%s0 + $0x44] sm:$0xf]
  %v42 = vld [vmem:[%s0 + $0x48] sm:$0xf]
  %v43 = vld [vmem:[%s0 + $0x4c] sm:$0xf]
  %v44 = vld [vmem:[%s0 + $0x50] sm:$0xf]
  %v45 = vld [vmem:[%s0 + $0x54] sm:$0xf]
  %v46 = vld [vmem:[%s0 + $0x58] sm:$0xf]
  %v47 = vld [vmem:[%s0 + $0x5c] sm:$0xf]
  %v48 = vld [vmem:[%s0 + $0x60] sm:$0xf]
  %v49 = vld [vmem:[%s0 + $0x64] sm:$0xf]
  %v50 = vld [vmem:[%s0 + $0x68] sm:$0xf]
  %v51 = vld [vmem:[%s0 + $0x6c] sm:$0xf]
  %v52 = vld [vmem:[%s0 + $0x70] sm:$0xf]
  %v53 = vld [vmem:[%s0 + $0x74] sm:$0xf]
  %v54 = vld [vmem:[%s0 + $0x78] sm:$0xf]
  %v55 = vld [vmem:[%s0 + $0x7c] sm:$0xf]
  %v56 = vld [vmem:[%s0 + $0x80] sm:$0xf]
  %v57 = vld [vmem:[%s0 + $0x84] sm:$0xf]
  %v58 = vld [vmem:[%s0 + $0x88] sm:$0xf]
  %v59 = vld [vmem:[%s0 + $0x8c] sm:$0xf]
  %v60 = vld [vmem:[%s0 + $0x90] sm:$0xf]
  %v61 = vld [vmem:[%s0 + $0x94] sm:$0xf]
  %v62 = vld [vmem:[%s0 + $0x98] sm:$0xf]
  %v63 = vld [vmem:[%s0 + $0x9c] sm:$0xf]
  %v64 = vld [vmem:[%s0 + $0xa0] sm:$0xf]
  %v65 = vld [vmem:[%s0 + $0xa4] sm:$0xf]
  %v66 = vld [vmem:[%s0 + $0xa8] sm:$0xf]
  %v67 = vld [vmem:[%s0 + $0xac] sm:$0xf]
  %v68 = vld [vmem:[%s0 + $0xb0] sm:$0xf]
  %v69 = vld [vmem:[%s0 + $0xb4] sm:$0xf]
  %v70 = vld [vmem:[%s0 + $0xb8] sm:$0xf]
  %v71 = vld [vmem:[%s0 + $0xbc] sm:$0xf]
  %v72 = vld [vmem:[%s0 + $0xc0] sm:$0xf]
  %v73 = vld [vmem:[%s0 + $0xc4] sm:$0xf]
  %v74 = vld [vmem:[%s0 + $0xc8] sm:$0xf]
  %v75 = vld [vmem:[%s0 + $0xcc] sm:$0xf]
  %v76 = vld [vmem:[%s0 + $0xd0] sm:$0xf]
  %v77 = vld [vmem:[%s0 + $0xd4] sm:$0xf]
  %v78 = vld [vmem:[%s0 + $0xd8] sm:$0xf]
  %v79 = vld [vmem:[%s0 + $0xdc] sm:$0xf]
  %v80 = vld [vmem:[%s0 + $0xe0] sm:$0xf]
  %v81 = vld [vmem:[%s0 + $0xe4] sm:$0xf]
  %v82 = vld [vmem:[%s0 + $0xe8] sm:$0xf]
  %v83 = vld [vmem:[%s0 + $0xec] sm:$0xf]
  %v84 = vld [vmem:[%s0 + $0xf0] sm:$0xf]
  %v85 = vld [vmem:[%s0 + $0xf4] sm:$0xf]
  %v86 = vld [vmem:[%s0 + $0xf8] sm:$0xf]
  %v87 = vld [vmem:[%s0 + $0xfc] sm:$0xf]
  %v88 = vld [vmem:[%s2] sm:$0xf]
  %v89 = vld [vmem:[%s2 + $0x4] sm:$0xf]
  %v90 = vld [vmem:[%s2 + $0x8] sm:$0xf]
  %v91 = vld [vmem:[%s2 + $0xc] sm:$0x3]
  %v92 = vld [vmem:[%s1] sm:$0xf]
  %v93 = vld [vmem:[%s1 + $0x4] sm:$0xf]
  %v94 = vld [vmem:[%s1 + $0x8] sm:$0xf]
  %v95 = vld [vmem:[%s1 + $0xc] sm:$0xf]
  %v96 = vld [vmem:[%s1 + $0x10] sm:$0xf]
  %v97 = vld [vmem:[%s1 + $0x14] sm:$0xf]
  %v98 = vld [vmem:[%s1 + $0x18] sm:$0xf]
  %v99 = vld [vmem:[%s1 + $0x1c] sm:$0xf]
  %v100 = vld [vmem:[%s1 + $0x20] sm:$0xf]
  %v101 = vld [vmem:[%s1 + $0x24] sm:$0xf]
  %v102 = vld [vmem:[%s1 + $0x28] sm:$0xf]
  %v103 = vld [vmem:[%s1 + $0x2c] sm:$0xf]
  %v104 = vld [vmem:[%s1 + $0x30] sm:$0xf]
  %v105 = vld [vmem:[%s1 + $0x34] sm:$0xf]
  %v106 = vld [vmem:[%s1 + $0x38] sm:$0xf]
  %v107 = vld [vmem:[%s1 + $0x3c] sm:$0xf]
  %v108 = vld [vmem:[%s1 + $0x40] sm:$0xf]
  %v109 = vld [vmem:[%s1 + $0x44] sm:$0xf]
  %v110 = vld [vmem:[%s1 + $0x48] sm:$0xf]
  %v111 = vld [vmem:[%s1 + $0x4c] sm:$0xf]
  %v112 = vld [vmem:[%s1 + $0x50] sm:$0xf]
  %v113 = vld [vmem:[%s1 + $0x54] sm:$0xf]
  %v114 = vld [vmem:[%s1 + $0x58] sm:$0xf]
  %v115 = vld [vmem:[%s1 + $0x5c] sm:$0xf]
  %v116 = vld [vmem:[%s1 + $0x60] sm:$0xf]
  %v117 = vld [vmem:[%s1 + $0x64] sm:$0xf]
  %v118 = vld [vmem:[%s1 + $0x68] sm:$0xf]
  %v119 = vld [vmem:[%s1 + $0x6c] sm:$0xf]
  %v120 = vld [vmem:[%s1 + $0x70] sm:$0xf]
  %v121 = vld [vmem:[%s1 + $0x74] sm:$0xf]
  %v122 = vld [vmem:[%s1 + $0x78] sm:$0xf]
  %v123 = vld [vmem:[%s1 + $0x7c] sm:$0xf]
  %v124 = vld [vmem:[%s1 + $0x80] sm:$0xf]
  %v125 = vld [vmem:[%s1 + $0x84] sm:$0xf]
  %v126 = vld [vmem:[%s1 + $0x88] sm:$0xf]
  %v127 = vld [vmem:[%s1 + $0x8c] sm:$0xf]
  %v128 = vld [vmem:[%s1 + $0x90] sm:$0xf]
  %v129 = vld [vmem:[%s1 + $0x94] sm:$0xf]
  %v130 = vld [vmem:[%s1 + $0x98] sm:$0xf]
  %v131 = vld [vmem:[%s1 + $0x9c] sm:$0xf]
  %v132 = vld [vmem:[%s1 + $0xa0] sm:$0xf]
  %v133 = vld [vmem:[%s1 + $0xa4] sm:$0xf]
  %v134 = vld [vmem:[%s1 + $0xa8] sm:$0xf]
  %v135 = vld [vmem:[%s1 + $0xac] sm:$0xf]
  %v136 = vld [vmem:[%s1 + $0xb0] sm:$0xf]
  %v137 = vld [vmem:[%s1 + $0xb4] sm:$0xf]
  %v138 = vld [vmem:[%s1 + $0xb8] sm:$0xf]
  %v139 = vld [vmem:[%s1 + $0xbc] sm:$0xf]
  %v140 = vld [vmem:[%s1 + $0xc0] sm:$0xf]
  %v141 = vld [vmem:[%s1 + $0xc4] sm:$0xf]
  %v142 = vld [vmem:[%s1 + $0xc8] sm:$0xf]
  %v143 = vld [vmem:[%s1 + $0xcc] sm:$0xf]
  %v144 = vld [vmem:[%s1 + $0xd0] sm:$0xf]
  %v145 = vld [vmem:[%s1 + $0xd4] sm:$0xf]
  %v146 = vld [vmem:[%s1 + $0xd8] sm:$0xf]
  %v147 = vld [vmem:[%s1 + $0xdc] sm:$0xf]
  %v148 = vld [vmem:[%s1 + $0xe0] sm:$0xf]
  %v149 = vld [vmem:[%s1 + $0xe4] sm:$0xf]
  %v150 = vld [vmem:[%s1 + $0xe8] sm:$0xf]
  %v151 = vld [vmem:[%s1 + $0xec] sm:$0xf]
  %v152 = vld [vmem:[%s1 + $0xf0] sm:$0xf]
  %v153 = vld [vmem:[%s1 + $0xf4] sm:$0xf]
  %v154 = vld [vmem:[%s1 + $0xf8] sm:$0xf]
  %v155 = vld [vmem:[%s1 + $0xfc] sm:$0xf]
  %v156 = vld [vmem:[%s3] sm:$0x1]
  %v158 = vlaneseq
  %v159 = vshrl.u32 %v158, 7
  %v160 = vsub.s32 0, %v159
  %v161 = vrot.slane %v156, %v160
  %v227 = vunpack.c.l.b16 %v24
  %v228 = vunpack.c.l.b16 %v25
  %v229 = vunpack.c.l.b16 %v26
  %v230 = vunpack.c.l.b16 %v27
  %v231 = vunpack.c.l.b16 %v28
  %v232 = vunpack.c.l.b16 %v29
  %v233 = vunpack.c.l.b16 %v30
  %v234 = vunpack.c.l.b16 %v31
  %v235 = vunpack.c.l.b16 %v32
  %v236 = vunpack.c.l.b16 %v33
  %v237 = vunpack.c.l.b16 %v34
  %v238 = vunpack.c.l.b16 %v35
  %v239 = vunpack.c.l.b16 %v36
  %v240 = vunpack.c.l.b16 %v37
  %v241 = vunpack.c.l.b16 %v38
  %v242 = vunpack.c.l.b16 %v39
  %v243 = vunpack.c.l.b16 %v40
  %v244 = vunpack.c.l.b16 %v41
  %v245 = vunpack.c.l.b16 %v42
  %v246 = vunpack.c.l.b16 %v43
  %v247 = vunpack.c.l.b16 %v44
  %v248 = vunpack.c.l.b16 %v45
  %v249 = vunpack.c.l.b16 %v46
  %v250 = vunpack.c.l.b16 %v47
  %v251 = vunpack.c.l.b16 %v48
  %v252 = vunpack.c.l.b16 %v49
  %v253 = vunpack.c.l.b16 %v50
  %v254 = vunpack.c.l.b16 %v51
  %v255 = vunpack.c.l.b16 %v52
  %v256 = vunpack.c.l.b16 %v53
  %v257 = vunpack.c.l.b16 %v54
  %v258 = vunpack.c.l.b16 %v55
  %v259 = vunpack.c.l.b16 %v56
  %v260 = vunpack.c.l.b16 %v57
  %v261 = vunpack.c.l.b16 %v58
  %v262 = vunpack.c.l.b16 %v59
  %v263 = vunpack.c.l.b16 %v60
  %v264 = vunpack.c.l.b16 %v61
  %v265 = vunpack.c.l.b16 %v62
  %v266 = vunpack.c.l.b16 %v63
  %v267 = vunpack.c.l.b16 %v64
  %v268 = vunpack.c.l.b16 %v65
  %v269 = vunpack.c.l.b16 %v66
  %v270 = vunpack.c.l.b16 %v67
  %v271 = vunpack.c.l.b16 %v68
  %v272 = vunpack.c.l.b16 %v69
  %v273 = vunpack.c.l.b16 %v70
  %v274 = vunpack.c.l.b16 %v71
  %v275 = vunpack.c.l.b16 %v72
  %v276 = vunpack.c.l.b16 %v73
  %v277 = vunpack.c.l.b16 %v74
  %v278 = vunpack.c.l.b16 %v75
  %v279 = vunpack.c.l.b16 %v76
  %v280 = vunpack.c.l.b16 %v77
  %v281 = vunpack.c.l.b16 %v78
  %v282 = vunpack.c.l.b16 %v79
  %v283 = vunpack.c.l.b16 %v80
  %v284 = vunpack.c.l.b16 %v81
  %v285 = vunpack.c.l.b16 %v82
  %v286 = vunpack.c.l.b16 %v83
  %v287 = vunpack.c.l.b16 %v84
  %v288 = vunpack.c.l.b16 %v85
  %v289 = vunpack.c.l.b16 %v86
  %v290 = vunpack.c.l.b16 %v87
  %v291 = vpack.c.b16 %v228, %v227
  %v292 = vpack.c.b16 %v230, %v229
  %v293 = vpack.c.b16 %v232, %v231
  %v294 = vpack.c.b16 %v234, %v233
  %v295 = vpack.c.b16 %v236, %v235
  %v296 = vpack.c.b16 %v238, %v237
  %v297 = vpack.c.b16 %v240, %v239
  %v298 = vpack.c.b16 %v242, %v241
  %v299 = vpack.c.b16 %v244, %v243
  %v300 = vpack.c.b16 %v246, %v245
  %v301 = vpack.c.b16 %v248, %v247
  %v302 = vpack.c.b16 %v250, %v249
  %v303 = vpack.c.b16 %v252, %v251
  %v304 = vpack.c.b16 %v254, %v253
  %v305 = vpack.c.b16 %v256, %v255
  %v306 = vpack.c.b16 %v258, %v257
  %v307 = vpack.c.b16 %v260, %v259
  %v308 = vpack.c.b16 %v262, %v261
  %v309 = vpack.c.b16 %v264, %v263
  %v310 = vpack.c.b16 %v266, %v265
  %v311 = vpack.c.b16 %v268, %v267
  %v312 = vpack.c.b16 %v270, %v269
  %v313 = vpack.c.b16 %v272, %v271
  %v314 = vpack.c.b16 %v274, %v273
  %v315 = vpack.c.b16 %v276, %v275
  %v316 = vpack.c.b16 %v278, %v277
  %v317 = vpack.c.b16 %v280, %v279
  %v318 = vpack.c.b16 %v282, %v281
  %v319 = vpack.c.b16 %v284, %v283
  %v320 = vpack.c.b16 %v286, %v285
  %v321 = vpack.c.b16 %v288, %v287
  %v322 = vpack.c.b16 %v290, %v289
  %v327 = vunpack.c.l.b16 %v88
  %v328 = vunpack.c.l.b16 %v89
  %v329 = vunpack.c.l.b16 %v90
  %v330 = vunpack.c.l.b16 %v91
  %v331 = vpack.c.b16 %v328, %v327
  %v332 = vpack.c.b16 %v330, %v329
  %vm334 = vcmask 220160
  %v336 = vsel %vm334, %v291, 0
  %v339 = vsel %vm334, %v292, 0
  %v342 = vsel %vm334, %v293, 0
  %v345 = vsel %vm334, %v294, 0
  %v348 = vsel %vm334, %v295, 0
  %v351 = vsel %vm334, %v296, 0
  %v354 = vsel %vm334, %v297, 0
  %v357 = vsel %vm334, %v298, 0
  %v360 = vsel %vm334, %v299, 0
  %v363 = vsel %vm334, %v300, 0
  %v366 = vsel %vm334, %v301, 0
  %v369 = vsel %vm334, %v302, 0
  %v372 = vsel %vm334, %v303, 0
  %v375 = vsel %vm334, %v304, 0
  %v378 = vsel %vm334, %v305, 0
  %v381 = vsel %vm334, %v306, 0
  %v384 = vsel %vm334, %v307, 0
  %v387 = vsel %vm334, %v308, 0
  %v390 = vsel %vm334, %v309, 0
  %v393 = vsel %vm334, %v310, 0
  %v396 = vsel %vm334, %v311, 0
  %v399 = vsel %vm334, %v312, 0
  %v402 = vsel %vm334, %v313, 0
  %v405 = vsel %vm334, %v314, 0
  %v408 = vsel %vm334, %v315, 0
  %v411 = vsel %vm334, %v316, 0
  %v414 = vsel %vm334, %v317, 0
  %v417 = vsel %vm334, %v318, 0
  %v420 = vsel %vm334, %v319, 0
  %v423 = vsel %vm334, %v320, 0
  %v426 = vsel %vm334, %v321, 0
  %v429 = vsel %vm334, %v322, 0
  %vm431 = vcmask 1044480
  %vm432 = vcmask 1045504
  %v433 = vsel %vm431, 4294967295, 65535
  %v434 = vsel %vm432, %v433, 0
  %v436 = vand.u32 %v332, %v434
  %438 = vmatprep.subr.bf16.mxu0 0
  %439 = vmatpush1.bf16.msra.mxu0 0
  %440 = vmatprep.subr.bf16.mxu0 0
  %441 = vmatpush1.bf16.msra.mxu0 0
  %442 = vmatprep.subr.bf16.mxu0 0
  %443 = vmatpush1.bf16.msra.mxu0 0
  %444 = vmatprep.subr.bf16.mxu0 0
  %445 = vmatpush1.bf16.msra.mxu0 0
  %446 = vmatprep.subr.bf16.mxu0 0
  %447 = vmatpush1.bf16.msra.mxu0 0
  %448 = vmatprep.subr.bf16.mxu0 0
  %449 = vmatpush1.bf16.msra.mxu0 0
  %450 = vmatprep.subr.bf16.mxu0 0
  %451 = vmatpush1.bf16.msra.mxu0 %v436
  %452 = vmatprep.subr.bf16.mxu0 0
  %453 = vmatpush1.bf16.msra.mxu0 %v331
  %454 = vmatprep.subr.bf16.mxu0 0
  %455 = vmatpush2.bf16.msra.mxu0 0
  %456 = vmatprep.subr.bf16.mxu0 0
  %457 = vmatpush2.bf16.msra.mxu0 0
  %458 = vmatprep.subr.bf16.mxu0 0
  %459 = vmatpush2.bf16.msra.mxu0 0
  %460 = vmatprep.subr.bf16.mxu0 0
  %461 = vmatpush2.bf16.msra.mxu0 0
  %462 = vmatprep.subr.bf16.mxu0 0
  %463 = vmatpush2.bf16.msra.mxu0 0
  %464 = vmatprep.subr.bf16.mxu0 0
  %465 = vmatpush2.bf16.msra.mxu0 0
  %466 = vmatprep.subr.bf16.mxu0 0
  %467 = vmatpush2.bf16.msra.mxu0 0
  %468 = vmatprep.subr.bf16.mxu0 0
  %469 = vmatpush2.bf16.msra.mxu0 0
  %470 = vmatprep.mubr.bf16.mxu0 0
  %471 = vmatmul.mubr.bf16.gmra.mxu0 %v336
  %v472 = vpop.f32.mrf.mxu0
  %v473 = vadd.f32 %v161, %v472
  %v474 = vpop.f32.mrf.mxu0
  %v475 = vpop.f32.mrf.mxu0
  %v476 = vadd.f32 %v161, %v475
  %v477 = vpop.f32.mrf.mxu0
  %478 = vmatprep.mubr.bf16.mxu0 0
  %479 = vmatmul.mubr.bf16.gmra.mxu0 %v339
  %v480 = vpop.f32.mrf.mxu0
  %v481 = vadd.f32 %v161, %v480
  %v482 = vpop.f32.mrf.mxu0
  %v483 = vpop.f32.mrf.mxu0
  %v484 = vadd.f32 %v161, %v483
  %v485 = vpop.f32.mrf.mxu0
  %486 = vmatprep.mubr.bf16.mxu0 0
  %487 = vmatmul.mubr.bf16.gmra.mxu0 %v342
  %v488 = vpop.f32.mrf.mxu0
  %v489 = vadd.f32 %v161, %v488
  %v490 = vpop.f32.mrf.mxu0
  %v491 = vpop.f32.mrf.mxu0
  %v492 = vadd.f32 %v161, %v491
  %v493 = vpop.f32.mrf.mxu0
  %494 = vmatprep.mubr.bf16.mxu0 0
  %495 = vmatmul.mubr.bf16.gmra.mxu0 %v345
  %v496 = vpop.f32.mrf.mxu0
  %v497 = vadd.f32 %v161, %v496
  %v498 = vpop.f32.mrf.mxu0
  %v499 = vpop.f32.mrf.mxu0
  %v500 = vadd.f32 %v161, %v499
  %v501 = vpop.f32.mrf.mxu0
  %502 = vmatprep.mubr.bf16.mxu0 0
  %503 = vmatmul.mubr.bf16.gmra.mxu0 %v348
  %v504 = vpop.f32.mrf.mxu0
  %v505 = vadd.f32 %v161, %v504
  %v506 = vpop.f32.mrf.mxu0
  %v507 = vpop.f32.mrf.mxu0
  %v508 = vadd.f32 %v161, %v507
  %v509 = vpop.f32.mrf.mxu0
  %510 = vmatprep.mubr.bf16.mxu0 0
  %511 = vmatmul.mubr.bf16.gmra.mxu0 %v351
  %v512 = vpop.f32.mrf.mxu0
  %v513 = vadd.f32 %v161, %v512
  %v514 = vpop.f32.mrf.mxu0
  %v515 = vpop.f32.mrf.mxu0
  %v516 = vadd.f32 %v161, %v515
  %v517 = vpop.f32.mrf.mxu0
  %518 = vmatprep.mubr.bf16.mxu0 0
  %519 = vmatmul.mubr.bf16.gmra.mxu0 %v354
  %v520 = vpop.f32.mrf.mxu0
  %v521 = vadd.f32 %v161, %v520
  %v522 = vpop.f32.mrf.mxu0
  %v523 = vpop.f32.mrf.mxu0
  %v524 = vadd.f32 %v161, %v523
  %v525 = vpop.f32.mrf.mxu0
  %526 = vmatprep.mubr.bf16.mxu0 0
  %527 = vmatmul.mubr.bf16.gmra.mxu0 %v357
  %v528 = vpop.f32.mrf.mxu0
  %v529 = vadd.f32 %v161, %v528
  %v530 = vpop.f32.mrf.mxu0
  %v531 = vpop.f32.mrf.mxu0
  %v532 = vadd.f32 %v161, %v531
  %v533 = vpop.f32.mrf.mxu0
  %534 = vmatprep.mubr.bf16.mxu0 0
  %535 = vmatmul.mubr.bf16.gmra.mxu0 %v360
  %v536 = vpop.f32.mrf.mxu0
  %v537 = vadd.f32 %v161, %v536
  %v538 = vpop.f32.mrf.mxu0
  %v539 = vpop.f32.mrf.mxu0
  %v540 = vadd.f32 %v161, %v539
  %v541 = vpop.f32.mrf.mxu0
  %542 = vmatprep.mubr.bf16.mxu0 0
  %543 = vmatmul.mubr.bf16.gmra.mxu0 %v363
  %v544 = vpop.f32.mrf.mxu0
  %v545 = vadd.f32 %v161, %v544
  %v546 = vpop.f32.mrf.mxu0
  %v547 = vpop.f32.mrf.mxu0
  %v548 = vadd.f32 %v161, %v547
  %v549 = vpop.f32.mrf.mxu0
  %550 = vmatprep.mubr.bf16.mxu0 0
  %551 = vmatmul.mubr.bf16.gmra.mxu0 %v366
  %v552 = vpop.f32.mrf.mxu0
  %v553 = vadd.f32 %v161, %v552
  %v554 = vpop.f32.mrf.mxu0
  %v555 = vpop.f32.mrf.mxu0
  %v556 = vadd.f32 %v161, %v555
  %v557 = vpop.f32.mrf.mxu0
  %558 = vmatprep.mubr.bf16.mxu0 0
  %559 = vmatmul.mubr.bf16.gmra.mxu0 %v369
  %v560 = vpop.f32.mrf.mxu0
  %v561 = vadd.f32 %v161, %v560
  %v562 = vpop.f32.mrf.mxu0
  %v563 = vpop.f32.mrf.mxu0
  %v564 = vadd.f32 %v161, %v563
  %v565 = vpop.f32.mrf.mxu0
  %566 = vmatprep.mubr.bf16.mxu0 0
  %567 = vmatmul.mubr.bf16.gmra.mxu0 %v372
  %v568 = vpop.f32.mrf.mxu0
  %v569 = vadd.f32 %v161, %v568
  %v570 = vpop.f32.mrf.mxu0
  %v571 = vpop.f32.mrf.mxu0
  %v572 = vadd.f32 %v161, %v571
  %v573 = vpop.f32.mrf.mxu0
  %574 = vmatprep.mubr.bf16.mxu0 0
  %575 = vmatmul.mubr.bf16.gmra.mxu0 %v375
  %v576 = vpop.f32.mrf.mxu0
  %v577 = vadd.f32 %v161, %v576
  %v578 = vpop.f32.mrf.mxu0
  %v579 = vpop.f32.mrf.mxu0
  %v580 = vadd.f32 %v161, %v579
  %v581 = vpop.f32.mrf.mxu0
  %582 = vmatprep.mubr.bf16.mxu0 0
  %583 = vmatmul.mubr.bf16.gmra.mxu0 %v378
  %v584 = vpop.f32.mrf.mxu0
  %v585 = vadd.f32 %v161, %v584
  %v586 = vpop.f32.mrf.mxu0
  %v587 = vpop.f32.mrf.mxu0
  %v588 = vadd.f32 %v161, %v587
  %v589 = vpop.f32.mrf.mxu0
  %590 = vmatprep.mubr.bf16.mxu0 0
  %591 = vmatmul.mubr.bf16.gmra.mxu0 %v381
  %v592 = vpop.f32.mrf.mxu0
  %v593 = vadd.f32 %v161, %v592
  %v594 = vpop.f32.mrf.mxu0
  %v595 = vpop.f32.mrf.mxu0
  %v596 = vadd.f32 %v161, %v595
  %v597 = vpop.f32.mrf.mxu0
  %598 = vmatprep.mubr.bf16.mxu0 0
  %599 = vmatmul.mubr.bf16.gmra.mxu0 %v384
  %v600 = vpop.f32.mrf.mxu0
  %v601 = vadd.f32 %v161, %v600
  %v602 = vpop.f32.mrf.mxu0
  %v603 = vpop.f32.mrf.mxu0
  %v604 = vadd.f32 %v161, %v603
  %v605 = vpop.f32.mrf.mxu0
  %606 = vmatprep.mubr.bf16.mxu0 0
  %607 = vmatmul.mubr.bf16.gmra.mxu0 %v387
  %v608 = vpop.f32.mrf.mxu0
  %v609 = vadd.f32 %v161, %v608
  %v610 = vpop.f32.mrf.mxu0
  %v611 = vpop.f32.mrf.mxu0
  %v612 = vadd.f32 %v161, %v611
  %v613 = vpop.f32.mrf.mxu0
  %614 = vmatprep.mubr.bf16.mxu0 0
  %615 = vmatmul.mubr.bf16.gmra.mxu0 %v390
  %v616 = vpop.f32.mrf.mxu0
  %v617 = vadd.f32 %v161, %v616
  %v618 = vpop.f32.mrf.mxu0
  %v619 = vpop.f32.mrf.mxu0
  %v620 = vadd.f32 %v161, %v619
  %v621 = vpop.f32.mrf.mxu0
  %622 = vmatprep.mubr.bf16.mxu0 0
  %623 = vmatmul.mubr.bf16.gmra.mxu0 %v393
  %v624 = vpop.f32.mrf.mxu0
  %v625 = vadd.f32 %v161, %v624
  %v626 = vpop.f32.mrf.mxu0
  %v627 = vpop.f32.mrf.mxu0
  %v628 = vadd.f32 %v161, %v627
  %v629 = vpop.f32.mrf.mxu0
  %630 = vmatprep.mubr.bf16.mxu0 0
  %631 = vmatmul.mubr.bf16.gmra.mxu0 %v396
  %v632 = vpop.f32.mrf.mxu0
  %v633 = vadd.f32 %v161, %v632
  %v634 = vpop.f32.mrf.mxu0
  %v635 = vpop.f32.mrf.mxu0
  %v636 = vadd.f32 %v161, %v635
  %v637 = vpop.f32.mrf.mxu0
  %638 = vmatprep.mubr.bf16.mxu0 0
  %639 = vmatmul.mubr.bf16.gmra.mxu0 %v399
  %v640 = vpop.f32.mrf.mxu0
  %v641 = vadd.f32 %v161, %v640
  %v642 = vpop.f32.mrf.mxu0
  %v643 = vpop.f32.mrf.mxu0
  %v644 = vadd.f32 %v161, %v643
  %v645 = vpop.f32.mrf.mxu0
  %646 = vmatprep.mubr.bf16.mxu0 0
  %647 = vmatmul.mubr.bf16.gmra.mxu0 %v402
  %v648 = vpop.f32.mrf.mxu0
  %v649 = vadd.f32 %v161, %v648
  %v650 = vpop.f32.mrf.mxu0
  %v651 = vpop.f32.mrf.mxu0
  %v652 = vadd.f32 %v161, %v651
  %v653 = vpop.f32.mrf.mxu0
  %654 = vmatprep.mubr.bf16.mxu0 0
  %655 = vmatmul.mubr.bf16.gmra.mxu0 %v405
  %v656 = vpop.f32.mrf.mxu0
  %v657 = vadd.f32 %v161, %v656
  %v658 = vpop.f32.mrf.mxu0
  %v659 = vpop.f32.mrf.mxu0
  %v660 = vadd.f32 %v161, %v659
  %v661 = vpop.f32.mrf.mxu0
  %662 = vmatprep.mubr.bf16.mxu0 0
  %663 = vmatmul.mubr.bf16.gmra.mxu0 %v408
  %v664 = vpop.f32.mrf.mxu0
  %v665 = vadd.f32 %v161, %v664
  %v666 = vpop.f32.mrf.mxu0
  %v667 = vpop.f32.mrf.mxu0
  %v668 = vadd.f32 %v161, %v667
  %v669 = vpop.f32.mrf.mxu0
  %670 = vmatprep.mubr.bf16.mxu0 0
  %671 = vmatmul.mubr.bf16.gmra.mxu0 %v411
  %v672 = vpop.f32.mrf.mxu0
  %v673 = vadd.f32 %v161, %v672
  %v674 = vpop.f32.mrf.mxu0
  %v675 = vpop.f32.mrf.mxu0
  %v676 = vadd.f32 %v161, %v675
  %v677 = vpop.f32.mrf.mxu0
  %678 = vmatprep.mubr.bf16.mxu0 0
  %679 = vmatmul.mubr.bf16.gmra.mxu0 %v414
  %v680 = vpop.f32.mrf.mxu0
  %v681 = vadd.f32 %v161, %v680
  %v682 = vpop.f32.mrf.mxu0
  %v683 = vpop.f32.mrf.mxu0
  %v684 = vadd.f32 %v161, %v683
  %v685 = vpop.f32.mrf.mxu0
  %686 = vmatprep.mubr.bf16.mxu0 0
  %687 = vmatmul.mubr.bf16.gmra.mxu0 %v417
  %v688 = vpop.f32.mrf.mxu0
  %v689 = vadd.f32 %v161, %v688
  %v690 = vpop.f32.mrf.mxu0
  %v691 = vpop.f32.mrf.mxu0
  %v692 = vadd.f32 %v161, %v691
  %v693 = vpop.f32.mrf.mxu0
  %694 = vmatprep.mubr.bf16.mxu0 0
  %695 = vmatmul.mubr.bf16.gmra.mxu0 %v420
  %v696 = vpop.f32.mrf.mxu0
  %v697 = vadd.f32 %v161, %v696
  %v698 = vpop.f32.mrf.mxu0
  %v699 = vpop.f32.mrf.mxu0
  %v700 = vadd.f32 %v161, %v699
  %v701 = vpop.f32.mrf.mxu0
  %702 = vmatprep.mubr.bf16.mxu0 0
  %703 = vmatmul.mubr.bf16.gmra.mxu0 %v423
  %v704 = vpop.f32.mrf.mxu0
  %v705 = vadd.f32 %v161, %v704
  %v706 = vpop.f32.mrf.mxu0
  %v707 = vpop.f32.mrf.mxu0
  %v708 = vadd.f32 %v161, %v707
  %v709 = vpop.f32.mrf.mxu0
  %710 = vmatprep.mubr.bf16.mxu0 0
  %711 = vmatmul.mubr.bf16.gmra.mxu0 %v426
  %v712 = vpop.f32.mrf.mxu0
  %v713 = vadd.f32 %v161, %v712
  %v714 = vpop.f32.mrf.mxu0
  %v715 = vpop.f32.mrf.mxu0
  %v716 = vadd.f32 %v161, %v715
  %v717 = vpop.f32.mrf.mxu0
  %718 = vmatprep.mubr.bf16.mxu0 0
  %719 = vmatmul.mubr.bf16.gmra.mxu0 %v429
  %v720 = vpop.f32.mrf.mxu0
  %v721 = vadd.f32 %v161, %v720
  %v722 = vpop.f32.mrf.mxu0
  %v723 = vpop.f32.mrf.mxu0
  %v724 = vadd.f32 %v161, %v723
  %v725 = vpop.f32.mrf.mxu0
  %726 = vdwg.mxu0
  %v727 = vmax.f32 %v473, 0.0
  %v728 = vmax.f32 %v476, 0.0
  %v729 = vmax.f32 %v481, 0.0
  %v730 = vmax.f32 %v484, 0.0
  %v731 = vmax.f32 %v489, 0.0
  %v732 = vmax.f32 %v492, 0.0
  %v733 = vmax.f32 %v497, 0.0
  %v734 = vmax.f32 %v500, 0.0
  %v735 = vmax.f32 %v505, 0.0
  %v736 = vmax.f32 %v508, 0.0
  %v737 = vmax.f32 %v513, 0.0
  %v738 = vmax.f32 %v516, 0.0
  %v739 = vmax.f32 %v521, 0.0
  %v740 = vmax.f32 %v524, 0.0
  %v741 = vmax.f32 %v529, 0.0
  %v742 = vmax.f32 %v532, 0.0
  %v743 = vmax.f32 %v537, 0.0
  %v744 = vmax.f32 %v540, 0.0
  %v745 = vmax.f32 %v545, 0.0
  %v746 = vmax.f32 %v548, 0.0
  %v747 = vmax.f32 %v553, 0.0
  %v748 = vmax.f32 %v556, 0.0
  %v749 = vmax.f32 %v561, 0.0
  %v750 = vmax.f32 %v564, 0.0
  %v751 = vmax.f32 %v569, 0.0
  %v752 = vmax.f32 %v572, 0.0
  %v753 = vmax.f32 %v577, 0.0
  %v754 = vmax.f32 %v580, 0.0
  %v755 = vmax.f32 %v585, 0.0
  %v756 = vmax.f32 %v588, 0.0
  %v757 = vmax.f32 %v593, 0.0
  %v758 = vmax.f32 %v596, 0.0
  %v759 = vmax.f32 %v601, 0.0
  %v760 = vmax.f32 %v604, 0.0
  %v761 = vmax.f32 %v609, 0.0
  %v762 = vmax.f32 %v612, 0.0
  %v763 = vmax.f32 %v617, 0.0
  %v764 = vmax.f32 %v620, 0.0
  %v765 = vmax.f32 %v625, 0.0
  %v766 = vmax.f32 %v628, 0.0
  %v767 = vmax.f32 %v633, 0.0
  %v768 = vmax.f32 %v636, 0.0
  %v769 = vmax.f32 %v641, 0.0
  %v770 = vmax.f32 %v644, 0.0
  %v771 = vmax.f32 %v649, 0.0
  %v772 = vmax.f32 %v652, 0.0
  %v773 = vmax.f32 %v657, 0.0
  %v774 = vmax.f32 %v660, 0.0
  %v775 = vmax.f32 %v665, 0.0
  %v776 = vmax.f32 %v668, 0.0
  %v777 = vmax.f32 %v673, 0.0
  %v778 = vmax.f32 %v676, 0.0
  %v779 = vmax.f32 %v681, 0.0
  %v780 = vmax.f32 %v684, 0.0
  %v781 = vmax.f32 %v689, 0.0
  %v782 = vmax.f32 %v692, 0.0
  %v783 = vmax.f32 %v697, 0.0
  %v784 = vmax.f32 %v700, 0.0
  %v785 = vmax.f32 %v705, 0.0
  %v786 = vmax.f32 %v708, 0.0
  %v787 = vmax.f32 %v713, 0.0
  %v788 = vmax.f32 %v716, 0.0
  %v789 = vmax.f32 %v721, 0.0
  %v790 = vmax.f32 %v724, 0.0
  %v855 = vunpack.c.l.b16 %v92
  %v856 = vunpack.c.l.b16 %v93
  %v857 = vunpack.c.l.b16 %v94
  %v858 = vunpack.c.l.b16 %v95
  %v859 = vunpack.c.l.b16 %v96
  %v860 = vunpack.c.l.b16 %v97
  %v861 = vunpack.c.l.b16 %v98
  %v862 = vunpack.c.l.b16 %v99
  %v863 = vunpack.c.l.b16 %v100
  %v864 = vunpack.c.l.b16 %v101
  %v865 = vunpack.c.l.b16 %v102
  %v866 = vunpack.c.l.b16 %v103
  %v867 = vunpack.c.l.b16 %v104
  %v868 = vunpack.c.l.b16 %v105
  %v869 = vunpack.c.l.b16 %v106
  %v870 = vunpack.c.l.b16 %v107
  %v871 = vunpack.c.l.b16 %v108
  %v872 = vunpack.c.l.b16 %v109
  %v873 = vunpack.c.l.b16 %v110
  %v874 = vunpack.c.l.b16 %v111
  %v875 = vunpack.c.l.b16 %v112
  %v876 = vunpack.c.l.b16 %v113
  %v877 = vunpack.c.l.b16 %v114
  %v878 = vunpack.c.l.b16 %v115
  %v879 = vunpack.c.l.b16 %v116
  %v880 = vunpack.c.l.b16 %v117
  %v881 = vunpack.c.l.b16 %v118
  %v882 = vunpack.c.l.b16 %v119
  %v883 = vunpack.c.l.b16 %v120
  %v884 = vunpack.c.l.b16 %v121
  %v885 = vunpack.c.l.b16 %v122
  %v886 = vunpack.c.l.b16 %v123
  %v887 = vunpack.c.l.b16 %v124
  %v888 = vunpack.c.l.b16 %v125
  %v889 = vunpack.c.l.b16 %v126
  %v890 = vunpack.c.l.b16 %v127
  %v891 = vunpack.c.l.b16 %v128
  %v892 = vunpack.c.l.b16 %v129
  %v893 = vunpack.c.l.b16 %v130
  %v894 = vunpack.c.l.b16 %v131
  %v895 = vunpack.c.l.b16 %v132
  %v896 = vunpack.c.l.b16 %v133
  %v897 = vunpack.c.l.b16 %v134
  %v898 = vunpack.c.l.b16 %v135
  %v899 = vunpack.c.l.b16 %v136
  %v900 = vunpack.c.l.b16 %v137
  %v901 = vunpack.c.l.b16 %v138
  %v902 = vunpack.c.l.b16 %v139
  %v903 = vunpack.c.l.b16 %v140
  %v904 = vunpack.c.l.b16 %v141
  %v905 = vunpack.c.l.b16 %v142
  %v906 = vunpack.c.l.b16 %v143
  %v907 = vunpack.c.l.b16 %v144
  %v908 = vunpack.c.l.b16 %v145
  %v909 = vunpack.c.l.b16 %v146
  %v910 = vunpack.c.l.b16 %v147
  %v911 = vunpack.c.l.b16 %v148
  %v912 = vunpack.c.l.b16 %v149
  %v913 = vunpack.c.l.b16 %v150
  %v914 = vunpack.c.l.b16 %v151
  %v915 = vunpack.c.l.b16 %v152
  %v916 = vunpack.c.l.b16 %v153
  %v917 = vunpack.c.l.b16 %v154
  %v918 = vunpack.c.l.b16 %v155
  %v919 = vpack.c.b16 %v856, %v855
  %v920 = vpack.c.b16 %v858, %v857
  %v921 = vpack.c.b16 %v860, %v859
  %v922 = vpack.c.b16 %v862, %v861
  %v923 = vpack.c.b16 %v864, %v863
  %v924 = vpack.c.b16 %v866, %v865
  %v925 = vpack.c.b16 %v868, %v867
  %v926 = vpack.c.b16 %v870, %v869
  %v927 = vpack.c.b16 %v872, %v871
  %v928 = vpack.c.b16 %v874, %v873
  %v929 = vpack.c.b16 %v876, %v875
  %v930 = vpack.c.b16 %v878, %v877
  %v931 = vpack.c.b16 %v880, %v879
  %v932 = vpack.c.b16 %v882, %v881
  %v933 = vpack.c.b16 %v884, %v883
  %v934 = vpack.c.b16 %v886, %v885
  %v935 = vpack.c.b16 %v888, %v887
  %v936 = vpack.c.b16 %v890, %v889
  %v937 = vpack.c.b16 %v892, %v891
  %v938 = vpack.c.b16 %v894, %v893
  %v939 = vpack.c.b16 %v896, %v895
  %v940 = vpack.c.b16 %v898, %v897
  %v941 = vpack.c.b16 %v900, %v899
  %v942 = vpack.c.b16 %v902, %v901
  %v943 = vpack.c.b16 %v904, %v903
  %v944 = vpack.c.b16 %v906, %v905
  %v945 = vpack.c.b16 %v908, %v907
  %v946 = vpack.c.b16 %v910, %v909
  %v947 = vpack.c.b16 %v912, %v911
  %v948 = vpack.c.b16 %v914, %v913
  %v949 = vpack.c.b16 %v916, %v915
  %v950 = vpack.c.b16 %v918, %v917
  %v952 = vsel %vm334, %v919, 0
  %v955 = vsel %vm334, %v920, 0
  %v958 = vsel %vm334, %v921, 0
  %v961 = vsel %vm334, %v922, 0
  %v964 = vsel %vm334, %v923, 0
  %v967 = vsel %vm334, %v924, 0
  %v970 = vsel %vm334, %v925, 0
  %v973 = vsel %vm334, %v926, 0
  %v976 = vsel %vm334, %v927, 0
  %v979 = vsel %vm334, %v928, 0
  %v982 = vsel %vm334, %v929, 0
  %v985 = vsel %vm334, %v930, 0
  %v988 = vsel %vm334, %v931, 0
  %v991 = vsel %vm334, %v932, 0
  %v994 = vsel %vm334, %v933, 0
  %v997 = vsel %vm334, %v934, 0
  %v1000 = vsel %vm334, %v935, 0
  %v1003 = vsel %vm334, %v936, 0
  %v1006 = vsel %vm334, %v937, 0
  %v1009 = vsel %vm334, %v938, 0
  %v1012 = vsel %vm334, %v939, 0
  %v1015 = vsel %vm334, %v940, 0
  %v1018 = vsel %vm334, %v941, 0
  %v1021 = vsel %vm334, %v942, 0
  %v1024 = vsel %vm334, %v943, 0
  %v1027 = vsel %vm334, %v944, 0
  %v1030 = vsel %vm334, %v945, 0
  %v1033 = vsel %vm334, %v946, 0
  %v1036 = vsel %vm334, %v947, 0
  %v1039 = vsel %vm334, %v948, 0
  %v1042 = vsel %vm334, %v949, 0
  %v1045 = vsel %vm334, %v950, 0
  %1047 = vmatprep.subr.bf16.mxu0 0
  %1048 = vmatpush1.bf16.msra.mxu0 0
  %1049 = vmatprep.subr.bf16.mxu0 0
  %1050 = vmatpush1.bf16.msra.mxu0 0
  %1051 = vmatprep.subr.bf16.mxu0 0
  %1052 = vmatpush1.bf16.msra.mxu0 0
  %1053 = vmatprep.subr.bf16.mxu0 0
  %1054 = vmatpush1.bf16.msra.mxu0 0
  %1055 = vmatprep.subr.bf16.mxu0 0
  %1056 = vmatpush1.bf16.msra.mxu0 0
  %1057 = vmatprep.subr.bf16.mxu0 0
  %1058 = vmatpush1.bf16.msra.mxu0 0
  %1059 = vmatprep.subr.bf16.mxu0 0
  %1060 = vmatpush1.bf16.msra.mxu0 %v436
  %1061 = vmatprep.subr.bf16.mxu0 0
  %1062 = vmatpush1.bf16.msra.mxu0 %v331
  %1063 = vmatprep.subr.bf16.mxu0 0
  %1064 = vmatpush2.bf16.msra.mxu0 0
  %1065 = vmatprep.subr.bf16.mxu0 0
  %1066 = vmatpush2.bf16.msra.mxu0 0
  %1067 = vmatprep.subr.bf16.mxu0 0
  %1068 = vmatpush2.bf16.msra.mxu0 0
  %1069 = vmatprep.subr.bf16.mxu0 0
  %1070 = vmatpush2.bf16.msra.mxu0 0
  %1071 = vmatprep.subr.bf16.mxu0 0
  %1072 = vmatpush2.bf16.msra.mxu0 0
  %1073 = vmatprep.subr.bf16.mxu0 0
  %1074 = vmatpush2.bf16.msra.mxu0 0
  %1075 = vmatprep.subr.bf16.mxu0 0
  %1076 = vmatpush2.bf16.msra.mxu0 0
  %1077 = vmatprep.subr.bf16.mxu0 0
  %1078 = vmatpush2.bf16.msra.mxu0 0
  %1079 = vmatprep.mubr.bf16.mxu0 0
  %1080 = vmatmul.mubr.bf16.gmra.mxu0 %v952
  %v1081 = vpop.f32.mrf.mxu0
  %v1082 = vadd.f32 %v161, %v1081
  %v1083 = vpop.f32.mrf.mxu0
  %v1084 = vpop.f32.mrf.mxu0
  %v1085 = vadd.f32 %v161, %v1084
  %v1086 = vpop.f32.mrf.mxu0
  %1087 = vmatprep.mubr.bf16.mxu0 0
  %1088 = vmatmul.mubr.bf16.gmra.mxu0 %v955
  %v1089 = vpop.f32.mrf.mxu0
  %v1090 = vadd.f32 %v161, %v1089
  %v1091 = vpop.f32.mrf.mxu0
  %v1092 = vpop.f32.mrf.mxu0
  %v1093 = vadd.f32 %v161, %v1092
  %v1094 = vpop.f32.mrf.mxu0
  %1095 = vmatprep.mubr.bf16.mxu0 0
  %1096 = vmatmul.mubr.bf16.gmra.mxu0 %v958
  %v1097 = vpop.f32.mrf.mxu0
  %v1098 = vadd.f32 %v161, %v1097
  %v1099 = vpop.f32.mrf.mxu0
  %v1100 = vpop.f32.mrf.mxu0
  %v1101 = vadd.f32 %v161, %v1100
  %v1102 = vpop.f32.mrf.mxu0
  %1103 = vmatprep.mubr.bf16.mxu0 0
  %1104 = vmatmul.mubr.bf16.gmra.mxu0 %v961
  %v1105 = vpop.f32.mrf.mxu0
  %v1106 = vadd.f32 %v161, %v1105
  %v1107 = vpop.f32.mrf.mxu0
  %v1108 = vpop.f32.mrf.mxu0
  %v1109 = vadd.f32 %v161, %v1108
  %v1110 = vpop.f32.mrf.mxu0
  %1111 = vmatprep.mubr.bf16.mxu0 0
  %1112 = vmatmul.mubr.bf16.gmra.mxu0 %v964
  %v1113 = vpop.f32.mrf.mxu0
  %v1114 = vadd.f32 %v161, %v1113
  %v1115 = vpop.f32.mrf.mxu0
  %v1116 = vpop.f32.mrf.mxu0
  %v1117 = vadd.f32 %v161, %v1116
  %v1118 = vpop.f32.mrf.mxu0
  %1119 = vmatprep.mubr.bf16.mxu0 0
  %1120 = vmatmul.mubr.bf16.gmra.mxu0 %v967
  %v1121 = vpop.f32.mrf.mxu0
  %v1122 = vadd.f32 %v161, %v1121
  %v1123 = vpop.f32.mrf.mxu0
  %v1124 = vpop.f32.mrf.mxu0
  %v1125 = vadd.f32 %v161, %v1124
  %v1126 = vpop.f32.mrf.mxu0
  %1127 = vmatprep.mubr.bf16.mxu0 0
  %1128 = vmatmul.mubr.bf16.gmra.mxu0 %v970
  %v1129 = vpop.f32.mrf.mxu0
  %v1130 = vadd.f32 %v161, %v1129
  %v1131 = vpop.f32.mrf.mxu0
  %v1132 = vpop.f32.mrf.mxu0
  %v1133 = vadd.f32 %v161, %v1132
  %v1134 = vpop.f32.mrf.mxu0
  %1135 = vmatprep.mubr.bf16.mxu0 0
  %1136 = vmatmul.mubr.bf16.gmra.mxu0 %v973
  %v1137 = vpop.f32.mrf.mxu0
  %v1138 = vadd.f32 %v161, %v1137
  %v1139 = vpop.f32.mrf.mxu0
  %v1140 = vpop.f32.mrf.mxu0
  %v1141 = vadd.f32 %v161, %v1140
  %v1142 = vpop.f32.mrf.mxu0
  %1143 = vmatprep.mubr.bf16.mxu0 0
  %1144 = vmatmul.mubr.bf16.gmra.mxu0 %v976
  %v1145 = vpop.f32.mrf.mxu0
  %v1146 = vadd.f32 %v161, %v1145
  %v1147 = vpop.f32.mrf.mxu0
  %v1148 = vpop.f32.mrf.mxu0
  %v1149 = vadd.f32 %v161, %v1148
  %v1150 = vpop.f32.mrf.mxu0
  %1151 = vmatprep.mubr.bf16.mxu0 0
  %1152 = vmatmul.mubr.bf16.gmra.mxu0 %v979
  %v1153 = vpop.f32.mrf.mxu0
  %v1154 = vadd.f32 %v161, %v1153
  %v1155 = vpop.f32.mrf.mxu0
  %v1156 = vpop.f32.mrf.mxu0
  %v1157 = vadd.f32 %v161, %v1156
  %v1158 = vpop.f32.mrf.mxu0
  %1159 = vmatprep.mubr.bf16.mxu0 0
  %1160 = vmatmul.mubr.bf16.gmra.mxu0 %v982
  %v1161 = vpop.f32.mrf.mxu0
  %v1162 = vadd.f32 %v161, %v1161
  %v1163 = vpop.f32.mrf.mxu0
  %v1164 = vpop.f32.mrf.mxu0
  %v1165 = vadd.f32 %v161, %v1164
  %v1166 = vpop.f32.mrf.mxu0
  %1167 = vmatprep.mubr.bf16.mxu0 0
  %1168 = vmatmul.mubr.bf16.gmra.mxu0 %v985
  %v1169 = vpop.f32.mrf.mxu0
  %v1170 = vadd.f32 %v161, %v1169
  %v1171 = vpop.f32.mrf.mxu0
  %v1172 = vpop.f32.mrf.mxu0
  %v1173 = vadd.f32 %v161, %v1172
  %v1174 = vpop.f32.mrf.mxu0
  %1175 = vmatprep.mubr.bf16.mxu0 0
  %1176 = vmatmul.mubr.bf16.gmra.mxu0 %v988
  %v1177 = vpop.f32.mrf.mxu0
  %v1178 = vadd.f32 %v161, %v1177
  %v1179 = vpop.f32.mrf.mxu0
  %v1180 = vpop.f32.mrf.mxu0
  %v1181 = vadd.f32 %v161, %v1180
  %v1182 = vpop.f32.mrf.mxu0
  %1183 = vmatprep.mubr.bf16.mxu0 0
  %1184 = vmatmul.mubr.bf16.gmra.mxu0 %v991
  %v1185 = vpop.f32.mrf.mxu0
  %v1186 = vadd.f32 %v161, %v1185
  %v1187 = vpop.f32.mrf.mxu0
  %v1188 = vpop.f32.mrf.mxu0
  %v1189 = vadd.f32 %v161, %v1188
  %v1190 = vpop.f32.mrf.mxu0
  %1191 = vmatprep.mubr.bf16.mxu0 0
  %1192 = vmatmul.mubr.bf16.gmra.mxu0 %v994
  %v1193 = vpop.f32.mrf.mxu0
  %v1194 = vadd.f32 %v161, %v1193
  %v1195 = vpop.f32.mrf.mxu0
  %v1196 = vpop.f32.mrf.mxu0
  %v1197 = vadd.f32 %v161, %v1196
  %v1198 = vpop.f32.mrf.mxu0
  %1199 = vmatprep.mubr.bf16.mxu0 0
  %1200 = vmatmul.mubr.bf16.gmra.mxu0 %v997
  %v1201 = vpop.f32.mrf.mxu0
  %v1202 = vadd.f32 %v161, %v1201
  %v1203 = vpop.f32.mrf.mxu0
  %v1204 = vpop.f32.mrf.mxu0
  %v1205 = vadd.f32 %v161, %v1204
  %v1206 = vpop.f32.mrf.mxu0
  %1207 = vmatprep.mubr.bf16.mxu0 0
  %1208 = vmatmul.mubr.bf16.gmra.mxu0 %v1000
  %v1209 = vpop.f32.mrf.mxu0
  %v1210 = vadd.f32 %v161, %v1209
  %v1211 = vpop.f32.mrf.mxu0
  %v1212 = vpop.f32.mrf.mxu0
  %v1213 = vadd.f32 %v161, %v1212
  %v1214 = vpop.f32.mrf.mxu0
  %1215 = vmatprep.mubr.bf16.mxu0 0
  %1216 = vmatmul.mubr.bf16.gmra.mxu0 %v1003
  %v1217 = vpop.f32.mrf.mxu0
  %v1218 = vadd.f32 %v161, %v1217
  %v1219 = vpop.f32.mrf.mxu0
  %v1220 = vpop.f32.mrf.mxu0
  %v1221 = vadd.f32 %v161, %v1220
  %v1222 = vpop.f32.mrf.mxu0
  %1223 = vmatprep.mubr.bf16.mxu0 0
  %1224 = vmatmul.mubr.bf16.gmra.mxu0 %v1006
  %v1225 = vpop.f32.mrf.mxu0
  %v1226 = vadd.f32 %v161, %v1225
  %v1227 = vpop.f32.mrf.mxu0
  %v1228 = vpop.f32.mrf.mxu0
  %v1229 = vadd.f32 %v161, %v1228
  %v1230 = vpop.f32.mrf.mxu0
  %1231 = vmatprep.mubr.bf16.mxu0 0
  %1232 = vmatmul.mubr.bf16.gmra.mxu0 %v1009
  %v1233 = vpop.f32.mrf.mxu0
  %v1234 = vadd.f32 %v161, %v1233
  %v1235 = vpop.f32.mrf.mxu0
  %v1236 = vpop.f32.mrf.mxu0
  %v1237 = vadd.f32 %v161, %v1236
  %v1238 = vpop.f32.mrf.mxu0
  %1239 = vmatprep.mubr.bf16.mxu0 0
  %1240 = vmatmul.mubr.bf16.gmra.mxu0 %v1012
  %v1241 = vpop.f32.mrf.mxu0
  %v1242 = vadd.f32 %v161, %v1241
  %v1243 = vpop.f32.mrf.mxu0
  %v1244 = vpop.f32.mrf.mxu0
  %v1245 = vadd.f32 %v161, %v1244
  %v1246 = vpop.f32.mrf.mxu0
  %1247 = vmatprep.mubr.bf16.mxu0 0
  %1248 = vmatmul.mubr.bf16.gmra.mxu0 %v1015
  %v1249 = vpop.f32.mrf.mxu0
  %v1250 = vadd.f32 %v161, %v1249
  %v1251 = vpop.f32.mrf.mxu0
  %v1252 = vpop.f32.mrf.mxu0
  %v1253 = vadd.f32 %v161, %v1252
  %v1254 = vpop.f32.mrf.mxu0
  %1255 = vmatprep.mubr.bf16.mxu0 0
  %1256 = vmatmul.mubr.bf16.gmra.mxu0 %v1018
  %v1257 = vpop.f32.mrf.mxu0
  %v1258 = vadd.f32 %v161, %v1257
  %v1259 = vpop.f32.mrf.mxu0
  %v1260 = vpop.f32.mrf.mxu0
  %v1261 = vadd.f32 %v161, %v1260
  %v1262 = vpop.f32.mrf.mxu0
  %1263 = vmatprep.mubr.bf16.mxu0 0
  %1264 = vmatmul.mubr.bf16.gmra.mxu0 %v1021
  %v1265 = vpop.f32.mrf.mxu0
  %v1266 = vadd.f32 %v161, %v1265
  %v1267 = vpop.f32.mrf.mxu0
  %v1268 = vpop.f32.mrf.mxu0
  %v1269 = vadd.f32 %v161, %v1268
  %v1270 = vpop.f32.mrf.mxu0
  %1271 = vmatprep.mubr.bf16.mxu0 0
  %1272 = vmatmul.mubr.bf16.gmra.mxu0 %v1024
  %v1273 = vpop.f32.mrf.mxu0
  %v1274 = vadd.f32 %v161, %v1273
  %v1275 = vpop.f32.mrf.mxu0
  %v1276 = vpop.f32.mrf.mxu0
  %v1277 = vadd.f32 %v161, %v1276
  %v1278 = vpop.f32.mrf.mxu0
  %1279 = vmatprep.mubr.bf16.mxu0 0
  %1280 = vmatmul.mubr.bf16.gmra.mxu0 %v1027
  %v1281 = vpop.f32.mrf.mxu0
  %v1282 = vadd.f32 %v161, %v1281
  %v1283 = vpop.f32.mrf.mxu0
  %v1284 = vpop.f32.mrf.mxu0
  %v1285 = vadd.f32 %v161, %v1284
  %v1286 = vpop.f32.mrf.mxu0
  %1287 = vmatprep.mubr.bf16.mxu0 0
  %1288 = vmatmul.mubr.bf16.gmra.mxu0 %v1030
  %v1289 = vpop.f32.mrf.mxu0
  %v1290 = vadd.f32 %v161, %v1289
  %v1291 = vpop.f32.mrf.mxu0
  %v1292 = vpop.f32.mrf.mxu0
  %v1293 = vadd.f32 %v161, %v1292
  %v1294 = vpop.f32.mrf.mxu0
  %1295 = vmatprep.mubr.bf16.mxu0 0
  %1296 = vmatmul.mubr.bf16.gmra.mxu0 %v1033
  %v1297 = vpop.f32.mrf.mxu0
  %v1298 = vadd.f32 %v161, %v1297
  %v1299 = vpop.f32.mrf.mxu0
  %v1300 = vpop.f32.mrf.mxu0
  %v1301 = vadd.f32 %v161, %v1300
  %v1302 = vpop.f32.mrf.mxu0
  %1303 = vmatprep.mubr.bf16.mxu0 0
  %1304 = vmatmul.mubr.bf16.gmra.mxu0 %v1036
  %v1305 = vpop.f32.mrf.mxu0
  %v1306 = vadd.f32 %v161, %v1305
  %v1307 = vpop.f32.mrf.mxu0
  %v1308 = vpop.f32.mrf.mxu0
  %v1309 = vadd.f32 %v161, %v1308
  %v1310 = vpop.f32.mrf.mxu0
  %1311 = vmatprep.mubr.bf16.mxu0 0
  %1312 = vmatmul.mubr.bf16.gmra.mxu0 %v1039
  %v1313 = vpop.f32.mrf.mxu0
  %v1314 = vadd.f32 %v161, %v1313
  %v1315 = vpop.f32.mrf.mxu0
  %v1316 = vpop.f32.mrf.mxu0
  %v1317 = vadd.f32 %v161, %v1316
  %v1318 = vpop.f32.mrf.mxu0
  %1319 = vmatprep.mubr.bf16.mxu0 0
  %1320 = vmatmul.mubr.bf16.gmra.mxu0 %v1042
  %v1321 = vpop.f32.mrf.mxu0
  %v1322 = vadd.f32 %v161, %v1321
  %v1323 = vpop.f32.mrf.mxu0
  %v1324 = vpop.f32.mrf.mxu0
  %v1325 = vadd.f32 %v161, %v1324
  %v1326 = vpop.f32.mrf.mxu0
  %1327 = vmatprep.mubr.bf16.mxu0 0
  %1328 = vmatmul.mubr.bf16.gmra.mxu0 %v1045
  %v1329 = vpop.f32.mrf.mxu0
  %v1330 = vadd.f32 %v161, %v1329
  %v1331 = vpop.f32.mrf.mxu0
  %v1332 = vpop.f32.mrf.mxu0
  %v1333 = vadd.f32 %v161, %v1332
  %v1334 = vpop.f32.mrf.mxu0
  %1335 = vdwg.mxu0
  %v1336 = vmax.f32 %v1082, 0.0
  %v1337 = vmax.f32 %v1085, 0.0
  %v1338 = vmax.f32 %v1090, 0.0
  %v1339 = vmax.f32 %v1093, 0.0
  %v1340 = vmax.f32 %v1098, 0.0
  %v1341 = vmax.f32 %v1101, 0.0
  %v1342 = vmax.f32 %v1106, 0.0
  %v1343 = vmax.f32 %v1109, 0.0
  %v1344 = vmax.f32 %v1114, 0.0
  %v1345 = vmax.f32 %v1117, 0.0
  %v1346 = vmax.f32 %v1122, 0.0
  %v1347 = vmax.f32 %v1125, 0.0
  %v1348 = vmax.f32 %v1130, 0.0
  %v1349 = vmax.f32 %v1133, 0.0
  %v1350 = vmax.f32 %v1138, 0.0
  %v1351 = vmax.f32 %v1141, 0.0
  %v1352 = vmax.f32 %v1146, 0.0
  %v1353 = vmax.f32 %v1149, 0.0
  %v1354 = vmax.f32 %v1154, 0.0
  %v1355 = vmax.f32 %v1157, 0.0
  %v1356 = vmax.f32 %v1162, 0.0
  %v1357 = vmax.f32 %v1165, 0.0
  %v1358 = vmax.f32 %v1170, 0.0
  %v1359 = vmax.f32 %v1173, 0.0
  %v1360 = vmax.f32 %v1178, 0.0
  %v1361 = vmax.f32 %v1181, 0.0
  %v1362 = vmax.f32 %v1186, 0.0
  %v1363 = vmax.f32 %v1189, 0.0
  %v1364 = vmax.f32 %v1194, 0.0
  %v1365 = vmax.f32 %v1197, 0.0
  %v1366 = vmax.f32 %v1202, 0.0
  %v1367 = vmax.f32 %v1205, 0.0
  %v1368 = vmax.f32 %v1210, 0.0
  %v1369 = vmax.f32 %v1213, 0.0
  %v1370 = vmax.f32 %v1218, 0.0
  %v1371 = vmax.f32 %v1221, 0.0
  %v1372 = vmax.f32 %v1226, 0.0
  %v1373 = vmax.f32 %v1229, 0.0
  %v1374 = vmax.f32 %v1234, 0.0
  %v1375 = vmax.f32 %v1237, 0.0
  %v1376 = vmax.f32 %v1242, 0.0
  %v1377 = vmax.f32 %v1245, 0.0
  %v1378 = vmax.f32 %v1250, 0.0
  %v1379 = vmax.f32 %v1253, 0.0
  %v1380 = vmax.f32 %v1258, 0.0
  %v1381 = vmax.f32 %v1261, 0.0
  %v1382 = vmax.f32 %v1266, 0.0
  %v1383 = vmax.f32 %v1269, 0.0
  %v1384 = vmax.f32 %v1274, 0.0
  %v1385 = vmax.f32 %v1277, 0.0
  %v1386 = vmax.f32 %v1282, 0.0
  %v1387 = vmax.f32 %v1285, 0.0
  %v1388 = vmax.f32 %v1290, 0.0
  %v1389 = vmax.f32 %v1293, 0.0
  %v1390 = vmax.f32 %v1298, 0.0
  %v1391 = vmax.f32 %v1301, 0.0
  %v1392 = vmax.f32 %v1306, 0.0
  %v1393 = vmax.f32 %v1309, 0.0
  %v1394 = vmax.f32 %v1314, 0.0
  %v1395 = vmax.f32 %v1317, 0.0
  %v1396 = vmax.f32 %v1322, 0.0
  %v1397 = vmax.f32 %v1325, 0.0
  %v1398 = vmax.f32 %v1330, 0.0
  %v1399 = vmax.f32 %v1333, 0.0
  %v1400 = vpack.c.bf16 %v728, %v727
  %v1401 = vpack.c.bf16 %v730, %v729
  %v1402 = vpack.c.bf16 %v732, %v731
  %v1403 = vpack.c.bf16 %v734, %v733
  %v1404 = vpack.c.bf16 %v736, %v735
  %v1405 = vpack.c.bf16 %v738, %v737
  %v1406 = vpack.c.bf16 %v740, %v739
  %v1407 = vpack.c.bf16 %v742, %v741
  %v1408 = vpack.c.bf16 %v744, %v743
  %v1409 = vpack.c.bf16 %v746, %v745
  %v1410 = vpack.c.bf16 %v748, %v747
  %v1411 = vpack.c.bf16 %v750, %v749
  %v1412 = vpack.c.bf16 %v752, %v751
  %v1413 = vpack.c.bf16 %v754, %v753
  %v1414 = vpack.c.bf16 %v756, %v755
  %v1415 = vpack.c.bf16 %v758, %v757
  %v1416 = vpack.c.bf16 %v760, %v759
  %v1417 = vpack.c.bf16 %v762, %v761
  %v1418 = vpack.c.bf16 %v764, %v763
  %v1419 = vpack.c.bf16 %v766, %v765
  %v1420 = vpack.c.bf16 %v768, %v767
  %v1421 = vpack.c.bf16 %v770, %v769
  %v1422 = vpack.c.bf16 %v772, %v771
  %v1423 = vpack.c.bf16 %v774, %v773
  %v1424 = vpack.c.bf16 %v776, %v775
  %v1425 = vpack.c.bf16 %v778, %v777
  %v1426 = vpack.c.bf16 %v780, %v779
  %v1427 = vpack.c.bf16 %v782, %v781
  %v1428 = vpack.c.bf16 %v784, %v783
  %v1429 = vpack.c.bf16 %v786, %v785
  %v1430 = vpack.c.bf16 %v788, %v787
  %v1431 = vpack.c.bf16 %v790, %v789
  %v1464 = vunpack.c.l.b16 %v1400
  %v1465 = vunpack.c.h.b16 %v1400
  %v1466 = vunpack.c.l.b16 %v1401
  %v1467 = vunpack.c.h.b16 %v1401
  %v1468 = vunpack.c.l.b16 %v1402
  %v1469 = vunpack.c.h.b16 %v1402
  %v1470 = vunpack.c.l.b16 %v1403
  %v1471 = vunpack.c.h.b16 %v1403
  %v1472 = vunpack.c.l.b16 %v1404
  %v1473 = vunpack.c.h.b16 %v1404
  %v1474 = vunpack.c.l.b16 %v1405
  %v1475 = vunpack.c.h.b16 %v1405
  %v1476 = vunpack.c.l.b16 %v1406
  %v1477 = vunpack.c.h.b16 %v1406
  %v1478 = vunpack.c.l.b16 %v1407
  %v1479 = vunpack.c.h.b16 %v1407
  %v1480 = vunpack.c.l.b16 %v1408
  %v1481 = vunpack.c.h.b16 %v1408
  %v1482 = vunpack.c.l.b16 %v1409
  %v1483 = vunpack.c.h.b16 %v1409
  %v1484 = vunpack.c.l.b16 %v1410
  %v1485 = vunpack.c.h.b16 %v1410
  %v1486 = vunpack.c.l.b16 %v1411
  %v1487 = vunpack.c.h.b16 %v1411
  %v1488 = vunpack.c.l.b16 %v1412
  %v1489 = vunpack.c.h.b16 %v1412
  %v1490 = vunpack.c.l.b16 %v1413
  %v1491 = vunpack.c.h.b16 %v1413
  %v1492 = vunpack.c.l.b16 %v1414
  %v1493 = vunpack.c.h.b16 %v1414
  %v1494 = vunpack.c.l.b16 %v1415
  %v1495 = vunpack.c.h.b16 %v1415
  %v1496 = vunpack.c.l.b16 %v1416
  %v1497 = vunpack.c.h.b16 %v1416
  %v1498 = vunpack.c.l.b16 %v1417
  %v1499 = vunpack.c.h.b16 %v1417
  %v1500 = vunpack.c.l.b16 %v1418
  %v1501 = vunpack.c.h.b16 %v1418
  %v1502 = vunpack.c.l.b16 %v1419
  %v1503 = vunpack.c.h.b16 %v1419
  %v1504 = vunpack.c.l.b16 %v1420
  %v1505 = vunpack.c.h.b16 %v1420
  %v1506 = vunpack.c.l.b16 %v1421
  %v1507 = vunpack.c.h.b16 %v1421
  %v1508 = vunpack.c.l.b16 %v1422
  %v1509 = vunpack.c.h.b16 %v1422
  %v1510 = vunpack.c.l.b16 %v1423
  %v1511 = vunpack.c.h.b16 %v1423
  %v1512 = vunpack.c.l.b16 %v1424
  %v1513 = vunpack.c.h.b16 %v1424
  %v1514 = vunpack.c.l.b16 %v1425
  %v1515 = vunpack.c.h.b16 %v1425
  %v1516 = vunpack.c.l.b16 %v1426
  %v1517 = vunpack.c.h.b16 %v1426
  %v1518 = vunpack.c.l.b16 %v1427
  %v1519 = vunpack.c.h.b16 %v1427
  %v1520 = vunpack.c.l.b16 %v1428
  %v1521 = vunpack.c.h.b16 %v1428
  %v1522 = vunpack.c.l.b16 %v1429
  %v1523 = vunpack.c.h.b16 %v1429
  %v1524 = vunpack.c.l.b16 %v1430
  %v1525 = vunpack.c.h.b16 %v1430
  %v1526 = vunpack.c.l.b16 %v1431
  %v1527 = vunpack.c.h.b16 %v1431
  %v1528 = vpack.c.b16 %v1464, %v1464
  %v1529 = vpack.c.b16 %v1465, %v1465
  %v1530 = vpack.c.b16 %v1466, %v1466
  %v1531 = vpack.c.b16 %v1467, %v1467
  %v1532 = vpack.c.b16 %v1468, %v1468
  %v1533 = vpack.c.b16 %v1469, %v1469
  %v1534 = vpack.c.b16 %v1470, %v1470
  %v1535 = vpack.c.b16 %v1471, %v1471
  %v1536 = vpack.c.b16 %v1472, %v1472
  %v1537 = vpack.c.b16 %v1473, %v1473
  %v1538 = vpack.c.b16 %v1474, %v1474
  %v1539 = vpack.c.b16 %v1475, %v1475
  %v1540 = vpack.c.b16 %v1476, %v1476
  %v1541 = vpack.c.b16 %v1477, %v1477
  %v1542 = vpack.c.b16 %v1478, %v1478
  %v1543 = vpack.c.b16 %v1479, %v1479
  %v1544 = vpack.c.b16 %v1480, %v1480
  %v1545 = vpack.c.b16 %v1481, %v1481
  %v1546 = vpack.c.b16 %v1482, %v1482
  %v1547 = vpack.c.b16 %v1483, %v1483
  %v1548 = vpack.c.b16 %v1484, %v1484
  %v1549 = vpack.c.b16 %v1485, %v1485
  %v1550 = vpack.c.b16 %v1486, %v1486
  %v1551 = vpack.c.b16 %v1487, %v1487
  %v1552 = vpack.c.b16 %v1488, %v1488
  %v1553 = vpack.c.b16 %v1489, %v1489
  %v1554 = vpack.c.b16 %v1490, %v1490
  %v1555 = vpack.c.b16 %v1491, %v1491
  %v1556 = vpack.c.b16 %v1492, %v1492
  %v1557 = vpack.c.b16 %v1493, %v1493
  %v1558 = vpack.c.b16 %v1494, %v1494
  %v1559 = vpack.c.b16 %v1495, %v1495
  %v1560 = vpack.c.b16 %v1496, %v1496
  %v1561 = vpack.c.b16 %v1497, %v1497
  %v1562 = vpack.c.b16 %v1498, %v1498
  %v1563 = vpack.c.b16 %v1499, %v1499
  %v1564 = vpack.c.b16 %v1500, %v1500
  %v1565 = vpack.c.b16 %v1501, %v1501
  %v1566 = vpack.c.b16 %v1502, %v1502
  %v1567 = vpack.c.b16 %v1503, %v1503
  %v1568 = vpack.c.b16 %v1504, %v1504
  %v1569 = vpack.c.b16 %v1505, %v1505
  %v1570 = vpack.c.b16 %v1506, %v1506
  %v1571 = vpack.c.b16 %v1507, %v1507
  %v1572 = vpack.c.b16 %v1508, %v1508
  %v1573 = vpack.c.b16 %v1509, %v1509
  %v1574 = vpack.c.b16 %v1510, %v1510
  %v1575 = vpack.c.b16 %v1511, %v1511
  %v1576 = vpack.c.b16 %v1512, %v1512
  %v1577 = vpack.c.b16 %v1513, %v1513
  %v1578 = vpack.c.b16 %v1514, %v1514
  %v1579 = vpack.c.b16 %v1515, %v1515
  %v1580 = vpack.c.b16 %v1516, %v1516
  %v1581 = vpack.c.b16 %v1517, %v1517
  %v1582 = vpack.c.b16 %v1518, %v1518
  %v1583 = vpack.c.b16 %v1519, %v1519
  %v1584 = vpack.c.b16 %v1520, %v1520
  %v1585 = vpack.c.b16 %v1521, %v1521
  %v1586 = vpack.c.b16 %v1522, %v1522
  %v1587 = vpack.c.b16 %v1523, %v1523
  %v1588 = vpack.c.b16 %v1524, %v1524
  %v1589 = vpack.c.b16 %v1525, %v1525
  %v1590 = vpack.c.b16 %v1526, %v1526
  %v1591 = vpack.c.b16 %v1527, %v1527
  %vm1656 = vcmask 60416
  %1657 = vst.msk [vmem:[%s5] sm:$0xf] %vm1656, %v1528
  %1658 = vst.msk [vmem:[%s5 + $0x4] sm:$0xf] %vm1656, %v1529
  %1659 = vst.msk [vmem:[%s5 + $0x8] sm:$0xf] %vm1656, %v1530
  %1660 = vst.msk [vmem:[%s5 + $0xc] sm:$0xf] %vm1656, %v1531
  %1661 = vst.msk [vmem:[%s5 + $0x10] sm:$0xf] %vm1656, %v1532
  %1662 = vst.msk [vmem:[%s5 + $0x14] sm:$0xf] %vm1656, %v1533
  %1663 = vst.msk [vmem:[%s5 + $0x18] sm:$0xf] %vm1656, %v1534
  %1664 = vst.msk [vmem:[%s5 + $0x1c] sm:$0xf] %vm1656, %v1535
  %1665 = vst.msk [vmem:[%s5 + $0x20] sm:$0xf] %vm1656, %v1536
  %1666 = vst.msk [vmem:[%s5 + $0x24] sm:$0xf] %vm1656, %v1537
  %1667 = vst.msk [vmem:[%s5 + $0x28] sm:$0xf] %vm1656, %v1538
  %1668 = vst.msk [vmem:[%s5 + $0x2c] sm:$0xf] %vm1656, %v1539
  %1669 = vst.msk [vmem:[%s5 + $0x30] sm:$0xf] %vm1656, %v1540
  %1670 = vst.msk [vmem:[%s5 + $0x34] sm:$0xf] %vm1656, %v1541
  %1671 = vst.msk [vmem:[%s5 + $0x38] sm:$0xf] %vm1656, %v1542
  %1672 = vst.msk [vmem:[%s5 + $0x3c] sm:$0xf] %vm1656, %v1543
  %1673 = vst.msk [vmem:[%s5 + $0x40] sm:$0xf] %vm1656, %v1544
  %1674 = vst.msk [vmem:[%s5 + $0x44] sm:$0xf] %vm1656, %v1545
  %1675 = vst.msk [vmem:[%s5 + $0x48] sm:$0xf] %vm1656, %v1546
  %1676 = vst.msk [vmem:[%s5 + $0x4c] sm:$0xf] %vm1656, %v1547
  %1677 = vst.msk [vmem:[%s5 + $0x50] sm:$0xf] %vm1656, %v1548
  %1678 = vst.msk [vmem:[%s5 + $0x54] sm:$0xf] %vm1656, %v1549
  %1679 = vst.msk [vmem:[%s5 + $0x58] sm:$0xf] %vm1656, %v1550
  %1680 = vst.msk [vmem:[%s5 + $0x5c] sm:$0xf] %vm1656, %v1551
  %1681 = vst.msk [vmem:[%s5 + $0x60] sm:$0xf] %vm1656, %v1552
  %1682 = vst.msk [vmem:[%s5 + $0x64] sm:$0xf] %vm1656, %v1553
  %1683 = vst.msk [vmem:[%s5 + $0x68] sm:$0xf] %vm1656, %v1554
  %1684 = vst.msk [vmem:[%s5 + $0x6c] sm:$0xf] %vm1656, %v1555
  %1685 = vst.msk [vmem:[%s5 + $0x70] sm:$0xf] %vm1656, %v1556
  %1686 = vst.msk [vmem:[%s5 + $0x74] sm:$0xf] %vm1656, %v1557
  %1687 = vst.msk [vmem:[%s5 + $0x78] sm:$0xf] %vm1656, %v1558
  %1688 = vst.msk [vmem:[%s5 + $0x7c] sm:$0xf] %vm1656, %v1559
  %1689 = vst.msk [vmem:[%s5 + $0x80] sm:$0xf] %vm1656, %v1560
  %1690 = vst.msk [vmem:[%s5 + $0x84] sm:$0xf] %vm1656, %v1561
  %1691 = vst.msk [vmem:[%s5 + $0x88] sm:$0xf] %vm1656, %v1562
  %1692 = vst.msk [vmem:[%s5 + $0x8c] sm:$0xf] %vm1656, %v1563
  %1693 = vst.msk [vmem:[%s5 + $0x90] sm:$0xf] %vm1656, %v1564
  %1694 = vst.msk [vmem:[%s5 + $0x94] sm:$0xf] %vm1656, %v1565
  %1695 = vst.msk [vmem:[%s5 + $0x98] sm:$0xf] %vm1656, %v1566
  %1696 = vst.msk [vmem:[%s5 + $0x9c] sm:$0xf] %vm1656, %v1567
  %1697 = vst.msk [vmem:[%s5 + $0xa0] sm:$0xf] %vm1656, %v1568
  %1698 = vst.msk [vmem:[%s5 + $0xa4] sm:$0xf] %vm1656, %v1569
  %1699 = vst.msk [vmem:[%s5 + $0xa8] sm:$0xf] %vm1656, %v1570
  %1700 = vst.msk [vmem:[%s5 + $0xac] sm:$0xf] %vm1656, %v1571
  %1701 = vst.msk [vmem:[%s5 + $0xb0] sm:$0xf] %vm1656, %v1572
  %1702 = vst.msk [vmem:[%s5 + $0xb4] sm:$0xf] %vm1656, %v1573
  %1703 = vst.msk [vmem:[%s5 + $0xb8] sm:$0xf] %vm1656, %v1574
  %1704 = vst.msk [vmem:[%s5 + $0xbc] sm:$0xf] %vm1656, %v1575
  %1705 = vst.msk [vmem:[%s5 + $0xc0] sm:$0xf] %vm1656, %v1576
  %1706 = vst.msk [vmem:[%s5 + $0xc4] sm:$0xf] %vm1656, %v1577
  %1707 = vst.msk [vmem:[%s5 + $0xc8] sm:$0xf] %vm1656, %v1578
  %1708 = vst.msk [vmem:[%s5 + $0xcc] sm:$0xf] %vm1656, %v1579
  %1709 = vst.msk [vmem:[%s5 + $0xd0] sm:$0xf] %vm1656, %v1580
  %1710 = vst.msk [vmem:[%s5 + $0xd4] sm:$0xf] %vm1656, %v1581
  %1711 = vst.msk [vmem:[%s5 + $0xd8] sm:$0xf] %vm1656, %v1582
  %1712 = vst.msk [vmem:[%s5 + $0xdc] sm:$0xf] %vm1656, %v1583
  %1713 = vst.msk [vmem:[%s5 + $0xe0] sm:$0xf] %vm1656, %v1584
  %1714 = vst.msk [vmem:[%s5 + $0xe4] sm:$0xf] %vm1656, %v1585
  %1715 = vst.msk [vmem:[%s5 + $0xe8] sm:$0xf] %vm1656, %v1586
  %1716 = vst.msk [vmem:[%s5 + $0xec] sm:$0xf] %vm1656, %v1587
  %1717 = vst.msk [vmem:[%s5 + $0xf0] sm:$0xf] %vm1656, %v1588
  %1718 = vst.msk [vmem:[%s5 + $0xf4] sm:$0xf] %vm1656, %v1589
  %1719 = vst.msk [vmem:[%s5 + $0xf8] sm:$0xf] %vm1656, %v1590
  %1720 = vst.msk [vmem:[%s5 + $0xfc] sm:$0xf] %vm1656, %v1591
  %v1721 = vpack.c.bf16 %v1337, %v1336
  %v1722 = vpack.c.bf16 %v1339, %v1338
  %v1723 = vpack.c.bf16 %v1341, %v1340
  %v1724 = vpack.c.bf16 %v1343, %v1342
  %v1725 = vpack.c.bf16 %v1345, %v1344
  %v1726 = vpack.c.bf16 %v1347, %v1346
  %v1727 = vpack.c.bf16 %v1349, %v1348
  %v1728 = vpack.c.bf16 %v1351, %v1350
  %v1729 = vpack.c.bf16 %v1353, %v1352
  %v1730 = vpack.c.bf16 %v1355, %v1354
  %v1731 = vpack.c.bf16 %v1357, %v1356
  %v1732 = vpack.c.bf16 %v1359, %v1358
  %v1733 = vpack.c.bf16 %v1361, %v1360
  %v1734 = vpack.c.bf16 %v1363, %v1362
  %v1735 = vpack.c.bf16 %v1365, %v1364
  %v1736 = vpack.c.bf16 %v1367, %v1366
  %v1737 = vpack.c.bf16 %v1369, %v1368
  %v1738 = vpack.c.bf16 %v1371, %v1370
  %v1739 = vpack.c.bf16 %v1373, %v1372
  %v1740 = vpack.c.bf16 %v1375, %v1374
  %v1741 = vpack.c.bf16 %v1377, %v1376
  %v1742 = vpack.c.bf16 %v1379, %v1378
  %v1743 = vpack.c.bf16 %v1381, %v1380
  %v1744 = vpack.c.bf16 %v1383, %v1382
  %v1745 = vpack.c.bf16 %v1385, %v1384
  %v1746 = vpack.c.bf16 %v1387, %v1386
  %v1747 = vpack.c.bf16 %v1389, %v1388
  %v1748 = vpack.c.bf16 %v1391, %v1390
  %v1749 = vpack.c.bf16 %v1393, %v1392
  %v1750 = vpack.c.bf16 %v1395, %v1394
  %v1751 = vpack.c.bf16 %v1397, %v1396
  %v1752 = vpack.c.bf16 %v1399, %v1398
  %v1785 = vunpack.c.l.b16 %v1721
  %v1786 = vunpack.c.h.b16 %v1721
  %v1787 = vunpack.c.l.b16 %v1722
  %v1788 = vunpack.c.h.b16 %v1722
  %v1789 = vunpack.c.l.b16 %v1723
  %v1790 = vunpack.c.h.b16 %v1723
  %v1791 = vunpack.c.l.b16 %v1724
  %v1792 = vunpack.c.h.b16 %v1724
  %v1793 = vunpack.c.l.b16 %v1725
  %v1794 = vunpack.c.h.b16 %v1725
  %v1795 = vunpack.c.l.b16 %v1726
  %v1796 = vunpack.c.h.b16 %v1726
  %v1797 = vunpack.c.l.b16 %v1727
  %v1798 = vunpack.c.h.b16 %v1727
  %v1799 = vunpack.c.l.b16 %v1728
  %v1800 = vunpack.c.h.b16 %v1728
  %v1801 = vunpack.c.l.b16 %v1729
  %v1802 = vunpack.c.h.b16 %v1729
  %v1803 = vunpack.c.l.b16 %v1730
  %v1804 = vunpack.c.h.b16 %v1730
  %v1805 = vunpack.c.l.b16 %v1731
  %v1806 = vunpack.c.h.b16 %v1731
  %v1807 = vunpack.c.l.b16 %v1732
  %v1808 = vunpack.c.h.b16 %v1732
  %v1809 = vunpack.c.l.b16 %v1733
  %v1810 = vunpack.c.h.b16 %v1733
  %v1811 = vunpack.c.l.b16 %v1734
  %v1812 = vunpack.c.h.b16 %v1734
  %v1813 = vunpack.c.l.b16 %v1735
  %v1814 = vunpack.c.h.b16 %v1735
  %v1815 = vunpack.c.l.b16 %v1736
  %v1816 = vunpack.c.h.b16 %v1736
  %v1817 = vunpack.c.l.b16 %v1737
  %v1818 = vunpack.c.h.b16 %v1737
  %v1819 = vunpack.c.l.b16 %v1738
  %v1820 = vunpack.c.h.b16 %v1738
  %v1821 = vunpack.c.l.b16 %v1739
  %v1822 = vunpack.c.h.b16 %v1739
  %v1823 = vunpack.c.l.b16 %v1740
  %v1824 = vunpack.c.h.b16 %v1740
  %v1825 = vunpack.c.l.b16 %v1741
  %v1826 = vunpack.c.h.b16 %v1741
  %v1827 = vunpack.c.l.b16 %v1742
  %v1828 = vunpack.c.h.b16 %v1742
  %v1829 = vunpack.c.l.b16 %v1743
  %v1830 = vunpack.c.h.b16 %v1743
  %v1831 = vunpack.c.l.b16 %v1744
  %v1832 = vunpack.c.h.b16 %v1744
  %v1833 = vunpack.c.l.b16 %v1745
  %v1834 = vunpack.c.h.b16 %v1745
  %v1835 = vunpack.c.l.b16 %v1746
  %v1836 = vunpack.c.h.b16 %v1746
  %v1837 = vunpack.c.l.b16 %v1747
  %v1838 = vunpack.c.h.b16 %v1747
  %v1839 = vunpack.c.l.b16 %v1748
  %v1840 = vunpack.c.h.b16 %v1748
  %v1841 = vunpack.c.l.b16 %v1749
  %v1842 = vunpack.c.h.b16 %v1749
  %v1843 = vunpack.c.l.b16 %v1750
  %v1844 = vunpack.c.h.b16 %v1750
  %v1845 = vunpack.c.l.b16 %v1751
  %v1846 = vunpack.c.h.b16 %v1751
  %v1847 = vunpack.c.l.b16 %v1752
  %v1848 = vunpack.c.h.b16 %v1752
  %v1849 = vpack.c.b16 %v1785, %v1785
  %v1850 = vpack.c.b16 %v1786, %v1786
  %v1851 = vpack.c.b16 %v1787, %v1787
  %v1852 = vpack.c.b16 %v1788, %v1788
  %v1853 = vpack.c.b16 %v1789, %v1789
  %v1854 = vpack.c.b16 %v1790, %v1790
  %v1855 = vpack.c.b16 %v1791, %v1791
  %v1856 = vpack.c.b16 %v1792, %v1792
  %v1857 = vpack.c.b16 %v1793, %v1793
  %v1858 = vpack.c.b16 %v1794, %v1794
  %v1859 = vpack.c.b16 %v1795, %v1795
  %v1860 = vpack.c.b16 %v1796, %v1796
  %v1861 = vpack.c.b16 %v1797, %v1797
  %v1862 = vpack.c.b16 %v1798, %v1798
  %v1863 = vpack.c.b16 %v1799, %v1799
  %v1864 = vpack.c.b16 %v1800, %v1800
  %v1865 = vpack.c.b16 %v1801, %v1801
  %v1866 = vpack.c.b16 %v1802, %v1802
  %v1867 = vpack.c.b16 %v1803, %v1803
  %v1868 = vpack.c.b16 %v1804, %v1804
  %v1869 = vpack.c.b16 %v1805, %v1805
  %v1870 = vpack.c.b16 %v1806, %v1806
  %v1871 = vpack.c.b16 %v1807, %v1807
  %v1872 = vpack.c.b16 %v1808, %v1808
  %v1873 = vpack.c.b16 %v1809, %v1809
  %v1874 = vpack.c.b16 %v1810, %v1810
  %v1875 = vpack.c.b16 %v1811, %v1811
  %v1876 = vpack.c.b16 %v1812, %v1812
  %v1877 = vpack.c.b16 %v1813, %v1813
  %v1878 = vpack.c.b16 %v1814, %v1814
  %v1879 = vpack.c.b16 %v1815, %v1815
  %v1880 = vpack.c.b16 %v1816, %v1816
  %v1881 = vpack.c.b16 %v1817, %v1817
  %v1882 = vpack.c.b16 %v1818, %v1818
  %v1883 = vpack.c.b16 %v1819, %v1819
  %v1884 = vpack.c.b16 %v1820, %v1820
  %v1885 = vpack.c.b16 %v1821, %v1821
  %v1886 = vpack.c.b16 %v1822, %v1822
  %v1887 = vpack.c.b16 %v1823, %v1823
  %v1888 = vpack.c.b16 %v1824, %v1824
  %v1889 = vpack.c.b16 %v1825, %v1825
  %v1890 = vpack.c.b16 %v1826, %v1826
  %v1891 = vpack.c.b16 %v1827, %v1827
  %v1892 = vpack.c.b16 %v1828, %v1828
  %v1893 = vpack.c.b16 %v1829, %v1829
  %v1894 = vpack.c.b16 %v1830, %v1830
  %v1895 = vpack.c.b16 %v1831, %v1831
  %v1896 = vpack.c.b16 %v1832, %v1832
  %v1897 = vpack.c.b16 %v1833, %v1833
  %v1898 = vpack.c.b16 %v1834, %v1834
  %v1899 = vpack.c.b16 %v1835, %v1835
  %v1900 = vpack.c.b16 %v1836, %v1836
  %v1901 = vpack.c.b16 %v1837, %v1837
  %v1902 = vpack.c.b16 %v1838, %v1838
  %v1903 = vpack.c.b16 %v1839, %v1839
  %v1904 = vpack.c.b16 %v1840, %v1840
  %v1905 = vpack.c.b16 %v1841, %v1841
  %v1906 = vpack.c.b16 %v1842, %v1842
  %v1907 = vpack.c.b16 %v1843, %v1843
  %v1908 = vpack.c.b16 %v1844, %v1844
  %v1909 = vpack.c.b16 %v1845, %v1845
  %v1910 = vpack.c.b16 %v1846, %v1846
  %v1911 = vpack.c.b16 %v1847, %v1847
  %v1912 = vpack.c.b16 %v1848, %v1848
  %1977 = vst.msk [vmem:[%s6] sm:$0xf] %vm1656, %v1849
  %1978 = vst.msk [vmem:[%s6 + $0x4] sm:$0xf] %vm1656, %v1850
  %1979 = vst.msk [vmem:[%s6 + $0x8] sm:$0xf] %vm1656, %v1851
  %1980 = vst.msk [vmem:[%s6 + $0xc] sm:$0xf] %vm1656, %v1852
  %1981 = vst.msk [vmem:[%s6 + $0x10] sm:$0xf] %vm1656, %v1853
  %1982 = vst.msk [vmem:[%s6 + $0x14] sm:$0xf] %vm1656, %v1854
  %1983 = vst.msk [vmem:[%s6 + $0x18] sm:$0xf] %vm1656, %v1855
  %1984 = vst.msk [vmem:[%s6 + $0x1c] sm:$0xf] %vm1656, %v1856
  %1985 = vst.msk [vmem:[%s6 + $0x20] sm:$0xf] %vm1656, %v1857
  %1986 = vst.msk [vmem:[%s6 + $0x24] sm:$0xf] %vm1656, %v1858
  %1987 = vst.msk [vmem:[%s6 + $0x28] sm:$0xf] %vm1656, %v1859
  %1988 = vst.msk [vmem:[%s6 + $0x2c] sm:$0xf] %vm1656, %v1860
  %1989 = vst.msk [vmem:[%s6 + $0x30] sm:$0xf] %vm1656, %v1861
  %1990 = vst.msk [vmem:[%s6 + $0x34] sm:$0xf] %vm1656, %v1862
  %1991 = vst.msk [vmem:[%s6 + $0x38] sm:$0xf] %vm1656, %v1863
  %1992 = vst.msk [vmem:[%s6 + $0x3c] sm:$0xf] %vm1656, %v1864
  %1993 = vst.msk [vmem:[%s6 + $0x40] sm:$0xf] %vm1656, %v1865
  %1994 = vst.msk [vmem:[%s6 + $0x44] sm:$0xf] %vm1656, %v1866
  %1995 = vst.msk [vmem:[%s6 + $0x48] sm:$0xf] %vm1656, %v1867
  %1996 = vst.msk [vmem:[%s6 + $0x4c] sm:$0xf] %vm1656, %v1868
  %1997 = vst.msk [vmem:[%s6 + $0x50] sm:$0xf] %vm1656, %v1869
  %1998 = vst.msk [vmem:[%s6 + $0x54] sm:$0xf] %vm1656, %v1870
  %1999 = vst.msk [vmem:[%s6 + $0x58] sm:$0xf] %vm1656, %v1871
  %2000 = vst.msk [vmem:[%s6 + $0x5c] sm:$0xf] %vm1656, %v1872
  %2001 = vst.msk [vmem:[%s6 + $0x60] sm:$0xf] %vm1656, %v1873
  %2002 = vst.msk [vmem:[%s6 + $0x64] sm:$0xf] %vm1656, %v1874
  %2003 = vst.msk [vmem:[%s6 + $0x68] sm:$0xf] %vm1656, %v1875
  %2004 = vst.msk [vmem:[%s6 + $0x6c] sm:$0xf] %vm1656, %v1876
  %2005 = vst.msk [vmem:[%s6 + $0x70] sm:$0xf] %vm1656, %v1877
  %2006 = vst.msk [vmem:[%s6 + $0x74] sm:$0xf] %vm1656, %v1878
  %2007 = vst.msk [vmem:[%s6 + $0x78] sm:$0xf] %vm1656, %v1879
  %2008 = vst.msk [vmem:[%s6 + $0x7c] sm:$0xf] %vm1656, %v1880
  %2009 = vst.msk [vmem:[%s6 + $0x80] sm:$0xf] %vm1656, %v1881
  %2010 = vst.msk [vmem:[%s6 + $0x84] sm:$0xf] %vm1656, %v1882
  %2011 = vst.msk [vmem:[%s6 + $0x88] sm:$0xf] %vm1656, %v1883
  %2012 = vst.msk [vmem:[%s6 + $0x8c] sm:$0xf] %vm1656, %v1884
  %2013 = vst.msk [vmem:[%s6 + $0x90] sm:$0xf] %vm1656, %v1885
  %2014 = vst.msk [vmem:[%s6 + $0x94] sm:$0xf] %vm1656, %v1886
  %2015 = vst.msk [vmem:[%s6 + $0x98] sm:$0xf] %vm1656, %v1887
  %2016 = vst.msk [vmem:[%s6 + $0x9c] sm:$0xf] %vm1656, %v1888
  %2017 = vst.msk [vmem:[%s6 + $0xa0] sm:$0xf] %vm1656, %v1889
  %2018 = vst.msk [vmem:[%s6 + $0xa4] sm:$0xf] %vm1656, %v1890
  %2019 = vst.msk [vmem:[%s6 + $0xa8] sm:$0xf] %vm1656, %v1891
  %2020 = vst.msk [vmem:[%s6 + $0xac] sm:$0xf] %vm1656, %v1892
  %2021 = vst.msk [vmem:[%s6 + $0xb0] sm:$0xf] %vm1656, %v1893
  %2022 = vst.msk [vmem:[%s6 + $0xb4] sm:$0xf] %vm1656, %v1894
  %2023 = vst.msk [vmem:[%s6 + $0xb8] sm:$0xf] %vm1656, %v1895
  %2024 = vst.msk [vmem:[%s6 + $0xbc] sm:$0xf] %vm1656, %v1896
  %2025 = vst.msk [vmem:[%s6 + $0xc0] sm:$0xf] %vm1656, %v1897
  %2026 = vst.msk [vmem:[%s6 + $0xc4] sm:$0xf] %vm1656, %v1898
  %2027 = vst.msk [vmem:[%s6 + $0xc8] sm:$0xf] %vm1656, %v1899
  %2028 = vst.msk [vmem:[%s6 + $0xcc] sm:$0xf] %vm1656, %v1900
  %2029 = vst.msk [vmem:[%s6 + $0xd0] sm:$0xf] %vm1656, %v1901
  %2030 = vst.msk [vmem:[%s6 + $0xd4] sm:$0xf] %vm1656, %v1902
  %2031 = vst.msk [vmem:[%s6 + $0xd8] sm:$0xf] %vm1656, %v1903
  %2032 = vst.msk [vmem:[%s6 + $0xdc] sm:$0xf] %vm1656, %v1904
  %2033 = vst.msk [vmem:[%s6 + $0xe0] sm:$0xf] %vm1656, %v1905
  %2034 = vst.msk [vmem:[%s6 + $0xe4] sm:$0xf] %vm1656, %v1906
  %2035 = vst.msk [vmem:[%s6 + $0xe8] sm:$0xf] %vm1656, %v1907
  %2036 = vst.msk [vmem:[%s6 + $0xec] sm:$0xf] %vm1656, %v1908
  %2037 = vst.msk [vmem:[%s6 + $0xf0] sm:$0xf] %vm1656, %v1909
  %2038 = vst.msk [vmem:[%s6 + $0xf4] sm:$0xf] %vm1656, %v1910
  %2039 = vst.msk [vmem:[%s6 + $0xf8] sm:$0xf] %vm1656, %v1911
  %2040 = vst.msk [vmem:[%s6 + $0xfc] sm:$0xf] %vm1656, %v1912
  %v2041 = vmul.f32 %v727, %v727
  %v2042 = vmul.f32 %v728, %v728
  %v2043 = vmul.f32 %v729, %v729
  %v2044 = vmul.f32 %v730, %v730
  %v2045 = vmul.f32 %v731, %v731
  %v2046 = vmul.f32 %v732, %v732
  %v2047 = vmul.f32 %v733, %v733
  %v2048 = vmul.f32 %v734, %v734
  %v2049 = vmul.f32 %v735, %v735
  %v2050 = vmul.f32 %v736, %v736
  %v2051 = vmul.f32 %v737, %v737
  %v2052 = vmul.f32 %v738, %v738
  %v2053 = vmul.f32 %v739, %v739
  %v2054 = vmul.f32 %v740, %v740
  %v2055 = vmul.f32 %v741, %v741
  %v2056 = vmul.f32 %v742, %v742
  %v2057 = vmul.f32 %v743, %v743
  %v2058 = vmul.f32 %v744, %v744
  %v2059 = vmul.f32 %v745, %v745
  %v2060 = vmul.f32 %v746, %v746
  %v2061 = vmul.f32 %v747, %v747
  %v2062 = vmul.f32 %v748, %v748
  %v2063 = vmul.f32 %v749, %v749
  %v2064 = vmul.f32 %v750, %v750
  %v2065 = vmul.f32 %v751, %v751
  %v2066 = vmul.f32 %v752, %v752
  %v2067 = vmul.f32 %v753, %v753
  %v2068 = vmul.f32 %v754, %v754
  %v2069 = vmul.f32 %v755, %v755
  %v2070 = vmul.f32 %v756, %v756
  %v2071 = vmul.f32 %v757, %v757
  %v2072 = vmul.f32 %v758, %v758
  %v2073 = vmul.f32 %v759, %v759
  %v2074 = vmul.f32 %v760, %v760
  %v2075 = vmul.f32 %v761, %v761
  %v2076 = vmul.f32 %v762, %v762
  %v2077 = vmul.f32 %v763, %v763
  %v2078 = vmul.f32 %v764, %v764
  %v2079 = vmul.f32 %v765, %v765
  %v2080 = vmul.f32 %v766, %v766
  %v2081 = vmul.f32 %v767, %v767
  %v2082 = vmul.f32 %v768, %v768
  %v2083 = vmul.f32 %v769, %v769
  %v2084 = vmul.f32 %v770, %v770
  %v2085 = vmul.f32 %v771, %v771
  %v2086 = vmul.f32 %v772, %v772
  %v2087 = vmul.f32 %v773, %v773
  %v2088 = vmul.f32 %v774, %v774
  %v2089 = vmul.f32 %v775, %v775
  %v2090 = vmul.f32 %v776, %v776
  %v2091 = vmul.f32 %v777, %v777
  %v2092 = vmul.f32 %v778, %v778
  %v2093 = vmul.f32 %v779, %v779
  %v2094 = vmul.f32 %v780, %v780
  %v2095 = vmul.f32 %v781, %v781
  %v2096 = vmul.f32 %v782, %v782
  %v2097 = vmul.f32 %v783, %v783
  %v2098 = vmul.f32 %v784, %v784
  %v2099 = vmul.f32 %v785, %v785
  %v2100 = vmul.f32 %v786, %v786
  %v2101 = vmul.f32 %v787, %v787
  %v2102 = vmul.f32 %v788, %v788
  %v2103 = vmul.f32 %v789, %v789
  %v2104 = vmul.f32 %v790, %v790
  %2105 = vmatprep.subr.mxu0 0.0
  %2106 = vmatpush1.msra.mxu0 1.0
  %2107 = vmatprep.subr.mxu0 0.0
  %2108 = vmatpush1.msra.mxu0 1.0
  %2109 = vmatprep.subr.mxu0 0.0
  %2110 = vmatpush1.msra.mxu0 1.0
  %2111 = vmatprep.subr.mxu0 0.0
  %2112 = vmatpush1.msra.mxu0 1.0
  %2113 = vmatprep.subr.mxu0 0.0
  %2114 = vmatpush1.msra.mxu0 1.0
  %2115 = vmatprep.subr.mxu0 0.0
  %2116 = vmatpush1.msra.mxu0 1.0
  %2117 = vmatprep.subr.mxu0 0.0
  %2118 = vmatpush1.msra.mxu0 1.0
  %2119 = vmatprep.subr.mxu0 0.0
  %2120 = vmatpush1.msra.mxu0 1.0
  %2121 = vmatprep.subr.mxu0 0.0
  %2122 = vmatpush1.msra.mxu0 1.0
  %2123 = vmatprep.subr.mxu0 0.0
  %2124 = vmatpush1.msra.mxu0 1.0
  %2125 = vmatprep.subr.mxu0 0.0
  %2126 = vmatpush1.msra.mxu0 1.0
  %2127 = vmatprep.subr.mxu0 0.0
  %2128 = vmatpush1.msra.mxu0 1.0
  %2129 = vmatprep.subr.mxu0 0.0
  %2130 = vmatpush1.msra.mxu0 1.0
  %2131 = vmatprep.subr.mxu0 0.0
  %2132 = vmatpush1.msra.mxu0 1.0
  %2133 = vmatprep.subr.mxu0 0.0
  %2134 = vmatpush1.msra.mxu0 1.0
  %2135 = vmatprep.subr.mxu0 0.0
  %2136 = vmatpush1.msra.mxu0 1.0
  %2137 = vmatprep.subr.mxu0 0.0
  %2138 = vmatpush2.msra.mxu0 0.0
  %2139 = vmatprep.subr.mxu0 0.0
  %2140 = vmatpush2.msra.mxu0 0.0
  %2141 = vmatprep.subr.mxu0 0.0
  %2142 = vmatpush2.msra.mxu0 0.0
  %2143 = vmatprep.subr.mxu0 0.0
  %2144 = vmatpush2.msra.mxu0 0.0
  %2145 = vmatprep.subr.mxu0 0.0
  %2146 = vmatpush2.msra.mxu0 0.0
  %2147 = vmatprep.subr.mxu0 0.0
  %2148 = vmatpush2.msra.mxu0 0.0
  %2149 = vmatprep.subr.mxu0 0.0
  %2150 = vmatpush2.msra.mxu0 0.0
  %2151 = vmatprep.subr.mxu0 0.0
  %2152 = vmatpush2.msra.mxu0 0.0
  %2153 = vmatprep.subr.mxu0 0.0
  %2154 = vmatpush2.msra.mxu0 0.0
  %2155 = vmatprep.subr.mxu0 0.0
  %2156 = vmatpush2.msra.mxu0 0.0
  %2157 = vmatprep.subr.mxu0 0.0
  %2158 = vmatpush2.msra.mxu0 0.0
  %2159 = vmatprep.subr.mxu0 0.0
  %2160 = vmatpush2.msra.mxu0 0.0
  %2161 = vmatprep.subr.mxu0 0.0
  %2162 = vmatpush2.msra.mxu0 0.0
  %2163 = vmatprep.subr.mxu0 0.0
  %2164 = vmatpush2.msra.mxu0 0.0
  %2165 = vmatprep.subr.mxu0 0.0
  %2166 = vmatpush2.msra.mxu0 0.0
  %2167 = vmatprep.subr.mxu0 0.0
  %2168 = vmatpush2.msra.mxu0 0.0
  %2169 = vmatprep.mubr.f32.mxu0 0.0
  %2170 = vmatmul.mubr.f32.gmra.mxu0 %v2041
  %v2171 = vpop.f32.mrf.mxu0
  %v2172 = vadd.f32 0.0, %v2171
  %v2173 = vpop.f32.mrf.mxu0
  %2174 = vmatprep.mubr.f32.mxu0 0.0
  %2175 = vmatmul.mubr.f32.gmra.mxu0 %v2042
  %v2176 = vpop.f32.mrf.mxu0
  %v2177 = vadd.f32 0.0, %v2176
  %v2178 = vpop.f32.mrf.mxu0
  %2179 = vmatprep.mubr.f32.mxu0 0.0
  %2180 = vmatmul.mubr.f32.gmra.mxu0 %v2043
  %v2181 = vpop.f32.mrf.mxu0
  %v2182 = vadd.f32 0.0, %v2181
  %v2183 = vpop.f32.mrf.mxu0
  %2184 = vmatprep.mubr.f32.mxu0 0.0
  %2185 = vmatmul.mubr.f32.gmra.mxu0 %v2044
  %v2186 = vpop.f32.mrf.mxu0
  %v2187 = vadd.f32 0.0, %v2186
  %v2188 = vpop.f32.mrf.mxu0
  %2189 = vmatprep.mubr.f32.mxu0 0.0
  %2190 = vmatmul.mubr.f32.gmra.mxu0 %v2045
  %v2191 = vpop.f32.mrf.mxu0
  %v2192 = vadd.f32 0.0, %v2191
  %v2193 = vpop.f32.mrf.mxu0
  %2194 = vmatprep.mubr.f32.mxu0 0.0
  %2195 = vmatmul.mubr.f32.gmra.mxu0 %v2046
  %v2196 = vpop.f32.mrf.mxu0
  %v2197 = vadd.f32 0.0, %v2196
  %v2198 = vpop.f32.mrf.mxu0
  %2199 = vmatprep.mubr.f32.mxu0 0.0
  %2200 = vmatmul.mubr.f32.gmra.mxu0 %v2047
  %v2201 = vpop.f32.mrf.mxu0
  %v2202 = vadd.f32 0.0, %v2201
  %v2203 = vpop.f32.mrf.mxu0
  %2204 = vmatprep.mubr.f32.mxu0 0.0
  %2205 = vmatmul.mubr.f32.gmra.mxu0 %v2048
  %v2206 = vpop.f32.mrf.mxu0
  %v2207 = vadd.f32 0.0, %v2206
  %v2208 = vpop.f32.mrf.mxu0
  %2209 = vmatprep.mubr.f32.mxu0 0.0
  %2210 = vmatmul.mubr.f32.gmra.mxu0 %v2049
  %v2211 = vpop.f32.mrf.mxu0
  %v2212 = vadd.f32 0.0, %v2211
  %v2213 = vpop.f32.mrf.mxu0
  %2214 = vmatprep.mubr.f32.mxu0 0.0
  %2215 = vmatmul.mubr.f32.gmra.mxu0 %v2050
  %v2216 = vpop.f32.mrf.mxu0
  %v2217 = vadd.f32 0.0, %v2216
  %v2218 = vpop.f32.mrf.mxu0
  %2219 = vmatprep.mubr.f32.mxu0 0.0
  %2220 = vmatmul.mubr.f32.gmra.mxu0 %v2051
  %v2221 = vpop.f32.mrf.mxu0
  %v2222 = vadd.f32 0.0, %v2221
  %v2223 = vpop.f32.mrf.mxu0
  %2224 = vmatprep.mubr.f32.mxu0 0.0
  %2225 = vmatmul.mubr.f32.gmra.mxu0 %v2052
  %v2226 = vpop.f32.mrf.mxu0
  %v2227 = vadd.f32 0.0, %v2226
  %v2228 = vpop.f32.mrf.mxu0
  %2229 = vmatprep.mubr.f32.mxu0 0.0
  %2230 = vmatmul.mubr.f32.gmra.mxu0 %v2053
  %v2231 = vpop.f32.mrf.mxu0
  %v2232 = vadd.f32 0.0, %v2231
  %v2233 = vpop.f32.mrf.mxu0
  %2234 = vmatprep.mubr.f32.mxu0 0.0
  %2235 = vmatmul.mubr.f32.gmra.mxu0 %v2054
  %v2236 = vpop.f32.mrf.mxu0
  %v2237 = vadd.f32 0.0, %v2236
  %v2238 = vpop.f32.mrf.mxu0
  %2239 = vmatprep.mubr.f32.mxu0 0.0
  %2240 = vmatmul.mubr.f32.gmra.mxu0 %v2055
  %v2241 = vpop.f32.mrf.mxu0
  %v2242 = vadd.f32 0.0, %v2241
  %v2243 = vpop.f32.mrf.mxu0
  %2244 = vmatprep.mubr.f32.mxu0 0.0
  %2245 = vmatmul.mubr.f32.gmra.mxu0 %v2056
  %v2246 = vpop.f32.mrf.mxu0
  %v2247 = vadd.f32 0.0, %v2246
  %v2248 = vpop.f32.mrf.mxu0
  %2249 = vmatprep.mubr.f32.mxu0 0.0
  %2250 = vmatmul.mubr.f32.gmra.mxu0 %v2057
  %v2251 = vpop.f32.mrf.mxu0
  %v2252 = vadd.f32 0.0, %v2251
  %v2253 = vpop.f32.mrf.mxu0
  %2254 = vmatprep.mubr.f32.mxu0 0.0
  %2255 = vmatmul.mubr.f32.gmra.mxu0 %v2058
  %v2256 = vpop.f32.mrf.mxu0
  %v2257 = vadd.f32 0.0, %v2256
  %v2258 = vpop.f32.mrf.mxu0
  %2259 = vmatprep.mubr.f32.mxu0 0.0
  %2260 = vmatmul.mubr.f32.gmra.mxu0 %v2059
  %v2261 = vpop.f32.mrf.mxu0
  %v2262 = vadd.f32 0.0, %v2261
  %v2263 = vpop.f32.mrf.mxu0
  %2264 = vmatprep.mubr.f32.mxu0 0.0
  %2265 = vmatmul.mubr.f32.gmra.mxu0 %v2060
  %v2266 = vpop.f32.mrf.mxu0
  %v2267 = vadd.f32 0.0, %v2266
  %v2268 = vpop.f32.mrf.mxu0
  %2269 = vmatprep.mubr.f32.mxu0 0.0
  %2270 = vmatmul.mubr.f32.gmra.mxu0 %v2061
  %v2271 = vpop.f32.mrf.mxu0
  %v2272 = vadd.f32 0.0, %v2271
  %v2273 = vpop.f32.mrf.mxu0
  %2274 = vmatprep.mubr.f32.mxu0 0.0
  %2275 = vmatmul.mubr.f32.gmra.mxu0 %v2062
  %v2276 = vpop.f32.mrf.mxu0
  %v2277 = vadd.f32 0.0, %v2276
  %v2278 = vpop.f32.mrf.mxu0
  %2279 = vmatprep.mubr.f32.mxu0 0.0
  %2280 = vmatmul.mubr.f32.gmra.mxu0 %v2063
  %v2281 = vpop.f32.mrf.mxu0
  %v2282 = vadd.f32 0.0, %v2281
  %v2283 = vpop.f32.mrf.mxu0
  %2284 = vmatprep.mubr.f32.mxu0 0.0
  %2285 = vmatmul.mubr.f32.gmra.mxu0 %v2064
  %v2286 = vpop.f32.mrf.mxu0
  %v2287 = vadd.f32 0.0, %v2286
  %v2288 = vpop.f32.mrf.mxu0
  %2289 = vmatprep.mubr.f32.mxu0 0.0
  %2290 = vmatmul.mubr.f32.gmra.mxu0 %v2065
  %v2291 = vpop.f32.mrf.mxu0
  %v2292 = vadd.f32 0.0, %v2291
  %v2293 = vpop.f32.mrf.mxu0
  %2294 = vmatprep.mubr.f32.mxu0 0.0
  %2295 = vmatmul.mubr.f32.gmra.mxu0 %v2066
  %v2296 = vpop.f32.mrf.mxu0
  %v2297 = vadd.f32 0.0, %v2296
  %v2298 = vpop.f32.mrf.mxu0
  %2299 = vmatprep.mubr.f32.mxu0 0.0
  %2300 = vmatmul.mubr.f32.gmra.mxu0 %v2067
  %v2301 = vpop.f32.mrf.mxu0
  %v2302 = vadd.f32 0.0, %v2301
  %v2303 = vpop.f32.mrf.mxu0
  %2304 = vmatprep.mubr.f32.mxu0 0.0
  %2305 = vmatmul.mubr.f32.gmra.mxu0 %v2068
  %v2306 = vpop.f32.mrf.mxu0
  %v2307 = vadd.f32 0.0, %v2306
  %v2308 = vpop.f32.mrf.mxu0
  %2309 = vmatprep.mubr.f32.mxu0 0.0
  %2310 = vmatmul.mubr.f32.gmra.mxu0 %v2069
  %v2311 = vpop.f32.mrf.mxu0
  %v2312 = vadd.f32 0.0, %v2311
  %v2313 = vpop.f32.mrf.mxu0
  %2314 = vmatprep.mubr.f32.mxu0 0.0
  %2315 = vmatmul.mubr.f32.gmra.mxu0 %v2070
  %v2316 = vpop.f32.mrf.mxu0
  %v2317 = vadd.f32 0.0, %v2316
  %v2318 = vpop.f32.mrf.mxu0
  %2319 = vmatprep.mubr.f32.mxu0 0.0
  %2320 = vmatmul.mubr.f32.gmra.mxu0 %v2071
  %v2321 = vpop.f32.mrf.mxu0
  %v2322 = vadd.f32 0.0, %v2321
  %v2323 = vpop.f32.mrf.mxu0
  %2324 = vmatprep.mubr.f32.mxu0 0.0
  %2325 = vmatmul.mubr.f32.gmra.mxu0 %v2072
  %v2326 = vpop.f32.mrf.mxu0
  %v2327 = vadd.f32 0.0, %v2326
  %v2328 = vpop.f32.mrf.mxu0
  %2329 = vmatprep.mubr.f32.mxu0 0.0
  %2330 = vmatmul.mubr.f32.gmra.mxu0 %v2073
  %v2331 = vpop.f32.mrf.mxu0
  %v2332 = vadd.f32 0.0, %v2331
  %v2333 = vpop.f32.mrf.mxu0
  %2334 = vmatprep.mubr.f32.mxu0 0.0
  %2335 = vmatmul.mubr.f32.gmra.mxu0 %v2074
  %v2336 = vpop.f32.mrf.mxu0
  %v2337 = vadd.f32 0.0, %v2336
  %v2338 = vpop.f32.mrf.mxu0
  %2339 = vmatprep.mubr.f32.mxu0 0.0
  %2340 = vmatmul.mubr.f32.gmra.mxu0 %v2075
  %v2341 = vpop.f32.mrf.mxu0
  %v2342 = vadd.f32 0.0, %v2341
  %v2343 = vpop.f32.mrf.mxu0
  %2344 = vmatprep.mubr.f32.mxu0 0.0
  %2345 = vmatmul.mubr.f32.gmra.mxu0 %v2076
  %v2346 = vpop.f32.mrf.mxu0
  %v2347 = vadd.f32 0.0, %v2346
  %v2348 = vpop.f32.mrf.mxu0
  %2349 = vmatprep.mubr.f32.mxu0 0.0
  %2350 = vmatmul.mubr.f32.gmra.mxu0 %v2077
  %v2351 = vpop.f32.mrf.mxu0
  %v2352 = vadd.f32 0.0, %v2351
  %v2353 = vpop.f32.mrf.mxu0
  %2354 = vmatprep.mubr.f32.mxu0 0.0
  %2355 = vmatmul.mubr.f32.gmra.mxu0 %v2078
  %v2356 = vpop.f32.mrf.mxu0
  %v2357 = vadd.f32 0.0, %v2356
  %v2358 = vpop.f32.mrf.mxu0
  %2359 = vmatprep.mubr.f32.mxu0 0.0
  %2360 = vmatmul.mubr.f32.gmra.mxu0 %v2079
  %v2361 = vpop.f32.mrf.mxu0
  %v2362 = vadd.f32 0.0, %v2361
  %v2363 = vpop.f32.mrf.mxu0
  %2364 = vmatprep.mubr.f32.mxu0 0.0
  %2365 = vmatmul.mubr.f32.gmra.mxu0 %v2080
  %v2366 = vpop.f32.mrf.mxu0
  %v2367 = vadd.f32 0.0, %v2366
  %v2368 = vpop.f32.mrf.mxu0
  %2369 = vmatprep.mubr.f32.mxu0 0.0
  %2370 = vmatmul.mubr.f32.gmra.mxu0 %v2081
  %v2371 = vpop.f32.mrf.mxu0
  %v2372 = vadd.f32 0.0, %v2371
  %v2373 = vpop.f32.mrf.mxu0
  %2374 = vmatprep.mubr.f32.mxu0 0.0
  %2375 = vmatmul.mubr.f32.gmra.mxu0 %v2082
  %v2376 = vpop.f32.mrf.mxu0
  %v2377 = vadd.f32 0.0, %v2376
  %v2378 = vpop.f32.mrf.mxu0
  %2379 = vmatprep.mubr.f32.mxu0 0.0
  %2380 = vmatmul.mubr.f32.gmra.mxu0 %v2083
  %v2381 = vpop.f32.mrf.mxu0
  %v2382 = vadd.f32 0.0, %v2381
  %v2383 = vpop.f32.mrf.mxu0
  %2384 = vmatprep.mubr.f32.mxu0 0.0
  %2385 = vmatmul.mubr.f32.gmra.mxu0 %v2084
  %v2386 = vpop.f32.mrf.mxu0
  %v2387 = vadd.f32 0.0, %v2386
  %v2388 = vpop.f32.mrf.mxu0
  %2389 = vmatprep.mubr.f32.mxu0 0.0
  %2390 = vmatmul.mubr.f32.gmra.mxu0 %v2085
  %v2391 = vpop.f32.mrf.mxu0
  %v2392 = vadd.f32 0.0, %v2391
  %v2393 = vpop.f32.mrf.mxu0
  %2394 = vmatprep.mubr.f32.mxu0 0.0
  %2395 = vmatmul.mubr.f32.gmra.mxu0 %v2086
  %v2396 = vpop.f32.mrf.mxu0
  %v2397 = vadd.f32 0.0, %v2396
  %v2398 = vpop.f32.mrf.mxu0
  %2399 = vmatprep.mubr.f32.mxu0 0.0
  %2400 = vmatmul.mubr.f32.gmra.mxu0 %v2087
  %v2401 = vpop.f32.mrf.mxu0
  %v2402 = vadd.f32 0.0, %v2401
  %v2403 = vpop.f32.mrf.mxu0
  %2404 = vmatprep.mubr.f32.mxu0 0.0
  %2405 = vmatmul.mubr.f32.gmra.mxu0 %v2088
  %v2406 = vpop.f32.mrf.mxu0
  %v2407 = vadd.f32 0.0, %v2406
  %v2408 = vpop.f32.mrf.mxu0
  %2409 = vmatprep.mubr.f32.mxu0 0.0
  %2410 = vmatmul.mubr.f32.gmra.mxu0 %v2089
  %v2411 = vpop.f32.mrf.mxu0
  %v2412 = vadd.f32 0.0, %v2411
  %v2413 = vpop.f32.mrf.mxu0
  %2414 = vmatprep.mubr.f32.mxu0 0.0
  %2415 = vmatmul.mubr.f32.gmra.mxu0 %v2090
  %v2416 = vpop.f32.mrf.mxu0
  %v2417 = vadd.f32 0.0, %v2416
  %v2418 = vpop.f32.mrf.mxu0
  %2419 = vmatprep.mubr.f32.mxu0 0.0
  %2420 = vmatmul.mubr.f32.gmra.mxu0 %v2091
  %v2421 = vpop.f32.mrf.mxu0
  %v2422 = vadd.f32 0.0, %v2421
  %v2423 = vpop.f32.mrf.mxu0
  %2424 = vmatprep.mubr.f32.mxu0 0.0
  %2425 = vmatmul.mubr.f32.gmra.mxu0 %v2092
  %v2426 = vpop.f32.mrf.mxu0
  %v2427 = vadd.f32 0.0, %v2426
  %v2428 = vpop.f32.mrf.mxu0
  %2429 = vmatprep.mubr.f32.mxu0 0.0
  %2430 = vmatmul.mubr.f32.gmra.mxu0 %v2093
  %v2431 = vpop.f32.mrf.mxu0
  %v2432 = vadd.f32 0.0, %v2431
  %v2433 = vpop.f32.mrf.mxu0
  %2434 = vmatprep.mubr.f32.mxu0 0.0
  %2435 = vmatmul.mubr.f32.gmra.mxu0 %v2094
  %v2436 = vpop.f32.mrf.mxu0
  %v2437 = vadd.f32 0.0, %v2436
  %v2438 = vpop.f32.mrf.mxu0
  %2439 = vmatprep.mubr.f32.mxu0 0.0
  %2440 = vmatmul.mubr.f32.gmra.mxu0 %v2095
  %v2441 = vpop.f32.mrf.mxu0
  %v2442 = vadd.f32 0.0, %v2441
  %v2443 = vpop.f32.mrf.mxu0
  %2444 = vmatprep.mubr.f32.mxu0 0.0
  %2445 = vmatmul.mubr.f32.gmra.mxu0 %v2096
  %v2446 = vpop.f32.mrf.mxu0
  %v2447 = vadd.f32 0.0, %v2446
  %v2448 = vpop.f32.mrf.mxu0
  %2449 = vmatprep.mubr.f32.mxu0 0.0
  %2450 = vmatmul.mubr.f32.gmra.mxu0 %v2097
  %v2451 = vpop.f32.mrf.mxu0
  %v2452 = vadd.f32 0.0, %v2451
  %v2453 = vpop.f32.mrf.mxu0
  %2454 = vmatprep.mubr.f32.mxu0 0.0
  %2455 = vmatmul.mubr.f32.gmra.mxu0 %v2098
  %v2456 = vpop.f32.mrf.mxu0
  %v2457 = vadd.f32 0.0, %v2456
  %v2458 = vpop.f32.mrf.mxu0
  %2459 = vmatprep.mubr.f32.mxu0 0.0
  %2460 = vmatmul.mubr.f32.gmra.mxu0 %v2099
  %v2461 = vpop.f32.mrf.mxu0
  %v2462 = vadd.f32 0.0, %v2461
  %v2463 = vpop.f32.mrf.mxu0
  %2464 = vmatprep.mubr.f32.mxu0 0.0
  %2465 = vmatmul.mubr.f32.gmra.mxu0 %v2100
  %v2466 = vpop.f32.mrf.mxu0
  %v2467 = vadd.f32 0.0, %v2466
  %v2468 = vpop.f32.mrf.mxu0
  %2469 = vmatprep.mubr.f32.mxu0 0.0
  %2470 = vmatmul.mubr.f32.gmra.mxu0 %v2101
  %v2471 = vpop.f32.mrf.mxu0
  %v2472 = vadd.f32 0.0, %v2471
  %v2473 = vpop.f32.mrf.mxu0
  %2474 = vmatprep.mubr.f32.mxu0 0.0
  %2475 = vmatmul.mubr.f32.gmra.mxu0 %v2102
  %v2476 = vpop.f32.mrf.mxu0
  %v2477 = vadd.f32 0.0, %v2476
  %v2478 = vpop.f32.mrf.mxu0
  %2479 = vmatprep.mubr.f32.mxu0 0.0
  %2480 = vmatmul.mubr.f32.gmra.mxu0 %v2103
  %v2481 = vpop.f32.mrf.mxu0
  %v2482 = vadd.f32 0.0, %v2481
  %v2483 = vpop.f32.mrf.mxu0
  %2484 = vmatprep.mubr.f32.mxu0 0.0
  %2485 = vmatmul.mubr.f32.gmra.mxu0 %v2104
  %v2486 = vpop.f32.mrf.mxu0
  %v2487 = vadd.f32 0.0, %v2486
  %v2488 = vpop.f32.mrf.mxu0
  %2489 = vdwg.mxu0
  %v2490 = vmul.f32 %v1336, %v1336
  %v2491 = vmul.f32 %v1337, %v1337
  %v2492 = vmul.f32 %v1338, %v1338
  %v2493 = vmul.f32 %v1339, %v1339
  %v2494 = vmul.f32 %v1340, %v1340
  %v2495 = vmul.f32 %v1341, %v1341
  %v2496 = vmul.f32 %v1342, %v1342
  %v2497 = vmul.f32 %v1343, %v1343
  %v2498 = vmul.f32 %v1344, %v1344
  %v2499 = vmul.f32 %v1345, %v1345
  %v2500 = vmul.f32 %v1346, %v1346
  %v2501 = vmul.f32 %v1347, %v1347
  %v2502 = vmul.f32 %v1348, %v1348
  %v2503 = vmul.f32 %v1349, %v1349
  %v2504 = vmul.f32 %v1350, %v1350
  %v2505 = vmul.f32 %v1351, %v1351
  %v2506 = vmul.f32 %v1352, %v1352
  %v2507 = vmul.f32 %v1353, %v1353
  %v2508 = vmul.f32 %v1354, %v1354
  %v2509 = vmul.f32 %v1355, %v1355
  %v2510 = vmul.f32 %v1356, %v1356
  %v2511 = vmul.f32 %v1357, %v1357
  %v2512 = vmul.f32 %v1358, %v1358
  %v2513 = vmul.f32 %v1359, %v1359
  %v2514 = vmul.f32 %v1360, %v1360
  %v2515 = vmul.f32 %v1361, %v1361
  %v2516 = vmul.f32 %v1362, %v1362
  %v2517 = vmul.f32 %v1363, %v1363
  %v2518 = vmul.f32 %v1364, %v1364
  %v2519 = vmul.f32 %v1365, %v1365
  %v2520 = vmul.f32 %v1366, %v1366
  %v2521 = vmul.f32 %v1367, %v1367
  %v2522 = vmul.f32 %v1368, %v1368
  %v2523 = vmul.f32 %v1369, %v1369
  %v2524 = vmul.f32 %v1370, %v1370
  %v2525 = vmul.f32 %v1371, %v1371
  %v2526 = vmul.f32 %v1372, %v1372
  %v2527 = vmul.f32 %v1373, %v1373
  %v2528 = vmul.f32 %v1374, %v1374
  %v2529 = vmul.f32 %v1375, %v1375
  %v2530 = vmul.f32 %v1376, %v1376
  %v2531 = vmul.f32 %v1377, %v1377
  %v2532 = vmul.f32 %v1378, %v1378
  %v2533 = vmul.f32 %v1379, %v1379
  %v2534 = vmul.f32 %v1380, %v1380
  %v2535 = vmul.f32 %v1381, %v1381
  %v2536 = vmul.f32 %v1382, %v1382
  %v2537 = vmul.f32 %v1383, %v1383
  %v2538 = vmul.f32 %v1384, %v1384
  %v2539 = vmul.f32 %v1385, %v1385
  %v2540 = vmul.f32 %v1386, %v1386
  %v2541 = vmul.f32 %v1387, %v1387
  %v2542 = vmul.f32 %v1388, %v1388
  %v2543 = vmul.f32 %v1389, %v1389
  %v2544 = vmul.f32 %v1390, %v1390
  %v2545 = vmul.f32 %v1391, %v1391
  %v2546 = vmul.f32 %v1392, %v1392
  %v2547 = vmul.f32 %v1393, %v1393
  %v2548 = vmul.f32 %v1394, %v1394
  %v2549 = vmul.f32 %v1395, %v1395
  %v2550 = vmul.f32 %v1396, %v1396
  %v2551 = vmul.f32 %v1397, %v1397
  %v2552 = vmul.f32 %v1398, %v1398
  %v2553 = vmul.f32 %v1399, %v1399
  %2554 = vmatprep.subr.mxu0 0.0
  %2555 = vmatpush1.msra.mxu0 1.0
  %2556 = vmatprep.subr.mxu0 0.0
  %2557 = vmatpush1.msra.mxu0 1.0
  %2558 = vmatprep.subr.mxu0 0.0
  %2559 = vmatpush1.msra.mxu0 1.0
  %2560 = vmatprep.subr.mxu0 0.0
  %2561 = vmatpush1.msra.mxu0 1.0
  %2562 = vmatprep.subr.mxu0 0.0
  %2563 = vmatpush1.msra.mxu0 1.0
  %2564 = vmatprep.subr.mxu0 0.0
  %2565 = vmatpush1.msra.mxu0 1.0
  %2566 = vmatprep.subr.mxu0 0.0
  %2567 = vmatpush1.msra.mxu0 1.0
  %2568 = vmatprep.subr.mxu0 0.0
  %2569 = vmatpush1.msra.mxu0 1.0
  %2570 = vmatprep.subr.mxu0 0.0
  %2571 = vmatpush1.msra.mxu0 1.0
  %2572 = vmatprep.subr.mxu0 0.0
  %2573 = vmatpush1.msra.mxu0 1.0
  %2574 = vmatprep.subr.mxu0 0.0
  %2575 = vmatpush1.msra.mxu0 1.0
  %2576 = vmatprep.subr.mxu0 0.0
  %2577 = vmatpush1.msra.mxu0 1.0
  %2578 = vmatprep.subr.mxu0 0.0
  %2579 = vmatpush1.msra.mxu0 1.0
  %2580 = vmatprep.subr.mxu0 0.0
  %2581 = vmatpush1.msra.mxu0 1.0
  %2582 = vmatprep.subr.mxu0 0.0
  %2583 = vmatpush1.msra.mxu0 1.0
  %2584 = vmatprep.subr.mxu0 0.0
  %2585 = vmatpush1.msra.mxu0 1.0
  %2586 = vmatprep.subr.mxu0 0.0
  %2587 = vmatpush2.msra.mxu0 0.0
  %2588 = vmatprep.subr.mxu0 0.0
  %2589 = vmatpush2.msra.mxu0 0.0
  %2590 = vmatprep.subr.mxu0 0.0
  %2591 = vmatpush2.msra.mxu0 0.0
  %2592 = vmatprep.subr.mxu0 0.0
  %2593 = vmatpush2.msra.mxu0 0.0
  %2594 = vmatprep.subr.mxu0 0.0
  %2595 = vmatpush2.msra.mxu0 0.0
  %2596 = vmatprep.subr.mxu0 0.0
  %2597 = vmatpush2.msra.mxu0 0.0
  %2598 = vmatprep.subr.mxu0 0.0
  %2599 = vmatpush2.msra.mxu0 0.0
  %2600 = vmatprep.subr.mxu0 0.0
  %2601 = vmatpush2.msra.mxu0 0.0
  %2602 = vmatprep.subr.mxu0 0.0
  %2603 = vmatpush2.msra.mxu0 0.0
  %2604 = vmatprep.subr.mxu0 0.0
  %2605 = vmatpush2.msra.mxu0 0.0
  %2606 = vmatprep.subr.mxu0 0.0
  %2607 = vmatpush2.msra.mxu0 0.0
  %2608 = vmatprep.subr.mxu0 0.0
  %2609 = vmatpush2.msra.mxu0 0.0
  %2610 = vmatprep.subr.mxu0 0.0
  %2611 = vmatpush2.msra.mxu0 0.0
  %2612 = vmatprep.subr.mxu0 0.0
  %2613 = vmatpush2.msra.mxu0 0.0
  %2614 = vmatprep.subr.mxu0 0.0
  %2615 = vmatpush2.msra.mxu0 0.0
  %2616 = vmatprep.subr.mxu0 0.0
  %2617 = vmatpush2.msra.mxu0 0.0
  %2618 = vmatprep.mubr.f32.mxu0 0.0
  %2619 = vmatmul.mubr.f32.gmra.mxu0 %v2490
  %v2620 = vpop.f32.mrf.mxu0
  %v2621 = vadd.f32 0.0, %v2620
  %v2622 = vpop.f32.mrf.mxu0
  %2623 = vmatprep.mubr.f32.mxu0 0.0
  %2624 = vmatmul.mubr.f32.gmra.mxu0 %v2491
  %v2625 = vpop.f32.mrf.mxu0
  %v2626 = vadd.f32 0.0, %v2625
  %v2627 = vpop.f32.mrf.mxu0
  %2628 = vmatprep.mubr.f32.mxu0 0.0
  %2629 = vmatmul.mubr.f32.gmra.mxu0 %v2492
  %v2630 = vpop.f32.mrf.mxu0
  %v2631 = vadd.f32 0.0, %v2630
  %v2632 = vpop.f32.mrf.mxu0
  %2633 = vmatprep.mubr.f32.mxu0 0.0
  %2634 = vmatmul.mubr.f32.gmra.mxu0 %v2493
  %v2635 = vpop.f32.mrf.mxu0
  %v2636 = vadd.f32 0.0, %v2635
  %v2637 = vpop.f32.mrf.mxu0
  %2638 = vmatprep.mubr.f32.mxu0 0.0
  %2639 = vmatmul.mubr.f32.gmra.mxu0 %v2494
  %v2640 = vpop.f32.mrf.mxu0
  %v2641 = vadd.f32 0.0, %v2640
  %v2642 = vpop.f32.mrf.mxu0
  %2643 = vmatprep.mubr.f32.mxu0 0.0
  %2644 = vmatmul.mubr.f32.gmra.mxu0 %v2495
  %v2645 = vpop.f32.mrf.mxu0
  %v2646 = vadd.f32 0.0, %v2645
  %v2647 = vpop.f32.mrf.mxu0
  %2648 = vmatprep.mubr.f32.mxu0 0.0
  %2649 = vmatmul.mubr.f32.gmra.mxu0 %v2496
  %v2650 = vpop.f32.mrf.mxu0
  %v2651 = vadd.f32 0.0, %v2650
  %v2652 = vpop.f32.mrf.mxu0
  %2653 = vmatprep.mubr.f32.mxu0 0.0
  %2654 = vmatmul.mubr.f32.gmra.mxu0 %v2497
  %v2655 = vpop.f32.mrf.mxu0
  %v2656 = vadd.f32 0.0, %v2655
  %v2657 = vpop.f32.mrf.mxu0
  %2658 = vmatprep.mubr.f32.mxu0 0.0
  %2659 = vmatmul.mubr.f32.gmra.mxu0 %v2498
  %v2660 = vpop.f32.mrf.mxu0
  %v2661 = vadd.f32 0.0, %v2660
  %v2662 = vpop.f32.mrf.mxu0
  %2663 = vmatprep.mubr.f32.mxu0 0.0
  %2664 = vmatmul.mubr.f32.gmra.mxu0 %v2499
  %v2665 = vpop.f32.mrf.mxu0
  %v2666 = vadd.f32 0.0, %v2665
  %v2667 = vpop.f32.mrf.mxu0
  %2668 = vmatprep.mubr.f32.mxu0 0.0
  %2669 = vmatmul.mubr.f32.gmra.mxu0 %v2500
  %v2670 = vpop.f32.mrf.mxu0
  %v2671 = vadd.f32 0.0, %v2670
  %v2672 = vpop.f32.mrf.mxu0
  %2673 = vmatprep.mubr.f32.mxu0 0.0
  %2674 = vmatmul.mubr.f32.gmra.mxu0 %v2501
  %v2675 = vpop.f32.mrf.mxu0
  %v2676 = vadd.f32 0.0, %v2675
  %v2677 = vpop.f32.mrf.mxu0
  %2678 = vmatprep.mubr.f32.mxu0 0.0
  %2679 = vmatmul.mubr.f32.gmra.mxu0 %v2502
  %v2680 = vpop.f32.mrf.mxu0
  %v2681 = vadd.f32 0.0, %v2680
  %v2682 = vpop.f32.mrf.mxu0
  %2683 = vmatprep.mubr.f32.mxu0 0.0
  %2684 = vmatmul.mubr.f32.gmra.mxu0 %v2503
  %v2685 = vpop.f32.mrf.mxu0
  %v2686 = vadd.f32 0.0, %v2685
  %v2687 = vpop.f32.mrf.mxu0
  %2688 = vmatprep.mubr.f32.mxu0 0.0
  %2689 = vmatmul.mubr.f32.gmra.mxu0 %v2504
  %v2690 = vpop.f32.mrf.mxu0
  %v2691 = vadd.f32 0.0, %v2690
  %v2692 = vpop.f32.mrf.mxu0
  %2693 = vmatprep.mubr.f32.mxu0 0.0
  %2694 = vmatmul.mubr.f32.gmra.mxu0 %v2505
  %v2695 = vpop.f32.mrf.mxu0
  %v2696 = vadd.f32 0.0, %v2695
  %v2697 = vpop.f32.mrf.mxu0
  %2698 = vmatprep.mubr.f32.mxu0 0.0
  %2699 = vmatmul.mubr.f32.gmra.mxu0 %v2506
  %v2700 = vpop.f32.mrf.mxu0
  %v2701 = vadd.f32 0.0, %v2700
  %v2702 = vpop.f32.mrf.mxu0
  %2703 = vmatprep.mubr.f32.mxu0 0.0
  %2704 = vmatmul.mubr.f32.gmra.mxu0 %v2507
  %v2705 = vpop.f32.mrf.mxu0
  %v2706 = vadd.f32 0.0, %v2705
  %v2707 = vpop.f32.mrf.mxu0
  %2708 = vmatprep.mubr.f32.mxu0 0.0
  %2709 = vmatmul.mubr.f32.gmra.mxu0 %v2508
  %v2710 = vpop.f32.mrf.mxu0
  %v2711 = vadd.f32 0.0, %v2710
  %v2712 = vpop.f32.mrf.mxu0
  %2713 = vmatprep.mubr.f32.mxu0 0.0
  %2714 = vmatmul.mubr.f32.gmra.mxu0 %v2509
  %v2715 = vpop.f32.mrf.mxu0
  %v2716 = vadd.f32 0.0, %v2715
  %v2717 = vpop.f32.mrf.mxu0
  %2718 = vmatprep.mubr.f32.mxu0 0.0
  %2719 = vmatmul.mubr.f32.gmra.mxu0 %v2510
  %v2720 = vpop.f32.mrf.mxu0
  %v2721 = vadd.f32 0.0, %v2720
  %v2722 = vpop.f32.mrf.mxu0
  %2723 = vmatprep.mubr.f32.mxu0 0.0
  %2724 = vmatmul.mubr.f32.gmra.mxu0 %v2511
  %v2725 = vpop.f32.mrf.mxu0
  %v2726 = vadd.f32 0.0, %v2725
  %v2727 = vpop.f32.mrf.mxu0
  %2728 = vmatprep.mubr.f32.mxu0 0.0
  %2729 = vmatmul.mubr.f32.gmra.mxu0 %v2512
  %v2730 = vpop.f32.mrf.mxu0
  %v2731 = vadd.f32 0.0, %v2730
  %v2732 = vpop.f32.mrf.mxu0
  %2733 = vmatprep.mubr.f32.mxu0 0.0
  %2734 = vmatmul.mubr.f32.gmra.mxu0 %v2513
  %v2735 = vpop.f32.mrf.mxu0
  %v2736 = vadd.f32 0.0, %v2735
  %v2737 = vpop.f32.mrf.mxu0
  %2738 = vmatprep.mubr.f32.mxu0 0.0
  %2739 = vmatmul.mubr.f32.gmra.mxu0 %v2514
  %v2740 = vpop.f32.mrf.mxu0
  %v2741 = vadd.f32 0.0, %v2740
  %v2742 = vpop.f32.mrf.mxu0
  %2743 = vmatprep.mubr.f32.mxu0 0.0
  %2744 = vmatmul.mubr.f32.gmra.mxu0 %v2515
  %v2745 = vpop.f32.mrf.mxu0
  %v2746 = vadd.f32 0.0, %v2745
  %v2747 = vpop.f32.mrf.mxu0
  %2748 = vmatprep.mubr.f32.mxu0 0.0
  %2749 = vmatmul.mubr.f32.gmra.mxu0 %v2516
  %v2750 = vpop.f32.mrf.mxu0
  %v2751 = vadd.f32 0.0, %v2750
  %v2752 = vpop.f32.mrf.mxu0
  %2753 = vmatprep.mubr.f32.mxu0 0.0
  %2754 = vmatmul.mubr.f32.gmra.mxu0 %v2517
  %v2755 = vpop.f32.mrf.mxu0
  %v2756 = vadd.f32 0.0, %v2755
  %v2757 = vpop.f32.mrf.mxu0
  %2758 = vmatprep.mubr.f32.mxu0 0.0
  %2759 = vmatmul.mubr.f32.gmra.mxu0 %v2518
  %v2760 = vpop.f32.mrf.mxu0
  %v2761 = vadd.f32 0.0, %v2760
  %v2762 = vpop.f32.mrf.mxu0
  %2763 = vmatprep.mubr.f32.mxu0 0.0
  %2764 = vmatmul.mubr.f32.gmra.mxu0 %v2519
  %v2765 = vpop.f32.mrf.mxu0
  %v2766 = vadd.f32 0.0, %v2765
  %v2767 = vpop.f32.mrf.mxu0
  %2768 = vmatprep.mubr.f32.mxu0 0.0
  %2769 = vmatmul.mubr.f32.gmra.mxu0 %v2520
  %v2770 = vpop.f32.mrf.mxu0
  %v2771 = vadd.f32 0.0, %v2770
  %v2772 = vpop.f32.mrf.mxu0
  %2773 = vmatprep.mubr.f32.mxu0 0.0
  %2774 = vmatmul.mubr.f32.gmra.mxu0 %v2521
  %v2775 = vpop.f32.mrf.mxu0
  %v2776 = vadd.f32 0.0, %v2775
  %v2777 = vpop.f32.mrf.mxu0
  %2778 = vmatprep.mubr.f32.mxu0 0.0
  %2779 = vmatmul.mubr.f32.gmra.mxu0 %v2522
  %v2780 = vpop.f32.mrf.mxu0
  %v2781 = vadd.f32 0.0, %v2780
  %v2782 = vpop.f32.mrf.mxu0
  %2783 = vmatprep.mubr.f32.mxu0 0.0
  %2784 = vmatmul.mubr.f32.gmra.mxu0 %v2523
  %v2785 = vpop.f32.mrf.mxu0
  %v2786 = vadd.f32 0.0, %v2785
  %v2787 = vpop.f32.mrf.mxu0
  %2788 = vmatprep.mubr.f32.mxu0 0.0
  %2789 = vmatmul.mubr.f32.gmra.mxu0 %v2524
  %v2790 = vpop.f32.mrf.mxu0
  %v2791 = vadd.f32 0.0, %v2790
  %v2792 = vpop.f32.mrf.mxu0
  %2793 = vmatprep.mubr.f32.mxu0 0.0
  %2794 = vmatmul.mubr.f32.gmra.mxu0 %v2525
  %v2795 = vpop.f32.mrf.mxu0
  %v2796 = vadd.f32 0.0, %v2795
  %v2797 = vpop.f32.mrf.mxu0
  %2798 = vmatprep.mubr.f32.mxu0 0.0
  %2799 = vmatmul.mubr.f32.gmra.mxu0 %v2526
  %v2800 = vpop.f32.mrf.mxu0
  %v2801 = vadd.f32 0.0, %v2800
  %v2802 = vpop.f32.mrf.mxu0
  %2803 = vmatprep.mubr.f32.mxu0 0.0
  %2804 = vmatmul.mubr.f32.gmra.mxu0 %v2527
  %v2805 = vpop.f32.mrf.mxu0
  %v2806 = vadd.f32 0.0, %v2805
  %v2807 = vpop.f32.mrf.mxu0
  %2808 = vmatprep.mubr.f32.mxu0 0.0
  %2809 = vmatmul.mubr.f32.gmra.mxu0 %v2528
  %v2810 = vpop.f32.mrf.mxu0
  %v2811 = vadd.f32 0.0, %v2810
  %v2812 = vpop.f32.mrf.mxu0
  %2813 = vmatprep.mubr.f32.mxu0 0.0
  %2814 = vmatmul.mubr.f32.gmra.mxu0 %v2529
  %v2815 = vpop.f32.mrf.mxu0
  %v2816 = vadd.f32 0.0, %v2815
  %v2817 = vpop.f32.mrf.mxu0
  %2818 = vmatprep.mubr.f32.mxu0 0.0
  %2819 = vmatmul.mubr.f32.gmra.mxu0 %v2530
  %v2820 = vpop.f32.mrf.mxu0
  %v2821 = vadd.f32 0.0, %v2820
  %v2822 = vpop.f32.mrf.mxu0
  %2823 = vmatprep.mubr.f32.mxu0 0.0
  %2824 = vmatmul.mubr.f32.gmra.mxu0 %v2531
  %v2825 = vpop.f32.mrf.mxu0
  %v2826 = vadd.f32 0.0, %v2825
  %v2827 = vpop.f32.mrf.mxu0
  %2828 = vmatprep.mubr.f32.mxu0 0.0
  %2829 = vmatmul.mubr.f32.gmra.mxu0 %v2532
  %v2830 = vpop.f32.mrf.mxu0
  %v2831 = vadd.f32 0.0, %v2830
  %v2832 = vpop.f32.mrf.mxu0
  %2833 = vmatprep.mubr.f32.mxu0 0.0
  %2834 = vmatmul.mubr.f32.gmra.mxu0 %v2533
  %v2835 = vpop.f32.mrf.mxu0
  %v2836 = vadd.f32 0.0, %v2835
  %v2837 = vpop.f32.mrf.mxu0
  %2838 = vmatprep.mubr.f32.mxu0 0.0
  %2839 = vmatmul.mubr.f32.gmra.mxu0 %v2534
  %v2840 = vpop.f32.mrf.mxu0
  %v2841 = vadd.f32 0.0, %v2840
  %v2842 = vpop.f32.mrf.mxu0
  %2843 = vmatprep.mubr.f32.mxu0 0.0
  %2844 = vmatmul.mubr.f32.gmra.mxu0 %v2535
  %v2845 = vpop.f32.mrf.mxu0
  %v2846 = vadd.f32 0.0, %v2845
  %v2847 = vpop.f32.mrf.mxu0
  %2848 = vmatprep.mubr.f32.mxu0 0.0
  %2849 = vmatmul.mubr.f32.gmra.mxu0 %v2536
  %v2850 = vpop.f32.mrf.mxu0
  %v2851 = vadd.f32 0.0, %v2850
  %v2852 = vpop.f32.mrf.mxu0
  %2853 = vmatprep.mubr.f32.mxu0 0.0
  %2854 = vmatmul.mubr.f32.gmra.mxu0 %v2537
  %v2855 = vpop.f32.mrf.mxu0
  %v2856 = vadd.f32 0.0, %v2855
  %v2857 = vpop.f32.mrf.mxu0
  %2858 = vmatprep.mubr.f32.mxu0 0.0
  %2859 = vmatmul.mubr.f32.gmra.mxu0 %v2538
  %v2860 = vpop.f32.mrf.mxu0
  %v2861 = vadd.f32 0.0, %v2860
  %v2862 = vpop.f32.mrf.mxu0
  %2863 = vmatprep.mubr.f32.mxu0 0.0
  %2864 = vmatmul.mubr.f32.gmra.mxu0 %v2539
  %v2865 = vpop.f32.mrf.mxu0
  %v2866 = vadd.f32 0.0, %v2865
  %v2867 = vpop.f32.mrf.mxu0
  %2868 = vmatprep.mubr.f32.mxu0 0.0
  %2869 = vmatmul.mubr.f32.gmra.mxu0 %v2540
  %v2870 = vpop.f32.mrf.mxu0
  %v2871 = vadd.f32 0.0, %v2870
  %v2872 = vpop.f32.mrf.mxu0
  %2873 = vmatprep.mubr.f32.mxu0 0.0
  %2874 = vmatmul.mubr.f32.gmra.mxu0 %v2541
  %v2875 = vpop.f32.mrf.mxu0
  %v2876 = vadd.f32 0.0, %v2875
  %v2877 = vpop.f32.mrf.mxu0
  %2878 = vmatprep.mubr.f32.mxu0 0.0
  %2879 = vmatmul.mubr.f32.gmra.mxu0 %v2542
  %v2880 = vpop.f32.mrf.mxu0
  %v2881 = vadd.f32 0.0, %v2880
  %v2882 = vpop.f32.mrf.mxu0
  %2883 = vmatprep.mubr.f32.mxu0 0.0
  %2884 = vmatmul.mubr.f32.gmra.mxu0 %v2543
  %v2885 = vpop.f32.mrf.mxu0
  %v2886 = vadd.f32 0.0, %v2885
  %v2887 = vpop.f32.mrf.mxu0
  %2888 = vmatprep.mubr.f32.mxu0 0.0
  %2889 = vmatmul.mubr.f32.gmra.mxu0 %v2544
  %v2890 = vpop.f32.mrf.mxu0
  %v2891 = vadd.f32 0.0, %v2890
  %v2892 = vpop.f32.mrf.mxu0
  %2893 = vmatprep.mubr.f32.mxu0 0.0
  %2894 = vmatmul.mubr.f32.gmra.mxu0 %v2545
  %v2895 = vpop.f32.mrf.mxu0
  %v2896 = vadd.f32 0.0, %v2895
  %v2897 = vpop.f32.mrf.mxu0
  %2898 = vmatprep.mubr.f32.mxu0 0.0
  %2899 = vmatmul.mubr.f32.gmra.mxu0 %v2546
  %v2900 = vpop.f32.mrf.mxu0
  %v2901 = vadd.f32 0.0, %v2900
  %v2902 = vpop.f32.mrf.mxu0
  %2903 = vmatprep.mubr.f32.mxu0 0.0
  %2904 = vmatmul.mubr.f32.gmra.mxu0 %v2547
  %v2905 = vpop.f32.mrf.mxu0
  %v2906 = vadd.f32 0.0, %v2905
  %v2907 = vpop.f32.mrf.mxu0
  %2908 = vmatprep.mubr.f32.mxu0 0.0
  %2909 = vmatmul.mubr.f32.gmra.mxu0 %v2548
  %v2910 = vpop.f32.mrf.mxu0
  %v2911 = vadd.f32 0.0, %v2910
  %v2912 = vpop.f32.mrf.mxu0
  %2913 = vmatprep.mubr.f32.mxu0 0.0
  %2914 = vmatmul.mubr.f32.gmra.mxu0 %v2549
  %v2915 = vpop.f32.mrf.mxu0
  %v2916 = vadd.f32 0.0, %v2915
  %v2917 = vpop.f32.mrf.mxu0
  %2918 = vmatprep.mubr.f32.mxu0 0.0
  %2919 = vmatmul.mubr.f32.gmra.mxu0 %v2550
  %v2920 = vpop.f32.mrf.mxu0
  %v2921 = vadd.f32 0.0, %v2920
  %v2922 = vpop.f32.mrf.mxu0
  %2923 = vmatprep.mubr.f32.mxu0 0.0
  %2924 = vmatmul.mubr.f32.gmra.mxu0 %v2551
  %v2925 = vpop.f32.mrf.mxu0
  %v2926 = vadd.f32 0.0, %v2925
  %v2927 = vpop.f32.mrf.mxu0
  %2928 = vmatprep.mubr.f32.mxu0 0.0
  %2929 = vmatmul.mubr.f32.gmra.mxu0 %v2552
  %v2930 = vpop.f32.mrf.mxu0
  %v2931 = vadd.f32 0.0, %v2930
  %v2932 = vpop.f32.mrf.mxu0
  %2933 = vmatprep.mubr.f32.mxu0 0.0
  %2934 = vmatmul.mubr.f32.gmra.mxu0 %v2553
  %v2935 = vpop.f32.mrf.mxu0
  %v2936 = vadd.f32 0.0, %v2935
  %v2937 = vpop.f32.mrf.mxu0
  %2938 = vdwg.mxu0
  %v2939 = vrsqrt.pop %v2172
  %v2940 = vmul.f32 %v2172, %v2939
  %vm2941 = vcmp.eq.f32.partialorder %v2172, inf
  %v2942 = vsel %vm2941, %v2172, %v2940
  %vm2943 = vcmp.eq.f32.partialorder %v2172, 0.0
  %v2944 = vand.u32 %v2172, 2147483648
  %v2945 = vsel %vm2943, %v2944, %v2942
  %v2946 = vrsqrt.pop %v2177
  %v2947 = vmul.f32 %v2177, %v2946
  %vm2948 = vcmp.eq.f32.partialorder %v2177, inf
  %v2949 = vsel %vm2948, %v2177, %v2947
  %vm2950 = vcmp.eq.f32.partialorder %v2177, 0.0
  %v2951 = vand.u32 %v2177, 2147483648
  %v2952 = vsel %vm2950, %v2951, %v2949
  %v2953 = vrsqrt.pop %v2182
  %v2954 = vmul.f32 %v2182, %v2953
  %vm2955 = vcmp.eq.f32.partialorder %v2182, inf
  %v2956 = vsel %vm2955, %v2182, %v2954
  %vm2957 = vcmp.eq.f32.partialorder %v2182, 0.0
  %v2958 = vand.u32 %v2182, 2147483648
  %v2959 = vsel %vm2957, %v2958, %v2956
  %v2960 = vrsqrt.pop %v2187
  %v2961 = vmul.f32 %v2187, %v2960
  %vm2962 = vcmp.eq.f32.partialorder %v2187, inf
  %v2963 = vsel %vm2962, %v2187, %v2961
  %vm2964 = vcmp.eq.f32.partialorder %v2187, 0.0
  %v2965 = vand.u32 %v2187, 2147483648
  %v2966 = vsel %vm2964, %v2965, %v2963
  %v2967 = vrsqrt.pop %v2192
  %v2968 = vmul.f32 %v2192, %v2967
  %vm2969 = vcmp.eq.f32.partialorder %v2192, inf
  %v2970 = vsel %vm2969, %v2192, %v2968
  %vm2971 = vcmp.eq.f32.partialorder %v2192, 0.0
  %v2972 = vand.u32 %v2192, 2147483648
  %v2973 = vsel %vm2971, %v2972, %v2970
  %v2974 = vrsqrt.pop %v2197
  %v2975 = vmul.f32 %v2197, %v2974
  %vm2976 = vcmp.eq.f32.partialorder %v2197, inf
  %v2977 = vsel %vm2976, %v2197, %v2975
  %vm2978 = vcmp.eq.f32.partialorder %v2197, 0.0
  %v2979 = vand.u32 %v2197, 2147483648
  %v2980 = vsel %vm2978, %v2979, %v2977
  %v2981 = vrsqrt.pop %v2202
  %v2982 = vmul.f32 %v2202, %v2981
  %vm2983 = vcmp.eq.f32.partialorder %v2202, inf
  %v2984 = vsel %vm2983, %v2202, %v2982
  %vm2985 = vcmp.eq.f32.partialorder %v2202, 0.0
  %v2986 = vand.u32 %v2202, 2147483648
  %v2987 = vsel %vm2985, %v2986, %v2984
  %v2988 = vrsqrt.pop %v2207
  %v2989 = vmul.f32 %v2207, %v2988
  %vm2990 = vcmp.eq.f32.partialorder %v2207, inf
  %v2991 = vsel %vm2990, %v2207, %v2989
  %vm2992 = vcmp.eq.f32.partialorder %v2207, 0.0
  %v2993 = vand.u32 %v2207, 2147483648
  %v2994 = vsel %vm2992, %v2993, %v2991
  %v2995 = vrsqrt.pop %v2212
  %v2996 = vmul.f32 %v2212, %v2995
  %vm2997 = vcmp.eq.f32.partialorder %v2212, inf
  %v2998 = vsel %vm2997, %v2212, %v2996
  %vm2999 = vcmp.eq.f32.partialorder %v2212, 0.0
  %v3000 = vand.u32 %v2212, 2147483648
  %v3001 = vsel %vm2999, %v3000, %v2998
  %v3002 = vrsqrt.pop %v2217
  %v3003 = vmul.f32 %v2217, %v3002
  %vm3004 = vcmp.eq.f32.partialorder %v2217, inf
  %v3005 = vsel %vm3004, %v2217, %v3003
  %vm3006 = vcmp.eq.f32.partialorder %v2217, 0.0
  %v3007 = vand.u32 %v2217, 2147483648
  %v3008 = vsel %vm3006, %v3007, %v3005
  %v3009 = vrsqrt.pop %v2222
  %v3010 = vmul.f32 %v2222, %v3009
  %vm3011 = vcmp.eq.f32.partialorder %v2222, inf
  %v3012 = vsel %vm3011, %v2222, %v3010
  %vm3013 = vcmp.eq.f32.partialorder %v2222, 0.0
  %v3014 = vand.u32 %v2222, 2147483648
  %v3015 = vsel %vm3013, %v3014, %v3012
  %v3016 = vrsqrt.pop %v2227
  %v3017 = vmul.f32 %v2227, %v3016
  %vm3018 = vcmp.eq.f32.partialorder %v2227, inf
  %v3019 = vsel %vm3018, %v2227, %v3017
  %vm3020 = vcmp.eq.f32.partialorder %v2227, 0.0
  %v3021 = vand.u32 %v2227, 2147483648
  %v3022 = vsel %vm3020, %v3021, %v3019
  %v3023 = vrsqrt.pop %v2232
  %v3024 = vmul.f32 %v2232, %v3023
  %vm3025 = vcmp.eq.f32.partialorder %v2232, inf
  %v3026 = vsel %vm3025, %v2232, %v3024
  %vm3027 = vcmp.eq.f32.partialorder %v2232, 0.0
  %v3028 = vand.u32 %v2232, 2147483648
  %v3029 = vsel %vm3027, %v3028, %v3026
  %v3030 = vrsqrt.pop %v2237
  %v3031 = vmul.f32 %v2237, %v3030
  %vm3032 = vcmp.eq.f32.partialorder %v2237, inf
  %v3033 = vsel %vm3032, %v2237, %v3031
  %vm3034 = vcmp.eq.f32.partialorder %v2237, 0.0
  %v3035 = vand.u32 %v2237, 2147483648
  %v3036 = vsel %vm3034, %v3035, %v3033
  %v3037 = vrsqrt.pop %v2242
  %v3038 = vmul.f32 %v2242, %v3037
  %vm3039 = vcmp.eq.f32.partialorder %v2242, inf
  %v3040 = vsel %vm3039, %v2242, %v3038
  %vm3041 = vcmp.eq.f32.partialorder %v2242, 0.0
  %v3042 = vand.u32 %v2242, 2147483648
  %v3043 = vsel %vm3041, %v3042, %v3040
  %v3044 = vrsqrt.pop %v2247
  %v3045 = vmul.f32 %v2247, %v3044
  %vm3046 = vcmp.eq.f32.partialorder %v2247, inf
  %v3047 = vsel %vm3046, %v2247, %v3045
  %vm3048 = vcmp.eq.f32.partialorder %v2247, 0.0
  %v3049 = vand.u32 %v2247, 2147483648
  %v3050 = vsel %vm3048, %v3049, %v3047
  %v3051 = vrsqrt.pop %v2252
  %v3052 = vmul.f32 %v2252, %v3051
  %vm3053 = vcmp.eq.f32.partialorder %v2252, inf
  %v3054 = vsel %vm3053, %v2252, %v3052
  %vm3055 = vcmp.eq.f32.partialorder %v2252, 0.0
  %v3056 = vand.u32 %v2252, 2147483648
  %v3057 = vsel %vm3055, %v3056, %v3054
  %v3058 = vrsqrt.pop %v2257
  %v3059 = vmul.f32 %v2257, %v3058
  %vm3060 = vcmp.eq.f32.partialorder %v2257, inf
  %v3061 = vsel %vm3060, %v2257, %v3059
  %vm3062 = vcmp.eq.f32.partialorder %v2257, 0.0
  %v3063 = vand.u32 %v2257, 2147483648
  %v3064 = vsel %vm3062, %v3063, %v3061
  %v3065 = vrsqrt.pop %v2262
  %v3066 = vmul.f32 %v2262, %v3065
  %vm3067 = vcmp.eq.f32.partialorder %v2262, inf
  %v3068 = vsel %vm3067, %v2262, %v3066
  %vm3069 = vcmp.eq.f32.partialorder %v2262, 0.0
  %v3070 = vand.u32 %v2262, 2147483648
  %v3071 = vsel %vm3069, %v3070, %v3068
  %v3072 = vrsqrt.pop %v2267
  %v3073 = vmul.f32 %v2267, %v3072
  %vm3074 = vcmp.eq.f32.partialorder %v2267, inf
  %v3075 = vsel %vm3074, %v2267, %v3073
  %vm3076 = vcmp.eq.f32.partialorder %v2267, 0.0
  %v3077 = vand.u32 %v2267, 2147483648
  %v3078 = vsel %vm3076, %v3077, %v3075
  %v3079 = vrsqrt.pop %v2272
  %v3080 = vmul.f32 %v2272, %v3079
  %vm3081 = vcmp.eq.f32.partialorder %v2272, inf
  %v3082 = vsel %vm3081, %v2272, %v3080
  %vm3083 = vcmp.eq.f32.partialorder %v2272, 0.0
  %v3084 = vand.u32 %v2272, 2147483648
  %v3085 = vsel %vm3083, %v3084, %v3082
  %v3086 = vrsqrt.pop %v2277
  %v3087 = vmul.f32 %v2277, %v3086
  %vm3088 = vcmp.eq.f32.partialorder %v2277, inf
  %v3089 = vsel %vm3088, %v2277, %v3087
  %vm3090 = vcmp.eq.f32.partialorder %v2277, 0.0
  %v3091 = vand.u32 %v2277, 2147483648
  %v3092 = vsel %vm3090, %v3091, %v3089
  %v3093 = vrsqrt.pop %v2282
  %v3094 = vmul.f32 %v2282, %v3093
  %vm3095 = vcmp.eq.f32.partialorder %v2282, inf
  %v3096 = vsel %vm3095, %v2282, %v3094
  %vm3097 = vcmp.eq.f32.partialorder %v2282, 0.0
  %v3098 = vand.u32 %v2282, 2147483648
  %v3099 = vsel %vm3097, %v3098, %v3096
  %v3100 = vrsqrt.pop %v2287
  %v3101 = vmul.f32 %v2287, %v3100
  %vm3102 = vcmp.eq.f32.partialorder %v2287, inf
  %v3103 = vsel %vm3102, %v2287, %v3101
  %vm3104 = vcmp.eq.f32.partialorder %v2287, 0.0
  %v3105 = vand.u32 %v2287, 2147483648
  %v3106 = vsel %vm3104, %v3105, %v3103
  %v3107 = vrsqrt.pop %v2292
  %v3108 = vmul.f32 %v2292, %v3107
  %vm3109 = vcmp.eq.f32.partialorder %v2292, inf
  %v3110 = vsel %vm3109, %v2292, %v3108
  %vm3111 = vcmp.eq.f32.partialorder %v2292, 0.0
  %v3112 = vand.u32 %v2292, 2147483648
  %v3113 = vsel %vm3111, %v3112, %v3110
  %v3114 = vrsqrt.pop %v2297
  %v3115 = vmul.f32 %v2297, %v3114
  %vm3116 = vcmp.eq.f32.partialorder %v2297, inf
  %v3117 = vsel %vm3116, %v2297, %v3115
  %vm3118 = vcmp.eq.f32.partialorder %v2297, 0.0
  %v3119 = vand.u32 %v2297, 2147483648
  %v3120 = vsel %vm3118, %v3119, %v3117
  %v3121 = vrsqrt.pop %v2302
  %v3122 = vmul.f32 %v2302, %v3121
  %vm3123 = vcmp.eq.f32.partialorder %v2302, inf
  %v3124 = vsel %vm3123, %v2302, %v3122
  %vm3125 = vcmp.eq.f32.partialorder %v2302, 0.0
  %v3126 = vand.u32 %v2302, 2147483648
  %v3127 = vsel %vm3125, %v3126, %v3124
  %v3128 = vrsqrt.pop %v2307
  %v3129 = vmul.f32 %v2307, %v3128
  %vm3130 = vcmp.eq.f32.partialorder %v2307, inf
  %v3131 = vsel %vm3130, %v2307, %v3129
  %vm3132 = vcmp.eq.f32.partialorder %v2307, 0.0
  %v3133 = vand.u32 %v2307, 2147483648
  %v3134 = vsel %vm3132, %v3133, %v3131
  %v3135 = vrsqrt.pop %v2312
  %v3136 = vmul.f32 %v2312, %v3135
  %vm3137 = vcmp.eq.f32.partialorder %v2312, inf
  %v3138 = vsel %vm3137, %v2312, %v3136
  %vm3139 = vcmp.eq.f32.partialorder %v2312, 0.0
  %v3140 = vand.u32 %v2312, 2147483648
  %v3141 = vsel %vm3139, %v3140, %v3138
  %v3142 = vrsqrt.pop %v2317
  %v3143 = vmul.f32 %v2317, %v3142
  %vm3144 = vcmp.eq.f32.partialorder %v2317, inf
  %v3145 = vsel %vm3144, %v2317, %v3143
  %vm3146 = vcmp.eq.f32.partialorder %v2317, 0.0
  %v3147 = vand.u32 %v2317, 2147483648
  %v3148 = vsel %vm3146, %v3147, %v3145
  %v3149 = vrsqrt.pop %v2322
  %v3150 = vmul.f32 %v2322, %v3149
  %vm3151 = vcmp.eq.f32.partialorder %v2322, inf
  %v3152 = vsel %vm3151, %v2322, %v3150
  %vm3153 = vcmp.eq.f32.partialorder %v2322, 0.0
  %v3154 = vand.u32 %v2322, 2147483648
  %v3155 = vsel %vm3153, %v3154, %v3152
  %v3156 = vrsqrt.pop %v2327
  %v3157 = vmul.f32 %v2327, %v3156
  %vm3158 = vcmp.eq.f32.partialorder %v2327, inf
  %v3159 = vsel %vm3158, %v2327, %v3157
  %vm3160 = vcmp.eq.f32.partialorder %v2327, 0.0
  %v3161 = vand.u32 %v2327, 2147483648
  %v3162 = vsel %vm3160, %v3161, %v3159
  %v3163 = vrsqrt.pop %v2332
  %v3164 = vmul.f32 %v2332, %v3163
  %vm3165 = vcmp.eq.f32.partialorder %v2332, inf
  %v3166 = vsel %vm3165, %v2332, %v3164
  %vm3167 = vcmp.eq.f32.partialorder %v2332, 0.0
  %v3168 = vand.u32 %v2332, 2147483648
  %v3169 = vsel %vm3167, %v3168, %v3166
  %v3170 = vrsqrt.pop %v2337
  %v3171 = vmul.f32 %v2337, %v3170
  %vm3172 = vcmp.eq.f32.partialorder %v2337, inf
  %v3173 = vsel %vm3172, %v2337, %v3171
  %vm3174 = vcmp.eq.f32.partialorder %v2337, 0.0
  %v3175 = vand.u32 %v2337, 2147483648
  %v3176 = vsel %vm3174, %v3175, %v3173
  %v3177 = vrsqrt.pop %v2342
  %v3178 = vmul.f32 %v2342, %v3177
  %vm3179 = vcmp.eq.f32.partialorder %v2342, inf
  %v3180 = vsel %vm3179, %v2342, %v3178
  %vm3181 = vcmp.eq.f32.partialorder %v2342, 0.0
  %v3182 = vand.u32 %v2342, 2147483648
  %v3183 = vsel %vm3181, %v3182, %v3180
  %v3184 = vrsqrt.pop %v2347
  %v3185 = vmul.f32 %v2347, %v3184
  %vm3186 = vcmp.eq.f32.partialorder %v2347, inf
  %v3187 = vsel %vm3186, %v2347, %v3185
  %vm3188 = vcmp.eq.f32.partialorder %v2347, 0.0
  %v3189 = vand.u32 %v2347, 2147483648
  %v3190 = vsel %vm3188, %v3189, %v3187
  %v3191 = vrsqrt.pop %v2352
  %v3192 = vmul.f32 %v2352, %v3191
  %vm3193 = vcmp.eq.f32.partialorder %v2352, inf
  %v3194 = vsel %vm3193, %v2352, %v3192
  %vm3195 = vcmp.eq.f32.partialorder %v2352, 0.0
  %v3196 = vand.u32 %v2352, 2147483648
  %v3197 = vsel %vm3195, %v3196, %v3194
  %v3198 = vrsqrt.pop %v2357
  %v3199 = vmul.f32 %v2357, %v3198
  %vm3200 = vcmp.eq.f32.partialorder %v2357, inf
  %v3201 = vsel %vm3200, %v2357, %v3199
  %vm3202 = vcmp.eq.f32.partialorder %v2357, 0.0
  %v3203 = vand.u32 %v2357, 2147483648
  %v3204 = vsel %vm3202, %v3203, %v3201
  %v3205 = vrsqrt.pop %v2362
  %v3206 = vmul.f32 %v2362, %v3205
  %vm3207 = vcmp.eq.f32.partialorder %v2362, inf
  %v3208 = vsel %vm3207, %v2362, %v3206
  %vm3209 = vcmp.eq.f32.partialorder %v2362, 0.0
  %v3210 = vand.u32 %v2362, 2147483648
  %v3211 = vsel %vm3209, %v3210, %v3208
  %v3212 = vrsqrt.pop %v2367
  %v3213 = vmul.f32 %v2367, %v3212
  %vm3214 = vcmp.eq.f32.partialorder %v2367, inf
  %v3215 = vsel %vm3214, %v2367, %v3213
  %vm3216 = vcmp.eq.f32.partialorder %v2367, 0.0
  %v3217 = vand.u32 %v2367, 2147483648
  %v3218 = vsel %vm3216, %v3217, %v3215
  %v3219 = vrsqrt.pop %v2372
  %v3220 = vmul.f32 %v2372, %v3219
  %vm3221 = vcmp.eq.f32.partialorder %v2372, inf
  %v3222 = vsel %vm3221, %v2372, %v3220
  %vm3223 = vcmp.eq.f32.partialorder %v2372, 0.0
  %v3224 = vand.u32 %v2372, 2147483648
  %v3225 = vsel %vm3223, %v3224, %v3222
  %v3226 = vrsqrt.pop %v2377
  %v3227 = vmul.f32 %v2377, %v3226
  %vm3228 = vcmp.eq.f32.partialorder %v2377, inf
  %v3229 = vsel %vm3228, %v2377, %v3227
  %vm3230 = vcmp.eq.f32.partialorder %v2377, 0.0
  %v3231 = vand.u32 %v2377, 2147483648
  %v3232 = vsel %vm3230, %v3231, %v3229
  %v3233 = vrsqrt.pop %v2382
  %v3234 = vmul.f32 %v2382, %v3233
  %vm3235 = vcmp.eq.f32.partialorder %v2382, inf
  %v3236 = vsel %vm3235, %v2382, %v3234
  %vm3237 = vcmp.eq.f32.partialorder %v2382, 0.0
  %v3238 = vand.u32 %v2382, 2147483648
  %v3239 = vsel %vm3237, %v3238, %v3236
  %v3240 = vrsqrt.pop %v2387
  %v3241 = vmul.f32 %v2387, %v3240
  %vm3242 = vcmp.eq.f32.partialorder %v2387, inf
  %v3243 = vsel %vm3242, %v2387, %v3241
  %vm3244 = vcmp.eq.f32.partialorder %v2387, 0.0
  %v3245 = vand.u32 %v2387, 2147483648
  %v3246 = vsel %vm3244, %v3245, %v3243
  %v3247 = vrsqrt.pop %v2392
  %v3248 = vmul.f32 %v2392, %v3247
  %vm3249 = vcmp.eq.f32.partialorder %v2392, inf
  %v3250 = vsel %vm3249, %v2392, %v3248
  %vm3251 = vcmp.eq.f32.partialorder %v2392, 0.0
  %v3252 = vand.u32 %v2392, 2147483648
  %v3253 = vsel %vm3251, %v3252, %v3250
  %v3254 = vrsqrt.pop %v2397
  %v3255 = vmul.f32 %v2397, %v3254
  %vm3256 = vcmp.eq.f32.partialorder %v2397, inf
  %v3257 = vsel %vm3256, %v2397, %v3255
  %vm3258 = vcmp.eq.f32.partialorder %v2397, 0.0
  %v3259 = vand.u32 %v2397, 2147483648
  %v3260 = vsel %vm3258, %v3259, %v3257
  %v3261 = vrsqrt.pop %v2402
  %v3262 = vmul.f32 %v2402, %v3261
  %vm3263 = vcmp.eq.f32.partialorder %v2402, inf
  %v3264 = vsel %vm3263, %v2402, %v3262
  %vm3265 = vcmp.eq.f32.partialorder %v2402, 0.0
  %v3266 = vand.u32 %v2402, 2147483648
  %v3267 = vsel %vm3265, %v3266, %v3264
  %v3268 = vrsqrt.pop %v2407
  %v3269 = vmul.f32 %v2407, %v3268
  %vm3270 = vcmp.eq.f32.partialorder %v2407, inf
  %v3271 = vsel %vm3270, %v2407, %v3269
  %vm3272 = vcmp.eq.f32.partialorder %v2407, 0.0
  %v3273 = vand.u32 %v2407, 2147483648
  %v3274 = vsel %vm3272, %v3273, %v3271
  %v3275 = vrsqrt.pop %v2412
  %v3276 = vmul.f32 %v2412, %v3275
  %vm3277 = vcmp.eq.f32.partialorder %v2412, inf
  %v3278 = vsel %vm3277, %v2412, %v3276
  %vm3279 = vcmp.eq.f32.partialorder %v2412, 0.0
  %v3280 = vand.u32 %v2412, 2147483648
  %v3281 = vsel %vm3279, %v3280, %v3278
  %v3282 = vrsqrt.pop %v2417
  %v3283 = vmul.f32 %v2417, %v3282
  %vm3284 = vcmp.eq.f32.partialorder %v2417, inf
  %v3285 = vsel %vm3284, %v2417, %v3283
  %vm3286 = vcmp.eq.f32.partialorder %v2417, 0.0
  %v3287 = vand.u32 %v2417, 2147483648
  %v3288 = vsel %vm3286, %v3287, %v3285
  %v3289 = vrsqrt.pop %v2422
  %v3290 = vmul.f32 %v2422, %v3289
  %vm3291 = vcmp.eq.f32.partialorder %v2422, inf
  %v3292 = vsel %vm3291, %v2422, %v3290
  %vm3293 = vcmp.eq.f32.partialorder %v2422, 0.0
  %v3294 = vand.u32 %v2422, 2147483648
  %v3295 = vsel %vm3293, %v3294, %v3292
  %v3296 = vrsqrt.pop %v2427
  %v3297 = vmul.f32 %v2427, %v3296
  %vm3298 = vcmp.eq.f32.partialorder %v2427, inf
  %v3299 = vsel %vm3298, %v2427, %v3297
  %vm3300 = vcmp.eq.f32.partialorder %v2427, 0.0
  %v3301 = vand.u32 %v2427, 2147483648
  %v3302 = vsel %vm3300, %v3301, %v3299
  %v3303 = vrsqrt.pop %v2432
  %v3304 = vmul.f32 %v2432, %v3303
  %vm3305 = vcmp.eq.f32.partialorder %v2432, inf
  %v3306 = vsel %vm3305, %v2432, %v3304
  %vm3307 = vcmp.eq.f32.partialorder %v2432, 0.0
  %v3308 = vand.u32 %v2432, 2147483648
  %v3309 = vsel %vm3307, %v3308, %v3306
  %v3310 = vrsqrt.pop %v2437
  %v3311 = vmul.f32 %v2437, %v3310
  %vm3312 = vcmp.eq.f32.partialorder %v2437, inf
  %v3313 = vsel %vm3312, %v2437, %v3311
  %vm3314 = vcmp.eq.f32.partialorder %v2437, 0.0
  %v3315 = vand.u32 %v2437, 2147483648
  %v3316 = vsel %vm3314, %v3315, %v3313
  %v3317 = vrsqrt.pop %v2442
  %v3318 = vmul.f32 %v2442, %v3317
  %vm3319 = vcmp.eq.f32.partialorder %v2442, inf
  %v3320 = vsel %vm3319, %v2442, %v3318
  %vm3321 = vcmp.eq.f32.partialorder %v2442, 0.0
  %v3322 = vand.u32 %v2442, 2147483648
  %v3323 = vsel %vm3321, %v3322, %v3320
  %v3324 = vrsqrt.pop %v2447
  %v3325 = vmul.f32 %v2447, %v3324
  %vm3326 = vcmp.eq.f32.partialorder %v2447, inf
  %v3327 = vsel %vm3326, %v2447, %v3325
  %vm3328 = vcmp.eq.f32.partialorder %v2447, 0.0
  %v3329 = vand.u32 %v2447, 2147483648
  %v3330 = vsel %vm3328, %v3329, %v3327
  %v3331 = vrsqrt.pop %v2452
  %v3332 = vmul.f32 %v2452, %v3331
  %vm3333 = vcmp.eq.f32.partialorder %v2452, inf
  %v3334 = vsel %vm3333, %v2452, %v3332
  %vm3335 = vcmp.eq.f32.partialorder %v2452, 0.0
  %v3336 = vand.u32 %v2452, 2147483648
  %v3337 = vsel %vm3335, %v3336, %v3334
  %v3338 = vrsqrt.pop %v2457
  %v3339 = vmul.f32 %v2457, %v3338
  %vm3340 = vcmp.eq.f32.partialorder %v2457, inf
  %v3341 = vsel %vm3340, %v2457, %v3339
  %vm3342 = vcmp.eq.f32.partialorder %v2457, 0.0
  %v3343 = vand.u32 %v2457, 2147483648
  %v3344 = vsel %vm3342, %v3343, %v3341
  %v3345 = vrsqrt.pop %v2462
  %v3346 = vmul.f32 %v2462, %v3345
  %vm3347 = vcmp.eq.f32.partialorder %v2462, inf
  %v3348 = vsel %vm3347, %v2462, %v3346
  %vm3349 = vcmp.eq.f32.partialorder %v2462, 0.0
  %v3350 = vand.u32 %v2462, 2147483648
  %v3351 = vsel %vm3349, %v3350, %v3348
  %v3352 = vrsqrt.pop %v2467
  %v3353 = vmul.f32 %v2467, %v3352
  %vm3354 = vcmp.eq.f32.partialorder %v2467, inf
  %v3355 = vsel %vm3354, %v2467, %v3353
  %vm3356 = vcmp.eq.f32.partialorder %v2467, 0.0
  %v3357 = vand.u32 %v2467, 2147483648
  %v3358 = vsel %vm3356, %v3357, %v3355
  %v3359 = vrsqrt.pop %v2472
  %v3360 = vmul.f32 %v2472, %v3359
  %vm3361 = vcmp.eq.f32.partialorder %v2472, inf
  %v3362 = vsel %vm3361, %v2472, %v3360
  %vm3363 = vcmp.eq.f32.partialorder %v2472, 0.0
  %v3364 = vand.u32 %v2472, 2147483648
  %v3365 = vsel %vm3363, %v3364, %v3362
  %v3366 = vrsqrt.pop %v2477
  %v3367 = vmul.f32 %v2477, %v3366
  %vm3368 = vcmp.eq.f32.partialorder %v2477, inf
  %v3369 = vsel %vm3368, %v2477, %v3367
  %vm3370 = vcmp.eq.f32.partialorder %v2477, 0.0
  %v3371 = vand.u32 %v2477, 2147483648
  %v3372 = vsel %vm3370, %v3371, %v3369
  %v3373 = vrsqrt.pop %v2482
  %v3374 = vmul.f32 %v2482, %v3373
  %vm3375 = vcmp.eq.f32.partialorder %v2482, inf
  %v3376 = vsel %vm3375, %v2482, %v3374
  %vm3377 = vcmp.eq.f32.partialorder %v2482, 0.0
  %v3378 = vand.u32 %v2482, 2147483648
  %v3379 = vsel %vm3377, %v3378, %v3376
  %v3380 = vrsqrt.pop %v2487
  %v3381 = vmul.f32 %v2487, %v3380
  %vm3382 = vcmp.eq.f32.partialorder %v2487, inf
  %v3383 = vsel %vm3382, %v2487, %v3381
  %vm3384 = vcmp.eq.f32.partialorder %v2487, 0.0
  %v3385 = vand.u32 %v2487, 2147483648
  %v3386 = vsel %vm3384, %v3385, %v3383
  %v3387 = vadd.f32 %v2945, 1e-10
  %v3388 = vadd.f32 %v2952, 1e-10
  %v3389 = vadd.f32 %v2959, 1e-10
  %v3390 = vadd.f32 %v2966, 1e-10
  %v3391 = vadd.f32 %v2973, 1e-10
  %v3392 = vadd.f32 %v2980, 1e-10
  %v3393 = vadd.f32 %v2987, 1e-10
  %v3394 = vadd.f32 %v2994, 1e-10
  %v3395 = vadd.f32 %v3001, 1e-10
  %v3396 = vadd.f32 %v3008, 1e-10
  %v3397 = vadd.f32 %v3015, 1e-10
  %v3398 = vadd.f32 %v3022, 1e-10
  %v3399 = vadd.f32 %v3029, 1e-10
  %v3400 = vadd.f32 %v3036, 1e-10
  %v3401 = vadd.f32 %v3043, 1e-10
  %v3402 = vadd.f32 %v3050, 1e-10
  %v3403 = vadd.f32 %v3057, 1e-10
  %v3404 = vadd.f32 %v3064, 1e-10
  %v3405 = vadd.f32 %v3071, 1e-10
  %v3406 = vadd.f32 %v3078, 1e-10
  %v3407 = vadd.f32 %v3085, 1e-10
  %v3408 = vadd.f32 %v3092, 1e-10
  %v3409 = vadd.f32 %v3099, 1e-10
  %v3410 = vadd.f32 %v3106, 1e-10
  %v3411 = vadd.f32 %v3113, 1e-10
  %v3412 = vadd.f32 %v3120, 1e-10
  %v3413 = vadd.f32 %v3127, 1e-10
  %v3414 = vadd.f32 %v3134, 1e-10
  %v3415 = vadd.f32 %v3141, 1e-10
  %v3416 = vadd.f32 %v3148, 1e-10
  %v3417 = vadd.f32 %v3155, 1e-10
  %v3418 = vadd.f32 %v3162, 1e-10
  %v3419 = vadd.f32 %v3169, 1e-10
  %v3420 = vadd.f32 %v3176, 1e-10
  %v3421 = vadd.f32 %v3183, 1e-10
  %v3422 = vadd.f32 %v3190, 1e-10
  %v3423 = vadd.f32 %v3197, 1e-10
  %v3424 = vadd.f32 %v3204, 1e-10
  %v3425 = vadd.f32 %v3211, 1e-10
  %v3426 = vadd.f32 %v3218, 1e-10
  %v3427 = vadd.f32 %v3225, 1e-10
  %v3428 = vadd.f32 %v3232, 1e-10
  %v3429 = vadd.f32 %v3239, 1e-10
  %v3430 = vadd.f32 %v3246, 1e-10
  %v3431 = vadd.f32 %v3253, 1e-10
  %v3432 = vadd.f32 %v3260, 1e-10
  %v3433 = vadd.f32 %v3267, 1e-10
  %v3434 = vadd.f32 %v3274, 1e-10
  %v3435 = vadd.f32 %v3281, 1e-10
  %v3436 = vadd.f32 %v3288, 1e-10
  %v3437 = vadd.f32 %v3295, 1e-10
  %v3438 = vadd.f32 %v3302, 1e-10
  %v3439 = vadd.f32 %v3309, 1e-10
  %v3440 = vadd.f32 %v3316, 1e-10
  %v3441 = vadd.f32 %v3323, 1e-10
  %v3442 = vadd.f32 %v3330, 1e-10
  %v3443 = vadd.f32 %v3337, 1e-10
  %v3444 = vadd.f32 %v3344, 1e-10
  %v3445 = vadd.f32 %v3351, 1e-10
  %v3446 = vadd.f32 %v3358, 1e-10
  %v3447 = vadd.f32 %v3365, 1e-10
  %v3448 = vadd.f32 %v3372, 1e-10
  %v3449 = vadd.f32 %v3379, 1e-10
  %v3450 = vadd.f32 %v3386, 1e-10
  %v3451 = vrcp.pop %v3387
  %v3452 = vmul.f32 %v727, %v3451
  %v3453 = vrcp.pop %v3388
  %v3454 = vmul.f32 %v728, %v3453
  %v3455 = vrcp.pop %v3389
  %v3456 = vmul.f32 %v729, %v3455
  %v3457 = vrcp.pop %v3390
  %v3458 = vmul.f32 %v730, %v3457
  %v3459 = vrcp.pop %v3391
  %v3460 = vmul.f32 %v731, %v3459
  %v3461 = vrcp.pop %v3392
  %v3462 = vmul.f32 %v732, %v3461
  %v3463 = vrcp.pop %v3393
  %v3464 = vmul.f32 %v733, %v3463
  %v3465 = vrcp.pop %v3394
  %v3466 = vmul.f32 %v734, %v3465
  %v3467 = vrcp.pop %v3395
  %v3468 = vmul.f32 %v735, %v3467
  %v3469 = vrcp.pop %v3396
  %v3470 = vmul.f32 %v736, %v3469
  %v3471 = vrcp.pop %v3397
  %v3472 = vmul.f32 %v737, %v3471
  %v3473 = vrcp.pop %v3398
  %v3474 = vmul.f32 %v738, %v3473
  %v3475 = vrcp.pop %v3399
  %v3476 = vmul.f32 %v739, %v3475
  %v3477 = vrcp.pop %v3400
  %v3478 = vmul.f32 %v740, %v3477
  %v3479 = vrcp.pop %v3401
  %v3480 = vmul.f32 %v741, %v3479
  %v3481 = vrcp.pop %v3402
  %v3482 = vmul.f32 %v742, %v3481
  %v3483 = vrcp.pop %v3403
  %v3484 = vmul.f32 %v743, %v3483
  %v3485 = vrcp.pop %v3404
  %v3486 = vmul.f32 %v744, %v3485
  %v3487 = vrcp.pop %v3405
  %v3488 = vmul.f32 %v745, %v3487
  %v3489 = vrcp.pop %v3406
  %v3490 = vmul.f32 %v746, %v3489
  %v3491 = vrcp.pop %v3407
  %v3492 = vmul.f32 %v747, %v3491
  %v3493 = vrcp.pop %v3408
  %v3494 = vmul.f32 %v748, %v3493
  %v3495 = vrcp.pop %v3409
  %v3496 = vmul.f32 %v749, %v3495
  %v3497 = vrcp.pop %v3410
  %v3498 = vmul.f32 %v750, %v3497
  %v3499 = vrcp.pop %v3411
  %v3500 = vmul.f32 %v751, %v3499
  %v3501 = vrcp.pop %v3412
  %v3502 = vmul.f32 %v752, %v3501
  %v3503 = vrcp.pop %v3413
  %v3504 = vmul.f32 %v753, %v3503
  %v3505 = vrcp.pop %v3414
  %v3506 = vmul.f32 %v754, %v3505
  %v3507 = vrcp.pop %v3415
  %v3508 = vmul.f32 %v755, %v3507
  %v3509 = vrcp.pop %v3416
  %v3510 = vmul.f32 %v756, %v3509
  %v3511 = vrcp.pop %v3417
  %v3512 = vmul.f32 %v757, %v3511
  %v3513 = vrcp.pop %v3418
  %v3514 = vmul.f32 %v758, %v3513
  %v3515 = vrcp.pop %v3419
  %v3516 = vmul.f32 %v759, %v3515
  %v3517 = vrcp.pop %v3420
  %v3518 = vmul.f32 %v760, %v3517
  %v3519 = vrcp.pop %v3421
  %v3520 = vmul.f32 %v761, %v3519
  %v3521 = vrcp.pop %v3422
  %v3522 = vmul.f32 %v762, %v3521
  %v3523 = vrcp.pop %v3423
  %v3524 = vmul.f32 %v763, %v3523
  %v3525 = vrcp.pop %v3424
  %v3526 = vmul.f32 %v764, %v3525
  %v3527 = vrcp.pop %v3425
  %v3528 = vmul.f32 %v765, %v3527
  %v3529 = vrcp.pop %v3426
  %v3530 = vmul.f32 %v766, %v3529
  %v3531 = vrcp.pop %v3427
  %v3532 = vmul.f32 %v767, %v3531
  %v3533 = vrcp.pop %v3428
  %v3534 = vmul.f32 %v768, %v3533
  %v3535 = vrcp.pop %v3429
  %v3536 = vmul.f32 %v769, %v3535
  %v3537 = vrcp.pop %v3430
  %v3538 = vmul.f32 %v770, %v3537
  %v3539 = vrcp.pop %v3431
  %v3540 = vmul.f32 %v771, %v3539
  %v3541 = vrcp.pop %v3432
  %v3542 = vmul.f32 %v772, %v3541
  %v3543 = vrcp.pop %v3433
  %v3544 = vmul.f32 %v773, %v3543
  %v3545 = vrcp.pop %v3434
  %v3546 = vmul.f32 %v774, %v3545
  %v3547 = vrcp.pop %v3435
  %v3548 = vmul.f32 %v775, %v3547
  %v3549 = vrcp.pop %v3436
  %v3550 = vmul.f32 %v776, %v3549
  %v3551 = vrcp.pop %v3437
  %v3552 = vmul.f32 %v777, %v3551
  %v3553 = vrcp.pop %v3438
  %v3554 = vmul.f32 %v778, %v3553
  %v3555 = vrcp.pop %v3439
  %v3556 = vmul.f32 %v779, %v3555
  %v3557 = vrcp.pop %v3440
  %v3558 = vmul.f32 %v780, %v3557
  %v3559 = vrcp.pop %v3441
  %v3560 = vmul.f32 %v781, %v3559
  %v3561 = vrcp.pop %v3442
  %v3562 = vmul.f32 %v782, %v3561
  %v3563 = vrcp.pop %v3443
  %v3564 = vmul.f32 %v783, %v3563
  %v3565 = vrcp.pop %v3444
  %v3566 = vmul.f32 %v784, %v3565
  %v3567 = vrcp.pop %v3445
  %v3568 = vmul.f32 %v785, %v3567
  %v3569 = vrcp.pop %v3446
  %v3570 = vmul.f32 %v786, %v3569
  %v3571 = vrcp.pop %v3447
  %v3572 = vmul.f32 %v787, %v3571
  %v3573 = vrcp.pop %v3448
  %v3574 = vmul.f32 %v788, %v3573
  %v3575 = vrcp.pop %v3449
  %v3576 = vmul.f32 %v789, %v3575
  %v3577 = vrcp.pop %v3450
  %v3578 = vmul.f32 %v790, %v3577
  %v3579 = vrsqrt.pop %v2621
  %v3580 = vmul.f32 %v2621, %v3579
  %vm3581 = vcmp.eq.f32.partialorder %v2621, inf
  %v3582 = vsel %vm3581, %v2621, %v3580
  %vm3583 = vcmp.eq.f32.partialorder %v2621, 0.0
  %v3584 = vand.u32 %v2621, 2147483648
  %v3585 = vsel %vm3583, %v3584, %v3582
  %v3586 = vrsqrt.pop %v2626
  %v3587 = vmul.f32 %v2626, %v3586
  %vm3588 = vcmp.eq.f32.partialorder %v2626, inf
  %v3589 = vsel %vm3588, %v2626, %v3587
  %vm3590 = vcmp.eq.f32.partialorder %v2626, 0.0
  %v3591 = vand.u32 %v2626, 2147483648
  %v3592 = vsel %vm3590, %v3591, %v3589
  %v3593 = vrsqrt.pop %v2631
  %v3594 = vmul.f32 %v2631, %v3593
  %vm3595 = vcmp.eq.f32.partialorder %v2631, inf
  %v3596 = vsel %vm3595, %v2631, %v3594
  %vm3597 = vcmp.eq.f32.partialorder %v2631, 0.0
  %v3598 = vand.u32 %v2631, 2147483648
  %v3599 = vsel %vm3597, %v3598, %v3596
  %v3600 = vrsqrt.pop %v2636
  %v3601 = vmul.f32 %v2636, %v3600
  %vm3602 = vcmp.eq.f32.partialorder %v2636, inf
  %v3603 = vsel %vm3602, %v2636, %v3601
  %vm3604 = vcmp.eq.f32.partialorder %v2636, 0.0
  %v3605 = vand.u32 %v2636, 2147483648
  %v3606 = vsel %vm3604, %v3605, %v3603
  %v3607 = vrsqrt.pop %v2641
  %v3608 = vmul.f32 %v2641, %v3607
  %vm3609 = vcmp.eq.f32.partialorder %v2641, inf
  %v3610 = vsel %vm3609, %v2641, %v3608
  %vm3611 = vcmp.eq.f32.partialorder %v2641, 0.0
  %v3612 = vand.u32 %v2641, 2147483648
  %v3613 = vsel %vm3611, %v3612, %v3610
  %v3614 = vrsqrt.pop %v2646
  %v3615 = vmul.f32 %v2646, %v3614
  %vm3616 = vcmp.eq.f32.partialorder %v2646, inf
  %v3617 = vsel %vm3616, %v2646, %v3615
  %vm3618 = vcmp.eq.f32.partialorder %v2646, 0.0
  %v3619 = vand.u32 %v2646, 2147483648
  %v3620 = vsel %vm3618, %v3619, %v3617
  %v3621 = vrsqrt.pop %v2651
  %v3622 = vmul.f32 %v2651, %v3621
  %vm3623 = vcmp.eq.f32.partialorder %v2651, inf
  %v3624 = vsel %vm3623, %v2651, %v3622
  %vm3625 = vcmp.eq.f32.partialorder %v2651, 0.0
  %v3626 = vand.u32 %v2651, 2147483648
  %v3627 = vsel %vm3625, %v3626, %v3624
  %v3628 = vrsqrt.pop %v2656
  %v3629 = vmul.f32 %v2656, %v3628
  %vm3630 = vcmp.eq.f32.partialorder %v2656, inf
  %v3631 = vsel %vm3630, %v2656, %v3629
  %vm3632 = vcmp.eq.f32.partialorder %v2656, 0.0
  %v3633 = vand.u32 %v2656, 2147483648
  %v3634 = vsel %vm3632, %v3633, %v3631
  %v3635 = vrsqrt.pop %v2661
  %v3636 = vmul.f32 %v2661, %v3635
  %vm3637 = vcmp.eq.f32.partialorder %v2661, inf
  %v3638 = vsel %vm3637, %v2661, %v3636
  %vm3639 = vcmp.eq.f32.partialorder %v2661, 0.0
  %v3640 = vand.u32 %v2661, 2147483648
  %v3641 = vsel %vm3639, %v3640, %v3638
  %v3642 = vrsqrt.pop %v2666
  %v3643 = vmul.f32 %v2666, %v3642
  %vm3644 = vcmp.eq.f32.partialorder %v2666, inf
  %v3645 = vsel %vm3644, %v2666, %v3643
  %vm3646 = vcmp.eq.f32.partialorder %v2666, 0.0
  %v3647 = vand.u32 %v2666, 2147483648
  %v3648 = vsel %vm3646, %v3647, %v3645
  %v3649 = vrsqrt.pop %v2671
  %v3650 = vmul.f32 %v2671, %v3649
  %vm3651 = vcmp.eq.f32.partialorder %v2671, inf
  %v3652 = vsel %vm3651, %v2671, %v3650
  %vm3653 = vcmp.eq.f32.partialorder %v2671, 0.0
  %v3654 = vand.u32 %v2671, 2147483648
  %v3655 = vsel %vm3653, %v3654, %v3652
  %v3656 = vrsqrt.pop %v2676
  %v3657 = vmul.f32 %v2676, %v3656
  %vm3658 = vcmp.eq.f32.partialorder %v2676, inf
  %v3659 = vsel %vm3658, %v2676, %v3657
  %vm3660 = vcmp.eq.f32.partialorder %v2676, 0.0
  %v3661 = vand.u32 %v2676, 2147483648
  %v3662 = vsel %vm3660, %v3661, %v3659
  %v3663 = vrsqrt.pop %v2681
  %v3664 = vmul.f32 %v2681, %v3663
  %vm3665 = vcmp.eq.f32.partialorder %v2681, inf
  %v3666 = vsel %vm3665, %v2681, %v3664
  %vm3667 = vcmp.eq.f32.partialorder %v2681, 0.0
  %v3668 = vand.u32 %v2681, 2147483648
  %v3669 = vsel %vm3667, %v3668, %v3666
  %v3670 = vrsqrt.pop %v2686
  %v3671 = vmul.f32 %v2686, %v3670
  %vm3672 = vcmp.eq.f32.partialorder %v2686, inf
  %v3673 = vsel %vm3672, %v2686, %v3671
  %vm3674 = vcmp.eq.f32.partialorder %v2686, 0.0
  %v3675 = vand.u32 %v2686, 2147483648
  %v3676 = vsel %vm3674, %v3675, %v3673
  %v3677 = vrsqrt.pop %v2691
  %v3678 = vmul.f32 %v2691, %v3677
  %vm3679 = vcmp.eq.f32.partialorder %v2691, inf
  %v3680 = vsel %vm3679, %v2691, %v3678
  %vm3681 = vcmp.eq.f32.partialorder %v2691, 0.0
  %v3682 = vand.u32 %v2691, 2147483648
  %v3683 = vsel %vm3681, %v3682, %v3680
  %v3684 = vrsqrt.pop %v2696
  %v3685 = vmul.f32 %v2696, %v3684
  %vm3686 = vcmp.eq.f32.partialorder %v2696, inf
  %v3687 = vsel %vm3686, %v2696, %v3685
  %vm3688 = vcmp.eq.f32.partialorder %v2696, 0.0
  %v3689 = vand.u32 %v2696, 2147483648
  %v3690 = vsel %vm3688, %v3689, %v3687
  %v3691 = vrsqrt.pop %v2701
  %v3692 = vmul.f32 %v2701, %v3691
  %vm3693 = vcmp.eq.f32.partialorder %v2701, inf
  %v3694 = vsel %vm3693, %v2701, %v3692
  %vm3695 = vcmp.eq.f32.partialorder %v2701, 0.0
  %v3696 = vand.u32 %v2701, 2147483648
  %v3697 = vsel %vm3695, %v3696, %v3694
  %v3698 = vrsqrt.pop %v2706
  %v3699 = vmul.f32 %v2706, %v3698
  %vm3700 = vcmp.eq.f32.partialorder %v2706, inf
  %v3701 = vsel %vm3700, %v2706, %v3699
  %vm3702 = vcmp.eq.f32.partialorder %v2706, 0.0
  %v3703 = vand.u32 %v2706, 2147483648
  %v3704 = vsel %vm3702, %v3703, %v3701
  %v3705 = vrsqrt.pop %v2711
  %v3706 = vmul.f32 %v2711, %v3705
  %vm3707 = vcmp.eq.f32.partialorder %v2711, inf
  %v3708 = vsel %vm3707, %v2711, %v3706
  %vm3709 = vcmp.eq.f32.partialorder %v2711, 0.0
  %v3710 = vand.u32 %v2711, 2147483648
  %v3711 = vsel %vm3709, %v3710, %v3708
  %v3712 = vrsqrt.pop %v2716
  %v3713 = vmul.f32 %v2716, %v3712
  %vm3714 = vcmp.eq.f32.partialorder %v2716, inf
  %v3715 = vsel %vm3714, %v2716, %v3713
  %vm3716 = vcmp.eq.f32.partialorder %v2716, 0.0
  %v3717 = vand.u32 %v2716, 2147483648
  %v3718 = vsel %vm3716, %v3717, %v3715
  %v3719 = vrsqrt.pop %v2721
  %v3720 = vmul.f32 %v2721, %v3719
  %vm3721 = vcmp.eq.f32.partialorder %v2721, inf
  %v3722 = vsel %vm3721, %v2721, %v3720
  %vm3723 = vcmp.eq.f32.partialorder %v2721, 0.0
  %v3724 = vand.u32 %v2721, 2147483648
  %v3725 = vsel %vm3723, %v3724, %v3722
  %v3726 = vrsqrt.pop %v2726
  %v3727 = vmul.f32 %v2726, %v3726
  %vm3728 = vcmp.eq.f32.partialorder %v2726, inf
  %v3729 = vsel %vm3728, %v2726, %v3727
  %vm3730 = vcmp.eq.f32.partialorder %v2726, 0.0
  %v3731 = vand.u32 %v2726, 2147483648
  %v3732 = vsel %vm3730, %v3731, %v3729
  %v3733 = vrsqrt.pop %v2731
  %v3734 = vmul.f32 %v2731, %v3733
  %vm3735 = vcmp.eq.f32.partialorder %v2731, inf
  %v3736 = vsel %vm3735, %v2731, %v3734
  %vm3737 = vcmp.eq.f32.partialorder %v2731, 0.0
  %v3738 = vand.u32 %v2731, 2147483648
  %v3739 = vsel %vm3737, %v3738, %v3736
  %v3740 = vrsqrt.pop %v2736
  %v3741 = vmul.f32 %v2736, %v3740
  %vm3742 = vcmp.eq.f32.partialorder %v2736, inf
  %v3743 = vsel %vm3742, %v2736, %v3741
  %vm3744 = vcmp.eq.f32.partialorder %v2736, 0.0
  %v3745 = vand.u32 %v2736, 2147483648
  %v3746 = vsel %vm3744, %v3745, %v3743
  %v3747 = vrsqrt.pop %v2741
  %v3748 = vmul.f32 %v2741, %v3747
  %vm3749 = vcmp.eq.f32.partialorder %v2741, inf
  %v3750 = vsel %vm3749, %v2741, %v3748
  %vm3751 = vcmp.eq.f32.partialorder %v2741, 0.0
  %v3752 = vand.u32 %v2741, 2147483648
  %v3753 = vsel %vm3751, %v3752, %v3750
  %v3754 = vrsqrt.pop %v2746
  %v3755 = vmul.f32 %v2746, %v3754
  %vm3756 = vcmp.eq.f32.partialorder %v2746, inf
  %v3757 = vsel %vm3756, %v2746, %v3755
  %vm3758 = vcmp.eq.f32.partialorder %v2746, 0.0
  %v3759 = vand.u32 %v2746, 2147483648
  %v3760 = vsel %vm3758, %v3759, %v3757
  %v3761 = vrsqrt.pop %v2751
  %v3762 = vmul.f32 %v2751, %v3761
  %vm3763 = vcmp.eq.f32.partialorder %v2751, inf
  %v3764 = vsel %vm3763, %v2751, %v3762
  %vm3765 = vcmp.eq.f32.partialorder %v2751, 0.0
  %v3766 = vand.u32 %v2751, 2147483648
  %v3767 = vsel %vm3765, %v3766, %v3764
  %v3768 = vrsqrt.pop %v2756
  %v3769 = vmul.f32 %v2756, %v3768
  %vm3770 = vcmp.eq.f32.partialorder %v2756, inf
  %v3771 = vsel %vm3770, %v2756, %v3769
  %vm3772 = vcmp.eq.f32.partialorder %v2756, 0.0
  %v3773 = vand.u32 %v2756, 2147483648
  %v3774 = vsel %vm3772, %v3773, %v3771
  %v3775 = vrsqrt.pop %v2761
  %v3776 = vmul.f32 %v2761, %v3775
  %vm3777 = vcmp.eq.f32.partialorder %v2761, inf
  %v3778 = vsel %vm3777, %v2761, %v3776
  %vm3779 = vcmp.eq.f32.partialorder %v2761, 0.0
  %v3780 = vand.u32 %v2761, 2147483648
  %v3781 = vsel %vm3779, %v3780, %v3778
  %v3782 = vrsqrt.pop %v2766
  %v3783 = vmul.f32 %v2766, %v3782
  %vm3784 = vcmp.eq.f32.partialorder %v2766, inf
  %v3785 = vsel %vm3784, %v2766, %v3783
  %vm3786 = vcmp.eq.f32.partialorder %v2766, 0.0
  %v3787 = vand.u32 %v2766, 2147483648
  %v3788 = vsel %vm3786, %v3787, %v3785
  %v3789 = vrsqrt.pop %v2771
  %v3790 = vmul.f32 %v2771, %v3789
  %vm3791 = vcmp.eq.f32.partialorder %v2771, inf
  %v3792 = vsel %vm3791, %v2771, %v3790
  %vm3793 = vcmp.eq.f32.partialorder %v2771, 0.0
  %v3794 = vand.u32 %v2771, 2147483648
  %v3795 = vsel %vm3793, %v3794, %v3792
  %v3796 = vrsqrt.pop %v2776
  %v3797 = vmul.f32 %v2776, %v3796
  %vm3798 = vcmp.eq.f32.partialorder %v2776, inf
  %v3799 = vsel %vm3798, %v2776, %v3797
  %vm3800 = vcmp.eq.f32.partialorder %v2776, 0.0
  %v3801 = vand.u32 %v2776, 2147483648
  %v3802 = vsel %vm3800, %v3801, %v3799
  %v3803 = vrsqrt.pop %v2781
  %v3804 = vmul.f32 %v2781, %v3803
  %vm3805 = vcmp.eq.f32.partialorder %v2781, inf
  %v3806 = vsel %vm3805, %v2781, %v3804
  %vm3807 = vcmp.eq.f32.partialorder %v2781, 0.0
  %v3808 = vand.u32 %v2781, 2147483648
  %v3809 = vsel %vm3807, %v3808, %v3806
  %v3810 = vrsqrt.pop %v2786
  %v3811 = vmul.f32 %v2786, %v3810
  %vm3812 = vcmp.eq.f32.partialorder %v2786, inf
  %v3813 = vsel %vm3812, %v2786, %v3811
  %vm3814 = vcmp.eq.f32.partialorder %v2786, 0.0
  %v3815 = vand.u32 %v2786, 2147483648
  %v3816 = vsel %vm3814, %v3815, %v3813
  %v3817 = vrsqrt.pop %v2791
  %v3818 = vmul.f32 %v2791, %v3817
  %vm3819 = vcmp.eq.f32.partialorder %v2791, inf
  %v3820 = vsel %vm3819, %v2791, %v3818
  %vm3821 = vcmp.eq.f32.partialorder %v2791, 0.0
  %v3822 = vand.u32 %v2791, 2147483648
  %v3823 = vsel %vm3821, %v3822, %v3820
  %v3824 = vrsqrt.pop %v2796
  %v3825 = vmul.f32 %v2796, %v3824
  %vm3826 = vcmp.eq.f32.partialorder %v2796, inf
  %v3827 = vsel %vm3826, %v2796, %v3825
  %vm3828 = vcmp.eq.f32.partialorder %v2796, 0.0
  %v3829 = vand.u32 %v2796, 2147483648
  %v3830 = vsel %vm3828, %v3829, %v3827
  %v3831 = vrsqrt.pop %v2801
  %v3832 = vmul.f32 %v2801, %v3831
  %vm3833 = vcmp.eq.f32.partialorder %v2801, inf
  %v3834 = vsel %vm3833, %v2801, %v3832
  %vm3835 = vcmp.eq.f32.partialorder %v2801, 0.0
  %v3836 = vand.u32 %v2801, 2147483648
  %v3837 = vsel %vm3835, %v3836, %v3834
  %v3838 = vrsqrt.pop %v2806
  %v3839 = vmul.f32 %v2806, %v3838
  %vm3840 = vcmp.eq.f32.partialorder %v2806, inf
  %v3841 = vsel %vm3840, %v2806, %v3839
  %vm3842 = vcmp.eq.f32.partialorder %v2806, 0.0
  %v3843 = vand.u32 %v2806, 2147483648
  %v3844 = vsel %vm3842, %v3843, %v3841
  %v3845 = vrsqrt.pop %v2811
  %v3846 = vmul.f32 %v2811, %v3845
  %vm3847 = vcmp.eq.f32.partialorder %v2811, inf
  %v3848 = vsel %vm3847, %v2811, %v3846
  %vm3849 = vcmp.eq.f32.partialorder %v2811, 0.0
  %v3850 = vand.u32 %v2811, 2147483648
  %v3851 = vsel %vm3849, %v3850, %v3848
  %v3852 = vrsqrt.pop %v2816
  %v3853 = vmul.f32 %v2816, %v3852
  %vm3854 = vcmp.eq.f32.partialorder %v2816, inf
  %v3855 = vsel %vm3854, %v2816, %v3853
  %vm3856 = vcmp.eq.f32.partialorder %v2816, 0.0
  %v3857 = vand.u32 %v2816, 2147483648
  %v3858 = vsel %vm3856, %v3857, %v3855
  %v3859 = vrsqrt.pop %v2821
  %v3860 = vmul.f32 %v2821, %v3859
  %vm3861 = vcmp.eq.f32.partialorder %v2821, inf
  %v3862 = vsel %vm3861, %v2821, %v3860
  %vm3863 = vcmp.eq.f32.partialorder %v2821, 0.0
  %v3864 = vand.u32 %v2821, 2147483648
  %v3865 = vsel %vm3863, %v3864, %v3862
  %v3866 = vrsqrt.pop %v2826
  %v3867 = vmul.f32 %v2826, %v3866
  %vm3868 = vcmp.eq.f32.partialorder %v2826, inf
  %v3869 = vsel %vm3868, %v2826, %v3867
  %vm3870 = vcmp.eq.f32.partialorder %v2826, 0.0
  %v3871 = vand.u32 %v2826, 2147483648
  %v3872 = vsel %vm3870, %v3871, %v3869
  %v3873 = vrsqrt.pop %v2831
  %v3874 = vmul.f32 %v2831, %v3873
  %vm3875 = vcmp.eq.f32.partialorder %v2831, inf
  %v3876 = vsel %vm3875, %v2831, %v3874
  %vm3877 = vcmp.eq.f32.partialorder %v2831, 0.0
  %v3878 = vand.u32 %v2831, 2147483648
  %v3879 = vsel %vm3877, %v3878, %v3876
  %v3880 = vrsqrt.pop %v2836
  %v3881 = vmul.f32 %v2836, %v3880
  %vm3882 = vcmp.eq.f32.partialorder %v2836, inf
  %v3883 = vsel %vm3882, %v2836, %v3881
  %vm3884 = vcmp.eq.f32.partialorder %v2836, 0.0
  %v3885 = vand.u32 %v2836, 2147483648
  %v3886 = vsel %vm3884, %v3885, %v3883
  %v3887 = vrsqrt.pop %v2841
  %v3888 = vmul.f32 %v2841, %v3887
  %vm3889 = vcmp.eq.f32.partialorder %v2841, inf
  %v3890 = vsel %vm3889, %v2841, %v3888
  %vm3891 = vcmp.eq.f32.partialorder %v2841, 0.0
  %v3892 = vand.u32 %v2841, 2147483648
  %v3893 = vsel %vm3891, %v3892, %v3890
  %v3894 = vrsqrt.pop %v2846
  %v3895 = vmul.f32 %v2846, %v3894
  %vm3896 = vcmp.eq.f32.partialorder %v2846, inf
  %v3897 = vsel %vm3896, %v2846, %v3895
  %vm3898 = vcmp.eq.f32.partialorder %v2846, 0.0
  %v3899 = vand.u32 %v2846, 2147483648
  %v3900 = vsel %vm3898, %v3899, %v3897
  %v3901 = vrsqrt.pop %v2851
  %v3902 = vmul.f32 %v2851, %v3901
  %vm3903 = vcmp.eq.f32.partialorder %v2851, inf
  %v3904 = vsel %vm3903, %v2851, %v3902
  %vm3905 = vcmp.eq.f32.partialorder %v2851, 0.0
  %v3906 = vand.u32 %v2851, 2147483648
  %v3907 = vsel %vm3905, %v3906, %v3904
  %v3908 = vrsqrt.pop %v2856
  %v3909 = vmul.f32 %v2856, %v3908
  %vm3910 = vcmp.eq.f32.partialorder %v2856, inf
  %v3911 = vsel %vm3910, %v2856, %v3909
  %vm3912 = vcmp.eq.f32.partialorder %v2856, 0.0
  %v3913 = vand.u32 %v2856, 2147483648
  %v3914 = vsel %vm3912, %v3913, %v3911
  %v3915 = vrsqrt.pop %v2861
  %v3916 = vmul.f32 %v2861, %v3915
  %vm3917 = vcmp.eq.f32.partialorder %v2861, inf
  %v3918 = vsel %vm3917, %v2861, %v3916
  %vm3919 = vcmp.eq.f32.partialorder %v2861, 0.0
  %v3920 = vand.u32 %v2861, 2147483648
  %v3921 = vsel %vm3919, %v3920, %v3918
  %v3922 = vrsqrt.pop %v2866
  %v3923 = vmul.f32 %v2866, %v3922
  %vm3924 = vcmp.eq.f32.partialorder %v2866, inf
  %v3925 = vsel %vm3924, %v2866, %v3923
  %vm3926 = vcmp.eq.f32.partialorder %v2866, 0.0
  %v3927 = vand.u32 %v2866, 2147483648
  %v3928 = vsel %vm3926, %v3927, %v3925
  %v3929 = vrsqrt.pop %v2871
  %v3930 = vmul.f32 %v2871, %v3929
  %vm3931 = vcmp.eq.f32.partialorder %v2871, inf
  %v3932 = vsel %vm3931, %v2871, %v3930
  %vm3933 = vcmp.eq.f32.partialorder %v2871, 0.0
  %v3934 = vand.u32 %v2871, 2147483648
  %v3935 = vsel %vm3933, %v3934, %v3932
  %v3936 = vrsqrt.pop %v2876
  %v3937 = vmul.f32 %v2876, %v3936
  %vm3938 = vcmp.eq.f32.partialorder %v2876, inf
  %v3939 = vsel %vm3938, %v2876, %v3937
  %vm3940 = vcmp.eq.f32.partialorder %v2876, 0.0
  %v3941 = vand.u32 %v2876, 2147483648
  %v3942 = vsel %vm3940, %v3941, %v3939
  %v3943 = vrsqrt.pop %v2881
  %v3944 = vmul.f32 %v2881, %v3943
  %vm3945 = vcmp.eq.f32.partialorder %v2881, inf
  %v3946 = vsel %vm3945, %v2881, %v3944
  %vm3947 = vcmp.eq.f32.partialorder %v2881, 0.0
  %v3948 = vand.u32 %v2881, 2147483648
  %v3949 = vsel %vm3947, %v3948, %v3946
  %v3950 = vrsqrt.pop %v2886
  %v3951 = vmul.f32 %v2886, %v3950
  %vm3952 = vcmp.eq.f32.partialorder %v2886, inf
  %v3953 = vsel %vm3952, %v2886, %v3951
  %vm3954 = vcmp.eq.f32.partialorder %v2886, 0.0
  %v3955 = vand.u32 %v2886, 2147483648
  %v3956 = vsel %vm3954, %v3955, %v3953
  %v3957 = vrsqrt.pop %v2891
  %v3958 = vmul.f32 %v2891, %v3957
  %vm3959 = vcmp.eq.f32.partialorder %v2891, inf
  %v3960 = vsel %vm3959, %v2891, %v3958
  %vm3961 = vcmp.eq.f32.partialorder %v2891, 0.0
  %v3962 = vand.u32 %v2891, 2147483648
  %v3963 = vsel %vm3961, %v3962, %v3960
  %v3964 = vrsqrt.pop %v2896
  %v3965 = vmul.f32 %v2896, %v3964
  %vm3966 = vcmp.eq.f32.partialorder %v2896, inf
  %v3967 = vsel %vm3966, %v2896, %v3965
  %vm3968 = vcmp.eq.f32.partialorder %v2896, 0.0
  %v3969 = vand.u32 %v2896, 2147483648
  %v3970 = vsel %vm3968, %v3969, %v3967
  %v3971 = vrsqrt.pop %v2901
  %v3972 = vmul.f32 %v2901, %v3971
  %vm3973 = vcmp.eq.f32.partialorder %v2901, inf
  %v3974 = vsel %vm3973, %v2901, %v3972
  %vm3975 = vcmp.eq.f32.partialorder %v2901, 0.0
  %v3976 = vand.u32 %v2901, 2147483648
  %v3977 = vsel %vm3975, %v3976, %v3974
  %v3978 = vrsqrt.pop %v2906
  %v3979 = vmul.f32 %v2906, %v3978
  %vm3980 = vcmp.eq.f32.partialorder %v2906, inf
  %v3981 = vsel %vm3980, %v2906, %v3979
  %vm3982 = vcmp.eq.f32.partialorder %v2906, 0.0
  %v3983 = vand.u32 %v2906, 2147483648
  %v3984 = vsel %vm3982, %v3983, %v3981
  %v3985 = vrsqrt.pop %v2911
  %v3986 = vmul.f32 %v2911, %v3985
  %vm3987 = vcmp.eq.f32.partialorder %v2911, inf
  %v3988 = vsel %vm3987, %v2911, %v3986
  %vm3989 = vcmp.eq.f32.partialorder %v2911, 0.0
  %v3990 = vand.u32 %v2911, 2147483648
  %v3991 = vsel %vm3989, %v3990, %v3988
  %v3992 = vrsqrt.pop %v2916
  %v3993 = vmul.f32 %v2916, %v3992
  %vm3994 = vcmp.eq.f32.partialorder %v2916, inf
  %v3995 = vsel %vm3994, %v2916, %v3993
  %vm3996 = vcmp.eq.f32.partialorder %v2916, 0.0
  %v3997 = vand.u32 %v2916, 2147483648
  %v3998 = vsel %vm3996, %v3997, %v3995
  %v3999 = vrsqrt.pop %v2921
  %v4000 = vmul.f32 %v2921, %v3999
  %vm4001 = vcmp.eq.f32.partialorder %v2921, inf
  %v4002 = vsel %vm4001, %v2921, %v4000
  %vm4003 = vcmp.eq.f32.partialorder %v2921, 0.0
  %v4004 = vand.u32 %v2921, 2147483648
  %v4005 = vsel %vm4003, %v4004, %v4002
  %v4006 = vrsqrt.pop %v2926
  %v4007 = vmul.f32 %v2926, %v4006
  %vm4008 = vcmp.eq.f32.partialorder %v2926, inf
  %v4009 = vsel %vm4008, %v2926, %v4007
  %vm4010 = vcmp.eq.f32.partialorder %v2926, 0.0
  %v4011 = vand.u32 %v2926, 2147483648
  %v4012 = vsel %vm4010, %v4011, %v4009
  %v4013 = vrsqrt.pop %v2931
  %v4014 = vmul.f32 %v2931, %v4013
  %vm4015 = vcmp.eq.f32.partialorder %v2931, inf
  %v4016 = vsel %vm4015, %v2931, %v4014
  %vm4017 = vcmp.eq.f32.partialorder %v2931, 0.0
  %v4018 = vand.u32 %v2931, 2147483648
  %v4019 = vsel %vm4017, %v4018, %v4016
  %v4020 = vrsqrt.pop %v2936
  %v4021 = vmul.f32 %v2936, %v4020
  %vm4022 = vcmp.eq.f32.partialorder %v2936, inf
  %v4023 = vsel %vm4022, %v2936, %v4021
  %vm4024 = vcmp.eq.f32.partialorder %v2936, 0.0
  %v4025 = vand.u32 %v2936, 2147483648
  %v4026 = vsel %vm4024, %v4025, %v4023
  %v4027 = vadd.f32 %v3585, 1e-10
  %v4028 = vadd.f32 %v3592, 1e-10
  %v4029 = vadd.f32 %v3599, 1e-10
  %v4030 = vadd.f32 %v3606, 1e-10
  %v4031 = vadd.f32 %v3613, 1e-10
  %v4032 = vadd.f32 %v3620, 1e-10
  %v4033 = vadd.f32 %v3627, 1e-10
  %v4034 = vadd.f32 %v3634, 1e-10
  %v4035 = vadd.f32 %v3641, 1e-10
  %v4036 = vadd.f32 %v3648, 1e-10
  %v4037 = vadd.f32 %v3655, 1e-10
  %v4038 = vadd.f32 %v3662, 1e-10
  %v4039 = vadd.f32 %v3669, 1e-10
  %v4040 = vadd.f32 %v3676, 1e-10
  %v4041 = vadd.f32 %v3683, 1e-10
  %v4042 = vadd.f32 %v3690, 1e-10
  %v4043 = vadd.f32 %v3697, 1e-10
  %v4044 = vadd.f32 %v3704, 1e-10
  %v4045 = vadd.f32 %v3711, 1e-10
  %v4046 = vadd.f32 %v3718, 1e-10
  %v4047 = vadd.f32 %v3725, 1e-10
  %v4048 = vadd.f32 %v3732, 1e-10
  %v4049 = vadd.f32 %v3739, 1e-10
  %v4050 = vadd.f32 %v3746, 1e-10
  %v4051 = vadd.f32 %v3753, 1e-10
  %v4052 = vadd.f32 %v3760, 1e-10
  %v4053 = vadd.f32 %v3767, 1e-10
  %v4054 = vadd.f32 %v3774, 1e-10
  %v4055 = vadd.f32 %v3781, 1e-10
  %v4056 = vadd.f32 %v3788, 1e-10
  %v4057 = vadd.f32 %v3795, 1e-10
  %v4058 = vadd.f32 %v3802, 1e-10
  %v4059 = vadd.f32 %v3809, 1e-10
  %v4060 = vadd.f32 %v3816, 1e-10
  %v4061 = vadd.f32 %v3823, 1e-10
  %v4062 = vadd.f32 %v3830, 1e-10
  %v4063 = vadd.f32 %v3837, 1e-10
  %v4064 = vadd.f32 %v3844, 1e-10
  %v4065 = vadd.f32 %v3851, 1e-10
  %v4066 = vadd.f32 %v3858, 1e-10
  %v4067 = vadd.f32 %v3865, 1e-10
  %v4068 = vadd.f32 %v3872, 1e-10
  %v4069 = vadd.f32 %v3879, 1e-10
  %v4070 = vadd.f32 %v3886, 1e-10
  %v4071 = vadd.f32 %v3893, 1e-10
  %v4072 = vadd.f32 %v3900, 1e-10
  %v4073 = vadd.f32 %v3907, 1e-10
  %v4074 = vadd.f32 %v3914, 1e-10
  %v4075 = vadd.f32 %v3921, 1e-10
  %v4076 = vadd.f32 %v3928, 1e-10
  %v4077 = vadd.f32 %v3935, 1e-10
  %v4078 = vadd.f32 %v3942, 1e-10
  %v4079 = vadd.f32 %v3949, 1e-10
  %v4080 = vadd.f32 %v3956, 1e-10
  %v4081 = vadd.f32 %v3963, 1e-10
  %v4082 = vadd.f32 %v3970, 1e-10
  %v4083 = vadd.f32 %v3977, 1e-10
  %v4084 = vadd.f32 %v3984, 1e-10
  %v4085 = vadd.f32 %v3991, 1e-10
  %v4086 = vadd.f32 %v3998, 1e-10
  %v4087 = vadd.f32 %v4005, 1e-10
  %v4088 = vadd.f32 %v4012, 1e-10
  %v4089 = vadd.f32 %v4019, 1e-10
  %v4090 = vadd.f32 %v4026, 1e-10
  %v4091 = vrcp.pop %v4027
  %v4092 = vmul.f32 %v1336, %v4091
  %v4093 = vrcp.pop %v4028
  %v4094 = vmul.f32 %v1337, %v4093
  %v4095 = vrcp.pop %v4029
  %v4096 = vmul.f32 %v1338, %v4095
  %v4097 = vrcp.pop %v4030
  %v4098 = vmul.f32 %v1339, %v4097
  %v4099 = vrcp.pop %v4031
  %v4100 = vmul.f32 %v1340, %v4099
  %v4101 = vrcp.pop %v4032
  %v4102 = vmul.f32 %v1341, %v4101
  %v4103 = vrcp.pop %v4033
  %v4104 = vmul.f32 %v1342, %v4103
  %v4105 = vrcp.pop %v4034
  %v4106 = vmul.f32 %v1343, %v4105
  %v4107 = vrcp.pop %v4035
  %v4108 = vmul.f32 %v1344, %v4107
  %v4109 = vrcp.pop %v4036
  %v4110 = vmul.f32 %v1345, %v4109
  %v4111 = vrcp.pop %v4037
  %v4112 = vmul.f32 %v1346, %v4111
  %v4113 = vrcp.pop %v4038
  %v4114 = vmul.f32 %v1347, %v4113
  %v4115 = vrcp.pop %v4039
  %v4116 = vmul.f32 %v1348, %v4115
  %v4117 = vrcp.pop %v4040
  %v4118 = vmul.f32 %v1349, %v4117
  %v4119 = vrcp.pop %v4041
  %v4120 = vmul.f32 %v1350, %v4119
  %v4121 = vrcp.pop %v4042
  %v4122 = vmul.f32 %v1351, %v4121
  %v4123 = vrcp.pop %v4043
  %v4124 = vmul.f32 %v1352, %v4123
  %v4125 = vrcp.pop %v4044
  %v4126 = vmul.f32 %v1353, %v4125
  %v4127 = vrcp.pop %v4045
  %v4128 = vmul.f32 %v1354, %v4127
  %v4129 = vrcp.pop %v4046
  %v4130 = vmul.f32 %v1355, %v4129
  %v4131 = vrcp.pop %v4047
  %v4132 = vmul.f32 %v1356, %v4131
  %v4133 = vrcp.pop %v4048
  %v4134 = vmul.f32 %v1357, %v4133
  %v4135 = vrcp.pop %v4049
  %v4136 = vmul.f32 %v1358, %v4135
  %v4137 = vrcp.pop %v4050
  %v4138 = vmul.f32 %v1359, %v4137
  %v4139 = vrcp.pop %v4051
  %v4140 = vmul.f32 %v1360, %v4139
  %v4141 = vrcp.pop %v4052
  %v4142 = vmul.f32 %v1361, %v4141
  %v4143 = vrcp.pop %v4053
  %v4144 = vmul.f32 %v1362, %v4143
  %v4145 = vrcp.pop %v4054
  %v4146 = vmul.f32 %v1363, %v4145
  %v4147 = vrcp.pop %v4055
  %v4148 = vmul.f32 %v1364, %v4147
  %v4149 = vrcp.pop %v4056
  %v4150 = vmul.f32 %v1365, %v4149
  %v4151 = vrcp.pop %v4057
  %v4152 = vmul.f32 %v1366, %v4151
  %v4153 = vrcp.pop %v4058
  %v4154 = vmul.f32 %v1367, %v4153
  %v4155 = vrcp.pop %v4059
  %v4156 = vmul.f32 %v1368, %v4155
  %v4157 = vrcp.pop %v4060
  %v4158 = vmul.f32 %v1369, %v4157
  %v4159 = vrcp.pop %v4061
  %v4160 = vmul.f32 %v1370, %v4159
  %v4161 = vrcp.pop %v4062
  %v4162 = vmul.f32 %v1371, %v4161
  %v4163 = vrcp.pop %v4063
  %v4164 = vmul.f32 %v1372, %v4163
  %v4165 = vrcp.pop %v4064
  %v4166 = vmul.f32 %v1373, %v4165
  %v4167 = vrcp.pop %v4065
  %v4168 = vmul.f32 %v1374, %v4167
  %v4169 = vrcp.pop %v4066
  %v4170 = vmul.f32 %v1375, %v4169
  %v4171 = vrcp.pop %v4067
  %v4172 = vmul.f32 %v1376, %v4171
  %v4173 = vrcp.pop %v4068
  %v4174 = vmul.f32 %v1377, %v4173
  %v4175 = vrcp.pop %v4069
  %v4176 = vmul.f32 %v1378, %v4175
  %v4177 = vrcp.pop %v4070
  %v4178 = vmul.f32 %v1379, %v4177
  %v4179 = vrcp.pop %v4071
  %v4180 = vmul.f32 %v1380, %v4179
  %v4181 = vrcp.pop %v4072
  %v4182 = vmul.f32 %v1381, %v4181
  %v4183 = vrcp.pop %v4073
  %v4184 = vmul.f32 %v1382, %v4183
  %v4185 = vrcp.pop %v4074
  %v4186 = vmul.f32 %v1383, %v4185
  %v4187 = vrcp.pop %v4075
  %v4188 = vmul.f32 %v1384, %v4187
  %v4189 = vrcp.pop %v4076
  %v4190 = vmul.f32 %v1385, %v4189
  %v4191 = vrcp.pop %v4077
  %v4192 = vmul.f32 %v1386, %v4191
  %v4193 = vrcp.pop %v4078
  %v4194 = vmul.f32 %v1387, %v4193
  %v4195 = vrcp.pop %v4079
  %v4196 = vmul.f32 %v1388, %v4195
  %v4197 = vrcp.pop %v4080
  %v4198 = vmul.f32 %v1389, %v4197
  %v4199 = vrcp.pop %v4081
  %v4200 = vmul.f32 %v1390, %v4199
  %v4201 = vrcp.pop %v4082
  %v4202 = vmul.f32 %v1391, %v4201
  %v4203 = vrcp.pop %v4083
  %v4204 = vmul.f32 %v1392, %v4203
  %v4205 = vrcp.pop %v4084
  %v4206 = vmul.f32 %v1393, %v4205
  %v4207 = vrcp.pop %v4085
  %v4208 = vmul.f32 %v1394, %v4207
  %v4209 = vrcp.pop %v4086
  %v4210 = vmul.f32 %v1395, %v4209
  %v4211 = vrcp.pop %v4087
  %v4212 = vmul.f32 %v1396, %v4211
  %v4213 = vrcp.pop %v4088
  %v4214 = vmul.f32 %v1397, %v4213
  %v4215 = vrcp.pop %v4089
  %v4216 = vmul.f32 %v1398, %v4215
  %v4217 = vrcp.pop %v4090
  %v4218 = vmul.f32 %v1399, %v4217
  %v4219 = vsub.f32 %v3452, %v4092
  %v4220 = vsub.f32 %v3454, %v4094
  %v4221 = vsub.f32 %v3456, %v4096
  %v4222 = vsub.f32 %v3458, %v4098
  %v4223 = vsub.f32 %v3460, %v4100
  %v4224 = vsub.f32 %v3462, %v4102
  %v4225 = vsub.f32 %v3464, %v4104
  %v4226 = vsub.f32 %v3466, %v4106
  %v4227 = vsub.f32 %v3468, %v4108
  %v4228 = vsub.f32 %v3470, %v4110
  %v4229 = vsub.f32 %v3472, %v4112
  %v4230 = vsub.f32 %v3474, %v4114
  %v4231 = vsub.f32 %v3476, %v4116
  %v4232 = vsub.f32 %v3478, %v4118
  %v4233 = vsub.f32 %v3480, %v4120
  %v4234 = vsub.f32 %v3482, %v4122
  %v4235 = vsub.f32 %v3484, %v4124
  %v4236 = vsub.f32 %v3486, %v4126
  %v4237 = vsub.f32 %v3488, %v4128
  %v4238 = vsub.f32 %v3490, %v4130
  %v4239 = vsub.f32 %v3492, %v4132
  %v4240 = vsub.f32 %v3494, %v4134
  %v4241 = vsub.f32 %v3496, %v4136
  %v4242 = vsub.f32 %v3498, %v4138
  %v4243 = vsub.f32 %v3500, %v4140
  %v4244 = vsub.f32 %v3502, %v4142
  %v4245 = vsub.f32 %v3504, %v4144
  %v4246 = vsub.f32 %v3506, %v4146
  %v4247 = vsub.f32 %v3508, %v4148
  %v4248 = vsub.f32 %v3510, %v4150
  %v4249 = vsub.f32 %v3512, %v4152
  %v4250 = vsub.f32 %v3514, %v4154
  %v4251 = vsub.f32 %v3516, %v4156
  %v4252 = vsub.f32 %v3518, %v4158
  %v4253 = vsub.f32 %v3520, %v4160
  %v4254 = vsub.f32 %v3522, %v4162
  %v4255 = vsub.f32 %v3524, %v4164
  %v4256 = vsub.f32 %v3526, %v4166
  %v4257 = vsub.f32 %v3528, %v4168
  %v4258 = vsub.f32 %v3530, %v4170
  %v4259 = vsub.f32 %v3532, %v4172
  %v4260 = vsub.f32 %v3534, %v4174
  %v4261 = vsub.f32 %v3536, %v4176
  %v4262 = vsub.f32 %v3538, %v4178
  %v4263 = vsub.f32 %v3540, %v4180
  %v4264 = vsub.f32 %v3542, %v4182
  %v4265 = vsub.f32 %v3544, %v4184
  %v4266 = vsub.f32 %v3546, %v4186
  %v4267 = vsub.f32 %v3548, %v4188
  %v4268 = vsub.f32 %v3550, %v4190
  %v4269 = vsub.f32 %v3552, %v4192
  %v4270 = vsub.f32 %v3554, %v4194
  %v4271 = vsub.f32 %v3556, %v4196
  %v4272 = vsub.f32 %v3558, %v4198
  %v4273 = vsub.f32 %v3560, %v4200
  %v4274 = vsub.f32 %v3562, %v4202
  %v4275 = vsub.f32 %v3564, %v4204
  %v4276 = vsub.f32 %v3566, %v4206
  %v4277 = vsub.f32 %v3568, %v4208
  %v4278 = vsub.f32 %v3570, %v4210
  %v4279 = vsub.f32 %v3572, %v4212
  %v4280 = vsub.f32 %v3574, %v4214
  %v4281 = vsub.f32 %v3576, %v4216
  %v4282 = vsub.f32 %v3578, %v4218
  %v4283 = vmul.f32 %v4219, %v4219
  %v4284 = vmul.f32 %v4220, %v4220
  %v4285 = vmul.f32 %v4221, %v4221
  %v4286 = vmul.f32 %v4222, %v4222
  %v4287 = vmul.f32 %v4223, %v4223
  %v4288 = vmul.f32 %v4224, %v4224
  %v4289 = vmul.f32 %v4225, %v4225
  %v4290 = vmul.f32 %v4226, %v4226
  %v4291 = vmul.f32 %v4227, %v4227
  %v4292 = vmul.f32 %v4228, %v4228
  %v4293 = vmul.f32 %v4229, %v4229
  %v4294 = vmul.f32 %v4230, %v4230
  %v4295 = vmul.f32 %v4231, %v4231
  %v4296 = vmul.f32 %v4232, %v4232
  %v4297 = vmul.f32 %v4233, %v4233
  %v4298 = vmul.f32 %v4234, %v4234
  %v4299 = vmul.f32 %v4235, %v4235
  %v4300 = vmul.f32 %v4236, %v4236
  %v4301 = vmul.f32 %v4237, %v4237
  %v4302 = vmul.f32 %v4238, %v4238
  %v4303 = vmul.f32 %v4239, %v4239
  %v4304 = vmul.f32 %v4240, %v4240
  %v4305 = vmul.f32 %v4241, %v4241
  %v4306 = vmul.f32 %v4242, %v4242
  %v4307 = vmul.f32 %v4243, %v4243
  %v4308 = vmul.f32 %v4244, %v4244
  %v4309 = vmul.f32 %v4245, %v4245
  %v4310 = vmul.f32 %v4246, %v4246
  %v4311 = vmul.f32 %v4247, %v4247
  %v4312 = vmul.f32 %v4248, %v4248
  %v4313 = vmul.f32 %v4249, %v4249
  %v4314 = vmul.f32 %v4250, %v4250
  %v4315 = vmul.f32 %v4251, %v4251
  %v4316 = vmul.f32 %v4252, %v4252
  %v4317 = vmul.f32 %v4253, %v4253
  %v4318 = vmul.f32 %v4254, %v4254
  %v4319 = vmul.f32 %v4255, %v4255
  %v4320 = vmul.f32 %v4256, %v4256
  %v4321 = vmul.f32 %v4257, %v4257
  %v4322 = vmul.f32 %v4258, %v4258
  %v4323 = vmul.f32 %v4259, %v4259
  %v4324 = vmul.f32 %v4260, %v4260
  %v4325 = vmul.f32 %v4261, %v4261
  %v4326 = vmul.f32 %v4262, %v4262
  %v4327 = vmul.f32 %v4263, %v4263
  %v4328 = vmul.f32 %v4264, %v4264
  %v4329 = vmul.f32 %v4265, %v4265
  %v4330 = vmul.f32 %v4266, %v4266
  %v4331 = vmul.f32 %v4267, %v4267
  %v4332 = vmul.f32 %v4268, %v4268
  %v4333 = vmul.f32 %v4269, %v4269
  %v4334 = vmul.f32 %v4270, %v4270
  %v4335 = vmul.f32 %v4271, %v4271
  %v4336 = vmul.f32 %v4272, %v4272
  %v4337 = vmul.f32 %v4273, %v4273
  %v4338 = vmul.f32 %v4274, %v4274
  %v4339 = vmul.f32 %v4275, %v4275
  %v4340 = vmul.f32 %v4276, %v4276
  %v4341 = vmul.f32 %v4277, %v4277
  %v4342 = vmul.f32 %v4278, %v4278
  %v4343 = vmul.f32 %v4279, %v4279
  %v4344 = vmul.f32 %v4280, %v4280
  %v4345 = vmul.f32 %v4281, %v4281
  %v4346 = vmul.f32 %v4282, %v4282
  %v4347 = vld [vmem:[%s4] sm:$0x1]
  %v4349 = vlaneseq
  %v4350 = vshrl.u32 %v4349, 7
  %v4351 = vsub.s32 0, %v4350
  %v4352 = vrot.slane %v4347, %v4351
  %v4354 = vmul.f32 %v4283, %v4352
  %v4355 = vmul.f32 %v4284, %v4352
  %v4356 = vmul.f32 %v4285, %v4352
  %v4357 = vmul.f32 %v4286, %v4352
  %v4358 = vmul.f32 %v4287, %v4352
  %v4359 = vmul.f32 %v4288, %v4352
  %v4360 = vmul.f32 %v4289, %v4352
  %v4361 = vmul.f32 %v4290, %v4352
  %v4362 = vmul.f32 %v4291, %v4352
  %v4363 = vmul.f32 %v4292, %v4352
  %v4364 = vmul.f32 %v4293, %v4352
  %v4365 = vmul.f32 %v4294, %v4352
  %v4366 = vmul.f32 %v4295, %v4352
  %v4367 = vmul.f32 %v4296, %v4352
  %v4368 = vmul.f32 %v4297, %v4352
  %v4369 = vmul.f32 %v4298, %v4352
  %v4370 = vmul.f32 %v4299, %v4352
  %v4371 = vmul.f32 %v4300, %v4352
  %v4372 = vmul.f32 %v4301, %v4352
  %v4373 = vmul.f32 %v4302, %v4352
  %v4374 = vmul.f32 %v4303, %v4352
  %v4375 = vmul.f32 %v4304, %v4352
  %v4376 = vmul.f32 %v4305, %v4352
  %v4377 = vmul.f32 %v4306, %v4352
  %v4378 = vmul.f32 %v4307, %v4352
  %v4379 = vmul.f32 %v4308, %v4352
  %v4380 = vmul.f32 %v4309, %v4352
  %v4381 = vmul.f32 %v4310, %v4352
  %v4382 = vmul.f32 %v4311, %v4352
  %v4383 = vmul.f32 %v4312, %v4352
  %v4384 = vmul.f32 %v4313, %v4352
  %v4385 = vmul.f32 %v4314, %v4352
  %v4386 = vmul.f32 %v4315, %v4352
  %v4387 = vmul.f32 %v4316, %v4352
  %v4388 = vmul.f32 %v4317, %v4352
  %v4389 = vmul.f32 %v4318, %v4352
  %v4390 = vmul.f32 %v4319, %v4352
  %v4391 = vmul.f32 %v4320, %v4352
  %v4392 = vmul.f32 %v4321, %v4352
  %v4393 = vmul.f32 %v4322, %v4352
  %v4394 = vmul.f32 %v4323, %v4352
  %v4395 = vmul.f32 %v4324, %v4352
  %v4396 = vmul.f32 %v4325, %v4352
  %v4397 = vmul.f32 %v4326, %v4352
  %v4398 = vmul.f32 %v4327, %v4352
  %v4399 = vmul.f32 %v4328, %v4352
  %v4400 = vmul.f32 %v4329, %v4352
  %v4401 = vmul.f32 %v4330, %v4352
  %v4402 = vmul.f32 %v4331, %v4352
  %v4403 = vmul.f32 %v4332, %v4352
  %v4404 = vmul.f32 %v4333, %v4352
  %v4405 = vmul.f32 %v4334, %v4352
  %v4406 = vmul.f32 %v4335, %v4352
  %v4407 = vmul.f32 %v4336, %v4352
  %v4408 = vmul.f32 %v4337, %v4352
  %v4409 = vmul.f32 %v4338, %v4352
  %v4410 = vmul.f32 %v4339, %v4352
  %v4411 = vmul.f32 %v4340, %v4352
  %v4412 = vmul.f32 %v4341, %v4352
  %v4413 = vmul.f32 %v4342, %v4352
  %v4414 = vmul.f32 %v4343, %v4352
  %v4415 = vmul.f32 %v4344, %v4352
  %v4416 = vmul.f32 %v4345, %v4352
  %v4417 = vmul.f32 %v4346, %v4352
  %v4418 = vadd.f32 %v4354, %v4355
  %v4419 = vadd.f32 %v4418, %v4356
  %v4420 = vadd.f32 %v4419, %v4357
  %v4421 = vadd.f32 %v4420, %v4358
  %v4422 = vadd.f32 %v4421, %v4359
  %v4423 = vadd.f32 %v4422, %v4360
  %v4424 = vadd.f32 %v4423, %v4361
  %v4425 = vadd.f32 %v4424, %v4362
  %v4426 = vadd.f32 %v4425, %v4363
  %v4427 = vadd.f32 %v4426, %v4364
  %v4428 = vadd.f32 %v4427, %v4365
  %v4429 = vadd.f32 %v4428, %v4366
  %v4430 = vadd.f32 %v4429, %v4367
  %v4431 = vadd.f32 %v4430, %v4368
  %v4432 = vadd.f32 %v4431, %v4369
  %v4433 = vadd.f32 %v4432, %v4370
  %v4434 = vadd.f32 %v4433, %v4371
  %v4435 = vadd.f32 %v4434, %v4372
  %v4436 = vadd.f32 %v4435, %v4373
  %v4437 = vadd.f32 %v4436, %v4374
  %v4438 = vadd.f32 %v4437, %v4375
  %v4439 = vadd.f32 %v4438, %v4376
  %v4440 = vadd.f32 %v4439, %v4377
  %v4441 = vadd.f32 %v4440, %v4378
  %v4442 = vadd.f32 %v4441, %v4379
  %v4443 = vadd.f32 %v4442, %v4380
  %v4444 = vadd.f32 %v4443, %v4381
  %v4445 = vadd.f32 %v4444, %v4382
  %v4446 = vadd.f32 %v4445, %v4383
  %v4447 = vadd.f32 %v4446, %v4384
  %v4448 = vadd.f32 %v4447, %v4385
  %v4449 = vadd.f32 %v4448, %v4386
  %v4450 = vadd.f32 %v4449, %v4387
  %v4451 = vadd.f32 %v4450, %v4388
  %v4452 = vadd.f32 %v4451, %v4389
  %v4453 = vadd.f32 %v4452, %v4390
  %v4454 = vadd.f32 %v4453, %v4391
  %v4455 = vadd.f32 %v4454, %v4392
  %v4456 = vadd.f32 %v4455, %v4393
  %v4457 = vadd.f32 %v4456, %v4394
  %v4458 = vadd.f32 %v4457, %v4395
  %v4459 = vadd.f32 %v4458, %v4396
  %v4460 = vadd.f32 %v4459, %v4397
  %v4461 = vadd.f32 %v4460, %v4398
  %v4462 = vadd.f32 %v4461, %v4399
  %v4463 = vadd.f32 %v4462, %v4400
  %v4464 = vadd.f32 %v4463, %v4401
  %v4465 = vadd.f32 %v4464, %v4402
  %v4466 = vadd.f32 %v4465, %v4403
  %v4467 = vadd.f32 %v4466, %v4404
  %v4468 = vadd.f32 %v4467, %v4405
  %v4469 = vadd.f32 %v4468, %v4406
  %v4470 = vadd.f32 %v4469, %v4407
  %v4471 = vadd.f32 %v4470, %v4408
  %v4472 = vadd.f32 %v4471, %v4409
  %v4473 = vadd.f32 %v4472, %v4410
  %v4474 = vadd.f32 %v4473, %v4411
  %v4475 = vadd.f32 %v4474, %v4412
  %v4476 = vadd.f32 %v4475, %v4413
  %v4477 = vadd.f32 %v4476, %v4414
  %v4478 = vadd.f32 %v4477, %v4415
  %v4479 = vadd.f32 %v4478, %v4416
  %v4480 = vadd.f32 %v4479, %v4417
  %v4481 = vrot.slane %v4480, 4
  %v4482 = vadd.f32 %v4480, %v4481
  %v4483 = vrot.slane %v4482, 2
  %v4484 = vadd.f32 %v4482, %v4483
  %v4485 = vrot.slane %v4484, 1
  %v4486 = vadd.f32 %v4484, %v4485
  %4487 = vst [vmem:[%s7] sm:$0x1] %v4486
  // Predicated region
  $region22: #{lpips_mse_loss.6} parent=0 // pred_check
    _
  $region23: #{lpips_mse_loss.6} parent=0 // pred_check_branch
    %4489 = sbr.rel (0) target = $region25
  $region24: #{lpips_mse_loss.6} parent=0 // pred_region
    _
  $region25: #{lpips_mse_loss.6} parent=0 // pred_fallthru
    _
  // Predicated region
  $region26: #{lpips_mse_loss.6} parent=0 // pred_check
    _
  $region27: #{lpips_mse_loss.6} parent=0 // pred_check_branch
    %4491 = sbr.rel (0) target = $region29
  $region28: #{lpips_mse_loss.6} parent=0 // pred_region
    _
  $region29: #{lpips_mse_loss.6} parent=0 // pred_fallthru
    _
  // Predicated region
  $region30: #{lpips_mse_loss.6} parent=0 // pred_check
    _
  $region31: #{lpips_mse_loss.6} parent=0 // pred_check_branch
    %4493 = sbr.rel (0) target = $region33
  $region32: #{lpips_mse_loss.6} parent=0 // pred_region
    _
  $region33: #{lpips_mse_loss.6} parent=0 // pred_fallthru
    _
  // Predicated region
  $region34: #{lpips_mse_loss.6} parent=0 // pred_check
    _
  $region35: #{lpips_mse_loss.6} parent=0 // pred_check_branch
    %4495 = sbr.rel (0) target = $region37
  $region36: #{lpips_mse_loss.6} parent=0 // pred_region
    _
  $region37: #{lpips_mse_loss.6} parent=0 // pred_fallthru
    _
  // Predicated region
  $region38: #{lpips_mse_loss.6} parent=0 // pred_check
    _
  $region39: #{lpips_mse_loss.6} parent=0 // pred_check_branch
    %4497 = sbr.rel (0) target = $region41
  $region40: #{lpips_mse_loss.6} parent=0 // pred_region
    _
  $region41: #{lpips_mse_loss.6} parent=0 // pred_fallthru
    _
  // Predicated region
  $region42: #{lpips_mse_loss.6} parent=0 // pred_check
    _
  $region43: #{lpips_mse_loss.6} parent=0 // pred_check_branch
    %4499 = sbr.rel (0) target = $region45
  $region44: #{lpips_mse_loss.6} parent=0 // pred_region
    _
  $region45: #{lpips_mse_loss.6} parent=0 // pred_fallthru
    _

// kernel: lpips_mse_loss.5
$region0: #{lpips_mse_loss.5}
  #allocation0 [shape = 'u32[]', space=smem, size = 0x4, offset = 0x4, fixed_abs, tag = 'smem constant byte address 0x4 - core index']
  #allocation1 [shape = 'u32[144,128]{1,0:T(1,128)}', space=vmem, size = 0x12000, scoped, tag = 'internal scratch']
  %s0 = inlined_call_operand.vmem [shape: f32[16,128], index: 0, kind: input, shape index: {}]
  %s1 = inlined_call_operand.vmem [shape: f32[16,128], index: 1, kind: input, shape index: {}]
  %s2 = inlined_call_operand.vmem [shape: f32[1,1,128], index: 2, kind: output, shape index: {}]
  %s3 = sld [smem:[#allocation0]]
  $region18: #{lpips_mse_loss.5} parent=0
    _
  %s5 = ssub.s32 1, %s3
  %s6 = scalar_select 0, %s5, %s3
  // Predicated region
  $region2: #{lpips_mse_loss.5} parent=0 // pred_check
    _
  $region3: #{lpips_mse_loss.5} parent=0 // pred_check_branch
    %8 = sbr.rel (0) target = $region5
  $region4: #{lpips_mse_loss.5} parent=0 // pred_region
    _
  $region5: #{lpips_mse_loss.5} parent=0 // pred_fallthru
    _
  // Predicated region
  $region6: #{lpips_mse_loss.5} parent=0 // pred_check
    _
  $region7: #{lpips_mse_loss.5} parent=0 // pred_check_branch
    %10 = sbr.rel (0) target = $region9
  $region8: #{lpips_mse_loss.5} parent=0 // pred_region
    _
  $region9: #{lpips_mse_loss.5} parent=0 // pred_fallthru
    _
  %v11 = vld [vmem:[%s0] sm:$0xff]
  %v12 = vld [vmem:[%s0 + $0x8] sm:$0xff]
  %v13 = vld [vmem:[%s1] sm:$0xff]
  %v14 = vld [vmem:[%s1 + $0x8] sm:$0xff]
  %v15 = vsub.f32 %v11, %v13
  %v16 = vsub.f32 %v12, %v14
  %v17 = vmul.f32 %v15, %v15
  %v18 = vmul.f32 %v16, %v16
  %v19 = vadd.f32 %v17, %v18
  %v20 = vrot.slane %v19, 4
  %v21 = vadd.f32 %v19, %v20
  %v22 = vrot.slane %v21, 2
  %v23 = vadd.f32 %v21, %v22
  %v24 = vrot.slane %v23, 1
  %v25 = vadd.f32 %v23, %v24
  %26 = vst [vmem:[%s2] sm:$0x1] %v25
  // Predicated region
  $region10: #{lpips_mse_loss.5} parent=0 // pred_check
    _
  $region11: #{lpips_mse_loss.5} parent=0 // pred_check_branch
    %28 = sbr.rel (0) target = $region13
  $region12: #{lpips_mse_loss.5} parent=0 // pred_region
    _
  $region13: #{lpips_mse_loss.5} parent=0 // pred_fallthru
    _
  // Predicated region
  $region14: #{lpips_mse_loss.5} parent=0 // pred_check
    _
  $region15: #{lpips_mse_loss.5} parent=0 // pred_check_branch
    %30 = sbr.rel (0) target = $region17
  $region16: #{lpips_mse_loss.5} parent=0 // pred_region
    _
  $region17: #{lpips_mse_loss.5} parent=0 // pred_fallthru
    _

// kernel: lpips_mse_loss.7
$region0: #{lpips_mse_loss.7}
  #allocation0 [shape = 'u32[]', space=smem, size = 0x4, offset = 0x4, fixed_abs, tag = 'smem constant byte address 0x4 - core index']
  #allocation1 [shape = 'u32[144,128]{1,0:T(1,128)}', space=vmem, size = 0x12000, scoped, tag = 'internal scratch']
  %s0 = inlined_call_operand.vmem [shape: bf16[512,72], index: 0, kind: input, shape index: {}]
  %s1 = inlined_call_operand.vmem [shape: bf16[512,72], index: 1, kind: input, shape index: {}]
  %s2 = inlined_call_operand.vmem [shape: bf16[72,128], index: 2, kind: input, shape index: {}]
  %s3 = inlined_call_operand.vmem [shape: f32[1,128], index: 3, kind: input, shape index: {}]
  %s4 = inlined_call_operand.vmem [shape: f32[1,128], index: 4, kind: input, shape index: {}]
  %s5 = inlined_call_operand.vmem [shape: f32[1,1,128], index: 5, kind: output, shape index: {}]
  %s6 = sld [smem:[#allocation0]]
  $region30: #{lpips_mse_loss.7} parent=0
    _
  %s8 = ssub.s32 1, %s6
  %s9 = scalar_select 0, %s8, %s6
  // Predicated region
  $region2: #{lpips_mse_loss.7} parent=0 // pred_check
    _
  $region3: #{lpips_mse_loss.7} parent=0 // pred_check_branch
    %11 = sbr.rel (0) target = $region5
  $region4: #{lpips_mse_loss.7} parent=0 // pred_region
    _
  $region5: #{lpips_mse_loss.7} parent=0 // pred_fallthru
    _
  // Predicated region
  $region6: #{lpips_mse_loss.7} parent=0 // pred_check
    _
  $region7: #{lpips_mse_loss.7} parent=0 // pred_check_branch
    %13 = sbr.rel (0) target = $region9
  $region8: #{lpips_mse_loss.7} parent=0 // pred_region
    _
  $region9: #{lpips_mse_loss.7} parent=0 // pred_fallthru
    _
  // Predicated region
  $region10: #{lpips_mse_loss.7} parent=0 // pred_check
    _
  $region11: #{lpips_mse_loss.7} parent=0 // pred_check_branch
    %15 = sbr.rel (0) target = $region13
  $region12: #{lpips_mse_loss.7} parent=0 // pred_region
    _
  $region13: #{lpips_mse_loss.7} parent=0 // pred_fallthru
    _
  // Predicated region
  $region14: #{lpips_mse_loss.7} parent=0 // pred_check
    _
  $region15: #{lpips_mse_loss.7} parent=0 // pred_check_branch
    %17 = sbr.rel (0) target = $region17
  $region16: #{lpips_mse_loss.7} parent=0 // pred_region
    _
  $region17: #{lpips_mse_loss.7} parent=0 // pred_fallthru
    _
  // Predicated region
  $region18: #{lpips_mse_loss.7} parent=0 // pred_check
    _
  $region19: #{lpips_mse_loss.7} parent=0 // pred_check_branch
    %19 = sbr.rel (0) target = $region21
  $region20: #{lpips_mse_loss.7} parent=0 // pred_region
    _
  $region21: #{lpips_mse_loss.7} parent=0 // pred_fallthru
    _
  %v21 = vld [vmem:[%s0] sm:$0xf]
  %v22 = vld [vmem:[%s0 + $0x4] sm:$0xf]
  %v23 = vld [vmem:[%s0 + $0x8] sm:$0xf]
  %v24 = vld [vmem:[%s0 + $0xc] sm:$0xf]
  %v25 = vld [vmem:[%s0 + $0x10] sm:$0xf]
  %v26 = vld [vmem:[%s0 + $0x14] sm:$0xf]
  %v27 = vld [vmem:[%s0 + $0x18] sm:$0xf]
  %v28 = vld [vmem:[%s0 + $0x1c] sm:$0xf]
  %v29 = vld [vmem:[%s0 + $0x20] sm:$0xf]
  %v30 = vld [vmem:[%s0 + $0x24] sm:$0xf]
  %v31 = vld [vmem:[%s0 + $0x28] sm:$0xf]
  %v32 = vld [vmem:[%s0 + $0x2c] sm:$0xf]
  %v33 = vld [vmem:[%s0 + $0x30] sm:$0xf]
  %v34 = vld [vmem:[%s0 + $0x34] sm:$0xf]
  %v35 = vld [vmem:[%s0 + $0x38] sm:$0xf]
  %v36 = vld [vmem:[%s0 + $0x3c] sm:$0xf]
  %v37 = vld [vmem:[%s0 + $0x40] sm:$0xf]
  %v38 = vld [vmem:[%s0 + $0x44] sm:$0xf]
  %v39 = vld [vmem:[%s0 + $0x48] sm:$0xf]
  %v40 = vld [vmem:[%s0 + $0x4c] sm:$0xf]
  %v41 = vld [vmem:[%s0 + $0x50] sm:$0xf]
  %v42 = vld [vmem:[%s0 + $0x54] sm:$0xf]
  %v43 = vld [vmem:[%s0 + $0x58] sm:$0xf]
  %v44 = vld [vmem:[%s0 + $0x5c] sm:$0xf]
  %v45 = vld [vmem:[%s0 + $0x60] sm:$0xf]
  %v46 = vld [vmem:[%s0 + $0x64] sm:$0xf]
  %v47 = vld [vmem:[%s0 + $0x68] sm:$0xf]
  %v48 = vld [vmem:[%s0 + $0x6c] sm:$0xf]
  %v49 = vld [vmem:[%s0 + $0x70] sm:$0xf]
  %v50 = vld [vmem:[%s0 + $0x74] sm:$0xf]
  %v51 = vld [vmem:[%s0 + $0x78] sm:$0xf]
  %v52 = vld [vmem:[%s0 + $0x7c] sm:$0xf]
  %v53 = vld [vmem:[%s0 + $0x80] sm:$0xf]
  %v54 = vld [vmem:[%s0 + $0x84] sm:$0xf]
  %v55 = vld [vmem:[%s0 + $0x88] sm:$0xf]
  %v56 = vld [vmem:[%s0 + $0x8c] sm:$0xf]
  %v57 = vld [vmem:[%s0 + $0x90] sm:$0xf]
  %v58 = vld [vmem:[%s0 + $0x94] sm:$0xf]
  %v59 = vld [vmem:[%s0 + $0x98] sm:$0xf]
  %v60 = vld [vmem:[%s0 + $0x9c] sm:$0xf]
  %v61 = vld [vmem:[%s0 + $0xa0] sm:$0xf]
  %v62 = vld [vmem:[%s0 + $0xa4] sm:$0xf]
  %v63 = vld [vmem:[%s0 + $0xa8] sm:$0xf]
  %v64 = vld [vmem:[%s0 + $0xac] sm:$0xf]
  %v65 = vld [vmem:[%s0 + $0xb0] sm:$0xf]
  %v66 = vld [vmem:[%s0 + $0xb4] sm:$0xf]
  %v67 = vld [vmem:[%s0 + $0xb8] sm:$0xf]
  %v68 = vld [vmem:[%s0 + $0xbc] sm:$0xf]
  %v69 = vld [vmem:[%s0 + $0xc0] sm:$0xf]
  %v70 = vld [vmem:[%s0 + $0xc4] sm:$0xf]
  %v71 = vld [vmem:[%s0 + $0xc8] sm:$0xf]
  %v72 = vld [vmem:[%s0 + $0xcc] sm:$0xf]
  %v73 = vld [vmem:[%s0 + $0xd0] sm:$0xf]
  %v74 = vld [vmem:[%s0 + $0xd4] sm:$0xf]
  %v75 = vld [vmem:[%s0 + $0xd8] sm:$0xf]
  %v76 = vld [vmem:[%s0 + $0xdc] sm:$0xf]
  %v77 = vld [vmem:[%s0 + $0xe0] sm:$0xf]
  %v78 = vld [vmem:[%s0 + $0xe4] sm:$0xf]
  %v79 = vld [vmem:[%s0 + $0xe8] sm:$0xf]
  %v80 = vld [vmem:[%s0 + $0xec] sm:$0xf]
  %v81 = vld [vmem:[%s0 + $0xf0] sm:$0xf]
  %v82 = vld [vmem:[%s0 + $0xf4] sm:$0xf]
  %v83 = vld [vmem:[%s0 + $0xf8] sm:$0xf]
  %v84 = vld [vmem:[%s0 + $0xfc] sm:$0xf]
  %v85 = vld [vmem:[%s2] sm:$0xf]
  %v86 = vld [vmem:[%s2 + $0x4] sm:$0xf]
  %v87 = vld [vmem:[%s2 + $0x8] sm:$0xf]
  %v88 = vld [vmem:[%s2 + $0xc] sm:$0xf]
  %v89 = vld [vmem:[%s2 + $0x10] sm:$0xf]
  %v90 = vld [vmem:[%s2 + $0x14] sm:$0xf]
  %v91 = vld [vmem:[%s2 + $0x18] sm:$0xf]
  %v92 = vld [vmem:[%s2 + $0x1c] sm:$0xf]
  %v93 = vld [vmem:[%s2 + $0x20] sm:$0xf]
  %v94 = vld [vmem:[%s1] sm:$0xf]
  %v95 = vld [vmem:[%s1 + $0x4] sm:$0xf]
  %v96 = vld [vmem:[%s1 + $0x8] sm:$0xf]
  %v97 = vld [vmem:[%s1 + $0xc] sm:$0xf]
  %v98 = vld [vmem:[%s1 + $0x10] sm:$0xf]
  %v99 = vld [vmem:[%s1 + $0x14] sm:$0xf]
  %v100 = vld [vmem:[%s1 + $0x18] sm:$0xf]
  %v101 = vld [vmem:[%s1 + $0x1c] sm:$0xf]
  %v102 = vld [vmem:[%s1 + $0x20] sm:$0xf]
  %v103 = vld [vmem:[%s1 + $0x24] sm:$0xf]
  %v104 = vld [vmem:[%s1 + $0x28] sm:$0xf]
  %v105 = vld [vmem:[%s1 + $0x2c] sm:$0xf]
  %v106 = vld [vmem:[%s1 + $0x30] sm:$0xf]
  %v107 = vld [vmem:[%s1 + $0x34] sm:$0xf]
  %v108 = vld [vmem:[%s1 + $0x38] sm:$0xf]
  %v109 = vld [vmem:[%s1 + $0x3c] sm:$0xf]
  %v110 = vld [vmem:[%s1 + $0x40] sm:$0xf]
  %v111 = vld [vmem:[%s1 + $0x44] sm:$0xf]
  %v112 = vld [vmem:[%s1 + $0x48] sm:$0xf]
  %v113 = vld [vmem:[%s1 + $0x4c] sm:$0xf]
  %v114 = vld [vmem:[%s1 + $0x50] sm:$0xf]
  %v115 = vld [vmem:[%s1 + $0x54] sm:$0xf]
  %v116 = vld [vmem:[%s1 + $0x58] sm:$0xf]
  %v117 = vld [vmem:[%s1 + $0x5c] sm:$0xf]
  %v118 = vld [vmem:[%s1 + $0x60] sm:$0xf]
  %v119 = vld [vmem:[%s1 + $0x64] sm:$0xf]
  %v120 = vld [vmem:[%s1 + $0x68] sm:$0xf]
  %v121 = vld [vmem:[%s1 + $0x6c] sm:$0xf]
  %v122 = vld [vmem:[%s1 + $0x70] sm:$0xf]
  %v123 = vld [vmem:[%s1 + $0x74] sm:$0xf]
  %v124 = vld [vmem:[%s1 + $0x78] sm:$0xf]
  %v125 = vld [vmem:[%s1 + $0x7c] sm:$0xf]
  %v126 = vld [vmem:[%s1 + $0x80] sm:$0xf]
  %v127 = vld [vmem:[%s1 + $0x84] sm:$0xf]
  %v128 = vld [vmem:[%s1 + $0x88] sm:$0xf]
  %v129 = vld [vmem:[%s1 + $0x8c] sm:$0xf]
  %v130 = vld [vmem:[%s1 + $0x90] sm:$0xf]
  %v131 = vld [vmem:[%s1 + $0x94] sm:$0xf]
  %v132 = vld [vmem:[%s1 + $0x98] sm:$0xf]
  %v133 = vld [vmem:[%s1 + $0x9c] sm:$0xf]
  %v134 = vld [vmem:[%s1 + $0xa0] sm:$0xf]
  %v135 = vld [vmem:[%s1 + $0xa4] sm:$0xf]
  %v136 = vld [vmem:[%s1 + $0xa8] sm:$0xf]
  %v137 = vld [vmem:[%s1 + $0xac] sm:$0xf]
  %v138 = vld [vmem:[%s1 + $0xb0] sm:$0xf]
  %v139 = vld [vmem:[%s1 + $0xb4] sm:$0xf]
  %v140 = vld [vmem:[%s1 + $0xb8] sm:$0xf]
  %v141 = vld [vmem:[%s1 + $0xbc] sm:$0xf]
  %v142 = vld [vmem:[%s1 + $0xc0] sm:$0xf]
  %v143 = vld [vmem:[%s1 + $0xc4] sm:$0xf]
  %v144 = vld [vmem:[%s1 + $0xc8] sm:$0xf]
  %v145 = vld [vmem:[%s1 + $0xcc] sm:$0xf]
  %v146 = vld [vmem:[%s1 + $0xd0] sm:$0xf]
  %v147 = vld [vmem:[%s1 + $0xd4] sm:$0xf]
  %v148 = vld [vmem:[%s1 + $0xd8] sm:$0xf]
  %v149 = vld [vmem:[%s1 + $0xdc] sm:$0xf]
  %v150 = vld [vmem:[%s1 + $0xe0] sm:$0xf]
  %v151 = vld [vmem:[%s1 + $0xe4] sm:$0xf]
  %v152 = vld [vmem:[%s1 + $0xe8] sm:$0xf]
  %v153 = vld [vmem:[%s1 + $0xec] sm:$0xf]
  %v154 = vld [vmem:[%s1 + $0xf0] sm:$0xf]
  %v155 = vld [vmem:[%s1 + $0xf4] sm:$0xf]
  %v156 = vld [vmem:[%s1 + $0xf8] sm:$0xf]
  %v157 = vld [vmem:[%s1 + $0xfc] sm:$0xf]
  %v158 = vld [vmem:[%s3] sm:$0x1]
  %v160 = vlaneseq
  %v161 = vshrl.u32 %v160, 7
  %v162 = vsub.s32 0, %v161
  %v163 = vrot.slane %v158, %v162
  %v229 = vunpack.c.l.b16 %v21
  %v230 = vunpack.c.l.b16 %v22
  %v231 = vunpack.c.l.b16 %v23
  %v232 = vunpack.c.l.b16 %v24
  %v233 = vunpack.c.l.b16 %v25
  %v234 = vunpack.c.l.b16 %v26
  %v235 = vunpack.c.l.b16 %v27
  %v236 = vunpack.c.l.b16 %v28
  %v237 = vunpack.c.l.b16 %v29
  %v238 = vunpack.c.l.b16 %v30
  %v239 = vunpack.c.l.b16 %v31
  %v240 = vunpack.c.l.b16 %v32
  %v241 = vunpack.c.l.b16 %v33
  %v242 = vunpack.c.l.b16 %v34
  %v243 = vunpack.c.l.b16 %v35
  %v244 = vunpack.c.l.b16 %v36
  %v245 = vunpack.c.l.b16 %v37
  %v246 = vunpack.c.l.b16 %v38
  %v247 = vunpack.c.l.b16 %v39
  %v248 = vunpack.c.l.b16 %v40
  %v249 = vunpack.c.l.b16 %v41
  %v250 = vunpack.c.l.b16 %v42
  %v251 = vunpack.c.l.b16 %v43
  %v252 = vunpack.c.l.b16 %v44
  %v253 = vunpack.c.l.b16 %v45
  %v254 = vunpack.c.l.b16 %v46
  %v255 = vunpack.c.l.b16 %v47
  %v256 = vunpack.c.l.b16 %v48
  %v257 = vunpack.c.l.b16 %v49
  %v258 = vunpack.c.l.b16 %v50
  %v259 = vunpack.c.l.b16 %v51
  %v260 = vunpack.c.l.b16 %v52
  %v261 = vunpack.c.l.b16 %v53
  %v262 = vunpack.c.l.b16 %v54
  %v263 = vunpack.c.l.b16 %v55
  %v264 = vunpack.c.l.b16 %v56
  %v265 = vunpack.c.l.b16 %v57
  %v266 = vunpack.c.l.b16 %v58
  %v267 = vunpack.c.l.b16 %v59
  %v268 = vunpack.c.l.b16 %v60
  %v269 = vunpack.c.l.b16 %v61
  %v270 = vunpack.c.l.b16 %v62
  %v271 = vunpack.c.l.b16 %v63
  %v272 = vunpack.c.l.b16 %v64
  %v273 = vunpack.c.l.b16 %v65
  %v274 = vunpack.c.l.b16 %v66
  %v275 = vunpack.c.l.b16 %v67
  %v276 = vunpack.c.l.b16 %v68
  %v277 = vunpack.c.l.b16 %v69
  %v278 = vunpack.c.l.b16 %v70
  %v279 = vunpack.c.l.b16 %v71
  %v280 = vunpack.c.l.b16 %v72
  %v281 = vunpack.c.l.b16 %v73
  %v282 = vunpack.c.l.b16 %v74
  %v283 = vunpack.c.l.b16 %v75
  %v284 = vunpack.c.l.b16 %v76
  %v285 = vunpack.c.l.b16 %v77
  %v286 = vunpack.c.l.b16 %v78
  %v287 = vunpack.c.l.b16 %v79
  %v288 = vunpack.c.l.b16 %v80
  %v289 = vunpack.c.l.b16 %v81
  %v290 = vunpack.c.l.b16 %v82
  %v291 = vunpack.c.l.b16 %v83
  %v292 = vunpack.c.l.b16 %v84
  %v293 = vpack.c.b16 %v230, %v229
  %v294 = vpack.c.b16 %v232, %v231
  %v295 = vpack.c.b16 %v234, %v233
  %v296 = vpack.c.b16 %v236, %v235
  %v297 = vpack.c.b16 %v238, %v237
  %v298 = vpack.c.b16 %v240, %v239
  %v299 = vpack.c.b16 %v242, %v241
  %v300 = vpack.c.b16 %v244, %v243
  %v301 = vpack.c.b16 %v246, %v245
  %v302 = vpack.c.b16 %v248, %v247
  %v303 = vpack.c.b16 %v250, %v249
  %v304 = vpack.c.b16 %v252, %v251
  %v305 = vpack.c.b16 %v254, %v253
  %v306 = vpack.c.b16 %v256, %v255
  %v307 = vpack.c.b16 %v258, %v257
  %v308 = vpack.c.b16 %v260, %v259
  %v309 = vpack.c.b16 %v262, %v261
  %v310 = vpack.c.b16 %v264, %v263
  %v311 = vpack.c.b16 %v266, %v265
  %v312 = vpack.c.b16 %v268, %v267
  %v313 = vpack.c.b16 %v270, %v269
  %v314 = vpack.c.b16 %v272, %v271
  %v315 = vpack.c.b16 %v274, %v273
  %v316 = vpack.c.b16 %v276, %v275
  %v317 = vpack.c.b16 %v278, %v277
  %v318 = vpack.c.b16 %v280, %v279
  %v319 = vpack.c.b16 %v282, %v281
  %v320 = vpack.c.b16 %v284, %v283
  %v321 = vpack.c.b16 %v286, %v285
  %v322 = vpack.c.b16 %v288, %v287
  %v323 = vpack.c.b16 %v290, %v289
  %v324 = vpack.c.b16 %v292, %v291
  %v334 = vunpack.c.l.b16 %v85
  %v335 = vunpack.c.l.b16 %v86
  %v336 = vunpack.c.l.b16 %v87
  %v337 = vunpack.c.l.b16 %v88
  %v338 = vunpack.c.l.b16 %v89
  %v339 = vunpack.c.l.b16 %v90
  %v340 = vunpack.c.l.b16 %v91
  %v341 = vunpack.c.l.b16 %v92
  %v342 = vunpack.c.l.b16 %v93
  %v343 = vpack.c.b16 %v335, %v334
  %v344 = vpack.c.b16 %v337, %v336
  %v345 = vpack.c.b16 %v339, %v338
  %v346 = vpack.c.b16 %v341, %v340
  %v347 = vpack.c.b16 %v342, %v342
  %vm352 = vcmask 588800
  %v354 = vsel %vm352, %v293, 0
  %v357 = vsel %vm352, %v294, 0
  %v360 = vsel %vm352, %v295, 0
  %v363 = vsel %vm352, %v296, 0
  %v366 = vsel %vm352, %v297, 0
  %v369 = vsel %vm352, %v298, 0
  %v372 = vsel %vm352, %v299, 0
  %v375 = vsel %vm352, %v300, 0
  %v378 = vsel %vm352, %v301, 0
  %v381 = vsel %vm352, %v302, 0
  %v384 = vsel %vm352, %v303, 0
  %v387 = vsel %vm352, %v304, 0
  %v390 = vsel %vm352, %v305, 0
  %v393 = vsel %vm352, %v306, 0
  %v396 = vsel %vm352, %v307, 0
  %v399 = vsel %vm352, %v308, 0
  %v402 = vsel %vm352, %v309, 0
  %v405 = vsel %vm352, %v310, 0
  %v408 = vsel %vm352, %v311, 0
  %v411 = vsel %vm352, %v312, 0
  %v414 = vsel %vm352, %v313, 0
  %v417 = vsel %vm352, %v314, 0
  %v420 = vsel %vm352, %v315, 0
  %v423 = vsel %vm352, %v316, 0
  %v426 = vsel %vm352, %v317, 0
  %v429 = vsel %vm352, %v318, 0
  %v432 = vsel %vm352, %v319, 0
  %v435 = vsel %vm352, %v320, 0
  %v438 = vsel %vm352, %v321, 0
  %v441 = vsel %vm352, %v322, 0
  %v444 = vsel %vm352, %v323, 0
  %v447 = vsel %vm352, %v324, 0
  %vm449 = vcmask 1043456
  %v451 = vsel %vm449, %v347, 0
  %453 = vmatprep.subr.bf16.mxu0 0
  %454 = vmatpush1.bf16.msra.mxu0 0
  %455 = vmatprep.subr.bf16.mxu0 0
  %456 = vmatpush1.bf16.msra.mxu0 0
  %457 = vmatprep.subr.bf16.mxu0 0
  %458 = vmatpush1.bf16.msra.mxu0 0
  %459 = vmatprep.subr.bf16.mxu0 0
  %460 = vmatpush1.bf16.msra.mxu0 %v451
  %461 = vmatprep.subr.bf16.mxu0 0
  %462 = vmatpush1.bf16.msra.mxu0 %v346
  %463 = vmatprep.subr.bf16.mxu0 0
  %464 = vmatpush1.bf16.msra.mxu0 %v345
  %465 = vmatprep.subr.bf16.mxu0 0
  %466 = vmatpush1.bf16.msra.mxu0 %v344
  %467 = vmatprep.subr.bf16.mxu0 0
  %468 = vmatpush1.bf16.msra.mxu0 %v343
  %469 = vmatprep.subr.bf16.mxu0 0
  %470 = vmatpush2.bf16.msra.mxu0 0
  %471 = vmatprep.subr.bf16.mxu0 0
  %472 = vmatpush2.bf16.msra.mxu0 0
  %473 = vmatprep.subr.bf16.mxu0 0
  %474 = vmatpush2.bf16.msra.mxu0 0
  %475 = vmatprep.subr.bf16.mxu0 0
  %476 = vmatpush2.bf16.msra.mxu0 0
  %477 = vmatprep.subr.bf16.mxu0 0
  %478 = vmatpush2.bf16.msra.mxu0 0
  %479 = vmatprep.subr.bf16.mxu0 0
  %480 = vmatpush2.bf16.msra.mxu0 0
  %481 = vmatprep.subr.bf16.mxu0 0
  %482 = vmatpush2.bf16.msra.mxu0 0
  %483 = vmatprep.subr.bf16.mxu0 0
  %484 = vmatpush2.bf16.msra.mxu0 0
  %485 = vmatprep.mubr.bf16.mxu0 0
  %486 = vmatmul.mubr.bf16.gmra.mxu0 %v354
  %v487 = vpop.f32.mrf.mxu0
  %v488 = vadd.f32 %v163, %v487
  %v489 = vpop.f32.mrf.mxu0
  %v490 = vpop.f32.mrf.mxu0
  %v491 = vadd.f32 %v163, %v490
  %v492 = vpop.f32.mrf.mxu0
  %493 = vmatprep.mubr.bf16.mxu0 0
  %494 = vmatmul.mubr.bf16.gmra.mxu0 %v357
  %v495 = vpop.f32.mrf.mxu0
  %v496 = vadd.f32 %v163, %v495
  %v497 = vpop.f32.mrf.mxu0
  %v498 = vpop.f32.mrf.mxu0
  %v499 = vadd.f32 %v163, %v498
  %v500 = vpop.f32.mrf.mxu0
  %501 = vmatprep.mubr.bf16.mxu0 0
  %502 = vmatmul.mubr.bf16.gmra.mxu0 %v360
  %v503 = vpop.f32.mrf.mxu0
  %v504 = vadd.f32 %v163, %v503
  %v505 = vpop.f32.mrf.mxu0
  %v506 = vpop.f32.mrf.mxu0
  %v507 = vadd.f32 %v163, %v506
  %v508 = vpop.f32.mrf.mxu0
  %509 = vmatprep.mubr.bf16.mxu0 0
  %510 = vmatmul.mubr.bf16.gmra.mxu0 %v363
  %v511 = vpop.f32.mrf.mxu0
  %v512 = vadd.f32 %v163, %v511
  %v513 = vpop.f32.mrf.mxu0
  %v514 = vpop.f32.mrf.mxu0
  %v515 = vadd.f32 %v163, %v514
  %v516 = vpop.f32.mrf.mxu0
  %517 = vmatprep.mubr.bf16.mxu0 0
  %518 = vmatmul.mubr.bf16.gmra.mxu0 %v366
  %v519 = vpop.f32.mrf.mxu0
  %v520 = vadd.f32 %v163, %v519
  %v521 = vpop.f32.mrf.mxu0
  %v522 = vpop.f32.mrf.mxu0
  %v523 = vadd.f32 %v163, %v522
  %v524 = vpop.f32.mrf.mxu0
  %525 = vmatprep.mubr.bf16.mxu0 0
  %526 = vmatmul.mubr.bf16.gmra.mxu0 %v369
  %v527 = vpop.f32.mrf.mxu0
  %v528 = vadd.f32 %v163, %v527
  %v529 = vpop.f32.mrf.mxu0
  %v530 = vpop.f32.mrf.mxu0
  %v531 = vadd.f32 %v163, %v530
  %v532 = vpop.f32.mrf.mxu0
  %533 = vmatprep.mubr.bf16.mxu0 0
  %534 = vmatmul.mubr.bf16.gmra.mxu0 %v372
  %v535 = vpop.f32.mrf.mxu0
  %v536 = vadd.f32 %v163, %v535
  %v537 = vpop.f32.mrf.mxu0
  %v538 = vpop.f32.mrf.mxu0
  %v539 = vadd.f32 %v163, %v538
  %v540 = vpop.f32.mrf.mxu0
  %541 = vmatprep.mubr.bf16.mxu0 0
  %542 = vmatmul.mubr.bf16.gmra.mxu0 %v375
  %v543 = vpop.f32.mrf.mxu0
  %v544 = vadd.f32 %v163, %v543
  %v545 = vpop.f32.mrf.mxu0
  %v546 = vpop.f32.mrf.mxu0
  %v547 = vadd.f32 %v163, %v546
  %v548 = vpop.f32.mrf.mxu0
  %549 = vmatprep.mubr.bf16.mxu0 0
  %550 = vmatmul.mubr.bf16.gmra.mxu0 %v378
  %v551 = vpop.f32.mrf.mxu0
  %v552 = vadd.f32 %v163, %v551
  %v553 = vpop.f32.mrf.mxu0
  %v554 = vpop.f32.mrf.mxu0
  %v555 = vadd.f32 %v163, %v554
  %v556 = vpop.f32.mrf.mxu0
  %557 = vmatprep.mubr.bf16.mxu0 0
  %558 = vmatmul.mubr.bf16.gmra.mxu0 %v381
  %v559 = vpop.f32.mrf.mxu0
  %v560 = vadd.f32 %v163, %v559
  %v561 = vpop.f32.mrf.mxu0
  %v562 = vpop.f32.mrf.mxu0
  %v563 = vadd.f32 %v163, %v562
  %v564 = vpop.f32.mrf.mxu0
  %565 = vmatprep.mubr.bf16.mxu0 0
  %566 = vmatmul.mubr.bf16.gmra.mxu0 %v384
  %v567 = vpop.f32.mrf.mxu0
  %v568 = vadd.f32 %v163, %v567
  %v569 = vpop.f32.mrf.mxu0
  %v570 = vpop.f32.mrf.mxu0
  %v571 = vadd.f32 %v163, %v570
  %v572 = vpop.f32.mrf.mxu0
  %573 = vmatprep.mubr.bf16.mxu0 0
  %574 = vmatmul.mubr.bf16.gmra.mxu0 %v387
  %v575 = vpop.f32.mrf.mxu0
  %v576 = vadd.f32 %v163, %v575
  %v577 = vpop.f32.mrf.mxu0
  %v578 = vpop.f32.mrf.mxu0
  %v579 = vadd.f32 %v163, %v578
  %v580 = vpop.f32.mrf.mxu0
  %581 = vmatprep.mubr.bf16.mxu0 0
  %582 = vmatmul.mubr.bf16.gmra.mxu0 %v390
  %v583 = vpop.f32.mrf.mxu0
  %v584 = vadd.f32 %v163, %v583
  %v585 = vpop.f32.mrf.mxu0
  %v586 = vpop.f32.mrf.mxu0
  %v587 = vadd.f32 %v163, %v586
  %v588 = vpop.f32.mrf.mxu0
  %589 = vmatprep.mubr.bf16.mxu0 0
  %590 = vmatmul.mubr.bf16.gmra.mxu0 %v393
  %v591 = vpop.f32.mrf.mxu0
  %v592 = vadd.f32 %v163, %v591
  %v593 = vpop.f32.mrf.mxu0
  %v594 = vpop.f32.mrf.mxu0
  %v595 = vadd.f32 %v163, %v594
  %v596 = vpop.f32.mrf.mxu0
  %597 = vmatprep.mubr.bf16.mxu0 0
  %598 = vmatmul.mubr.bf16.gmra.mxu0 %v396
  %v599 = vpop.f32.mrf.mxu0
  %v600 = vadd.f32 %v163, %v599
  %v601 = vpop.f32.mrf.mxu0
  %v602 = vpop.f32.mrf.mxu0
  %v603 = vadd.f32 %v163, %v602
  %v604 = vpop.f32.mrf.mxu0
  %605 = vmatprep.mubr.bf16.mxu0 0
  %606 = vmatmul.mubr.bf16.gmra.mxu0 %v399
  %v607 = vpop.f32.mrf.mxu0
  %v608 = vadd.f32 %v163, %v607
  %v609 = vpop.f32.mrf.mxu0
  %v610 = vpop.f32.mrf.mxu0
  %v611 = vadd.f32 %v163, %v610
  %v612 = vpop.f32.mrf.mxu0
  %613 = vmatprep.mubr.bf16.mxu0 0
  %614 = vmatmul.mubr.bf16.gmra.mxu0 %v402
  %v615 = vpop.f32.mrf.mxu0
  %v616 = vadd.f32 %v163, %v615
  %v617 = vpop.f32.mrf.mxu0
  %v618 = vpop.f32.mrf.mxu0
  %v619 = vadd.f32 %v163, %v618
  %v620 = vpop.f32.mrf.mxu0
  %621 = vmatprep.mubr.bf16.mxu0 0
  %622 = vmatmul.mubr.bf16.gmra.mxu0 %v405
  %v623 = vpop.f32.mrf.mxu0
  %v624 = vadd.f32 %v163, %v623
  %v625 = vpop.f32.mrf.mxu0
  %v626 = vpop.f32.mrf.mxu0
  %v627 = vadd.f32 %v163, %v626
  %v628 = vpop.f32.mrf.mxu0
  %629 = vmatprep.mubr.bf16.mxu0 0
  %630 = vmatmul.mubr.bf16.gmra.mxu0 %v408
  %v631 = vpop.f32.mrf.mxu0
  %v632 = vadd.f32 %v163, %v631
  %v633 = vpop.f32.mrf.mxu0
  %v634 = vpop.f32.mrf.mxu0
  %v635 = vadd.f32 %v163, %v634
  %v636 = vpop.f32.mrf.mxu0
  %637 = vmatprep.mubr.bf16.mxu0 0
  %638 = vmatmul.mubr.bf16.gmra.mxu0 %v411
  %v639 = vpop.f32.mrf.mxu0
  %v640 = vadd.f32 %v163, %v639
  %v641 = vpop.f32.mrf.mxu0
  %v642 = vpop.f32.mrf.mxu0
  %v643 = vadd.f32 %v163, %v642
  %v644 = vpop.f32.mrf.mxu0
  %645 = vmatprep.mubr.bf16.mxu0 0
  %646 = vmatmul.mubr.bf16.gmra.mxu0 %v414
  %v647 = vpop.f32.mrf.mxu0
  %v648 = vadd.f32 %v163, %v647
  %v649 = vpop.f32.mrf.mxu0
  %v650 = vpop.f32.mrf.mxu0
  %v651 = vadd.f32 %v163, %v650
  %v652 = vpop.f32.mrf.mxu0
  %653 = vmatprep.mubr.bf16.mxu0 0
  %654 = vmatmul.mubr.bf16.gmra.mxu0 %v417
  %v655 = vpop.f32.mrf.mxu0
  %v656 = vadd.f32 %v163, %v655
  %v657 = vpop.f32.mrf.mxu0
  %v658 = vpop.f32.mrf.mxu0
  %v659 = vadd.f32 %v163, %v658
  %v660 = vpop.f32.mrf.mxu0
  %661 = vmatprep.mubr.bf16.mxu0 0
  %662 = vmatmul.mubr.bf16.gmra.mxu0 %v420
  %v663 = vpop.f32.mrf.mxu0
  %v664 = vadd.f32 %v163, %v663
  %v665 = vpop.f32.mrf.mxu0
  %v666 = vpop.f32.mrf.mxu0
  %v667 = vadd.f32 %v163, %v666
  %v668 = vpop.f32.mrf.mxu0
  %669 = vmatprep.mubr.bf16.mxu0 0
  %670 = vmatmul.mubr.bf16.gmra.mxu0 %v423
  %v671 = vpop.f32.mrf.mxu0
  %v672 = vadd.f32 %v163, %v671
  %v673 = vpop.f32.mrf.mxu0
  %v674 = vpop.f32.mrf.mxu0
  %v675 = vadd.f32 %v163, %v674
  %v676 = vpop.f32.mrf.mxu0
  %677 = vmatprep.mubr.bf16.mxu0 0
  %678 = vmatmul.mubr.bf16.gmra.mxu0 %v426
  %v679 = vpop.f32.mrf.mxu0
  %v680 = vadd.f32 %v163, %v679
  %v681 = vpop.f32.mrf.mxu0
  %v682 = vpop.f32.mrf.mxu0
  %v683 = vadd.f32 %v163, %v682
  %v684 = vpop.f32.mrf.mxu0
  %685 = vmatprep.mubr.bf16.mxu0 0
  %686 = vmatmul.mubr.bf16.gmra.mxu0 %v429
  %v687 = vpop.f32.mrf.mxu0
  %v688 = vadd.f32 %v163, %v687
  %v689 = vpop.f32.mrf.mxu0
  %v690 = vpop.f32.mrf.mxu0
  %v691 = vadd.f32 %v163, %v690
  %v692 = vpop.f32.mrf.mxu0
  %693 = vmatprep.mubr.bf16.mxu0 0
  %694 = vmatmul.mubr.bf16.gmra.mxu0 %v432
  %v695 = vpop.f32.mrf.mxu0
  %v696 = vadd.f32 %v163, %v695
  %v697 = vpop.f32.mrf.mxu0
  %v698 = vpop.f32.mrf.mxu0
  %v699 = vadd.f32 %v163, %v698
  %v700 = vpop.f32.mrf.mxu0
  %701 = vmatprep.mubr.bf16.mxu0 0
  %702 = vmatmul.mubr.bf16.gmra.mxu0 %v435
  %v703 = vpop.f32.mrf.mxu0
  %v704 = vadd.f32 %v163, %v703
  %v705 = vpop.f32.mrf.mxu0
  %v706 = vpop.f32.mrf.mxu0
  %v707 = vadd.f32 %v163, %v706
  %v708 = vpop.f32.mrf.mxu0
  %709 = vmatprep.mubr.bf16.mxu0 0
  %710 = vmatmul.mubr.bf16.gmra.mxu0 %v438
  %v711 = vpop.f32.mrf.mxu0
  %v712 = vadd.f32 %v163, %v711
  %v713 = vpop.f32.mrf.mxu0
  %v714 = vpop.f32.mrf.mxu0
  %v715 = vadd.f32 %v163, %v714
  %v716 = vpop.f32.mrf.mxu0
  %717 = vmatprep.mubr.bf16.mxu0 0
  %718 = vmatmul.mubr.bf16.gmra.mxu0 %v441
  %v719 = vpop.f32.mrf.mxu0
  %v720 = vadd.f32 %v163, %v719
  %v721 = vpop.f32.mrf.mxu0
  %v722 = vpop.f32.mrf.mxu0
  %v723 = vadd.f32 %v163, %v722
  %v724 = vpop.f32.mrf.mxu0
  %725 = vmatprep.mubr.bf16.mxu0 0
  %726 = vmatmul.mubr.bf16.gmra.mxu0 %v444
  %v727 = vpop.f32.mrf.mxu0
  %v728 = vadd.f32 %v163, %v727
  %v729 = vpop.f32.mrf.mxu0
  %v730 = vpop.f32.mrf.mxu0
  %v731 = vadd.f32 %v163, %v730
  %v732 = vpop.f32.mrf.mxu0
  %733 = vmatprep.mubr.bf16.mxu0 0
  %734 = vmatmul.mubr.bf16.gmra.mxu0 %v447
  %v735 = vpop.f32.mrf.mxu0
  %v736 = vadd.f32 %v163, %v735
  %v737 = vpop.f32.mrf.mxu0
  %v738 = vpop.f32.mrf.mxu0
  %v739 = vadd.f32 %v163, %v738
  %v740 = vpop.f32.mrf.mxu0
  %741 = vdwg.mxu0
  %v742 = vmax.f32 %v488, 0.0
  %v743 = vmax.f32 %v491, 0.0
  %v744 = vmax.f32 %v496, 0.0
  %v745 = vmax.f32 %v499, 0.0
  %v746 = vmax.f32 %v504, 0.0
  %v747 = vmax.f32 %v507, 0.0
  %v748 = vmax.f32 %v512, 0.0
  %v749 = vmax.f32 %v515, 0.0
  %v750 = vmax.f32 %v520, 0.0
  %v751 = vmax.f32 %v523, 0.0
  %v752 = vmax.f32 %v528, 0.0
  %v753 = vmax.f32 %v531, 0.0
  %v754 = vmax.f32 %v536, 0.0
  %v755 = vmax.f32 %v539, 0.0
  %v756 = vmax.f32 %v544, 0.0
  %v757 = vmax.f32 %v547, 0.0
  %v758 = vmax.f32 %v552, 0.0
  %v759 = vmax.f32 %v555, 0.0
  %v760 = vmax.f32 %v560, 0.0
  %v761 = vmax.f32 %v563, 0.0
  %v762 = vmax.f32 %v568, 0.0
  %v763 = vmax.f32 %v571, 0.0
  %v764 = vmax.f32 %v576, 0.0
  %v765 = vmax.f32 %v579, 0.0
  %v766 = vmax.f32 %v584, 0.0
  %v767 = vmax.f32 %v587, 0.0
  %v768 = vmax.f32 %v592, 0.0
  %v769 = vmax.f32 %v595, 0.0
  %v770 = vmax.f32 %v600, 0.0
  %v771 = vmax.f32 %v603, 0.0
  %v772 = vmax.f32 %v608, 0.0
  %v773 = vmax.f32 %v611, 0.0
  %v774 = vmax.f32 %v616, 0.0
  %v775 = vmax.f32 %v619, 0.0
  %v776 = vmax.f32 %v624, 0.0
  %v777 = vmax.f32 %v627, 0.0
  %v778 = vmax.f32 %v632, 0.0
  %v779 = vmax.f32 %v635, 0.0
  %v780 = vmax.f32 %v640, 0.0
  %v781 = vmax.f32 %v643, 0.0
  %v782 = vmax.f32 %v648, 0.0
  %v783 = vmax.f32 %v651, 0.0
  %v784 = vmax.f32 %v656, 0.0
  %v785 = vmax.f32 %v659, 0.0
  %v786 = vmax.f32 %v664, 0.0
  %v787 = vmax.f32 %v667, 0.0
  %v788 = vmax.f32 %v672, 0.0
  %v789 = vmax.f32 %v675, 0.0
  %v790 = vmax.f32 %v680, 0.0
  %v791 = vmax.f32 %v683, 0.0
  %v792 = vmax.f32 %v688, 0.0
  %v793 = vmax.f32 %v691, 0.0
  %v794 = vmax.f32 %v696, 0.0
  %v795 = vmax.f32 %v699, 0.0
  %v796 = vmax.f32 %v704, 0.0
  %v797 = vmax.f32 %v707, 0.0
  %v798 = vmax.f32 %v712, 0.0
  %v799 = vmax.f32 %v715, 0.0
  %v800 = vmax.f32 %v720, 0.0
  %v801 = vmax.f32 %v723, 0.0
  %v802 = vmax.f32 %v728, 0.0
  %v803 = vmax.f32 %v731, 0.0
  %v804 = vmax.f32 %v736, 0.0
  %v805 = vmax.f32 %v739, 0.0
  %v870 = vunpack.c.l.b16 %v94
  %v871 = vunpack.c.l.b16 %v95
  %v872 = vunpack.c.l.b16 %v96
  %v873 = vunpack.c.l.b16 %v97
  %v874 = vunpack.c.l.b16 %v98
  %v875 = vunpack.c.l.b16 %v99
  %v876 = vunpack.c.l.b16 %v100
  %v877 = vunpack.c.l.b16 %v101
  %v878 = vunpack.c.l.b16 %v102
  %v879 = vunpack.c.l.b16 %v103
  %v880 = vunpack.c.l.b16 %v104
  %v881 = vunpack.c.l.b16 %v105
  %v882 = vunpack.c.l.b16 %v106
  %v883 = vunpack.c.l.b16 %v107
  %v884 = vunpack.c.l.b16 %v108
  %v885 = vunpack.c.l.b16 %v109
  %v886 = vunpack.c.l.b16 %v110
  %v887 = vunpack.c.l.b16 %v111
  %v888 = vunpack.c.l.b16 %v112
  %v889 = vunpack.c.l.b16 %v113
  %v890 = vunpack.c.l.b16 %v114
  %v891 = vunpack.c.l.b16 %v115
  %v892 = vunpack.c.l.b16 %v116
  %v893 = vunpack.c.l.b16 %v117
  %v894 = vunpack.c.l.b16 %v118
  %v895 = vunpack.c.l.b16 %v119
  %v896 = vunpack.c.l.b16 %v120
  %v897 = vunpack.c.l.b16 %v121
  %v898 = vunpack.c.l.b16 %v122
  %v899 = vunpack.c.l.b16 %v123
  %v900 = vunpack.c.l.b16 %v124
  %v901 = vunpack.c.l.b16 %v125
  %v902 = vunpack.c.l.b16 %v126
  %v903 = vunpack.c.l.b16 %v127
  %v904 = vunpack.c.l.b16 %v128
  %v905 = vunpack.c.l.b16 %v129
  %v906 = vunpack.c.l.b16 %v130
  %v907 = vunpack.c.l.b16 %v131
  %v908 = vunpack.c.l.b16 %v132
  %v909 = vunpack.c.l.b16 %v133
  %v910 = vunpack.c.l.b16 %v134
  %v911 = vunpack.c.l.b16 %v135
  %v912 = vunpack.c.l.b16 %v136
  %v913 = vunpack.c.l.b16 %v137
  %v914 = vunpack.c.l.b16 %v138
  %v915 = vunpack.c.l.b16 %v139
  %v916 = vunpack.c.l.b16 %v140
  %v917 = vunpack.c.l.b16 %v141
  %v918 = vunpack.c.l.b16 %v142
  %v919 = vunpack.c.l.b16 %v143
  %v920 = vunpack.c.l.b16 %v144
  %v921 = vunpack.c.l.b16 %v145
  %v922 = vunpack.c.l.b16 %v146
  %v923 = vunpack.c.l.b16 %v147
  %v924 = vunpack.c.l.b16 %v148
  %v925 = vunpack.c.l.b16 %v149
  %v926 = vunpack.c.l.b16 %v150
  %v927 = vunpack.c.l.b16 %v151
  %v928 = vunpack.c.l.b16 %v152
  %v929 = vunpack.c.l.b16 %v153
  %v930 = vunpack.c.l.b16 %v154
  %v931 = vunpack.c.l.b16 %v155
  %v932 = vunpack.c.l.b16 %v156
  %v933 = vunpack.c.l.b16 %v157
  %v934 = vpack.c.b16 %v871, %v870
  %v935 = vpack.c.b16 %v873, %v872
  %v936 = vpack.c.b16 %v875, %v874
  %v937 = vpack.c.b16 %v877, %v876
  %v938 = vpack.c.b16 %v879, %v878
  %v939 = vpack.c.b16 %v881, %v880
  %v940 = vpack.c.b16 %v883, %v882
  %v941 = vpack.c.b16 %v885, %v884
  %v942 = vpack.c.b16 %v887, %v886
  %v943 = vpack.c.b16 %v889, %v888
  %v944 = vpack.c.b16 %v891, %v890
  %v945 = vpack.c.b16 %v893, %v892
  %v946 = vpack.c.b16 %v895, %v894
  %v947 = vpack.c.b16 %v897, %v896
  %v948 = vpack.c.b16 %v899, %v898
  %v949 = vpack.c.b16 %v901, %v900
  %v950 = vpack.c.b16 %v903, %v902
  %v951 = vpack.c.b16 %v905, %v904
  %v952 = vpack.c.b16 %v907, %v906
  %v953 = vpack.c.b16 %v909, %v908
  %v954 = vpack.c.b16 %v911, %v910
  %v955 = vpack.c.b16 %v913, %v912
  %v956 = vpack.c.b16 %v915, %v914
  %v957 = vpack.c.b16 %v917, %v916
  %v958 = vpack.c.b16 %v919, %v918
  %v959 = vpack.c.b16 %v921, %v920
  %v960 = vpack.c.b16 %v923, %v922
  %v961 = vpack.c.b16 %v925, %v924
  %v962 = vpack.c.b16 %v927, %v926
  %v963 = vpack.c.b16 %v929, %v928
  %v964 = vpack.c.b16 %v931, %v930
  %v965 = vpack.c.b16 %v933, %v932
  %v967 = vsel %vm352, %v934, 0
  %v970 = vsel %vm352, %v935, 0
  %v973 = vsel %vm352, %v936, 0
  %v976 = vsel %vm352, %v937, 0
  %v979 = vsel %vm352, %v938, 0
  %v982 = vsel %vm352, %v939, 0
  %v985 = vsel %vm352, %v940, 0
  %v988 = vsel %vm352, %v941, 0
  %v991 = vsel %vm352, %v942, 0
  %v994 = vsel %vm352, %v943, 0
  %v997 = vsel %vm352, %v944, 0
  %v1000 = vsel %vm352, %v945, 0
  %v1003 = vsel %vm352, %v946, 0
  %v1006 = vsel %vm352, %v947, 0
  %v1009 = vsel %vm352, %v948, 0
  %v1012 = vsel %vm352, %v949, 0
  %v1015 = vsel %vm352, %v950, 0
  %v1018 = vsel %vm352, %v951, 0
  %v1021 = vsel %vm352, %v952, 0
  %v1024 = vsel %vm352, %v953, 0
  %v1027 = vsel %vm352, %v954, 0
  %v1030 = vsel %vm352, %v955, 0
  %v1033 = vsel %vm352, %v956, 0
  %v1036 = vsel %vm352, %v957, 0
  %v1039 = vsel %vm352, %v958, 0
  %v1042 = vsel %vm352, %v959, 0
  %v1045 = vsel %vm352, %v960, 0
  %v1048 = vsel %vm352, %v961, 0
  %v1051 = vsel %vm352, %v962, 0
  %v1054 = vsel %vm352, %v963, 0
  %v1057 = vsel %vm352, %v964, 0
  %v1060 = vsel %vm352, %v965, 0
  %1062 = vmatprep.subr.bf16.mxu0 0
  %1063 = vmatpush1.bf16.msra.mxu0 0
  %1064 = vmatprep.subr.bf16.mxu0 0
  %1065 = vmatpush1.bf16.msra.mxu0 0
  %1066 = vmatprep.subr.bf16.mxu0 0
  %1067 = vmatpush1.bf16.msra.mxu0 0
  %1068 = vmatprep.subr.bf16.mxu0 0
  %1069 = vmatpush1.bf16.msra.mxu0 %v451
  %1070 = vmatprep.subr.bf16.mxu0 0
  %1071 = vmatpush1.bf16.msra.mxu0 %v346
  %1072 = vmatprep.subr.bf16.mxu0 0
  %1073 = vmatpush1.bf16.msra.mxu0 %v345
  %1074 = vmatprep.subr.bf16.mxu0 0
  %1075 = vmatpush1.bf16.msra.mxu0 %v344
  %1076 = vmatprep.subr.bf16.mxu0 0
  %1077 = vmatpush1.bf16.msra.mxu0 %v343
  %1078 = vmatprep.subr.bf16.mxu0 0
  %1079 = vmatpush2.bf16.msra.mxu0 0
  %1080 = vmatprep.subr.bf16.mxu0 0
  %1081 = vmatpush2.bf16.msra.mxu0 0
  %1082 = vmatprep.subr.bf16.mxu0 0
  %1083 = vmatpush2.bf16.msra.mxu0 0
  %1084 = vmatprep.subr.bf16.mxu0 0
  %1085 = vmatpush2.bf16.msra.mxu0 0
  %1086 = vmatprep.subr.bf16.mxu0 0
  %1087 = vmatpush2.bf16.msra.mxu0 0
  %1088 = vmatprep.subr.bf16.mxu0 0
  %1089 = vmatpush2.bf16.msra.mxu0 0
  %1090 = vmatprep.subr.bf16.mxu0 0
  %1091 = vmatpush2.bf16.msra.mxu0 0
  %1092 = vmatprep.subr.bf16.mxu0 0
  %1093 = vmatpush2.bf16.msra.mxu0 0
  %1094 = vmatprep.mubr.bf16.mxu0 0
  %1095 = vmatmul.mubr.bf16.gmra.mxu0 %v967
  %v1096 = vpop.f32.mrf.mxu0
  %v1097 = vadd.f32 %v163, %v1096
  %v1098 = vpop.f32.mrf.mxu0
  %v1099 = vpop.f32.mrf.mxu0
  %v1100 = vadd.f32 %v163, %v1099
  %v1101 = vpop.f32.mrf.mxu0
  %1102 = vmatprep.mubr.bf16.mxu0 0
  %1103 = vmatmul.mubr.bf16.gmra.mxu0 %v970
  %v1104 = vpop.f32.mrf.mxu0
  %v1105 = vadd.f32 %v163, %v1104
  %v1106 = vpop.f32.mrf.mxu0
  %v1107 = vpop.f32.mrf.mxu0
  %v1108 = vadd.f32 %v163, %v1107
  %v1109 = vpop.f32.mrf.mxu0
  %1110 = vmatprep.mubr.bf16.mxu0 0
  %1111 = vmatmul.mubr.bf16.gmra.mxu0 %v973
  %v1112 = vpop.f32.mrf.mxu0
  %v1113 = vadd.f32 %v163, %v1112
  %v1114 = vpop.f32.mrf.mxu0
  %v1115 = vpop.f32.mrf.mxu0
  %v1116 = vadd.f32 %v163, %v1115
  %v1117 = vpop.f32.mrf.mxu0
  %1118 = vmatprep.mubr.bf16.mxu0 0
  %1119 = vmatmul.mubr.bf16.gmra.mxu0 %v976
  %v1120 = vpop.f32.mrf.mxu0
  %v1121 = vadd.f32 %v163, %v1120
  %v1122 = vpop.f32.mrf.mxu0
  %v1123 = vpop.f32.mrf.mxu0
  %v1124 = vadd.f32 %v163, %v1123
  %v1125 = vpop.f32.mrf.mxu0
  %1126 = vmatprep.mubr.bf16.mxu0 0
  %1127 = vmatmul.mubr.bf16.gmra.mxu0 %v979
  %v1128 = vpop.f32.mrf.mxu0
  %v1129 = vadd.f32 %v163, %v1128
  %v1130 = vpop.f32.mrf.mxu0
  %v1131 = vpop.f32.mrf.mxu0
  %v1132 = vadd.f32 %v163, %v1131
  %v1133 = vpop.f32.mrf.mxu0
  %1134 = vmatprep.mubr.bf16.mxu0 0
  %1135 = vmatmul.mubr.bf16.gmra.mxu0 %v982
  %v1136 = vpop.f32.mrf.mxu0
  %v1137 = vadd.f32 %v163, %v1136
  %v1138 = vpop.f32.mrf.mxu0
  %v1139 = vpop.f32.mrf.mxu0
  %v1140 = vadd.f32 %v163, %v1139
  %v1141 = vpop.f32.mrf.mxu0
  %1142 = vmatprep.mubr.bf16.mxu0 0
  %1143 = vmatmul.mubr.bf16.gmra.mxu0 %v985
  %v1144 = vpop.f32.mrf.mxu0
  %v1145 = vadd.f32 %v163, %v1144
  %v1146 = vpop.f32.mrf.mxu0
  %v1147 = vpop.f32.mrf.mxu0
  %v1148 = vadd.f32 %v163, %v1147
  %v1149 = vpop.f32.mrf.mxu0
  %1150 = vmatprep.mubr.bf16.mxu0 0
  %1151 = vmatmul.mubr.bf16.gmra.mxu0 %v988
  %v1152 = vpop.f32.mrf.mxu0
  %v1153 = vadd.f32 %v163, %v1152
  %v1154 = vpop.f32.mrf.mxu0
  %v1155 = vpop.f32.mrf.mxu0
  %v1156 = vadd.f32 %v163, %v1155
  %v1157 = vpop.f32.mrf.mxu0
  %1158 = vmatprep.mubr.bf16.mxu0 0
  %1159 = vmatmul.mubr.bf16.gmra.mxu0 %v991
  %v1160 = vpop.f32.mrf.mxu0
  %v1161 = vadd.f32 %v163, %v1160
  %v1162 = vpop.f32.mrf.mxu0
  %v1163 = vpop.f32.mrf.mxu0
  %v1164 = vadd.f32 %v163, %v1163
  %v1165 = vpop.f32.mrf.mxu0
  %1166 = vmatprep.mubr.bf16.mxu0 0
  %1167 = vmatmul.mubr.bf16.gmra.mxu0 %v994
  %v1168 = vpop.f32.mrf.mxu0
  %v1169 = vadd.f32 %v163, %v1168
  %v1170 = vpop.f32.mrf.mxu0
  %v1171 = vpop.f32.mrf.mxu0
  %v1172 = vadd.f32 %v163, %v1171
  %v1173 = vpop.f32.mrf.mxu0
  %1174 = vmatprep.mubr.bf16.mxu0 0
  %1175 = vmatmul.mubr.bf16.gmra.mxu0 %v997
  %v1176 = vpop.f32.mrf.mxu0
  %v1177 = vadd.f32 %v163, %v1176
  %v1178 = vpop.f32.mrf.mxu0
  %v1179 = vpop.f32.mrf.mxu0
  %v1180 = vadd.f32 %v163, %v1179
  %v1181 = vpop.f32.mrf.mxu0
  %1182 = vmatprep.mubr.bf16.mxu0 0
  %1183 = vmatmul.mubr.bf16.gmra.mxu0 %v1000
  %v1184 = vpop.f32.mrf.mxu0
  %v1185 = vadd.f32 %v163, %v1184
  %v1186 = vpop.f32.mrf.mxu0
  %v1187 = vpop.f32.mrf.mxu0
  %v1188 = vadd.f32 %v163, %v1187
  %v1189 = vpop.f32.mrf.mxu0
  %1190 = vmatprep.mubr.bf16.mxu0 0
  %1191 = vmatmul.mubr.bf16.gmra.mxu0 %v1003
  %v1192 = vpop.f32.mrf.mxu0
  %v1193 = vadd.f32 %v163, %v1192
  %v1194 = vpop.f32.mrf.mxu0
  %v1195 = vpop.f32.mrf.mxu0
  %v1196 = vadd.f32 %v163, %v1195
  %v1197 = vpop.f32.mrf.mxu0
  %1198 = vmatprep.mubr.bf16.mxu0 0
  %1199 = vmatmul.mubr.bf16.gmra.mxu0 %v1006
  %v1200 = vpop.f32.mrf.mxu0
  %v1201 = vadd.f32 %v163, %v1200
  %v1202 = vpop.f32.mrf.mxu0
  %v1203 = vpop.f32.mrf.mxu0
  %v1204 = vadd.f32 %v163, %v1203
  %v1205 = vpop.f32.mrf.mxu0
  %1206 = vmatprep.mubr.bf16.mxu0 0
  %1207 = vmatmul.mubr.bf16.gmra.mxu0 %v1009
  %v1208 = vpop.f32.mrf.mxu0
  %v1209 = vadd.f32 %v163, %v1208
  %v1210 = vpop.f32.mrf.mxu0
  %v1211 = vpop.f32.mrf.mxu0
  %v1212 = vadd.f32 %v163, %v1211
  %v1213 = vpop.f32.mrf.mxu0
  %1214 = vmatprep.mubr.bf16.mxu0 0
  %1215 = vmatmul.mubr.bf16.gmra.mxu0 %v1012
  %v1216 = vpop.f32.mrf.mxu0
  %v1217 = vadd.f32 %v163, %v1216
  %v1218 = vpop.f32.mrf.mxu0
  %v1219 = vpop.f32.mrf.mxu0
  %v1220 = vadd.f32 %v163, %v1219
  %v1221 = vpop.f32.mrf.mxu0
  %1222 = vmatprep.mubr.bf16.mxu0 0
  %1223 = vmatmul.mubr.bf16.gmra.mxu0 %v1015
  %v1224 = vpop.f32.mrf.mxu0
  %v1225 = vadd.f32 %v163, %v1224
  %v1226 = vpop.f32.mrf.mxu0
  %v1227 = vpop.f32.mrf.mxu0
  %v1228 = vadd.f32 %v163, %v1227
  %v1229 = vpop.f32.mrf.mxu0
  %1230 = vmatprep.mubr.bf16.mxu0 0
  %1231 = vmatmul.mubr.bf16.gmra.mxu0 %v1018
  %v1232 = vpop.f32.mrf.mxu0
  %v1233 = vadd.f32 %v163, %v1232
  %v1234 = vpop.f32.mrf.mxu0
  %v1235 = vpop.f32.mrf.mxu0
  %v1236 = vadd.f32 %v163, %v1235
  %v1237 = vpop.f32.mrf.mxu0
  %1238 = vmatprep.mubr.bf16.mxu0 0
  %1239 = vmatmul.mubr.bf16.gmra.mxu0 %v1021
  %v1240 = vpop.f32.mrf.mxu0
  %v1241 = vadd.f32 %v163, %v1240
  %v1242 = vpop.f32.mrf.mxu0
  %v1243 = vpop.f32.mrf.mxu0
  %v1244 = vadd.f32 %v163, %v1243
  %v1245 = vpop.f32.mrf.mxu0
  %1246 = vmatprep.mubr.bf16.mxu0 0
  %1247 = vmatmul.mubr.bf16.gmra.mxu0 %v1024
  %v1248 = vpop.f32.mrf.mxu0
  %v1249 = vadd.f32 %v163, %v1248
  %v1250 = vpop.f32.mrf.mxu0
  %v1251 = vpop.f32.mrf.mxu0
  %v1252 = vadd.f32 %v163, %v1251
  %v1253 = vpop.f32.mrf.mxu0
  %1254 = vmatprep.mubr.bf16.mxu0 0
  %1255 = vmatmul.mubr.bf16.gmra.mxu0 %v1027
  %v1256 = vpop.f32.mrf.mxu0
  %v1257 = vadd.f32 %v163, %v1256
  %v1258 = vpop.f32.mrf.mxu0
  %v1259 = vpop.f32.mrf.mxu0
  %v1260 = vadd.f32 %v163, %v1259
  %v1261 = vpop.f32.mrf.mxu0
  %1262 = vmatprep.mubr.bf16.mxu0 0
  %1263 = vmatmul.mubr.bf16.gmra.mxu0 %v1030
  %v1264 = vpop.f32.mrf.mxu0
  %v1265 = vadd.f32 %v163, %v1264
  %v1266 = vpop.f32.mrf.mxu0
  %v1267 = vpop.f32.mrf.mxu0
  %v1268 = vadd.f32 %v163, %v1267
  %v1269 = vpop.f32.mrf.mxu0
  %1270 = vmatprep.mubr.bf16.mxu0 0
  %1271 = vmatmul.mubr.bf16.gmra.mxu0 %v1033
  %v1272 = vpop.f32.mrf.mxu0
  %v1273 = vadd.f32 %v163, %v1272
  %v1274 = vpop.f32.mrf.mxu0
  %v1275 = vpop.f32.mrf.mxu0
  %v1276 = vadd.f32 %v163, %v1275
  %v1277 = vpop.f32.mrf.mxu0
  %1278 = vmatprep.mubr.bf16.mxu0 0
  %1279 = vmatmul.mubr.bf16.gmra.mxu0 %v1036
  %v1280 = vpop.f32.mrf.mxu0
  %v1281 = vadd.f32 %v163, %v1280
  %v1282 = vpop.f32.mrf.mxu0
  %v1283 = vpop.f32.mrf.mxu0
  %v1284 = vadd.f32 %v163, %v1283
  %v1285 = vpop.f32.mrf.mxu0
  %1286 = vmatprep.mubr.bf16.mxu0 0
  %1287 = vmatmul.mubr.bf16.gmra.mxu0 %v1039
  %v1288 = vpop.f32.mrf.mxu0
  %v1289 = vadd.f32 %v163, %v1288
  %v1290 = vpop.f32.mrf.mxu0
  %v1291 = vpop.f32.mrf.mxu0
  %v1292 = vadd.f32 %v163, %v1291
  %v1293 = vpop.f32.mrf.mxu0
  %1294 = vmatprep.mubr.bf16.mxu0 0
  %1295 = vmatmul.mubr.bf16.gmra.mxu0 %v1042
  %v1296 = vpop.f32.mrf.mxu0
  %v1297 = vadd.f32 %v163, %v1296
  %v1298 = vpop.f32.mrf.mxu0
  %v1299 = vpop.f32.mrf.mxu0
  %v1300 = vadd.f32 %v163, %v1299
  %v1301 = vpop.f32.mrf.mxu0
  %1302 = vmatprep.mubr.bf16.mxu0 0
  %1303 = vmatmul.mubr.bf16.gmra.mxu0 %v1045
  %v1304 = vpop.f32.mrf.mxu0
  %v1305 = vadd.f32 %v163, %v1304
  %v1306 = vpop.f32.mrf.mxu0
  %v1307 = vpop.f32.mrf.mxu0
  %v1308 = vadd.f32 %v163, %v1307
  %v1309 = vpop.f32.mrf.mxu0
  %1310 = vmatprep.mubr.bf16.mxu0 0
  %1311 = vmatmul.mubr.bf16.gmra.mxu0 %v1048
  %v1312 = vpop.f32.mrf.mxu0
  %v1313 = vadd.f32 %v163, %v1312
  %v1314 = vpop.f32.mrf.mxu0
  %v1315 = vpop.f32.mrf.mxu0
  %v1316 = vadd.f32 %v163, %v1315
  %v1317 = vpop.f32.mrf.mxu0
  %1318 = vmatprep.mubr.bf16.mxu0 0
  %1319 = vmatmul.mubr.bf16.gmra.mxu0 %v1051
  %v1320 = vpop.f32.mrf.mxu0
  %v1321 = vadd.f32 %v163, %v1320
  %v1322 = vpop.f32.mrf.mxu0
  %v1323 = vpop.f32.mrf.mxu0
  %v1324 = vadd.f32 %v163, %v1323
  %v1325 = vpop.f32.mrf.mxu0
  %1326 = vmatprep.mubr.bf16.mxu0 0
  %1327 = vmatmul.mubr.bf16.gmra.mxu0 %v1054
  %v1328 = vpop.f32.mrf.mxu0
  %v1329 = vadd.f32 %v163, %v1328
  %v1330 = vpop.f32.mrf.mxu0
  %v1331 = vpop.f32.mrf.mxu0
  %v1332 = vadd.f32 %v163, %v1331
  %v1333 = vpop.f32.mrf.mxu0
  %1334 = vmatprep.mubr.bf16.mxu0 0
  %1335 = vmatmul.mubr.bf16.gmra.mxu0 %v1057
  %v1336 = vpop.f32.mrf.mxu0
  %v1337 = vadd.f32 %v163, %v1336
  %v1338 = vpop.f32.mrf.mxu0
  %v1339 = vpop.f32.mrf.mxu0
  %v1340 = vadd.f32 %v163, %v1339
  %v1341 = vpop.f32.mrf.mxu0
  %1342 = vmatprep.mubr.bf16.mxu0 0
  %1343 = vmatmul.mubr.bf16.gmra.mxu0 %v1060
  %v1344 = vpop.f32.mrf.mxu0
  %v1345 = vadd.f32 %v163, %v1344
  %v1346 = vpop.f32.mrf.mxu0
  %v1347 = vpop.f32.mrf.mxu0
  %v1348 = vadd.f32 %v163, %v1347
  %v1349 = vpop.f32.mrf.mxu0
  %1350 = vdwg.mxu0
  %v1351 = vmax.f32 %v1097, 0.0
  %v1352 = vmax.f32 %v1100, 0.0
  %v1353 = vmax.f32 %v1105, 0.0
  %v1354 = vmax.f32 %v1108, 0.0
  %v1355 = vmax.f32 %v1113, 0.0
  %v1356 = vmax.f32 %v1116, 0.0
  %v1357 = vmax.f32 %v1121, 0.0
  %v1358 = vmax.f32 %v1124, 0.0
  %v1359 = vmax.f32 %v1129, 0.0
  %v1360 = vmax.f32 %v1132, 0.0
  %v1361 = vmax.f32 %v1137, 0.0
  %v1362 = vmax.f32 %v1140, 0.0
  %v1363 = vmax.f32 %v1145, 0.0
  %v1364 = vmax.f32 %v1148, 0.0
  %v1365 = vmax.f32 %v1153, 0.0
  %v1366 = vmax.f32 %v1156, 0.0
  %v1367 = vmax.f32 %v1161, 0.0
  %v1368 = vmax.f32 %v1164, 0.0
  %v1369 = vmax.f32 %v1169, 0.0
  %v1370 = vmax.f32 %v1172, 0.0
  %v1371 = vmax.f32 %v1177, 0.0
  %v1372 = vmax.f32 %v1180, 0.0
  %v1373 = vmax.f32 %v1185, 0.0
  %v1374 = vmax.f32 %v1188, 0.0
  %v1375 = vmax.f32 %v1193, 0.0
  %v1376 = vmax.f32 %v1196, 0.0
  %v1377 = vmax.f32 %v1201, 0.0
  %v1378 = vmax.f32 %v1204, 0.0
  %v1379 = vmax.f32 %v1209, 0.0
  %v1380 = vmax.f32 %v1212, 0.0
  %v1381 = vmax.f32 %v1217, 0.0
  %v1382 = vmax.f32 %v1220, 0.0
  %v1383 = vmax.f32 %v1225, 0.0
  %v1384 = vmax.f32 %v1228, 0.0
  %v1385 = vmax.f32 %v1233, 0.0
  %v1386 = vmax.f32 %v1236, 0.0
  %v1387 = vmax.f32 %v1241, 0.0
  %v1388 = vmax.f32 %v1244, 0.0
  %v1389 = vmax.f32 %v1249, 0.0
  %v1390 = vmax.f32 %v1252, 0.0
  %v1391 = vmax.f32 %v1257, 0.0
  %v1392 = vmax.f32 %v1260, 0.0
  %v1393 = vmax.f32 %v1265, 0.0
  %v1394 = vmax.f32 %v1268, 0.0
  %v1395 = vmax.f32 %v1273, 0.0
  %v1396 = vmax.f32 %v1276, 0.0
  %v1397 = vmax.f32 %v1281, 0.0
  %v1398 = vmax.f32 %v1284, 0.0
  %v1399 = vmax.f32 %v1289, 0.0
  %v1400 = vmax.f32 %v1292, 0.0
  %v1401 = vmax.f32 %v1297, 0.0
  %v1402 = vmax.f32 %v1300, 0.0
  %v1403 = vmax.f32 %v1305, 0.0
  %v1404 = vmax.f32 %v1308, 0.0
  %v1405 = vmax.f32 %v1313, 0.0
  %v1406 = vmax.f32 %v1316, 0.0
  %v1407 = vmax.f32 %v1321, 0.0
  %v1408 = vmax.f32 %v1324, 0.0
  %v1409 = vmax.f32 %v1329, 0.0
  %v1410 = vmax.f32 %v1332, 0.0
  %v1411 = vmax.f32 %v1337, 0.0
  %v1412 = vmax.f32 %v1340, 0.0
  %v1413 = vmax.f32 %v1345, 0.0
  %v1414 = vmax.f32 %v1348, 0.0
  %v1415 = vmul.f32 %v742, %v742
  %v1416 = vmul.f32 %v743, %v743
  %v1417 = vmul.f32 %v744, %v744
  %v1418 = vmul.f32 %v745, %v745
  %v1419 = vmul.f32 %v746, %v746
  %v1420 = vmul.f32 %v747, %v747
  %v1421 = vmul.f32 %v748, %v748
  %v1422 = vmul.f32 %v749, %v749
  %v1423 = vmul.f32 %v750, %v750
  %v1424 = vmul.f32 %v751, %v751
  %v1425 = vmul.f32 %v752, %v752
  %v1426 = vmul.f32 %v753, %v753
  %v1427 = vmul.f32 %v754, %v754
  %v1428 = vmul.f32 %v755, %v755
  %v1429 = vmul.f32 %v756, %v756
  %v1430 = vmul.f32 %v757, %v757
  %v1431 = vmul.f32 %v758, %v758
  %v1432 = vmul.f32 %v759, %v759
  %v1433 = vmul.f32 %v760, %v760
  %v1434 = vmul.f32 %v761, %v761
  %v1435 = vmul.f32 %v762, %v762
  %v1436 = vmul.f32 %v763, %v763
  %v1437 = vmul.f32 %v764, %v764
  %v1438 = vmul.f32 %v765, %v765
  %v1439 = vmul.f32 %v766, %v766
  %v1440 = vmul.f32 %v767, %v767
  %v1441 = vmul.f32 %v768, %v768
  %v1442 = vmul.f32 %v769, %v769
  %v1443 = vmul.f32 %v770, %v770
  %v1444 = vmul.f32 %v771, %v771
  %v1445 = vmul.f32 %v772, %v772
  %v1446 = vmul.f32 %v773, %v773
  %v1447 = vmul.f32 %v774, %v774
  %v1448 = vmul.f32 %v775, %v775
  %v1449 = vmul.f32 %v776, %v776
  %v1450 = vmul.f32 %v777, %v777
  %v1451 = vmul.f32 %v778, %v778
  %v1452 = vmul.f32 %v779, %v779
  %v1453 = vmul.f32 %v780, %v780
  %v1454 = vmul.f32 %v781, %v781
  %v1455 = vmul.f32 %v782, %v782
  %v1456 = vmul.f32 %v783, %v783
  %v1457 = vmul.f32 %v784, %v784
  %v1458 = vmul.f32 %v785, %v785
  %v1459 = vmul.f32 %v786, %v786
  %v1460 = vmul.f32 %v787, %v787
  %v1461 = vmul.f32 %v788, %v788
  %v1462 = vmul.f32 %v789, %v789
  %v1463 = vmul.f32 %v790, %v790
  %v1464 = vmul.f32 %v791, %v791
  %v1465 = vmul.f32 %v792, %v792
  %v1466 = vmul.f32 %v793, %v793
  %v1467 = vmul.f32 %v794, %v794
  %v1468 = vmul.f32 %v795, %v795
  %v1469 = vmul.f32 %v796, %v796
  %v1470 = vmul.f32 %v797, %v797
  %v1471 = vmul.f32 %v798, %v798
  %v1472 = vmul.f32 %v799, %v799
  %v1473 = vmul.f32 %v800, %v800
  %v1474 = vmul.f32 %v801, %v801
  %v1475 = vmul.f32 %v802, %v802
  %v1476 = vmul.f32 %v803, %v803
  %v1477 = vmul.f32 %v804, %v804
  %v1478 = vmul.f32 %v805, %v805
  %1479 = vmatprep.subr.mxu0 0.0
  %1480 = vmatpush1.msra.mxu0 1.0
  %1481 = vmatprep.subr.mxu0 0.0
  %1482 = vmatpush1.msra.mxu0 1.0
  %1483 = vmatprep.subr.mxu0 0.0
  %1484 = vmatpush1.msra.mxu0 1.0
  %1485 = vmatprep.subr.mxu0 0.0
  %1486 = vmatpush1.msra.mxu0 1.0
  %1487 = vmatprep.subr.mxu0 0.0
  %1488 = vmatpush1.msra.mxu0 1.0
  %1489 = vmatprep.subr.mxu0 0.0
  %1490 = vmatpush1.msra.mxu0 1.0
  %1491 = vmatprep.subr.mxu0 0.0
  %1492 = vmatpush1.msra.mxu0 1.0
  %1493 = vmatprep.subr.mxu0 0.0
  %1494 = vmatpush1.msra.mxu0 1.0
  %1495 = vmatprep.subr.mxu0 0.0
  %1496 = vmatpush1.msra.mxu0 1.0
  %1497 = vmatprep.subr.mxu0 0.0
  %1498 = vmatpush1.msra.mxu0 1.0
  %1499 = vmatprep.subr.mxu0 0.0
  %1500 = vmatpush1.msra.mxu0 1.0
  %1501 = vmatprep.subr.mxu0 0.0
  %1502 = vmatpush1.msra.mxu0 1.0
  %1503 = vmatprep.subr.mxu0 0.0
  %1504 = vmatpush1.msra.mxu0 1.0
  %1505 = vmatprep.subr.mxu0 0.0
  %1506 = vmatpush1.msra.mxu0 1.0
  %1507 = vmatprep.subr.mxu0 0.0
  %1508 = vmatpush1.msra.mxu0 1.0
  %1509 = vmatprep.subr.mxu0 0.0
  %1510 = vmatpush1.msra.mxu0 1.0
  %1511 = vmatprep.subr.mxu0 0.0
  %1512 = vmatpush2.msra.mxu0 0.0
  %1513 = vmatprep.subr.mxu0 0.0
  %1514 = vmatpush2.msra.mxu0 0.0
  %1515 = vmatprep.subr.mxu0 0.0
  %1516 = vmatpush2.msra.mxu0 0.0
  %1517 = vmatprep.subr.mxu0 0.0
  %1518 = vmatpush2.msra.mxu0 0.0
  %1519 = vmatprep.subr.mxu0 0.0
  %1520 = vmatpush2.msra.mxu0 0.0
  %1521 = vmatprep.subr.mxu0 0.0
  %1522 = vmatpush2.msra.mxu0 0.0
  %1523 = vmatprep.subr.mxu0 0.0
  %1524 = vmatpush2.msra.mxu0 0.0
  %1525 = vmatprep.subr.mxu0 0.0
  %1526 = vmatpush2.msra.mxu0 0.0
  %1527 = vmatprep.subr.mxu0 0.0
  %1528 = vmatpush2.msra.mxu0 0.0
  %1529 = vmatprep.subr.mxu0 0.0
  %1530 = vmatpush2.msra.mxu0 0.0
  %1531 = vmatprep.subr.mxu0 0.0
  %1532 = vmatpush2.msra.mxu0 0.0
  %1533 = vmatprep.subr.mxu0 0.0
  %1534 = vmatpush2.msra.mxu0 0.0
  %1535 = vmatprep.subr.mxu0 0.0
  %1536 = vmatpush2.msra.mxu0 0.0
  %1537 = vmatprep.subr.mxu0 0.0
  %1538 = vmatpush2.msra.mxu0 0.0
  %1539 = vmatprep.subr.mxu0 0.0
  %1540 = vmatpush2.msra.mxu0 0.0
  %1541 = vmatprep.subr.mxu0 0.0
  %1542 = vmatpush2.msra.mxu0 0.0
  %1543 = vmatprep.mubr.f32.mxu0 0.0
  %1544 = vmatmul.mubr.f32.gmra.mxu0 %v1415
  %v1545 = vpop.f32.mrf.mxu0
  %v1546 = vadd.f32 0.0, %v1545
  %v1547 = vpop.f32.mrf.mxu0
  %1548 = vmatprep.mubr.f32.mxu0 0.0
  %1549 = vmatmul.mubr.f32.gmra.mxu0 %v1416
  %v1550 = vpop.f32.mrf.mxu0
  %v1551 = vadd.f32 0.0, %v1550
  %v1552 = vpop.f32.mrf.mxu0
  %1553 = vmatprep.mubr.f32.mxu0 0.0
  %1554 = vmatmul.mubr.f32.gmra.mxu0 %v1417
  %v1555 = vpop.f32.mrf.mxu0
  %v1556 = vadd.f32 0.0, %v1555
  %v1557 = vpop.f32.mrf.mxu0
  %1558 = vmatprep.mubr.f32.mxu0 0.0
  %1559 = vmatmul.mubr.f32.gmra.mxu0 %v1418
  %v1560 = vpop.f32.mrf.mxu0
  %v1561 = vadd.f32 0.0, %v1560
  %v1562 = vpop.f32.mrf.mxu0
  %1563 = vmatprep.mubr.f32.mxu0 0.0
  %1564 = vmatmul.mubr.f32.gmra.mxu0 %v1419
  %v1565 = vpop.f32.mrf.mxu0
  %v1566 = vadd.f32 0.0, %v1565
  %v1567 = vpop.f32.mrf.mxu0
  %1568 = vmatprep.mubr.f32.mxu0 0.0
  %1569 = vmatmul.mubr.f32.gmra.mxu0 %v1420
  %v1570 = vpop.f32.mrf.mxu0
  %v1571 = vadd.f32 0.0, %v1570
  %v1572 = vpop.f32.mrf.mxu0
  %1573 = vmatprep.mubr.f32.mxu0 0.0
  %1574 = vmatmul.mubr.f32.gmra.mxu0 %v1421
  %v1575 = vpop.f32.mrf.mxu0
  %v1576 = vadd.f32 0.0, %v1575
  %v1577 = vpop.f32.mrf.mxu0
  %1578 = vmatprep.mubr.f32.mxu0 0.0
  %1579 = vmatmul.mubr.f32.gmra.mxu0 %v1422
  %v1580 = vpop.f32.mrf.mxu0
  %v1581 = vadd.f32 0.0, %v1580
  %v1582 = vpop.f32.mrf.mxu0
  %1583 = vmatprep.mubr.f32.mxu0 0.0
  %1584 = vmatmul.mubr.f32.gmra.mxu0 %v1423
  %v1585 = vpop.f32.mrf.mxu0
  %v1586 = vadd.f32 0.0, %v1585
  %v1587 = vpop.f32.mrf.mxu0
  %1588 = vmatprep.mubr.f32.mxu0 0.0
  %1589 = vmatmul.mubr.f32.gmra.mxu0 %v1424
  %v1590 = vpop.f32.mrf.mxu0
  %v1591 = vadd.f32 0.0, %v1590
  %v1592 = vpop.f32.mrf.mxu0
  %1593 = vmatprep.mubr.f32.mxu0 0.0
  %1594 = vmatmul.mubr.f32.gmra.mxu0 %v1425
  %v1595 = vpop.f32.mrf.mxu0
  %v1596 = vadd.f32 0.0, %v1595
  %v1597 = vpop.f32.mrf.mxu0
  %1598 = vmatprep.mubr.f32.mxu0 0.0
  %1599 = vmatmul.mubr.f32.gmra.mxu0 %v1426
  %v1600 = vpop.f32.mrf.mxu0
  %v1601 = vadd.f32 0.0, %v1600
  %v1602 = vpop.f32.mrf.mxu0
  %1603 = vmatprep.mubr.f32.mxu0 0.0
  %1604 = vmatmul.mubr.f32.gmra.mxu0 %v1427
  %v1605 = vpop.f32.mrf.mxu0
  %v1606 = vadd.f32 0.0, %v1605
  %v1607 = vpop.f32.mrf.mxu0
  %1608 = vmatprep.mubr.f32.mxu0 0.0
  %1609 = vmatmul.mubr.f32.gmra.mxu0 %v1428
  %v1610 = vpop.f32.mrf.mxu0
  %v1611 = vadd.f32 0.0, %v1610
  %v1612 = vpop.f32.mrf.mxu0
  %1613 = vmatprep.mubr.f32.mxu0 0.0
  %1614 = vmatmul.mubr.f32.gmra.mxu0 %v1429
  %v1615 = vpop.f32.mrf.mxu0
  %v1616 = vadd.f32 0.0, %v1615
  %v1617 = vpop.f32.mrf.mxu0
  %1618 = vmatprep.mubr.f32.mxu0 0.0
  %1619 = vmatmul.mubr.f32.gmra.mxu0 %v1430
  %v1620 = vpop.f32.mrf.mxu0
  %v1621 = vadd.f32 0.0, %v1620
  %v1622 = vpop.f32.mrf.mxu0
  %1623 = vmatprep.mubr.f32.mxu0 0.0
  %1624 = vmatmul.mubr.f32.gmra.mxu0 %v1431
  %v1625 = vpop.f32.mrf.mxu0
  %v1626 = vadd.f32 0.0, %v1625
  %v1627 = vpop.f32.mrf.mxu0
  %1628 = vmatprep.mubr.f32.mxu0 0.0
  %1629 = vmatmul.mubr.f32.gmra.mxu0 %v1432
  %v1630 = vpop.f32.mrf.mxu0
  %v1631 = vadd.f32 0.0, %v1630
  %v1632 = vpop.f32.mrf.mxu0
  %1633 = vmatprep.mubr.f32.mxu0 0.0
  %1634 = vmatmul.mubr.f32.gmra.mxu0 %v1433
  %v1635 = vpop.f32.mrf.mxu0
  %v1636 = vadd.f32 0.0, %v1635
  %v1637 = vpop.f32.mrf.mxu0
  %1638 = vmatprep.mubr.f32.mxu0 0.0
  %1639 = vmatmul.mubr.f32.gmra.mxu0 %v1434
  %v1640 = vpop.f32.mrf.mxu0
  %v1641 = vadd.f32 0.0, %v1640
  %v1642 = vpop.f32.mrf.mxu0
  %1643 = vmatprep.mubr.f32.mxu0 0.0
  %1644 = vmatmul.mubr.f32.gmra.mxu0 %v1435
  %v1645 = vpop.f32.mrf.mxu0
  %v1646 = vadd.f32 0.0, %v1645
  %v1647 = vpop.f32.mrf.mxu0
  %1648 = vmatprep.mubr.f32.mxu0 0.0
  %1649 = vmatmul.mubr.f32.gmra.mxu0 %v1436
  %v1650 = vpop.f32.mrf.mxu0
  %v1651 = vadd.f32 0.0, %v1650
  %v1652 = vpop.f32.mrf.mxu0
  %1653 = vmatprep.mubr.f32.mxu0 0.0
  %1654 = vmatmul.mubr.f32.gmra.mxu0 %v1437
  %v1655 = vpop.f32.mrf.mxu0
  %v1656 = vadd.f32 0.0, %v1655
  %v1657 = vpop.f32.mrf.mxu0
  %1658 = vmatprep.mubr.f32.mxu0 0.0
  %1659 = vmatmul.mubr.f32.gmra.mxu0 %v1438
  %v1660 = vpop.f32.mrf.mxu0
  %v1661 = vadd.f32 0.0, %v1660
  %v1662 = vpop.f32.mrf.mxu0
  %1663 = vmatprep.mubr.f32.mxu0 0.0
  %1664 = vmatmul.mubr.f32.gmra.mxu0 %v1439
  %v1665 = vpop.f32.mrf.mxu0
  %v1666 = vadd.f32 0.0, %v1665
  %v1667 = vpop.f32.mrf.mxu0
  %1668 = vmatprep.mubr.f32.mxu0 0.0
  %1669 = vmatmul.mubr.f32.gmra.mxu0 %v1440
  %v1670 = vpop.f32.mrf.mxu0
  %v1671 = vadd.f32 0.0, %v1670
  %v1672 = vpop.f32.mrf.mxu0
  %1673 = vmatprep.mubr.f32.mxu0 0.0
  %1674 = vmatmul.mubr.f32.gmra.mxu0 %v1441
  %v1675 = vpop.f32.mrf.mxu0
  %v1676 = vadd.f32 0.0, %v1675
  %v1677 = vpop.f32.mrf.mxu0
  %1678 = vmatprep.mubr.f32.mxu0 0.0
  %1679 = vmatmul.mubr.f32.gmra.mxu0 %v1442
  %v1680 = vpop.f32.mrf.mxu0
  %v1681 = vadd.f32 0.0, %v1680
  %v1682 = vpop.f32.mrf.mxu0
  %1683 = vmatprep.mubr.f32.mxu0 0.0
  %1684 = vmatmul.mubr.f32.gmra.mxu0 %v1443
  %v1685 = vpop.f32.mrf.mxu0
  %v1686 = vadd.f32 0.0, %v1685
  %v1687 = vpop.f32.mrf.mxu0
  %1688 = vmatprep.mubr.f32.mxu0 0.0
  %1689 = vmatmul.mubr.f32.gmra.mxu0 %v1444
  %v1690 = vpop.f32.mrf.mxu0
  %v1691 = vadd.f32 0.0, %v1690
  %v1692 = vpop.f32.mrf.mxu0
  %1693 = vmatprep.mubr.f32.mxu0 0.0
  %1694 = vmatmul.mubr.f32.gmra.mxu0 %v1445
  %v1695 = vpop.f32.mrf.mxu0
  %v1696 = vadd.f32 0.0, %v1695
  %v1697 = vpop.f32.mrf.mxu0
  %1698 = vmatprep.mubr.f32.mxu0 0.0
  %1699 = vmatmul.mubr.f32.gmra.mxu0 %v1446
  %v1700 = vpop.f32.mrf.mxu0
  %v1701 = vadd.f32 0.0, %v1700
  %v1702 = vpop.f32.mrf.mxu0
  %1703 = vmatprep.mubr.f32.mxu0 0.0
  %1704 = vmatmul.mubr.f32.gmra.mxu0 %v1447
  %v1705 = vpop.f32.mrf.mxu0
  %v1706 = vadd.f32 0.0, %v1705
  %v1707 = vpop.f32.mrf.mxu0
  %1708 = vmatprep.mubr.f32.mxu0 0.0
  %1709 = vmatmul.mubr.f32.gmra.mxu0 %v1448
  %v1710 = vpop.f32.mrf.mxu0
  %v1711 = vadd.f32 0.0, %v1710
  %v1712 = vpop.f32.mrf.mxu0
  %1713 = vmatprep.mubr.f32.mxu0 0.0
  %1714 = vmatmul.mubr.f32.gmra.mxu0 %v1449
  %v1715 = vpop.f32.mrf.mxu0
  %v1716 = vadd.f32 0.0, %v1715
  %v1717 = vpop.f32.mrf.mxu0
  %1718 = vmatprep.mubr.f32.mxu0 0.0
  %1719 = vmatmul.mubr.f32.gmra.mxu0 %v1450
  %v1720 = vpop.f32.mrf.mxu0
  %v1721 = vadd.f32 0.0, %v1720
  %v1722 = vpop.f32.mrf.mxu0
  %1723 = vmatprep.mubr.f32.mxu0 0.0
  %1724 = vmatmul.mubr.f32.gmra.mxu0 %v1451
  %v1725 = vpop.f32.mrf.mxu0
  %v1726 = vadd.f32 0.0, %v1725
  %v1727 = vpop.f32.mrf.mxu0
  %1728 = vmatprep.mubr.f32.mxu0 0.0
  %1729 = vmatmul.mubr.f32.gmra.mxu0 %v1452
  %v1730 = vpop.f32.mrf.mxu0
  %v1731 = vadd.f32 0.0, %v1730
  %v1732 = vpop.f32.mrf.mxu0
  %1733 = vmatprep.mubr.f32.mxu0 0.0
  %1734 = vmatmul.mubr.f32.gmra.mxu0 %v1453
  %v1735 = vpop.f32.mrf.mxu0
  %v1736 = vadd.f32 0.0, %v1735
  %v1737 = vpop.f32.mrf.mxu0
  %1738 = vmatprep.mubr.f32.mxu0 0.0
  %1739 = vmatmul.mubr.f32.gmra.mxu0 %v1454
  %v1740 = vpop.f32.mrf.mxu0
  %v1741 = vadd.f32 0.0, %v1740
  %v1742 = vpop.f32.mrf.mxu0
  %1743 = vmatprep.mubr.f32.mxu0 0.0
  %1744 = vmatmul.mubr.f32.gmra.mxu0 %v1455
  %v1745 = vpop.f32.mrf.mxu0
  %v1746 = vadd.f32 0.0, %v1745
  %v1747 = vpop.f32.mrf.mxu0
  %1748 = vmatprep.mubr.f32.mxu0 0.0
  %1749 = vmatmul.mubr.f32.gmra.mxu0 %v1456
  %v1750 = vpop.f32.mrf.mxu0
  %v1751 = vadd.f32 0.0, %v1750
  %v1752 = vpop.f32.mrf.mxu0
  %1753 = vmatprep.mubr.f32.mxu0 0.0
  %1754 = vmatmul.mubr.f32.gmra.mxu0 %v1457
  %v1755 = vpop.f32.mrf.mxu0
  %v1756 = vadd.f32 0.0, %v1755
  %v1757 = vpop.f32.mrf.mxu0
  %1758 = vmatprep.mubr.f32.mxu0 0.0
  %1759 = vmatmul.mubr.f32.gmra.mxu0 %v1458
  %v1760 = vpop.f32.mrf.mxu0
  %v1761 = vadd.f32 0.0, %v1760
  %v1762 = vpop.f32.mrf.mxu0
  %1763 = vmatprep.mubr.f32.mxu0 0.0
  %1764 = vmatmul.mubr.f32.gmra.mxu0 %v1459
  %v1765 = vpop.f32.mrf.mxu0
  %v1766 = vadd.f32 0.0, %v1765
  %v1767 = vpop.f32.mrf.mxu0
  %1768 = vmatprep.mubr.f32.mxu0 0.0
  %1769 = vmatmul.mubr.f32.gmra.mxu0 %v1460
  %v1770 = vpop.f32.mrf.mxu0
  %v1771 = vadd.f32 0.0, %v1770
  %v1772 = vpop.f32.mrf.mxu0
  %1773 = vmatprep.mubr.f32.mxu0 0.0
  %1774 = vmatmul.mubr.f32.gmra.mxu0 %v1461
  %v1775 = vpop.f32.mrf.mxu0
  %v1776 = vadd.f32 0.0, %v1775
  %v1777 = vpop.f32.mrf.mxu0
  %1778 = vmatprep.mubr.f32.mxu0 0.0
  %1779 = vmatmul.mubr.f32.gmra.mxu0 %v1462
  %v1780 = vpop.f32.mrf.mxu0
  %v1781 = vadd.f32 0.0, %v1780
  %v1782 = vpop.f32.mrf.mxu0
  %1783 = vmatprep.mubr.f32.mxu0 0.0
  %1784 = vmatmul.mubr.f32.gmra.mxu0 %v1463
  %v1785 = vpop.f32.mrf.mxu0
  %v1786 = vadd.f32 0.0, %v1785
  %v1787 = vpop.f32.mrf.mxu0
  %1788 = vmatprep.mubr.f32.mxu0 0.0
  %1789 = vmatmul.mubr.f32.gmra.mxu0 %v1464
  %v1790 = vpop.f32.mrf.mxu0
  %v1791 = vadd.f32 0.0, %v1790
  %v1792 = vpop.f32.mrf.mxu0
  %1793 = vmatprep.mubr.f32.mxu0 0.0
  %1794 = vmatmul.mubr.f32.gmra.mxu0 %v1465
  %v1795 = vpop.f32.mrf.mxu0
  %v1796 = vadd.f32 0.0, %v1795
  %v1797 = vpop.f32.mrf.mxu0
  %1798 = vmatprep.mubr.f32.mxu0 0.0
  %1799 = vmatmul.mubr.f32.gmra.mxu0 %v1466
  %v1800 = vpop.f32.mrf.mxu0
  %v1801 = vadd.f32 0.0, %v1800
  %v1802 = vpop.f32.mrf.mxu0
  %1803 = vmatprep.mubr.f32.mxu0 0.0
  %1804 = vmatmul.mubr.f32.gmra.mxu0 %v1467
  %v1805 = vpop.f32.mrf.mxu0
  %v1806 = vadd.f32 0.0, %v1805
  %v1807 = vpop.f32.mrf.mxu0
  %1808 = vmatprep.mubr.f32.mxu0 0.0
  %1809 = vmatmul.mubr.f32.gmra.mxu0 %v1468
  %v1810 = vpop.f32.mrf.mxu0
  %v1811 = vadd.f32 0.0, %v1810
  %v1812 = vpop.f32.mrf.mxu0
  %1813 = vmatprep.mubr.f32.mxu0 0.0
  %1814 = vmatmul.mubr.f32.gmra.mxu0 %v1469
  %v1815 = vpop.f32.mrf.mxu0
  %v1816 = vadd.f32 0.0, %v1815
  %v1817 = vpop.f32.mrf.mxu0
  %1818 = vmatprep.mubr.f32.mxu0 0.0
  %1819 = vmatmul.mubr.f32.gmra.mxu0 %v1470
  %v1820 = vpop.f32.mrf.mxu0
  %v1821 = vadd.f32 0.0, %v1820
  %v1822 = vpop.f32.mrf.mxu0
  %1823 = vmatprep.mubr.f32.mxu0 0.0
  %1824 = vmatmul.mubr.f32.gmra.mxu0 %v1471
  %v1825 = vpop.f32.mrf.mxu0
  %v1826 = vadd.f32 0.0, %v1825
  %v1827 = vpop.f32.mrf.mxu0
  %1828 = vmatprep.mubr.f32.mxu0 0.0
  %1829 = vmatmul.mubr.f32.gmra.mxu0 %v1472
  %v1830 = vpop.f32.mrf.mxu0
  %v1831 = vadd.f32 0.0, %v1830
  %v1832 = vpop.f32.mrf.mxu0
  %1833 = vmatprep.mubr.f32.mxu0 0.0
  %1834 = vmatmul.mubr.f32.gmra.mxu0 %v1473
  %v1835 = vpop.f32.mrf.mxu0
  %v1836 = vadd.f32 0.0, %v1835
  %v1837 = vpop.f32.mrf.mxu0
  %1838 = vmatprep.mubr.f32.mxu0 0.0
  %1839 = vmatmul.mubr.f32.gmra.mxu0 %v1474
  %v1840 = vpop.f32.mrf.mxu0
  %v1841 = vadd.f32 0.0, %v1840
  %v1842 = vpop.f32.mrf.mxu0
  %1843 = vmatprep.mubr.f32.mxu0 0.0
  %1844 = vmatmul.mubr.f32.gmra.mxu0 %v1475
  %v1845 = vpop.f32.mrf.mxu0
  %v1846 = vadd.f32 0.0, %v1845
  %v1847 = vpop.f32.mrf.mxu0
  %1848 = vmatprep.mubr.f32.mxu0 0.0
  %1849 = vmatmul.mubr.f32.gmra.mxu0 %v1476
  %v1850 = vpop.f32.mrf.mxu0
  %v1851 = vadd.f32 0.0, %v1850
  %v1852 = vpop.f32.mrf.mxu0
  %1853 = vmatprep.mubr.f32.mxu0 0.0
  %1854 = vmatmul.mubr.f32.gmra.mxu0 %v1477
  %v1855 = vpop.f32.mrf.mxu0
  %v1856 = vadd.f32 0.0, %v1855
  %v1857 = vpop.f32.mrf.mxu0
  %1858 = vmatprep.mubr.f32.mxu0 0.0
  %1859 = vmatmul.mubr.f32.gmra.mxu0 %v1478
  %v1860 = vpop.f32.mrf.mxu0
  %v1861 = vadd.f32 0.0, %v1860
  %v1862 = vpop.f32.mrf.mxu0
  %1863 = vdwg.mxu0
  %v1864 = vmul.f32 %v1351, %v1351
  %v1865 = vmul.f32 %v1352, %v1352
  %v1866 = vmul.f32 %v1353, %v1353
  %v1867 = vmul.f32 %v1354, %v1354
  %v1868 = vmul.f32 %v1355, %v1355
  %v1869 = vmul.f32 %v1356, %v1356
  %v1870 = vmul.f32 %v1357, %v1357
  %v1871 = vmul.f32 %v1358, %v1358
  %v1872 = vmul.f32 %v1359, %v1359
  %v1873 = vmul.f32 %v1360, %v1360
  %v1874 = vmul.f32 %v1361, %v1361
  %v1875 = vmul.f32 %v1362, %v1362
  %v1876 = vmul.f32 %v1363, %v1363
  %v1877 = vmul.f32 %v1364, %v1364
  %v1878 = vmul.f32 %v1365, %v1365
  %v1879 = vmul.f32 %v1366, %v1366
  %v1880 = vmul.f32 %v1367, %v1367
  %v1881 = vmul.f32 %v1368, %v1368
  %v1882 = vmul.f32 %v1369, %v1369
  %v1883 = vmul.f32 %v1370, %v1370
  %v1884 = vmul.f32 %v1371, %v1371
  %v1885 = vmul.f32 %v1372, %v1372
  %v1886 = vmul.f32 %v1373, %v1373
  %v1887 = vmul.f32 %v1374, %v1374
  %v1888 = vmul.f32 %v1375, %v1375
  %v1889 = vmul.f32 %v1376, %v1376
  %v1890 = vmul.f32 %v1377, %v1377
  %v1891 = vmul.f32 %v1378, %v1378
  %v1892 = vmul.f32 %v1379, %v1379
  %v1893 = vmul.f32 %v1380, %v1380
  %v1894 = vmul.f32 %v1381, %v1381
  %v1895 = vmul.f32 %v1382, %v1382
  %v1896 = vmul.f32 %v1383, %v1383
  %v1897 = vmul.f32 %v1384, %v1384
  %v1898 = vmul.f32 %v1385, %v1385
  %v1899 = vmul.f32 %v1386, %v1386
  %v1900 = vmul.f32 %v1387, %v1387
  %v1901 = vmul.f32 %v1388, %v1388
  %v1902 = vmul.f32 %v1389, %v1389
  %v1903 = vmul.f32 %v1390, %v1390
  %v1904 = vmul.f32 %v1391, %v1391
  %v1905 = vmul.f32 %v1392, %v1392
  %v1906 = vmul.f32 %v1393, %v1393
  %v1907 = vmul.f32 %v1394, %v1394
  %v1908 = vmul.f32 %v1395, %v1395
  %v1909 = vmul.f32 %v1396, %v1396
  %v1910 = vmul.f32 %v1397, %v1397
  %v1911 = vmul.f32 %v1398, %v1398
  %v1912 = vmul.f32 %v1399, %v1399
  %v1913 = vmul.f32 %v1400, %v1400
  %v1914 = vmul.f32 %v1401, %v1401
  %v1915 = vmul.f32 %v1402, %v1402
  %v1916 = vmul.f32 %v1403, %v1403
  %v1917 = vmul.f32 %v1404, %v1404
  %v1918 = vmul.f32 %v1405, %v1405
  %v1919 = vmul.f32 %v1406, %v1406
  %v1920 = vmul.f32 %v1407, %v1407
  %v1921 = vmul.f32 %v1408, %v1408
  %v1922 = vmul.f32 %v1409, %v1409
  %v1923 = vmul.f32 %v1410, %v1410
  %v1924 = vmul.f32 %v1411, %v1411
  %v1925 = vmul.f32 %v1412, %v1412
  %v1926 = vmul.f32 %v1413, %v1413
  %v1927 = vmul.f32 %v1414, %v1414
  %1928 = vmatprep.subr.mxu0 0.0
  %1929 = vmatpush1.msra.mxu0 1.0
  %1930 = vmatprep.subr.mxu0 0.0
  %1931 = vmatpush1.msra.mxu0 1.0
  %1932 = vmatprep.subr.mxu0 0.0
  %1933 = vmatpush1.msra.mxu0 1.0
  %1934 = vmatprep.subr.mxu0 0.0
  %1935 = vmatpush1.msra.mxu0 1.0
  %1936 = vmatprep.subr.mxu0 0.0
  %1937 = vmatpush1.msra.mxu0 1.0
  %1938 = vmatprep.subr.mxu0 0.0
  %1939 = vmatpush1.msra.mxu0 1.0
  %1940 = vmatprep.subr.mxu0 0.0
  %1941 = vmatpush1.msra.mxu0 1.0
  %1942 = vmatprep.subr.mxu0 0.0
  %1943 = vmatpush1.msra.mxu0 1.0
  %1944 = vmatprep.subr.mxu0 0.0
  %1945 = vmatpush1.msra.mxu0 1.0
  %1946 = vmatprep.subr.mxu0 0.0
  %1947 = vmatpush1.msra.mxu0 1.0
  %1948 = vmatprep.subr.mxu0 0.0
  %1949 = vmatpush1.msra.mxu0 1.0
  %1950 = vmatprep.subr.mxu0 0.0
  %1951 = vmatpush1.msra.mxu0 1.0
  %1952 = vmatprep.subr.mxu0 0.0
  %1953 = vmatpush1.msra.mxu0 1.0
  %1954 = vmatprep.subr.mxu0 0.0
  %1955 = vmatpush1.msra.mxu0 1.0
  %1956 = vmatprep.subr.mxu0 0.0
  %1957 = vmatpush1.msra.mxu0 1.0
  %1958 = vmatprep.subr.mxu0 0.0
  %1959 = vmatpush1.msra.mxu0 1.0
  %1960 = vmatprep.subr.mxu0 0.0
  %1961 = vmatpush2.msra.mxu0 0.0
  %1962 = vmatprep.subr.mxu0 0.0
  %1963 = vmatpush2.msra.mxu0 0.0
  %1964 = vmatprep.subr.mxu0 0.0
  %1965 = vmatpush2.msra.mxu0 0.0
  %1966 = vmatprep.subr.mxu0 0.0
  %1967 = vmatpush2.msra.mxu0 0.0
  %1968 = vmatprep.subr.mxu0 0.0
  %1969 = vmatpush2.msra.mxu0 0.0
  %1970 = vmatprep.subr.mxu0 0.0
  %1971 = vmatpush2.msra.mxu0 0.0
  %1972 = vmatprep.subr.mxu0 0.0
  %1973 = vmatpush2.msra.mxu0 0.0
  %1974 = vmatprep.subr.mxu0 0.0
  %1975 = vmatpush2.msra.mxu0 0.0
  %1976 = vmatprep.subr.mxu0 0.0
  %1977 = vmatpush2.msra.mxu0 0.0
  %1978 = vmatprep.subr.mxu0 0.0
  %1979 = vmatpush2.msra.mxu0 0.0
  %1980 = vmatprep.subr.mxu0 0.0
  %1981 = vmatpush2.msra.mxu0 0.0
  %1982 = vmatprep.subr.mxu0 0.0
  %1983 = vmatpush2.msra.mxu0 0.0
  %1984 = vmatprep.subr.mxu0 0.0
  %1985 = vmatpush2.msra.mxu0 0.0
  %1986 = vmatprep.subr.mxu0 0.0
  %1987 = vmatpush2.msra.mxu0 0.0
  %1988 = vmatprep.subr.mxu0 0.0
  %1989 = vmatpush2.msra.mxu0 0.0
  %1990 = vmatprep.subr.mxu0 0.0
  %1991 = vmatpush2.msra.mxu0 0.0
  %1992 = vmatprep.mubr.f32.mxu0 0.0
  %1993 = vmatmul.mubr.f32.gmra.mxu0 %v1864
  %v1994 = vpop.f32.mrf.mxu0
  %v1995 = vadd.f32 0.0, %v1994
  %v1996 = vpop.f32.mrf.mxu0
  %1997 = vmatprep.mubr.f32.mxu0 0.0
  %1998 = vmatmul.mubr.f32.gmra.mxu0 %v1865
  %v1999 = vpop.f32.mrf.mxu0
  %v2000 = vadd.f32 0.0, %v1999
  %v2001 = vpop.f32.mrf.mxu0
  %2002 = vmatprep.mubr.f32.mxu0 0.0
  %2003 = vmatmul.mubr.f32.gmra.mxu0 %v1866
  %v2004 = vpop.f32.mrf.mxu0
  %v2005 = vadd.f32 0.0, %v2004
  %v2006 = vpop.f32.mrf.mxu0
  %2007 = vmatprep.mubr.f32.mxu0 0.0
  %2008 = vmatmul.mubr.f32.gmra.mxu0 %v1867
  %v2009 = vpop.f32.mrf.mxu0
  %v2010 = vadd.f32 0.0, %v2009
  %v2011 = vpop.f32.mrf.mxu0
  %2012 = vmatprep.mubr.f32.mxu0 0.0
  %2013 = vmatmul.mubr.f32.gmra.mxu0 %v1868
  %v2014 = vpop.f32.mrf.mxu0
  %v2015 = vadd.f32 0.0, %v2014
  %v2016 = vpop.f32.mrf.mxu0
  %2017 = vmatprep.mubr.f32.mxu0 0.0
  %2018 = vmatmul.mubr.f32.gmra.mxu0 %v1869
  %v2019 = vpop.f32.mrf.mxu0
  %v2020 = vadd.f32 0.0, %v2019
  %v2021 = vpop.f32.mrf.mxu0
  %2022 = vmatprep.mubr.f32.mxu0 0.0
  %2023 = vmatmul.mubr.f32.gmra.mxu0 %v1870
  %v2024 = vpop.f32.mrf.mxu0
  %v2025 = vadd.f32 0.0, %v2024
  %v2026 = vpop.f32.mrf.mxu0
  %2027 = vmatprep.mubr.f32.mxu0 0.0
  %2028 = vmatmul.mubr.f32.gmra.mxu0 %v1871
  %v2029 = vpop.f32.mrf.mxu0
  %v2030 = vadd.f32 0.0, %v2029
  %v2031 = vpop.f32.mrf.mxu0
  %2032 = vmatprep.mubr.f32.mxu0 0.0
  %2033 = vmatmul.mubr.f32.gmra.mxu0 %v1872
  %v2034 = vpop.f32.mrf.mxu0
  %v2035 = vadd.f32 0.0, %v2034
  %v2036 = vpop.f32.mrf.mxu0
  %2037 = vmatprep.mubr.f32.mxu0 0.0
  %2038 = vmatmul.mubr.f32.gmra.mxu0 %v1873
  %v2039 = vpop.f32.mrf.mxu0
  %v2040 = vadd.f32 0.0, %v2039
  %v2041 = vpop.f32.mrf.mxu0
  %2042 = vmatprep.mubr.f32.mxu0 0.0
  %2043 = vmatmul.mubr.f32.gmra.mxu0 %v1874
  %v2044 = vpop.f32.mrf.mxu0
  %v2045 = vadd.f32 0.0, %v2044
  %v2046 = vpop.f32.mrf.mxu0
  %2047 = vmatprep.mubr.f32.mxu0 0.0
  %2048 = vmatmul.mubr.f32.gmra.mxu0 %v1875
  %v2049 = vpop.f32.mrf.mxu0
  %v2050 = vadd.f32 0.0, %v2049
  %v2051 = vpop.f32.mrf.mxu0
  %2052 = vmatprep.mubr.f32.mxu0 0.0
  %2053 = vmatmul.mubr.f32.gmra.mxu0 %v1876
  %v2054 = vpop.f32.mrf.mxu0
  %v2055 = vadd.f32 0.0, %v2054
  %v2056 = vpop.f32.mrf.mxu0
  %2057 = vmatprep.mubr.f32.mxu0 0.0
  %2058 = vmatmul.mubr.f32.gmra.mxu0 %v1877
  %v2059 = vpop.f32.mrf.mxu0
  %v2060 = vadd.f32 0.0, %v2059
  %v2061 = vpop.f32.mrf.mxu0
  %2062 = vmatprep.mubr.f32.mxu0 0.0
  %2063 = vmatmul.mubr.f32.gmra.mxu0 %v1878
  %v2064 = vpop.f32.mrf.mxu0
  %v2065 = vadd.f32 0.0, %v2064
  %v2066 = vpop.f32.mrf.mxu0
  %2067 = vmatprep.mubr.f32.mxu0 0.0
  %2068 = vmatmul.mubr.f32.gmra.mxu0 %v1879
  %v2069 = vpop.f32.mrf.mxu0
  %v2070 = vadd.f32 0.0, %v2069
  %v2071 = vpop.f32.mrf.mxu0
  %2072 = vmatprep.mubr.f32.mxu0 0.0
  %2073 = vmatmul.mubr.f32.gmra.mxu0 %v1880
  %v2074 = vpop.f32.mrf.mxu0
  %v2075 = vadd.f32 0.0, %v2074
  %v2076 = vpop.f32.mrf.mxu0
  %2077 = vmatprep.mubr.f32.mxu0 0.0
  %2078 = vmatmul.mubr.f32.gmra.mxu0 %v1881
  %v2079 = vpop.f32.mrf.mxu0
  %v2080 = vadd.f32 0.0, %v2079
  %v2081 = vpop.f32.mrf.mxu0
  %2082 = vmatprep.mubr.f32.mxu0 0.0
  %2083 = vmatmul.mubr.f32.gmra.mxu0 %v1882
  %v2084 = vpop.f32.mrf.mxu0
  %v2085 = vadd.f32 0.0, %v2084
  %v2086 = vpop.f32.mrf.mxu0
  %2087 = vmatprep.mubr.f32.mxu0 0.0
  %2088 = vmatmul.mubr.f32.gmra.mxu0 %v1883
  %v2089 = vpop.f32.mrf.mxu0
  %v2090 = vadd.f32 0.0, %v2089
  %v2091 = vpop.f32.mrf.mxu0
  %2092 = vmatprep.mubr.f32.mxu0 0.0
  %2093 = vmatmul.mubr.f32.gmra.mxu0 %v1884
  %v2094 = vpop.f32.mrf.mxu0
  %v2095 = vadd.f32 0.0, %v2094
  %v2096 = vpop.f32.mrf.mxu0
  %2097 = vmatprep.mubr.f32.mxu0 0.0
  %2098 = vmatmul.mubr.f32.gmra.mxu0 %v1885
  %v2099 = vpop.f32.mrf.mxu0
  %v2100 = vadd.f32 0.0, %v2099
  %v2101 = vpop.f32.mrf.mxu0
  %2102 = vmatprep.mubr.f32.mxu0 0.0
  %2103 = vmatmul.mubr.f32.gmra.mxu0 %v1886
  %v2104 = vpop.f32.mrf.mxu0
  %v2105 = vadd.f32 0.0, %v2104
  %v2106 = vpop.f32.mrf.mxu0
  %2107 = vmatprep.mubr.f32.mxu0 0.0
  %2108 = vmatmul.mubr.f32.gmra.mxu0 %v1887
  %v2109 = vpop.f32.mrf.mxu0
  %v2110 = vadd.f32 0.0, %v2109
  %v2111 = vpop.f32.mrf.mxu0
  %2112 = vmatprep.mubr.f32.mxu0 0.0
  %2113 = vmatmul.mubr.f32.gmra.mxu0 %v1888
  %v2114 = vpop.f32.mrf.mxu0
  %v2115 = vadd.f32 0.0, %v2114
  %v2116 = vpop.f32.mrf.mxu0
  %2117 = vmatprep.mubr.f32.mxu0 0.0
  %2118 = vmatmul.mubr.f32.gmra.mxu0 %v1889
  %v2119 = vpop.f32.mrf.mxu0
  %v2120 = vadd.f32 0.0, %v2119
  %v2121 = vpop.f32.mrf.mxu0
  %2122 = vmatprep.mubr.f32.mxu0 0.0
  %2123 = vmatmul.mubr.f32.gmra.mxu0 %v1890
  %v2124 = vpop.f32.mrf.mxu0
  %v2125 = vadd.f32 0.0, %v2124
  %v2126 = vpop.f32.mrf.mxu0
  %2127 = vmatprep.mubr.f32.mxu0 0.0
  %2128 = vmatmul.mubr.f32.gmra.mxu0 %v1891
  %v2129 = vpop.f32.mrf.mxu0
  %v2130 = vadd.f32 0.0, %v2129
  %v2131 = vpop.f32.mrf.mxu0
  %2132 = vmatprep.mubr.f32.mxu0 0.0
  %2133 = vmatmul.mubr.f32.gmra.mxu0 %v1892
  %v2134 = vpop.f32.mrf.mxu0
  %v2135 = vadd.f32 0.0, %v2134
  %v2136 = vpop.f32.mrf.mxu0
  %2137 = vmatprep.mubr.f32.mxu0 0.0
  %2138 = vmatmul.mubr.f32.gmra.mxu0 %v1893
  %v2139 = vpop.f32.mrf.mxu0
  %v2140 = vadd.f32 0.0, %v2139
  %v2141 = vpop.f32.mrf.mxu0
  %2142 = vmatprep.mubr.f32.mxu0 0.0
  %2143 = vmatmul.mubr.f32.gmra.mxu0 %v1894
  %v2144 = vpop.f32.mrf.mxu0
  %v2145 = vadd.f32 0.0, %v2144
  %v2146 = vpop.f32.mrf.mxu0
  %2147 = vmatprep.mubr.f32.mxu0 0.0
  %2148 = vmatmul.mubr.f32.gmra.mxu0 %v1895
  %v2149 = vpop.f32.mrf.mxu0
  %v2150 = vadd.f32 0.0, %v2149
  %v2151 = vpop.f32.mrf.mxu0
  %2152 = vmatprep.mubr.f32.mxu0 0.0
  %2153 = vmatmul.mubr.f32.gmra.mxu0 %v1896
  %v2154 = vpop.f32.mrf.mxu0
  %v2155 = vadd.f32 0.0, %v2154
  %v2156 = vpop.f32.mrf.mxu0
  %2157 = vmatprep.mubr.f32.mxu0 0.0
  %2158 = vmatmul.mubr.f32.gmra.mxu0 %v1897
  %v2159 = vpop.f32.mrf.mxu0
  %v2160 = vadd.f32 0.0, %v2159
  %v2161 = vpop.f32.mrf.mxu0
  %2162 = vmatprep.mubr.f32.mxu0 0.0
  %2163 = vmatmul.mubr.f32.gmra.mxu0 %v1898
  %v2164 = vpop.f32.mrf.mxu0
  %v2165 = vadd.f32 0.0, %v2164
  %v2166 = vpop.f32.mrf.mxu0
  %2167 = vmatprep.mubr.f32.mxu0 0.0
  %2168 = vmatmul.mubr.f32.gmra.mxu0 %v1899
  %v2169 = vpop.f32.mrf.mxu0
  %v2170 = vadd.f32 0.0, %v2169
  %v2171 = vpop.f32.mrf.mxu0
  %2172 = vmatprep.mubr.f32.mxu0 0.0
  %2173 = vmatmul.mubr.f32.gmra.mxu0 %v1900
  %v2174 = vpop.f32.mrf.mxu0
  %v2175 = vadd.f32 0.0, %v2174
  %v2176 = vpop.f32.mrf.mxu0
  %2177 = vmatprep.mubr.f32.mxu0 0.0
  %2178 = vmatmul.mubr.f32.gmra.mxu0 %v1901
  %v2179 = vpop.f32.mrf.mxu0
  %v2180 = vadd.f32 0.0, %v2179
  %v2181 = vpop.f32.mrf.mxu0
  %2182 = vmatprep.mubr.f32.mxu0 0.0
  %2183 = vmatmul.mubr.f32.gmra.mxu0 %v1902
  %v2184 = vpop.f32.mrf.mxu0
  %v2185 = vadd.f32 0.0, %v2184
  %v2186 = vpop.f32.mrf.mxu0
  %2187 = vmatprep.mubr.f32.mxu0 0.0
  %2188 = vmatmul.mubr.f32.gmra.mxu0 %v1903
  %v2189 = vpop.f32.mrf.mxu0
  %v2190 = vadd.f32 0.0, %v2189
  %v2191 = vpop.f32.mrf.mxu0
  %2192 = vmatprep.mubr.f32.mxu0 0.0
  %2193 = vmatmul.mubr.f32.gmra.mxu0 %v1904
  %v2194 = vpop.f32.mrf.mxu0
  %v2195 = vadd.f32 0.0, %v2194
  %v2196 = vpop.f32.mrf.mxu0
  %2197 = vmatprep.mubr.f32.mxu0 0.0
  %2198 = vmatmul.mubr.f32.gmra.mxu0 %v1905
  %v2199 = vpop.f32.mrf.mxu0
  %v2200 = vadd.f32 0.0, %v2199
  %v2201 = vpop.f32.mrf.mxu0
  %2202 = vmatprep.mubr.f32.mxu0 0.0
  %2203 = vmatmul.mubr.f32.gmra.mxu0 %v1906
  %v2204 = vpop.f32.mrf.mxu0
  %v2205 = vadd.f32 0.0, %v2204
  %v2206 = vpop.f32.mrf.mxu0
  %2207 = vmatprep.mubr.f32.mxu0 0.0
  %2208 = vmatmul.mubr.f32.gmra.mxu0 %v1907
  %v2209 = vpop.f32.mrf.mxu0
  %v2210 = vadd.f32 0.0, %v2209
  %v2211 = vpop.f32.mrf.mxu0
  %2212 = vmatprep.mubr.f32.mxu0 0.0
  %2213 = vmatmul.mubr.f32.gmra.mxu0 %v1908
  %v2214 = vpop.f32.mrf.mxu0
  %v2215 = vadd.f32 0.0, %v2214
  %v2216 = vpop.f32.mrf.mxu0
  %2217 = vmatprep.mubr.f32.mxu0 0.0
  %2218 = vmatmul.mubr.f32.gmra.mxu0 %v1909
  %v2219 = vpop.f32.mrf.mxu0
  %v2220 = vadd.f32 0.0, %v2219
  %v2221 = vpop.f32.mrf.mxu0
  %2222 = vmatprep.mubr.f32.mxu0 0.0
  %2223 = vmatmul.mubr.f32.gmra.mxu0 %v1910
  %v2224 = vpop.f32.mrf.mxu0
  %v2225 = vadd.f32 0.0, %v2224
  %v2226 = vpop.f32.mrf.mxu0
  %2227 = vmatprep.mubr.f32.mxu0 0.0
  %2228 = vmatmul.mubr.f32.gmra.mxu0 %v1911
  %v2229 = vpop.f32.mrf.mxu0
  %v2230 = vadd.f32 0.0, %v2229
  %v2231 = vpop.f32.mrf.mxu0
  %2232 = vmatprep.mubr.f32.mxu0 0.0
  %2233 = vmatmul.mubr.f32.gmra.mxu0 %v1912
  %v2234 = vpop.f32.mrf.mxu0
  %v2235 = vadd.f32 0.0, %v2234
  %v2236 = vpop.f32.mrf.mxu0
  %2237 = vmatprep.mubr.f32.mxu0 0.0
  %2238 = vmatmul.mubr.f32.gmra.mxu0 %v1913
  %v2239 = vpop.f32.mrf.mxu0
  %v2240 = vadd.f32 0.0, %v2239
  %v2241 = vpop.f32.mrf.mxu0
  %2242 = vmatprep.mubr.f32.mxu0 0.0
  %2243 = vmatmul.mubr.f32.gmra.mxu0 %v1914
  %v2244 = vpop.f32.mrf.mxu0
  %v2245 = vadd.f32 0.0, %v2244
  %v2246 = vpop.f32.mrf.mxu0
  %2247 = vmatprep.mubr.f32.mxu0 0.0
  %2248 = vmatmul.mubr.f32.gmra.mxu0 %v1915
  %v2249 = vpop.f32.mrf.mxu0
  %v2250 = vadd.f32 0.0, %v2249
  %v2251 = vpop.f32.mrf.mxu0
  %2252 = vmatprep.mubr.f32.mxu0 0.0
  %2253 = vmatmul.mubr.f32.gmra.mxu0 %v1916
  %v2254 = vpop.f32.mrf.mxu0
  %v2255 = vadd.f32 0.0, %v2254
  %v2256 = vpop.f32.mrf.mxu0
  %2257 = vmatprep.mubr.f32.mxu0 0.0
  %2258 = vmatmul.mubr.f32.gmra.mxu0 %v1917
  %v2259 = vpop.f32.mrf.mxu0
  %v2260 = vadd.f32 0.0, %v2259
  %v2261 = vpop.f32.mrf.mxu0
  %2262 = vmatprep.mubr.f32.mxu0 0.0
  %2263 = vmatmul.mubr.f32.gmra.mxu0 %v1918
  %v2264 = vpop.f32.mrf.mxu0
  %v2265 = vadd.f32 0.0, %v2264
  %v2266 = vpop.f32.mrf.mxu0
  %2267 = vmatprep.mubr.f32.mxu0 0.0
  %2268 = vmatmul.mubr.f32.gmra.mxu0 %v1919
  %v2269 = vpop.f32.mrf.mxu0
  %v2270 = vadd.f32 0.0, %v2269
  %v2271 = vpop.f32.mrf.mxu0
  %2272 = vmatprep.mubr.f32.mxu0 0.0
  %2273 = vmatmul.mubr.f32.gmra.mxu0 %v1920
  %v2274 = vpop.f32.mrf.mxu0
  %v2275 = vadd.f32 0.0, %v2274
  %v2276 = vpop.f32.mrf.mxu0
  %2277 = vmatprep.mubr.f32.mxu0 0.0
  %2278 = vmatmul.mubr.f32.gmra.mxu0 %v1921
  %v2279 = vpop.f32.mrf.mxu0
  %v2280 = vadd.f32 0.0, %v2279
  %v2281 = vpop.f32.mrf.mxu0
  %2282 = vmatprep.mubr.f32.mxu0 0.0
  %2283 = vmatmul.mubr.f32.gmra.mxu0 %v1922
  %v2284 = vpop.f32.mrf.mxu0
  %v2285 = vadd.f32 0.0, %v2284
  %v2286 = vpop.f32.mrf.mxu0
  %2287 = vmatprep.mubr.f32.mxu0 0.0
  %2288 = vmatmul.mubr.f32.gmra.mxu0 %v1923
  %v2289 = vpop.f32.mrf.mxu0
  %v2290 = vadd.f32 0.0, %v2289
  %v2291 = vpop.f32.mrf.mxu0
  %2292 = vmatprep.mubr.f32.mxu0 0.0
  %2293 = vmatmul.mubr.f32.gmra.mxu0 %v1924
  %v2294 = vpop.f32.mrf.mxu0
  %v2295 = vadd.f32 0.0, %v2294
  %v2296 = vpop.f32.mrf.mxu0
  %2297 = vmatprep.mubr.f32.mxu0 0.0
  %2298 = vmatmul.mubr.f32.gmra.mxu0 %v1925
  %v2299 = vpop.f32.mrf.mxu0
  %v2300 = vadd.f32 0.0, %v2299
  %v2301 = vpop.f32.mrf.mxu0
  %2302 = vmatprep.mubr.f32.mxu0 0.0
  %2303 = vmatmul.mubr.f32.gmra.mxu0 %v1926
  %v2304 = vpop.f32.mrf.mxu0
  %v2305 = vadd.f32 0.0, %v2304
  %v2306 = vpop.f32.mrf.mxu0
  %2307 = vmatprep.mubr.f32.mxu0 0.0
  %2308 = vmatmul.mubr.f32.gmra.mxu0 %v1927
  %v2309 = vpop.f32.mrf.mxu0
  %v2310 = vadd.f32 0.0, %v2309
  %v2311 = vpop.f32.mrf.mxu0
  %2312 = vdwg.mxu0
  %v2313 = vrsqrt.pop %v1546
  %v2314 = vmul.f32 %v1546, %v2313
  %vm2315 = vcmp.eq.f32.partialorder %v1546, inf
  %v2316 = vsel %vm2315, %v1546, %v2314
  %vm2317 = vcmp.eq.f32.partialorder %v1546, 0.0
  %v2318 = vand.u32 %v1546, 2147483648
  %v2319 = vsel %vm2317, %v2318, %v2316
  %v2320 = vrsqrt.pop %v1551
  %v2321 = vmul.f32 %v1551, %v2320
  %vm2322 = vcmp.eq.f32.partialorder %v1551, inf
  %v2323 = vsel %vm2322, %v1551, %v2321
  %vm2324 = vcmp.eq.f32.partialorder %v1551, 0.0
  %v2325 = vand.u32 %v1551, 2147483648
  %v2326 = vsel %vm2324, %v2325, %v2323
  %v2327 = vrsqrt.pop %v1556
  %v2328 = vmul.f32 %v1556, %v2327
  %vm2329 = vcmp.eq.f32.partialorder %v1556, inf
  %v2330 = vsel %vm2329, %v1556, %v2328
  %vm2331 = vcmp.eq.f32.partialorder %v1556, 0.0
  %v2332 = vand.u32 %v1556, 2147483648
  %v2333 = vsel %vm2331, %v2332, %v2330
  %v2334 = vrsqrt.pop %v1561
  %v2335 = vmul.f32 %v1561, %v2334
  %vm2336 = vcmp.eq.f32.partialorder %v1561, inf
  %v2337 = vsel %vm2336, %v1561, %v2335
  %vm2338 = vcmp.eq.f32.partialorder %v1561, 0.0
  %v2339 = vand.u32 %v1561, 2147483648
  %v2340 = vsel %vm2338, %v2339, %v2337
  %v2341 = vrsqrt.pop %v1566
  %v2342 = vmul.f32 %v1566, %v2341
  %vm2343 = vcmp.eq.f32.partialorder %v1566, inf
  %v2344 = vsel %vm2343, %v1566, %v2342
  %vm2345 = vcmp.eq.f32.partialorder %v1566, 0.0
  %v2346 = vand.u32 %v1566, 2147483648
  %v2347 = vsel %vm2345, %v2346, %v2344
  %v2348 = vrsqrt.pop %v1571
  %v2349 = vmul.f32 %v1571, %v2348
  %vm2350 = vcmp.eq.f32.partialorder %v1571, inf
  %v2351 = vsel %vm2350, %v1571, %v2349
  %vm2352 = vcmp.eq.f32.partialorder %v1571, 0.0
  %v2353 = vand.u32 %v1571, 2147483648
  %v2354 = vsel %vm2352, %v2353, %v2351
  %v2355 = vrsqrt.pop %v1576
  %v2356 = vmul.f32 %v1576, %v2355
  %vm2357 = vcmp.eq.f32.partialorder %v1576, inf
  %v2358 = vsel %vm2357, %v1576, %v2356
  %vm2359 = vcmp.eq.f32.partialorder %v1576, 0.0
  %v2360 = vand.u32 %v1576, 2147483648
  %v2361 = vsel %vm2359, %v2360, %v2358
  %v2362 = vrsqrt.pop %v1581
  %v2363 = vmul.f32 %v1581, %v2362
  %vm2364 = vcmp.eq.f32.partialorder %v1581, inf
  %v2365 = vsel %vm2364, %v1581, %v2363
  %vm2366 = vcmp.eq.f32.partialorder %v1581, 0.0
  %v2367 = vand.u32 %v1581, 2147483648
  %v2368 = vsel %vm2366, %v2367, %v2365
  %v2369 = vrsqrt.pop %v1586
  %v2370 = vmul.f32 %v1586, %v2369
  %vm2371 = vcmp.eq.f32.partialorder %v1586, inf
  %v2372 = vsel %vm2371, %v1586, %v2370
  %vm2373 = vcmp.eq.f32.partialorder %v1586, 0.0
  %v2374 = vand.u32 %v1586, 2147483648
  %v2375 = vsel %vm2373, %v2374, %v2372
  %v2376 = vrsqrt.pop %v1591
  %v2377 = vmul.f32 %v1591, %v2376
  %vm2378 = vcmp.eq.f32.partialorder %v1591, inf
  %v2379 = vsel %vm2378, %v1591, %v2377
  %vm2380 = vcmp.eq.f32.partialorder %v1591, 0.0
  %v2381 = vand.u32 %v1591, 2147483648
  %v2382 = vsel %vm2380, %v2381, %v2379
  %v2383 = vrsqrt.pop %v1596
  %v2384 = vmul.f32 %v1596, %v2383
  %vm2385 = vcmp.eq.f32.partialorder %v1596, inf
  %v2386 = vsel %vm2385, %v1596, %v2384
  %vm2387 = vcmp.eq.f32.partialorder %v1596, 0.0
  %v2388 = vand.u32 %v1596, 2147483648
  %v2389 = vsel %vm2387, %v2388, %v2386
  %v2390 = vrsqrt.pop %v1601
  %v2391 = vmul.f32 %v1601, %v2390
  %vm2392 = vcmp.eq.f32.partialorder %v1601, inf
  %v2393 = vsel %vm2392, %v1601, %v2391
  %vm2394 = vcmp.eq.f32.partialorder %v1601, 0.0
  %v2395 = vand.u32 %v1601, 2147483648
  %v2396 = vsel %vm2394, %v2395, %v2393
  %v2397 = vrsqrt.pop %v1606
  %v2398 = vmul.f32 %v1606, %v2397
  %vm2399 = vcmp.eq.f32.partialorder %v1606, inf
  %v2400 = vsel %vm2399, %v1606, %v2398
  %vm2401 = vcmp.eq.f32.partialorder %v1606, 0.0
  %v2402 = vand.u32 %v1606, 2147483648
  %v2403 = vsel %vm2401, %v2402, %v2400
  %v2404 = vrsqrt.pop %v1611
  %v2405 = vmul.f32 %v1611, %v2404
  %vm2406 = vcmp.eq.f32.partialorder %v1611, inf
  %v2407 = vsel %vm2406, %v1611, %v2405
  %vm2408 = vcmp.eq.f32.partialorder %v1611, 0.0
  %v2409 = vand.u32 %v1611, 2147483648
  %v2410 = vsel %vm2408, %v2409, %v2407
  %v2411 = vrsqrt.pop %v1616
  %v2412 = vmul.f32 %v1616, %v2411
  %vm2413 = vcmp.eq.f32.partialorder %v1616, inf
  %v2414 = vsel %vm2413, %v1616, %v2412
  %vm2415 = vcmp.eq.f32.partialorder %v1616, 0.0
  %v2416 = vand.u32 %v1616, 2147483648
  %v2417 = vsel %vm2415, %v2416, %v2414
  %v2418 = vrsqrt.pop %v1621
  %v2419 = vmul.f32 %v1621, %v2418
  %vm2420 = vcmp.eq.f32.partialorder %v1621, inf
  %v2421 = vsel %vm2420, %v1621, %v2419
  %vm2422 = vcmp.eq.f32.partialorder %v1621, 0.0
  %v2423 = vand.u32 %v1621, 2147483648
  %v2424 = vsel %vm2422, %v2423, %v2421
  %v2425 = vrsqrt.pop %v1626
  %v2426 = vmul.f32 %v1626, %v2425
  %vm2427 = vcmp.eq.f32.partialorder %v1626, inf
  %v2428 = vsel %vm2427, %v1626, %v2426
  %vm2429 = vcmp.eq.f32.partialorder %v1626, 0.0
  %v2430 = vand.u32 %v1626, 2147483648
  %v2431 = vsel %vm2429, %v2430, %v2428
  %v2432 = vrsqrt.pop %v1631
  %v2433 = vmul.f32 %v1631, %v2432
  %vm2434 = vcmp.eq.f32.partialorder %v1631, inf
  %v2435 = vsel %vm2434, %v1631, %v2433
  %vm2436 = vcmp.eq.f32.partialorder %v1631, 0.0
  %v2437 = vand.u32 %v1631, 2147483648
  %v2438 = vsel %vm2436, %v2437, %v2435
  %v2439 = vrsqrt.pop %v1636
  %v2440 = vmul.f32 %v1636, %v2439
  %vm2441 = vcmp.eq.f32.partialorder %v1636, inf
  %v2442 = vsel %vm2441, %v1636, %v2440
  %vm2443 = vcmp.eq.f32.partialorder %v1636, 0.0
  %v2444 = vand.u32 %v1636, 2147483648
  %v2445 = vsel %vm2443, %v2444, %v2442
  %v2446 = vrsqrt.pop %v1641
  %v2447 = vmul.f32 %v1641, %v2446
  %vm2448 = vcmp.eq.f32.partialorder %v1641, inf
  %v2449 = vsel %vm2448, %v1641, %v2447
  %vm2450 = vcmp.eq.f32.partialorder %v1641, 0.0
  %v2451 = vand.u32 %v1641, 2147483648
  %v2452 = vsel %vm2450, %v2451, %v2449
  %v2453 = vrsqrt.pop %v1646
  %v2454 = vmul.f32 %v1646, %v2453
  %vm2455 = vcmp.eq.f32.partialorder %v1646, inf
  %v2456 = vsel %vm2455, %v1646, %v2454
  %vm2457 = vcmp.eq.f32.partialorder %v1646, 0.0
  %v2458 = vand.u32 %v1646, 2147483648
  %v2459 = vsel %vm2457, %v2458, %v2456
  %v2460 = vrsqrt.pop %v1651
  %v2461 = vmul.f32 %v1651, %v2460
  %vm2462 = vcmp.eq.f32.partialorder %v1651, inf
  %v2463 = vsel %vm2462, %v1651, %v2461
  %vm2464 = vcmp.eq.f32.partialorder %v1651, 0.0
  %v2465 = vand.u32 %v1651, 2147483648
  %v2466 = vsel %vm2464, %v2465, %v2463
  %v2467 = vrsqrt.pop %v1656
  %v2468 = vmul.f32 %v1656, %v2467
  %vm2469 = vcmp.eq.f32.partialorder %v1656, inf
  %v2470 = vsel %vm2469, %v1656, %v2468
  %vm2471 = vcmp.eq.f32.partialorder %v1656, 0.0
  %v2472 = vand.u32 %v1656, 2147483648
  %v2473 = vsel %vm2471, %v2472, %v2470
  %v2474 = vrsqrt.pop %v1661
  %v2475 = vmul.f32 %v1661, %v2474
  %vm2476 = vcmp.eq.f32.partialorder %v1661, inf
  %v2477 = vsel %vm2476, %v1661, %v2475
  %vm2478 = vcmp.eq.f32.partialorder %v1661, 0.0
  %v2479 = vand.u32 %v1661, 2147483648
  %v2480 = vsel %vm2478, %v2479, %v2477
  %v2481 = vrsqrt.pop %v1666
  %v2482 = vmul.f32 %v1666, %v2481
  %vm2483 = vcmp.eq.f32.partialorder %v1666, inf
  %v2484 = vsel %vm2483, %v1666, %v2482
  %vm2485 = vcmp.eq.f32.partialorder %v1666, 0.0
  %v2486 = vand.u32 %v1666, 2147483648
  %v2487 = vsel %vm2485, %v2486, %v2484
  %v2488 = vrsqrt.pop %v1671
  %v2489 = vmul.f32 %v1671, %v2488
  %vm2490 = vcmp.eq.f32.partialorder %v1671, inf
  %v2491 = vsel %vm2490, %v1671, %v2489
  %vm2492 = vcmp.eq.f32.partialorder %v1671, 0.0
  %v2493 = vand.u32 %v1671, 2147483648
  %v2494 = vsel %vm2492, %v2493, %v2491
  %v2495 = vrsqrt.pop %v1676
  %v2496 = vmul.f32 %v1676, %v2495
  %vm2497 = vcmp.eq.f32.partialorder %v1676, inf
  %v2498 = vsel %vm2497, %v1676, %v2496
  %vm2499 = vcmp.eq.f32.partialorder %v1676, 0.0
  %v2500 = vand.u32 %v1676, 2147483648
  %v2501 = vsel %vm2499, %v2500, %v2498
  %v2502 = vrsqrt.pop %v1681
  %v2503 = vmul.f32 %v1681, %v2502
  %vm2504 = vcmp.eq.f32.partialorder %v1681, inf
  %v2505 = vsel %vm2504, %v1681, %v2503
  %vm2506 = vcmp.eq.f32.partialorder %v1681, 0.0
  %v2507 = vand.u32 %v1681, 2147483648
  %v2508 = vsel %vm2506, %v2507, %v2505
  %v2509 = vrsqrt.pop %v1686
  %v2510 = vmul.f32 %v1686, %v2509
  %vm2511 = vcmp.eq.f32.partialorder %v1686, inf
  %v2512 = vsel %vm2511, %v1686, %v2510
  %vm2513 = vcmp.eq.f32.partialorder %v1686, 0.0
  %v2514 = vand.u32 %v1686, 2147483648
  %v2515 = vsel %vm2513, %v2514, %v2512
  %v2516 = vrsqrt.pop %v1691
  %v2517 = vmul.f32 %v1691, %v2516
  %vm2518 = vcmp.eq.f32.partialorder %v1691, inf
  %v2519 = vsel %vm2518, %v1691, %v2517
  %vm2520 = vcmp.eq.f32.partialorder %v1691, 0.0
  %v2521 = vand.u32 %v1691, 2147483648
  %v2522 = vsel %vm2520, %v2521, %v2519
  %v2523 = vrsqrt.pop %v1696
  %v2524 = vmul.f32 %v1696, %v2523
  %vm2525 = vcmp.eq.f32.partialorder %v1696, inf
  %v2526 = vsel %vm2525, %v1696, %v2524
  %vm2527 = vcmp.eq.f32.partialorder %v1696, 0.0
  %v2528 = vand.u32 %v1696, 2147483648
  %v2529 = vsel %vm2527, %v2528, %v2526
  %v2530 = vrsqrt.pop %v1701
  %v2531 = vmul.f32 %v1701, %v2530
  %vm2532 = vcmp.eq.f32.partialorder %v1701, inf
  %v2533 = vsel %vm2532, %v1701, %v2531
  %vm2534 = vcmp.eq.f32.partialorder %v1701, 0.0
  %v2535 = vand.u32 %v1701, 2147483648
  %v2536 = vsel %vm2534, %v2535, %v2533
  %v2537 = vrsqrt.pop %v1706
  %v2538 = vmul.f32 %v1706, %v2537
  %vm2539 = vcmp.eq.f32.partialorder %v1706, inf
  %v2540 = vsel %vm2539, %v1706, %v2538
  %vm2541 = vcmp.eq.f32.partialorder %v1706, 0.0
  %v2542 = vand.u32 %v1706, 2147483648
  %v2543 = vsel %vm2541, %v2542, %v2540
  %v2544 = vrsqrt.pop %v1711
  %v2545 = vmul.f32 %v1711, %v2544
  %vm2546 = vcmp.eq.f32.partialorder %v1711, inf
  %v2547 = vsel %vm2546, %v1711, %v2545
  %vm2548 = vcmp.eq.f32.partialorder %v1711, 0.0
  %v2549 = vand.u32 %v1711, 2147483648
  %v2550 = vsel %vm2548, %v2549, %v2547
  %v2551 = vrsqrt.pop %v1716
  %v2552 = vmul.f32 %v1716, %v2551
  %vm2553 = vcmp.eq.f32.partialorder %v1716, inf
  %v2554 = vsel %vm2553, %v1716, %v2552
  %vm2555 = vcmp.eq.f32.partialorder %v1716, 0.0
  %v2556 = vand.u32 %v1716, 2147483648
  %v2557 = vsel %vm2555, %v2556, %v2554
  %v2558 = vrsqrt.pop %v1721
  %v2559 = vmul.f32 %v1721, %v2558
  %vm2560 = vcmp.eq.f32.partialorder %v1721, inf
  %v2561 = vsel %vm2560, %v1721, %v2559
  %vm2562 = vcmp.eq.f32.partialorder %v1721, 0.0
  %v2563 = vand.u32 %v1721, 2147483648
  %v2564 = vsel %vm2562, %v2563, %v2561
  %v2565 = vrsqrt.pop %v1726
  %v2566 = vmul.f32 %v1726, %v2565
  %vm2567 = vcmp.eq.f32.partialorder %v1726, inf
  %v2568 = vsel %vm2567, %v1726, %v2566
  %vm2569 = vcmp.eq.f32.partialorder %v1726, 0.0
  %v2570 = vand.u32 %v1726, 2147483648
  %v2571 = vsel %vm2569, %v2570, %v2568
  %v2572 = vrsqrt.pop %v1731
  %v2573 = vmul.f32 %v1731, %v2572
  %vm2574 = vcmp.eq.f32.partialorder %v1731, inf
  %v2575 = vsel %vm2574, %v1731, %v2573
  %vm2576 = vcmp.eq.f32.partialorder %v1731, 0.0
  %v2577 = vand.u32 %v1731, 2147483648
  %v2578 = vsel %vm2576, %v2577, %v2575
  %v2579 = vrsqrt.pop %v1736
  %v2580 = vmul.f32 %v1736, %v2579
  %vm2581 = vcmp.eq.f32.partialorder %v1736, inf
  %v2582 = vsel %vm2581, %v1736, %v2580
  %vm2583 = vcmp.eq.f32.partialorder %v1736, 0.0
  %v2584 = vand.u32 %v1736, 2147483648
  %v2585 = vsel %vm2583, %v2584, %v2582
  %v2586 = vrsqrt.pop %v1741
  %v2587 = vmul.f32 %v1741, %v2586
  %vm2588 = vcmp.eq.f32.partialorder %v1741, inf
  %v2589 = vsel %vm2588, %v1741, %v2587
  %vm2590 = vcmp.eq.f32.partialorder %v1741, 0.0
  %v2591 = vand.u32 %v1741, 2147483648
  %v2592 = vsel %vm2590, %v2591, %v2589
  %v2593 = vrsqrt.pop %v1746
  %v2594 = vmul.f32 %v1746, %v2593
  %vm2595 = vcmp.eq.f32.partialorder %v1746, inf
  %v2596 = vsel %vm2595, %v1746, %v2594
  %vm2597 = vcmp.eq.f32.partialorder %v1746, 0.0
  %v2598 = vand.u32 %v1746, 2147483648
  %v2599 = vsel %vm2597, %v2598, %v2596
  %v2600 = vrsqrt.pop %v1751
  %v2601 = vmul.f32 %v1751, %v2600
  %vm2602 = vcmp.eq.f32.partialorder %v1751, inf
  %v2603 = vsel %vm2602, %v1751, %v2601
  %vm2604 = vcmp.eq.f32.partialorder %v1751, 0.0
  %v2605 = vand.u32 %v1751, 2147483648
  %v2606 = vsel %vm2604, %v2605, %v2603
  %v2607 = vrsqrt.pop %v1756
  %v2608 = vmul.f32 %v1756, %v2607
  %vm2609 = vcmp.eq.f32.partialorder %v1756, inf
  %v2610 = vsel %vm2609, %v1756, %v2608
  %vm2611 = vcmp.eq.f32.partialorder %v1756, 0.0
  %v2612 = vand.u32 %v1756, 2147483648
  %v2613 = vsel %vm2611, %v2612, %v2610
  %v2614 = vrsqrt.pop %v1761
  %v2615 = vmul.f32 %v1761, %v2614
  %vm2616 = vcmp.eq.f32.partialorder %v1761, inf
  %v2617 = vsel %vm2616, %v1761, %v2615
  %vm2618 = vcmp.eq.f32.partialorder %v1761, 0.0
  %v2619 = vand.u32 %v1761, 2147483648
  %v2620 = vsel %vm2618, %v2619, %v2617
  %v2621 = vrsqrt.pop %v1766
  %v2622 = vmul.f32 %v1766, %v2621
  %vm2623 = vcmp.eq.f32.partialorder %v1766, inf
  %v2624 = vsel %vm2623, %v1766, %v2622
  %vm2625 = vcmp.eq.f32.partialorder %v1766, 0.0
  %v2626 = vand.u32 %v1766, 2147483648
  %v2627 = vsel %vm2625, %v2626, %v2624
  %v2628 = vrsqrt.pop %v1771
  %v2629 = vmul.f32 %v1771, %v2628
  %vm2630 = vcmp.eq.f32.partialorder %v1771, inf
  %v2631 = vsel %vm2630, %v1771, %v2629
  %vm2632 = vcmp.eq.f32.partialorder %v1771, 0.0
  %v2633 = vand.u32 %v1771, 2147483648
  %v2634 = vsel %vm2632, %v2633, %v2631
  %v2635 = vrsqrt.pop %v1776
  %v2636 = vmul.f32 %v1776, %v2635
  %vm2637 = vcmp.eq.f32.partialorder %v1776, inf
  %v2638 = vsel %vm2637, %v1776, %v2636
  %vm2639 = vcmp.eq.f32.partialorder %v1776, 0.0
  %v2640 = vand.u32 %v1776, 2147483648
  %v2641 = vsel %vm2639, %v2640, %v2638
  %v2642 = vrsqrt.pop %v1781
  %v2643 = vmul.f32 %v1781, %v2642
  %vm2644 = vcmp.eq.f32.partialorder %v1781, inf
  %v2645 = vsel %vm2644, %v1781, %v2643
  %vm2646 = vcmp.eq.f32.partialorder %v1781, 0.0
  %v2647 = vand.u32 %v1781, 2147483648
  %v2648 = vsel %vm2646, %v2647, %v2645
  %v2649 = vrsqrt.pop %v1786
  %v2650 = vmul.f32 %v1786, %v2649
  %vm2651 = vcmp.eq.f32.partialorder %v1786, inf
  %v2652 = vsel %vm2651, %v1786, %v2650
  %vm2653 = vcmp.eq.f32.partialorder %v1786, 0.0
  %v2654 = vand.u32 %v1786, 2147483648
  %v2655 = vsel %vm2653, %v2654, %v2652
  %v2656 = vrsqrt.pop %v1791
  %v2657 = vmul.f32 %v1791, %v2656
  %vm2658 = vcmp.eq.f32.partialorder %v1791, inf
  %v2659 = vsel %vm2658, %v1791, %v2657
  %vm2660 = vcmp.eq.f32.partialorder %v1791, 0.0
  %v2661 = vand.u32 %v1791, 2147483648
  %v2662 = vsel %vm2660, %v2661, %v2659
  %v2663 = vrsqrt.pop %v1796
  %v2664 = vmul.f32 %v1796, %v2663
  %vm2665 = vcmp.eq.f32.partialorder %v1796, inf
  %v2666 = vsel %vm2665, %v1796, %v2664
  %vm2667 = vcmp.eq.f32.partialorder %v1796, 0.0
  %v2668 = vand.u32 %v1796, 2147483648
  %v2669 = vsel %vm2667, %v2668, %v2666
  %v2670 = vrsqrt.pop %v1801
  %v2671 = vmul.f32 %v1801, %v2670
  %vm2672 = vcmp.eq.f32.partialorder %v1801, inf
  %v2673 = vsel %vm2672, %v1801, %v2671
  %vm2674 = vcmp.eq.f32.partialorder %v1801, 0.0
  %v2675 = vand.u32 %v1801, 2147483648
  %v2676 = vsel %vm2674, %v2675, %v2673
  %v2677 = vrsqrt.pop %v1806
  %v2678 = vmul.f32 %v1806, %v2677
  %vm2679 = vcmp.eq.f32.partialorder %v1806, inf
  %v2680 = vsel %vm2679, %v1806, %v2678
  %vm2681 = vcmp.eq.f32.partialorder %v1806, 0.0
  %v2682 = vand.u32 %v1806, 2147483648
  %v2683 = vsel %vm2681, %v2682, %v2680
  %v2684 = vrsqrt.pop %v1811
  %v2685 = vmul.f32 %v1811, %v2684
  %vm2686 = vcmp.eq.f32.partialorder %v1811, inf
  %v2687 = vsel %vm2686, %v1811, %v2685
  %vm2688 = vcmp.eq.f32.partialorder %v1811, 0.0
  %v2689 = vand.u32 %v1811, 2147483648
  %v2690 = vsel %vm2688, %v2689, %v2687
  %v2691 = vrsqrt.pop %v1816
  %v2692 = vmul.f32 %v1816, %v2691
  %vm2693 = vcmp.eq.f32.partialorder %v1816, inf
  %v2694 = vsel %vm2693, %v1816, %v2692
  %vm2695 = vcmp.eq.f32.partialorder %v1816, 0.0
  %v2696 = vand.u32 %v1816, 2147483648
  %v2697 = vsel %vm2695, %v2696, %v2694
  %v2698 = vrsqrt.pop %v1821
  %v2699 = vmul.f32 %v1821, %v2698
  %vm2700 = vcmp.eq.f32.partialorder %v1821, inf
  %v2701 = vsel %vm2700, %v1821, %v2699
  %vm2702 = vcmp.eq.f32.partialorder %v1821, 0.0
  %v2703 = vand.u32 %v1821, 2147483648
  %v2704 = vsel %vm2702, %v2703, %v2701
  %v2705 = vrsqrt.pop %v1826
  %v2706 = vmul.f32 %v1826, %v2705
  %vm2707 = vcmp.eq.f32.partialorder %v1826, inf
  %v2708 = vsel %vm2707, %v1826, %v2706
  %vm2709 = vcmp.eq.f32.partialorder %v1826, 0.0
  %v2710 = vand.u32 %v1826, 2147483648
  %v2711 = vsel %vm2709, %v2710, %v2708
  %v2712 = vrsqrt.pop %v1831
  %v2713 = vmul.f32 %v1831, %v2712
  %vm2714 = vcmp.eq.f32.partialorder %v1831, inf
  %v2715 = vsel %vm2714, %v1831, %v2713
  %vm2716 = vcmp.eq.f32.partialorder %v1831, 0.0
  %v2717 = vand.u32 %v1831, 2147483648
  %v2718 = vsel %vm2716, %v2717, %v2715
  %v2719 = vrsqrt.pop %v1836
  %v2720 = vmul.f32 %v1836, %v2719
  %vm2721 = vcmp.eq.f32.partialorder %v1836, inf
  %v2722 = vsel %vm2721, %v1836, %v2720
  %vm2723 = vcmp.eq.f32.partialorder %v1836, 0.0
  %v2724 = vand.u32 %v1836, 2147483648
  %v2725 = vsel %vm2723, %v2724, %v2722
  %v2726 = vrsqrt.pop %v1841
  %v2727 = vmul.f32 %v1841, %v2726
  %vm2728 = vcmp.eq.f32.partialorder %v1841, inf
  %v2729 = vsel %vm2728, %v1841, %v2727
  %vm2730 = vcmp.eq.f32.partialorder %v1841, 0.0
  %v2731 = vand.u32 %v1841, 2147483648
  %v2732 = vsel %vm2730, %v2731, %v2729
  %v2733 = vrsqrt.pop %v1846
  %v2734 = vmul.f32 %v1846, %v2733
  %vm2735 = vcmp.eq.f32.partialorder %v1846, inf
  %v2736 = vsel %vm2735, %v1846, %v2734
  %vm2737 = vcmp.eq.f32.partialorder %v1846, 0.0
  %v2738 = vand.u32 %v1846, 2147483648
  %v2739 = vsel %vm2737, %v2738, %v2736
  %v2740 = vrsqrt.pop %v1851
  %v2741 = vmul.f32 %v1851, %v2740
  %vm2742 = vcmp.eq.f32.partialorder %v1851, inf
  %v2743 = vsel %vm2742, %v1851, %v2741
  %vm2744 = vcmp.eq.f32.partialorder %v1851, 0.0
  %v2745 = vand.u32 %v1851, 2147483648
  %v2746 = vsel %vm2744, %v2745, %v2743
  %v2747 = vrsqrt.pop %v1856
  %v2748 = vmul.f32 %v1856, %v2747
  %vm2749 = vcmp.eq.f32.partialorder %v1856, inf
  %v2750 = vsel %vm2749, %v1856, %v2748
  %vm2751 = vcmp.eq.f32.partialorder %v1856, 0.0
  %v2752 = vand.u32 %v1856, 2147483648
  %v2753 = vsel %vm2751, %v2752, %v2750
  %v2754 = vrsqrt.pop %v1861
  %v2755 = vmul.f32 %v1861, %v2754
  %vm2756 = vcmp.eq.f32.partialorder %v1861, inf
  %v2757 = vsel %vm2756, %v1861, %v2755
  %vm2758 = vcmp.eq.f32.partialorder %v1861, 0.0
  %v2759 = vand.u32 %v1861, 2147483648
  %v2760 = vsel %vm2758, %v2759, %v2757
  %v2761 = vadd.f32 %v2319, 1e-10
  %v2762 = vadd.f32 %v2326, 1e-10
  %v2763 = vadd.f32 %v2333, 1e-10
  %v2764 = vadd.f32 %v2340, 1e-10
  %v2765 = vadd.f32 %v2347, 1e-10
  %v2766 = vadd.f32 %v2354, 1e-10
  %v2767 = vadd.f32 %v2361, 1e-10
  %v2768 = vadd.f32 %v2368, 1e-10
  %v2769 = vadd.f32 %v2375, 1e-10
  %v2770 = vadd.f32 %v2382, 1e-10
  %v2771 = vadd.f32 %v2389, 1e-10
  %v2772 = vadd.f32 %v2396, 1e-10
  %v2773 = vadd.f32 %v2403, 1e-10
  %v2774 = vadd.f32 %v2410, 1e-10
  %v2775 = vadd.f32 %v2417, 1e-10
  %v2776 = vadd.f32 %v2424, 1e-10
  %v2777 = vadd.f32 %v2431, 1e-10
  %v2778 = vadd.f32 %v2438, 1e-10
  %v2779 = vadd.f32 %v2445, 1e-10
  %v2780 = vadd.f32 %v2452, 1e-10
  %v2781 = vadd.f32 %v2459, 1e-10
  %v2782 = vadd.f32 %v2466, 1e-10
  %v2783 = vadd.f32 %v2473, 1e-10
  %v2784 = vadd.f32 %v2480, 1e-10
  %v2785 = vadd.f32 %v2487, 1e-10
  %v2786 = vadd.f32 %v2494, 1e-10
  %v2787 = vadd.f32 %v2501, 1e-10
  %v2788 = vadd.f32 %v2508, 1e-10
  %v2789 = vadd.f32 %v2515, 1e-10
  %v2790 = vadd.f32 %v2522, 1e-10
  %v2791 = vadd.f32 %v2529, 1e-10
  %v2792 = vadd.f32 %v2536, 1e-10
  %v2793 = vadd.f32 %v2543, 1e-10
  %v2794 = vadd.f32 %v2550, 1e-10
  %v2795 = vadd.f32 %v2557, 1e-10
  %v2796 = vadd.f32 %v2564, 1e-10
  %v2797 = vadd.f32 %v2571, 1e-10
  %v2798 = vadd.f32 %v2578, 1e-10
  %v2799 = vadd.f32 %v2585, 1e-10
  %v2800 = vadd.f32 %v2592, 1e-10
  %v2801 = vadd.f32 %v2599, 1e-10
  %v2802 = vadd.f32 %v2606, 1e-10
  %v2803 = vadd.f32 %v2613, 1e-10
  %v2804 = vadd.f32 %v2620, 1e-10
  %v2805 = vadd.f32 %v2627, 1e-10
  %v2806 = vadd.f32 %v2634, 1e-10
  %v2807 = vadd.f32 %v2641, 1e-10
  %v2808 = vadd.f32 %v2648, 1e-10
  %v2809 = vadd.f32 %v2655, 1e-10
  %v2810 = vadd.f32 %v2662, 1e-10
  %v2811 = vadd.f32 %v2669, 1e-10
  %v2812 = vadd.f32 %v2676, 1e-10
  %v2813 = vadd.f32 %v2683, 1e-10
  %v2814 = vadd.f32 %v2690, 1e-10
  %v2815 = vadd.f32 %v2697, 1e-10
  %v2816 = vadd.f32 %v2704, 1e-10
  %v2817 = vadd.f32 %v2711, 1e-10
  %v2818 = vadd.f32 %v2718, 1e-10
  %v2819 = vadd.f32 %v2725, 1e-10
  %v2820 = vadd.f32 %v2732, 1e-10
  %v2821 = vadd.f32 %v2739, 1e-10
  %v2822 = vadd.f32 %v2746, 1e-10
  %v2823 = vadd.f32 %v2753, 1e-10
  %v2824 = vadd.f32 %v2760, 1e-10
  %v2825 = vrcp.pop %v2761
  %v2826 = vmul.f32 %v742, %v2825
  %v2827 = vrcp.pop %v2762
  %v2828 = vmul.f32 %v743, %v2827
  %v2829 = vrcp.pop %v2763
  %v2830 = vmul.f32 %v744, %v2829
  %v2831 = vrcp.pop %v2764
  %v2832 = vmul.f32 %v745, %v2831
  %v2833 = vrcp.pop %v2765
  %v2834 = vmul.f32 %v746, %v2833
  %v2835 = vrcp.pop %v2766
  %v2836 = vmul.f32 %v747, %v2835
  %v2837 = vrcp.pop %v2767
  %v2838 = vmul.f32 %v748, %v2837
  %v2839 = vrcp.pop %v2768
  %v2840 = vmul.f32 %v749, %v2839
  %v2841 = vrcp.pop %v2769
  %v2842 = vmul.f32 %v750, %v2841
  %v2843 = vrcp.pop %v2770
  %v2844 = vmul.f32 %v751, %v2843
  %v2845 = vrcp.pop %v2771
  %v2846 = vmul.f32 %v752, %v2845
  %v2847 = vrcp.pop %v2772
  %v2848 = vmul.f32 %v753, %v2847
  %v2849 = vrcp.pop %v2773
  %v2850 = vmul.f32 %v754, %v2849
  %v2851 = vrcp.pop %v2774
  %v2852 = vmul.f32 %v755, %v2851
  %v2853 = vrcp.pop %v2775
  %v2854 = vmul.f32 %v756, %v2853
  %v2855 = vrcp.pop %v2776
  %v2856 = vmul.f32 %v757, %v2855
  %v2857 = vrcp.pop %v2777
  %v2858 = vmul.f32 %v758, %v2857
  %v2859 = vrcp.pop %v2778
  %v2860 = vmul.f32 %v759, %v2859
  %v2861 = vrcp.pop %v2779
  %v2862 = vmul.f32 %v760, %v2861
  %v2863 = vrcp.pop %v2780
  %v2864 = vmul.f32 %v761, %v2863
  %v2865 = vrcp.pop %v2781
  %v2866 = vmul.f32 %v762, %v2865
  %v2867 = vrcp.pop %v2782
  %v2868 = vmul.f32 %v763, %v2867
  %v2869 = vrcp.pop %v2783
  %v2870 = vmul.f32 %v764, %v2869
  %v2871 = vrcp.pop %v2784
  %v2872 = vmul.f32 %v765, %v2871
  %v2873 = vrcp.pop %v2785
  %v2874 = vmul.f32 %v766, %v2873
  %v2875 = vrcp.pop %v2786
  %v2876 = vmul.f32 %v767, %v2875
  %v2877 = vrcp.pop %v2787
  %v2878 = vmul.f32 %v768, %v2877
  %v2879 = vrcp.pop %v2788
  %v2880 = vmul.f32 %v769, %v2879
  %v2881 = vrcp.pop %v2789
  %v2882 = vmul.f32 %v770, %v2881
  %v2883 = vrcp.pop %v2790
  %v2884 = vmul.f32 %v771, %v2883
  %v2885 = vrcp.pop %v2791
  %v2886 = vmul.f32 %v772, %v2885
  %v2887 = vrcp.pop %v2792
  %v2888 = vmul.f32 %v773, %v2887
  %v2889 = vrcp.pop %v2793
  %v2890 = vmul.f32 %v774, %v2889
  %v2891 = vrcp.pop %v2794
  %v2892 = vmul.f32 %v775, %v2891
  %v2893 = vrcp.pop %v2795
  %v2894 = vmul.f32 %v776, %v2893
  %v2895 = vrcp.pop %v2796
  %v2896 = vmul.f32 %v777, %v2895
  %v2897 = vrcp.pop %v2797
  %v2898 = vmul.f32 %v778, %v2897
  %v2899 = vrcp.pop %v2798
  %v2900 = vmul.f32 %v779, %v2899
  %v2901 = vrcp.pop %v2799
  %v2902 = vmul.f32 %v780, %v2901
  %v2903 = vrcp.pop %v2800
  %v2904 = vmul.f32 %v781, %v2903
  %v2905 = vrcp.pop %v2801
  %v2906 = vmul.f32 %v782, %v2905
  %v2907 = vrcp.pop %v2802
  %v2908 = vmul.f32 %v783, %v2907
  %v2909 = vrcp.pop %v2803
  %v2910 = vmul.f32 %v784, %v2909
  %v2911 = vrcp.pop %v2804
  %v2912 = vmul.f32 %v785, %v2911
  %v2913 = vrcp.pop %v2805
  %v2914 = vmul.f32 %v786, %v2913
  %v2915 = vrcp.pop %v2806
  %v2916 = vmul.f32 %v787, %v2915
  %v2917 = vrcp.pop %v2807
  %v2918 = vmul.f32 %v788, %v2917
  %v2919 = vrcp.pop %v2808
  %v2920 = vmul.f32 %v789, %v2919
  %v2921 = vrcp.pop %v2809
  %v2922 = vmul.f32 %v790, %v2921
  %v2923 = vrcp.pop %v2810
  %v2924 = vmul.f32 %v791, %v2923
  %v2925 = vrcp.pop %v2811
  %v2926 = vmul.f32 %v792, %v2925
  %v2927 = vrcp.pop %v2812
  %v2928 = vmul.f32 %v793, %v2927
  %v2929 = vrcp.pop %v2813
  %v2930 = vmul.f32 %v794, %v2929
  %v2931 = vrcp.pop %v2814
  %v2932 = vmul.f32 %v795, %v2931
  %v2933 = vrcp.pop %v2815
  %v2934 = vmul.f32 %v796, %v2933
  %v2935 = vrcp.pop %v2816
  %v2936 = vmul.f32 %v797, %v2935
  %v2937 = vrcp.pop %v2817
  %v2938 = vmul.f32 %v798, %v2937
  %v2939 = vrcp.pop %v2818
  %v2940 = vmul.f32 %v799, %v2939
  %v2941 = vrcp.pop %v2819
  %v2942 = vmul.f32 %v800, %v2941
  %v2943 = vrcp.pop %v2820
  %v2944 = vmul.f32 %v801, %v2943
  %v2945 = vrcp.pop %v2821
  %v2946 = vmul.f32 %v802, %v2945
  %v2947 = vrcp.pop %v2822
  %v2948 = vmul.f32 %v803, %v2947
  %v2949 = vrcp.pop %v2823
  %v2950 = vmul.f32 %v804, %v2949
  %v2951 = vrcp.pop %v2824
  %v2952 = vmul.f32 %v805, %v2951
  %v2953 = vrsqrt.pop %v1995
  %v2954 = vmul.f32 %v1995, %v2953
  %vm2955 = vcmp.eq.f32.partialorder %v1995, inf
  %v2956 = vsel %vm2955, %v1995, %v2954
  %vm2957 = vcmp.eq.f32.partialorder %v1995, 0.0
  %v2958 = vand.u32 %v1995, 2147483648
  %v2959 = vsel %vm2957, %v2958, %v2956
  %v2960 = vrsqrt.pop %v2000
  %v2961 = vmul.f32 %v2000, %v2960
  %vm2962 = vcmp.eq.f32.partialorder %v2000, inf
  %v2963 = vsel %vm2962, %v2000, %v2961
  %vm2964 = vcmp.eq.f32.partialorder %v2000, 0.0
  %v2965 = vand.u32 %v2000, 2147483648
  %v2966 = vsel %vm2964, %v2965, %v2963
  %v2967 = vrsqrt.pop %v2005
  %v2968 = vmul.f32 %v2005, %v2967
  %vm2969 = vcmp.eq.f32.partialorder %v2005, inf
  %v2970 = vsel %vm2969, %v2005, %v2968
  %vm2971 = vcmp.eq.f32.partialorder %v2005, 0.0
  %v2972 = vand.u32 %v2005, 2147483648
  %v2973 = vsel %vm2971, %v2972, %v2970
  %v2974 = vrsqrt.pop %v2010
  %v2975 = vmul.f32 %v2010, %v2974
  %vm2976 = vcmp.eq.f32.partialorder %v2010, inf
  %v2977 = vsel %vm2976, %v2010, %v2975
  %vm2978 = vcmp.eq.f32.partialorder %v2010, 0.0
  %v2979 = vand.u32 %v2010, 2147483648
  %v2980 = vsel %vm2978, %v2979, %v2977
  %v2981 = vrsqrt.pop %v2015
  %v2982 = vmul.f32 %v2015, %v2981
  %vm2983 = vcmp.eq.f32.partialorder %v2015, inf
  %v2984 = vsel %vm2983, %v2015, %v2982
  %vm2985 = vcmp.eq.f32.partialorder %v2015, 0.0
  %v2986 = vand.u32 %v2015, 2147483648
  %v2987 = vsel %vm2985, %v2986, %v2984
  %v2988 = vrsqrt.pop %v2020
  %v2989 = vmul.f32 %v2020, %v2988
  %vm2990 = vcmp.eq.f32.partialorder %v2020, inf
  %v2991 = vsel %vm2990, %v2020, %v2989
  %vm2992 = vcmp.eq.f32.partialorder %v2020, 0.0
  %v2993 = vand.u32 %v2020, 2147483648
  %v2994 = vsel %vm2992, %v2993, %v2991
  %v2995 = vrsqrt.pop %v2025
  %v2996 = vmul.f32 %v2025, %v2995
  %vm2997 = vcmp.eq.f32.partialorder %v2025, inf
  %v2998 = vsel %vm2997, %v2025, %v2996
  %vm2999 = vcmp.eq.f32.partialorder %v2025, 0.0
  %v3000 = vand.u32 %v2025, 2147483648
  %v3001 = vsel %vm2999, %v3000, %v2998
  %v3002 = vrsqrt.pop %v2030
  %v3003 = vmul.f32 %v2030, %v3002
  %vm3004 = vcmp.eq.f32.partialorder %v2030, inf
  %v3005 = vsel %vm3004, %v2030, %v3003
  %vm3006 = vcmp.eq.f32.partialorder %v2030, 0.0
  %v3007 = vand.u32 %v2030, 2147483648
  %v3008 = vsel %vm3006, %v3007, %v3005
  %v3009 = vrsqrt.pop %v2035
  %v3010 = vmul.f32 %v2035, %v3009
  %vm3011 = vcmp.eq.f32.partialorder %v2035, inf
  %v3012 = vsel %vm3011, %v2035, %v3010
  %vm3013 = vcmp.eq.f32.partialorder %v2035, 0.0
  %v3014 = vand.u32 %v2035, 2147483648
  %v3015 = vsel %vm3013, %v3014, %v3012
  %v3016 = vrsqrt.pop %v2040
  %v3017 = vmul.f32 %v2040, %v3016
  %vm3018 = vcmp.eq.f32.partialorder %v2040, inf
  %v3019 = vsel %vm3018, %v2040, %v3017
  %vm3020 = vcmp.eq.f32.partialorder %v2040, 0.0
  %v3021 = vand.u32 %v2040, 2147483648
  %v3022 = vsel %vm3020, %v3021, %v3019
  %v3023 = vrsqrt.pop %v2045
  %v3024 = vmul.f32 %v2045, %v3023
  %vm3025 = vcmp.eq.f32.partialorder %v2045, inf
  %v3026 = vsel %vm3025, %v2045, %v3024
  %vm3027 = vcmp.eq.f32.partialorder %v2045, 0.0
  %v3028 = vand.u32 %v2045, 2147483648
  %v3029 = vsel %vm3027, %v3028, %v3026
  %v3030 = vrsqrt.pop %v2050
  %v3031 = vmul.f32 %v2050, %v3030
  %vm3032 = vcmp.eq.f32.partialorder %v2050, inf
  %v3033 = vsel %vm3032, %v2050, %v3031
  %vm3034 = vcmp.eq.f32.partialorder %v2050, 0.0
  %v3035 = vand.u32 %v2050, 2147483648
  %v3036 = vsel %vm3034, %v3035, %v3033
  %v3037 = vrsqrt.pop %v2055
  %v3038 = vmul.f32 %v2055, %v3037
  %vm3039 = vcmp.eq.f32.partialorder %v2055, inf
  %v3040 = vsel %vm3039, %v2055, %v3038
  %vm3041 = vcmp.eq.f32.partialorder %v2055, 0.0
  %v3042 = vand.u32 %v2055, 2147483648
  %v3043 = vsel %vm3041, %v3042, %v3040
  %v3044 = vrsqrt.pop %v2060
  %v3045 = vmul.f32 %v2060, %v3044
  %vm3046 = vcmp.eq.f32.partialorder %v2060, inf
  %v3047 = vsel %vm3046, %v2060, %v3045
  %vm3048 = vcmp.eq.f32.partialorder %v2060, 0.0
  %v3049 = vand.u32 %v2060, 2147483648
  %v3050 = vsel %vm3048, %v3049, %v3047
  %v3051 = vrsqrt.pop %v2065
  %v3052 = vmul.f32 %v2065, %v3051
  %vm3053 = vcmp.eq.f32.partialorder %v2065, inf
  %v3054 = vsel %vm3053, %v2065, %v3052
  %vm3055 = vcmp.eq.f32.partialorder %v2065, 0.0
  %v3056 = vand.u32 %v2065, 2147483648
  %v3057 = vsel %vm3055, %v3056, %v3054
  %v3058 = vrsqrt.pop %v2070
  %v3059 = vmul.f32 %v2070, %v3058
  %vm3060 = vcmp.eq.f32.partialorder %v2070, inf
  %v3061 = vsel %vm3060, %v2070, %v3059
  %vm3062 = vcmp.eq.f32.partialorder %v2070, 0.0
  %v3063 = vand.u32 %v2070, 2147483648
  %v3064 = vsel %vm3062, %v3063, %v3061
  %v3065 = vrsqrt.pop %v2075
  %v3066 = vmul.f32 %v2075, %v3065
  %vm3067 = vcmp.eq.f32.partialorder %v2075, inf
  %v3068 = vsel %vm3067, %v2075, %v3066
  %vm3069 = vcmp.eq.f32.partialorder %v2075, 0.0
  %v3070 = vand.u32 %v2075, 2147483648
  %v3071 = vsel %vm3069, %v3070, %v3068
  %v3072 = vrsqrt.pop %v2080
  %v3073 = vmul.f32 %v2080, %v3072
  %vm3074 = vcmp.eq.f32.partialorder %v2080, inf
  %v3075 = vsel %vm3074, %v2080, %v3073
  %vm3076 = vcmp.eq.f32.partialorder %v2080, 0.0
  %v3077 = vand.u32 %v2080, 2147483648
  %v3078 = vsel %vm3076, %v3077, %v3075
  %v3079 = vrsqrt.pop %v2085
  %v3080 = vmul.f32 %v2085, %v3079
  %vm3081 = vcmp.eq.f32.partialorder %v2085, inf
  %v3082 = vsel %vm3081, %v2085, %v3080
  %vm3083 = vcmp.eq.f32.partialorder %v2085, 0.0
  %v3084 = vand.u32 %v2085, 2147483648
  %v3085 = vsel %vm3083, %v3084, %v3082
  %v3086 = vrsqrt.pop %v2090
  %v3087 = vmul.f32 %v2090, %v3086
  %vm3088 = vcmp.eq.f32.partialorder %v2090, inf
  %v3089 = vsel %vm3088, %v2090, %v3087
  %vm3090 = vcmp.eq.f32.partialorder %v2090, 0.0
  %v3091 = vand.u32 %v2090, 2147483648
  %v3092 = vsel %vm3090, %v3091, %v3089
  %v3093 = vrsqrt.pop %v2095
  %v3094 = vmul.f32 %v2095, %v3093
  %vm3095 = vcmp.eq.f32.partialorder %v2095, inf
  %v3096 = vsel %vm3095, %v2095, %v3094
  %vm3097 = vcmp.eq.f32.partialorder %v2095, 0.0
  %v3098 = vand.u32 %v2095, 2147483648
  %v3099 = vsel %vm3097, %v3098, %v3096
  %v3100 = vrsqrt.pop %v2100
  %v3101 = vmul.f32 %v2100, %v3100
  %vm3102 = vcmp.eq.f32.partialorder %v2100, inf
  %v3103 = vsel %vm3102, %v2100, %v3101
  %vm3104 = vcmp.eq.f32.partialorder %v2100, 0.0
  %v3105 = vand.u32 %v2100, 2147483648
  %v3106 = vsel %vm3104, %v3105, %v3103
  %v3107 = vrsqrt.pop %v2105
  %v3108 = vmul.f32 %v2105, %v3107
  %vm3109 = vcmp.eq.f32.partialorder %v2105, inf
  %v3110 = vsel %vm3109, %v2105, %v3108
  %vm3111 = vcmp.eq.f32.partialorder %v2105, 0.0
  %v3112 = vand.u32 %v2105, 2147483648
  %v3113 = vsel %vm3111, %v3112, %v3110
  %v3114 = vrsqrt.pop %v2110
  %v3115 = vmul.f32 %v2110, %v3114
  %vm3116 = vcmp.eq.f32.partialorder %v2110, inf
  %v3117 = vsel %vm3116, %v2110, %v3115
  %vm3118 = vcmp.eq.f32.partialorder %v2110, 0.0
  %v3119 = vand.u32 %v2110, 2147483648
  %v3120 = vsel %vm3118, %v3119, %v3117
  %v3121 = vrsqrt.pop %v2115
  %v3122 = vmul.f32 %v2115, %v3121
  %vm3123 = vcmp.eq.f32.partialorder %v2115, inf
  %v3124 = vsel %vm3123, %v2115, %v3122
  %vm3125 = vcmp.eq.f32.partialorder %v2115, 0.0
  %v3126 = vand.u32 %v2115, 2147483648
  %v3127 = vsel %vm3125, %v3126, %v3124
  %v3128 = vrsqrt.pop %v2120
  %v3129 = vmul.f32 %v2120, %v3128
  %vm3130 = vcmp.eq.f32.partialorder %v2120, inf
  %v3131 = vsel %vm3130, %v2120, %v3129
  %vm3132 = vcmp.eq.f32.partialorder %v2120, 0.0
  %v3133 = vand.u32 %v2120, 2147483648
  %v3134 = vsel %vm3132, %v3133, %v3131
  %v3135 = vrsqrt.pop %v2125
  %v3136 = vmul.f32 %v2125, %v3135
  %vm3137 = vcmp.eq.f32.partialorder %v2125, inf
  %v3138 = vsel %vm3137, %v2125, %v3136
  %vm3139 = vcmp.eq.f32.partialorder %v2125, 0.0
  %v3140 = vand.u32 %v2125, 2147483648
  %v3141 = vsel %vm3139, %v3140, %v3138
  %v3142 = vrsqrt.pop %v2130
  %v3143 = vmul.f32 %v2130, %v3142
  %vm3144 = vcmp.eq.f32.partialorder %v2130, inf
  %v3145 = vsel %vm3144, %v2130, %v3143
  %vm3146 = vcmp.eq.f32.partialorder %v2130, 0.0
  %v3147 = vand.u32 %v2130, 2147483648
  %v3148 = vsel %vm3146, %v3147, %v3145
  %v3149 = vrsqrt.pop %v2135
  %v3150 = vmul.f32 %v2135, %v3149
  %vm3151 = vcmp.eq.f32.partialorder %v2135, inf
  %v3152 = vsel %vm3151, %v2135, %v3150
  %vm3153 = vcmp.eq.f32.partialorder %v2135, 0.0
  %v3154 = vand.u32 %v2135, 2147483648
  %v3155 = vsel %vm3153, %v3154, %v3152
  %v3156 = vrsqrt.pop %v2140
  %v3157 = vmul.f32 %v2140, %v3156
  %vm3158 = vcmp.eq.f32.partialorder %v2140, inf
  %v3159 = vsel %vm3158, %v2140, %v3157
  %vm3160 = vcmp.eq.f32.partialorder %v2140, 0.0
  %v3161 = vand.u32 %v2140, 2147483648
  %v3162 = vsel %vm3160, %v3161, %v3159
  %v3163 = vrsqrt.pop %v2145
  %v3164 = vmul.f32 %v2145, %v3163
  %vm3165 = vcmp.eq.f32.partialorder %v2145, inf
  %v3166 = vsel %vm3165, %v2145, %v3164
  %vm3167 = vcmp.eq.f32.partialorder %v2145, 0.0
  %v3168 = vand.u32 %v2145, 2147483648
  %v3169 = vsel %vm3167, %v3168, %v3166
  %v3170 = vrsqrt.pop %v2150
  %v3171 = vmul.f32 %v2150, %v3170
  %vm3172 = vcmp.eq.f32.partialorder %v2150, inf
  %v3173 = vsel %vm3172, %v2150, %v3171
  %vm3174 = vcmp.eq.f32.partialorder %v2150, 0.0
  %v3175 = vand.u32 %v2150, 2147483648
  %v3176 = vsel %vm3174, %v3175, %v3173
  %v3177 = vrsqrt.pop %v2155
  %v3178 = vmul.f32 %v2155, %v3177
  %vm3179 = vcmp.eq.f32.partialorder %v2155, inf
  %v3180 = vsel %vm3179, %v2155, %v3178
  %vm3181 = vcmp.eq.f32.partialorder %v2155, 0.0
  %v3182 = vand.u32 %v2155, 2147483648
  %v3183 = vsel %vm3181, %v3182, %v3180
  %v3184 = vrsqrt.pop %v2160
  %v3185 = vmul.f32 %v2160, %v3184
  %vm3186 = vcmp.eq.f32.partialorder %v2160, inf
  %v3187 = vsel %vm3186, %v2160, %v3185
  %vm3188 = vcmp.eq.f32.partialorder %v2160, 0.0
  %v3189 = vand.u32 %v2160, 2147483648
  %v3190 = vsel %vm3188, %v3189, %v3187
  %v3191 = vrsqrt.pop %v2165
  %v3192 = vmul.f32 %v2165, %v3191
  %vm3193 = vcmp.eq.f32.partialorder %v2165, inf
  %v3194 = vsel %vm3193, %v2165, %v3192
  %vm3195 = vcmp.eq.f32.partialorder %v2165, 0.0
  %v3196 = vand.u32 %v2165, 2147483648
  %v3197 = vsel %vm3195, %v3196, %v3194
  %v3198 = vrsqrt.pop %v2170
  %v3199 = vmul.f32 %v2170, %v3198
  %vm3200 = vcmp.eq.f32.partialorder %v2170, inf
  %v3201 = vsel %vm3200, %v2170, %v3199
  %vm3202 = vcmp.eq.f32.partialorder %v2170, 0.0
  %v3203 = vand.u32 %v2170, 2147483648
  %v3204 = vsel %vm3202, %v3203, %v3201
  %v3205 = vrsqrt.pop %v2175
  %v3206 = vmul.f32 %v2175, %v3205
  %vm3207 = vcmp.eq.f32.partialorder %v2175, inf
  %v3208 = vsel %vm3207, %v2175, %v3206
  %vm3209 = vcmp.eq.f32.partialorder %v2175, 0.0
  %v3210 = vand.u32 %v2175, 2147483648
  %v3211 = vsel %vm3209, %v3210, %v3208
  %v3212 = vrsqrt.pop %v2180
  %v3213 = vmul.f32 %v2180, %v3212
  %vm3214 = vcmp.eq.f32.partialorder %v2180, inf
  %v3215 = vsel %vm3214, %v2180, %v3213
  %vm3216 = vcmp.eq.f32.partialorder %v2180, 0.0
  %v3217 = vand.u32 %v2180, 2147483648
  %v3218 = vsel %vm3216, %v3217, %v3215
  %v3219 = vrsqrt.pop %v2185
  %v3220 = vmul.f32 %v2185, %v3219
  %vm3221 = vcmp.eq.f32.partialorder %v2185, inf
  %v3222 = vsel %vm3221, %v2185, %v3220
  %vm3223 = vcmp.eq.f32.partialorder %v2185, 0.0
  %v3224 = vand.u32 %v2185, 2147483648
  %v3225 = vsel %vm3223, %v3224, %v3222
  %v3226 = vrsqrt.pop %v2190
  %v3227 = vmul.f32 %v2190, %v3226
  %vm3228 = vcmp.eq.f32.partialorder %v2190, inf
  %v3229 = vsel %vm3228, %v2190, %v3227
  %vm3230 = vcmp.eq.f32.partialorder %v2190, 0.0
  %v3231 = vand.u32 %v2190, 2147483648
  %v3232 = vsel %vm3230, %v3231, %v3229
  %v3233 = vrsqrt.pop %v2195
  %v3234 = vmul.f32 %v2195, %v3233
  %vm3235 = vcmp.eq.f32.partialorder %v2195, inf
  %v3236 = vsel %vm3235, %v2195, %v3234
  %vm3237 = vcmp.eq.f32.partialorder %v2195, 0.0
  %v3238 = vand.u32 %v2195, 2147483648
  %v3239 = vsel %vm3237, %v3238, %v3236
  %v3240 = vrsqrt.pop %v2200
  %v3241 = vmul.f32 %v2200, %v3240
  %vm3242 = vcmp.eq.f32.partialorder %v2200, inf
  %v3243 = vsel %vm3242, %v2200, %v3241
  %vm3244 = vcmp.eq.f32.partialorder %v2200, 0.0
  %v3245 = vand.u32 %v2200, 2147483648
  %v3246 = vsel %vm3244, %v3245, %v3243
  %v3247 = vrsqrt.pop %v2205
  %v3248 = vmul.f32 %v2205, %v3247
  %vm3249 = vcmp.eq.f32.partialorder %v2205, inf
  %v3250 = vsel %vm3249, %v2205, %v3248
  %vm3251 = vcmp.eq.f32.partialorder %v2205, 0.0
  %v3252 = vand.u32 %v2205, 2147483648
  %v3253 = vsel %vm3251, %v3252, %v3250
  %v3254 = vrsqrt.pop %v2210
  %v3255 = vmul.f32 %v2210, %v3254
  %vm3256 = vcmp.eq.f32.partialorder %v2210, inf
  %v3257 = vsel %vm3256, %v2210, %v3255
  %vm3258 = vcmp.eq.f32.partialorder %v2210, 0.0
  %v3259 = vand.u32 %v2210, 2147483648
  %v3260 = vsel %vm3258, %v3259, %v3257
  %v3261 = vrsqrt.pop %v2215
  %v3262 = vmul.f32 %v2215, %v3261
  %vm3263 = vcmp.eq.f32.partialorder %v2215, inf
  %v3264 = vsel %vm3263, %v2215, %v3262
  %vm3265 = vcmp.eq.f32.partialorder %v2215, 0.0
  %v3266 = vand.u32 %v2215, 2147483648
  %v3267 = vsel %vm3265, %v3266, %v3264
  %v3268 = vrsqrt.pop %v2220
  %v3269 = vmul.f32 %v2220, %v3268
  %vm3270 = vcmp.eq.f32.partialorder %v2220, inf
  %v3271 = vsel %vm3270, %v2220, %v3269
  %vm3272 = vcmp.eq.f32.partialorder %v2220, 0.0
  %v3273 = vand.u32 %v2220, 2147483648
  %v3274 = vsel %vm3272, %v3273, %v3271
  %v3275 = vrsqrt.pop %v2225
  %v3276 = vmul.f32 %v2225, %v3275
  %vm3277 = vcmp.eq.f32.partialorder %v2225, inf
  %v3278 = vsel %vm3277, %v2225, %v3276
  %vm3279 = vcmp.eq.f32.partialorder %v2225, 0.0
  %v3280 = vand.u32 %v2225, 2147483648
  %v3281 = vsel %vm3279, %v3280, %v3278
  %v3282 = vrsqrt.pop %v2230
  %v3283 = vmul.f32 %v2230, %v3282
  %vm3284 = vcmp.eq.f32.partialorder %v2230, inf
  %v3285 = vsel %vm3284, %v2230, %v3283
  %vm3286 = vcmp.eq.f32.partialorder %v2230, 0.0
  %v3287 = vand.u32 %v2230, 2147483648
  %v3288 = vsel %vm3286, %v3287, %v3285
  %v3289 = vrsqrt.pop %v2235
  %v3290 = vmul.f32 %v2235, %v3289
  %vm3291 = vcmp.eq.f32.partialorder %v2235, inf
  %v3292 = vsel %vm3291, %v2235, %v3290
  %vm3293 = vcmp.eq.f32.partialorder %v2235, 0.0
  %v3294 = vand.u32 %v2235, 2147483648
  %v3295 = vsel %vm3293, %v3294, %v3292
  %v3296 = vrsqrt.pop %v2240
  %v3297 = vmul.f32 %v2240, %v3296
  %vm3298 = vcmp.eq.f32.partialorder %v2240, inf
  %v3299 = vsel %vm3298, %v2240, %v3297
  %vm3300 = vcmp.eq.f32.partialorder %v2240, 0.0
  %v3301 = vand.u32 %v2240, 2147483648
  %v3302 = vsel %vm3300, %v3301, %v3299
  %v3303 = vrsqrt.pop %v2245
  %v3304 = vmul.f32 %v2245, %v3303
  %vm3305 = vcmp.eq.f32.partialorder %v2245, inf
  %v3306 = vsel %vm3305, %v2245, %v3304
  %vm3307 = vcmp.eq.f32.partialorder %v2245, 0.0
  %v3308 = vand.u32 %v2245, 2147483648
  %v3309 = vsel %vm3307, %v3308, %v3306
  %v3310 = vrsqrt.pop %v2250
  %v3311 = vmul.f32 %v2250, %v3310
  %vm3312 = vcmp.eq.f32.partialorder %v2250, inf
  %v3313 = vsel %vm3312, %v2250, %v3311
  %vm3314 = vcmp.eq.f32.partialorder %v2250, 0.0
  %v3315 = vand.u32 %v2250, 2147483648
  %v3316 = vsel %vm3314, %v3315, %v3313
  %v3317 = vrsqrt.pop %v2255
  %v3318 = vmul.f32 %v2255, %v3317
  %vm3319 = vcmp.eq.f32.partialorder %v2255, inf
  %v3320 = vsel %vm3319, %v2255, %v3318
  %vm3321 = vcmp.eq.f32.partialorder %v2255, 0.0
  %v3322 = vand.u32 %v2255, 2147483648
  %v3323 = vsel %vm3321, %v3322, %v3320
  %v3324 = vrsqrt.pop %v2260
  %v3325 = vmul.f32 %v2260, %v3324
  %vm3326 = vcmp.eq.f32.partialorder %v2260, inf
  %v3327 = vsel %vm3326, %v2260, %v3325
  %vm3328 = vcmp.eq.f32.partialorder %v2260, 0.0
  %v3329 = vand.u32 %v2260, 2147483648
  %v3330 = vsel %vm3328, %v3329, %v3327
  %v3331 = vrsqrt.pop %v2265
  %v3332 = vmul.f32 %v2265, %v3331
  %vm3333 = vcmp.eq.f32.partialorder %v2265, inf
  %v3334 = vsel %vm3333, %v2265, %v3332
  %vm3335 = vcmp.eq.f32.partialorder %v2265, 0.0
  %v3336 = vand.u32 %v2265, 2147483648
  %v3337 = vsel %vm3335, %v3336, %v3334
  %v3338 = vrsqrt.pop %v2270
  %v3339 = vmul.f32 %v2270, %v3338
  %vm3340 = vcmp.eq.f32.partialorder %v2270, inf
  %v3341 = vsel %vm3340, %v2270, %v3339
  %vm3342 = vcmp.eq.f32.partialorder %v2270, 0.0
  %v3343 = vand.u32 %v2270, 2147483648
  %v3344 = vsel %vm3342, %v3343, %v3341
  %v3345 = vrsqrt.pop %v2275
  %v3346 = vmul.f32 %v2275, %v3345
  %vm3347 = vcmp.eq.f32.partialorder %v2275, inf
  %v3348 = vsel %vm3347, %v2275, %v3346
  %vm3349 = vcmp.eq.f32.partialorder %v2275, 0.0
  %v3350 = vand.u32 %v2275, 2147483648
  %v3351 = vsel %vm3349, %v3350, %v3348
  %v3352 = vrsqrt.pop %v2280
  %v3353 = vmul.f32 %v2280, %v3352
  %vm3354 = vcmp.eq.f32.partialorder %v2280, inf
  %v3355 = vsel %vm3354, %v2280, %v3353
  %vm3356 = vcmp.eq.f32.partialorder %v2280, 0.0
  %v3357 = vand.u32 %v2280, 2147483648
  %v3358 = vsel %vm3356, %v3357, %v3355
  %v3359 = vrsqrt.pop %v2285
  %v3360 = vmul.f32 %v2285, %v3359
  %vm3361 = vcmp.eq.f32.partialorder %v2285, inf
  %v3362 = vsel %vm3361, %v2285, %v3360
  %vm3363 = vcmp.eq.f32.partialorder %v2285, 0.0
  %v3364 = vand.u32 %v2285, 2147483648
  %v3365 = vsel %vm3363, %v3364, %v3362
  %v3366 = vrsqrt.pop %v2290
  %v3367 = vmul.f32 %v2290, %v3366
  %vm3368 = vcmp.eq.f32.partialorder %v2290, inf
  %v3369 = vsel %vm3368, %v2290, %v3367
  %vm3370 = vcmp.eq.f32.partialorder %v2290, 0.0
  %v3371 = vand.u32 %v2290, 2147483648
  %v3372 = vsel %vm3370, %v3371, %v3369
  %v3373 = vrsqrt.pop %v2295
  %v3374 = vmul.f32 %v2295, %v3373
  %vm3375 = vcmp.eq.f32.partialorder %v2295, inf
  %v3376 = vsel %vm3375, %v2295, %v3374
  %vm3377 = vcmp.eq.f32.partialorder %v2295, 0.0
  %v3378 = vand.u32 %v2295, 2147483648
  %v3379 = vsel %vm3377, %v3378, %v3376
  %v3380 = vrsqrt.pop %v2300
  %v3381 = vmul.f32 %v2300, %v3380
  %vm3382 = vcmp.eq.f32.partialorder %v2300, inf
  %v3383 = vsel %vm3382, %v2300, %v3381
  %vm3384 = vcmp.eq.f32.partialorder %v2300, 0.0
  %v3385 = vand.u32 %v2300, 2147483648
  %v3386 = vsel %vm3384, %v3385, %v3383
  %v3387 = vrsqrt.pop %v2305
  %v3388 = vmul.f32 %v2305, %v3387
  %vm3389 = vcmp.eq.f32.partialorder %v2305, inf
  %v3390 = vsel %vm3389, %v2305, %v3388
  %vm3391 = vcmp.eq.f32.partialorder %v2305, 0.0
  %v3392 = vand.u32 %v2305, 2147483648
  %v3393 = vsel %vm3391, %v3392, %v3390
  %v3394 = vrsqrt.pop %v2310
  %v3395 = vmul.f32 %v2310, %v3394
  %vm3396 = vcmp.eq.f32.partialorder %v2310, inf
  %v3397 = vsel %vm3396, %v2310, %v3395
  %vm3398 = vcmp.eq.f32.partialorder %v2310, 0.0
  %v3399 = vand.u32 %v2310, 2147483648
  %v3400 = vsel %vm3398, %v3399, %v3397
  %v3401 = vadd.f32 %v2959, 1e-10
  %v3402 = vadd.f32 %v2966, 1e-10
  %v3403 = vadd.f32 %v2973, 1e-10
  %v3404 = vadd.f32 %v2980, 1e-10
  %v3405 = vadd.f32 %v2987, 1e-10
  %v3406 = vadd.f32 %v2994, 1e-10
  %v3407 = vadd.f32 %v3001, 1e-10
  %v3408 = vadd.f32 %v3008, 1e-10
  %v3409 = vadd.f32 %v3015, 1e-10
  %v3410 = vadd.f32 %v3022, 1e-10
  %v3411 = vadd.f32 %v3029, 1e-10
  %v3412 = vadd.f32 %v3036, 1e-10
  %v3413 = vadd.f32 %v3043, 1e-10
  %v3414 = vadd.f32 %v3050, 1e-10
  %v3415 = vadd.f32 %v3057, 1e-10
  %v3416 = vadd.f32 %v3064, 1e-10
  %v3417 = vadd.f32 %v3071, 1e-10
  %v3418 = vadd.f32 %v3078, 1e-10
  %v3419 = vadd.f32 %v3085, 1e-10
  %v3420 = vadd.f32 %v3092, 1e-10
  %v3421 = vadd.f32 %v3099, 1e-10
  %v3422 = vadd.f32 %v3106, 1e-10
  %v3423 = vadd.f32 %v3113, 1e-10
  %v3424 = vadd.f32 %v3120, 1e-10
  %v3425 = vadd.f32 %v3127, 1e-10
  %v3426 = vadd.f32 %v3134, 1e-10
  %v3427 = vadd.f32 %v3141, 1e-10
  %v3428 = vadd.f32 %v3148, 1e-10
  %v3429 = vadd.f32 %v3155, 1e-10
  %v3430 = vadd.f32 %v3162, 1e-10
  %v3431 = vadd.f32 %v3169, 1e-10
  %v3432 = vadd.f32 %v3176, 1e-10
  %v3433 = vadd.f32 %v3183, 1e-10
  %v3434 = vadd.f32 %v3190, 1e-10
  %v3435 = vadd.f32 %v3197, 1e-10
  %v3436 = vadd.f32 %v3204, 1e-10
  %v3437 = vadd.f32 %v3211, 1e-10
  %v3438 = vadd.f32 %v3218, 1e-10
  %v3439 = vadd.f32 %v3225, 1e-10
  %v3440 = vadd.f32 %v3232, 1e-10
  %v3441 = vadd.f32 %v3239, 1e-10
  %v3442 = vadd.f32 %v3246, 1e-10
  %v3443 = vadd.f32 %v3253, 1e-10
  %v3444 = vadd.f32 %v3260, 1e-10
  %v3445 = vadd.f32 %v3267, 1e-10
  %v3446 = vadd.f32 %v3274, 1e-10
  %v3447 = vadd.f32 %v3281, 1e-10
  %v3448 = vadd.f32 %v3288, 1e-10
  %v3449 = vadd.f32 %v3295, 1e-10
  %v3450 = vadd.f32 %v3302, 1e-10
  %v3451 = vadd.f32 %v3309, 1e-10
  %v3452 = vadd.f32 %v3316, 1e-10
  %v3453 = vadd.f32 %v3323, 1e-10
  %v3454 = vadd.f32 %v3330, 1e-10
  %v3455 = vadd.f32 %v3337, 1e-10
  %v3456 = vadd.f32 %v3344, 1e-10
  %v3457 = vadd.f32 %v3351, 1e-10
  %v3458 = vadd.f32 %v3358, 1e-10
  %v3459 = vadd.f32 %v3365, 1e-10
  %v3460 = vadd.f32 %v3372, 1e-10
  %v3461 = vadd.f32 %v3379, 1e-10
  %v3462 = vadd.f32 %v3386, 1e-10
  %v3463 = vadd.f32 %v3393, 1e-10
  %v3464 = vadd.f32 %v3400, 1e-10
  %v3465 = vrcp.pop %v3401
  %v3466 = vmul.f32 %v1351, %v3465
  %v3467 = vrcp.pop %v3402
  %v3468 = vmul.f32 %v1352, %v3467
  %v3469 = vrcp.pop %v3403
  %v3470 = vmul.f32 %v1353, %v3469
  %v3471 = vrcp.pop %v3404
  %v3472 = vmul.f32 %v1354, %v3471
  %v3473 = vrcp.pop %v3405
  %v3474 = vmul.f32 %v1355, %v3473
  %v3475 = vrcp.pop %v3406
  %v3476 = vmul.f32 %v1356, %v3475
  %v3477 = vrcp.pop %v3407
  %v3478 = vmul.f32 %v1357, %v3477
  %v3479 = vrcp.pop %v3408
  %v3480 = vmul.f32 %v1358, %v3479
  %v3481 = vrcp.pop %v3409
  %v3482 = vmul.f32 %v1359, %v3481
  %v3483 = vrcp.pop %v3410
  %v3484 = vmul.f32 %v1360, %v3483
  %v3485 = vrcp.pop %v3411
  %v3486 = vmul.f32 %v1361, %v3485
  %v3487 = vrcp.pop %v3412
  %v3488 = vmul.f32 %v1362, %v3487
  %v3489 = vrcp.pop %v3413
  %v3490 = vmul.f32 %v1363, %v3489
  %v3491 = vrcp.pop %v3414
  %v3492 = vmul.f32 %v1364, %v3491
  %v3493 = vrcp.pop %v3415
  %v3494 = vmul.f32 %v1365, %v3493
  %v3495 = vrcp.pop %v3416
  %v3496 = vmul.f32 %v1366, %v3495
  %v3497 = vrcp.pop %v3417
  %v3498 = vmul.f32 %v1367, %v3497
  %v3499 = vrcp.pop %v3418
  %v3500 = vmul.f32 %v1368, %v3499
  %v3501 = vrcp.pop %v3419
  %v3502 = vmul.f32 %v1369, %v3501
  %v3503 = vrcp.pop %v3420
  %v3504 = vmul.f32 %v1370, %v3503
  %v3505 = vrcp.pop %v3421
  %v3506 = vmul.f32 %v1371, %v3505
  %v3507 = vrcp.pop %v3422
  %v3508 = vmul.f32 %v1372, %v3507
  %v3509 = vrcp.pop %v3423
  %v3510 = vmul.f32 %v1373, %v3509
  %v3511 = vrcp.pop %v3424
  %v3512 = vmul.f32 %v1374, %v3511
  %v3513 = vrcp.pop %v3425
  %v3514 = vmul.f32 %v1375, %v3513
  %v3515 = vrcp.pop %v3426
  %v3516 = vmul.f32 %v1376, %v3515
  %v3517 = vrcp.pop %v3427
  %v3518 = vmul.f32 %v1377, %v3517
  %v3519 = vrcp.pop %v3428
  %v3520 = vmul.f32 %v1378, %v3519
  %v3521 = vrcp.pop %v3429
  %v3522 = vmul.f32 %v1379, %v3521
  %v3523 = vrcp.pop %v3430
  %v3524 = vmul.f32 %v1380, %v3523
  %v3525 = vrcp.pop %v3431
  %v3526 = vmul.f32 %v1381, %v3525
  %v3527 = vrcp.pop %v3432
  %v3528 = vmul.f32 %v1382, %v3527
  %v3529 = vrcp.pop %v3433
  %v3530 = vmul.f32 %v1383, %v3529
  %v3531 = vrcp.pop %v3434
  %v3532 = vmul.f32 %v1384, %v3531
  %v3533 = vrcp.pop %v3435
  %v3534 = vmul.f32 %v1385, %v3533
  %v3535 = vrcp.pop %v3436
  %v3536 = vmul.f32 %v1386, %v3535
  %v3537 = vrcp.pop %v3437
  %v3538 = vmul.f32 %v1387, %v3537
  %v3539 = vrcp.pop %v3438
  %v3540 = vmul.f32 %v1388, %v3539
  %v3541 = vrcp.pop %v3439
  %v3542 = vmul.f32 %v1389, %v3541
  %v3543 = vrcp.pop %v3440
  %v3544 = vmul.f32 %v1390, %v3543
  %v3545 = vrcp.pop %v3441
  %v3546 = vmul.f32 %v1391, %v3545
  %v3547 = vrcp.pop %v3442
  %v3548 = vmul.f32 %v1392, %v3547
  %v3549 = vrcp.pop %v3443
  %v3550 = vmul.f32 %v1393, %v3549
  %v3551 = vrcp.pop %v3444
  %v3552 = vmul.f32 %v1394, %v3551
  %v3553 = vrcp.pop %v3445
  %v3554 = vmul.f32 %v1395, %v3553
  %v3555 = vrcp.pop %v3446
  %v3556 = vmul.f32 %v1396, %v3555
  %v3557 = vrcp.pop %v3447
  %v3558 = vmul.f32 %v1397, %v3557
  %v3559 = vrcp.pop %v3448
  %v3560 = vmul.f32 %v1398, %v3559
  %v3561 = vrcp.pop %v3449
  %v3562 = vmul.f32 %v1399, %v3561
  %v3563 = vrcp.pop %v3450
  %v3564 = vmul.f32 %v1400, %v3563
  %v3565 = vrcp.pop %v3451
  %v3566 = vmul.f32 %v1401, %v3565
  %v3567 = vrcp.pop %v3452
  %v3568 = vmul.f32 %v1402, %v3567
  %v3569 = vrcp.pop %v3453
  %v3570 = vmul.f32 %v1403, %v3569
  %v3571 = vrcp.pop %v3454
  %v3572 = vmul.f32 %v1404, %v3571
  %v3573 = vrcp.pop %v3455
  %v3574 = vmul.f32 %v1405, %v3573
  %v3575 = vrcp.pop %v3456
  %v3576 = vmul.f32 %v1406, %v3575
  %v3577 = vrcp.pop %v3457
  %v3578 = vmul.f32 %v1407, %v3577
  %v3579 = vrcp.pop %v3458
  %v3580 = vmul.f32 %v1408, %v3579
  %v3581 = vrcp.pop %v3459
  %v3582 = vmul.f32 %v1409, %v3581
  %v3583 = vrcp.pop %v3460
  %v3584 = vmul.f32 %v1410, %v3583
  %v3585 = vrcp.pop %v3461
  %v3586 = vmul.f32 %v1411, %v3585
  %v3587 = vrcp.pop %v3462
  %v3588 = vmul.f32 %v1412, %v3587
  %v3589 = vrcp.pop %v3463
  %v3590 = vmul.f32 %v1413, %v3589
  %v3591 = vrcp.pop %v3464
  %v3592 = vmul.f32 %v1414, %v3591
  %v3593 = vsub.f32 %v2826, %v3466
  %v3594 = vsub.f32 %v2828, %v3468
  %v3595 = vsub.f32 %v2830, %v3470
  %v3596 = vsub.f32 %v2832, %v3472
  %v3597 = vsub.f32 %v2834, %v3474
  %v3598 = vsub.f32 %v2836, %v3476
  %v3599 = vsub.f32 %v2838, %v3478
  %v3600 = vsub.f32 %v2840, %v3480
  %v3601 = vsub.f32 %v2842, %v3482
  %v3602 = vsub.f32 %v2844, %v3484
  %v3603 = vsub.f32 %v2846, %v3486
  %v3604 = vsub.f32 %v2848, %v3488
  %v3605 = vsub.f32 %v2850, %v3490
  %v3606 = vsub.f32 %v2852, %v3492
  %v3607 = vsub.f32 %v2854, %v3494
  %v3608 = vsub.f32 %v2856, %v3496
  %v3609 = vsub.f32 %v2858, %v3498
  %v3610 = vsub.f32 %v2860, %v3500
  %v3611 = vsub.f32 %v2862, %v3502
  %v3612 = vsub.f32 %v2864, %v3504
  %v3613 = vsub.f32 %v2866, %v3506
  %v3614 = vsub.f32 %v2868, %v3508
  %v3615 = vsub.f32 %v2870, %v3510
  %v3616 = vsub.f32 %v2872, %v3512
  %v3617 = vsub.f32 %v2874, %v3514
  %v3618 = vsub.f32 %v2876, %v3516
  %v3619 = vsub.f32 %v2878, %v3518
  %v3620 = vsub.f32 %v2880, %v3520
  %v3621 = vsub.f32 %v2882, %v3522
  %v3622 = vsub.f32 %v2884, %v3524
  %v3623 = vsub.f32 %v2886, %v3526
  %v3624 = vsub.f32 %v2888, %v3528
  %v3625 = vsub.f32 %v2890, %v3530
  %v3626 = vsub.f32 %v2892, %v3532
  %v3627 = vsub.f32 %v2894, %v3534
  %v3628 = vsub.f32 %v2896, %v3536
  %v3629 = vsub.f32 %v2898, %v3538
  %v3630 = vsub.f32 %v2900, %v3540
  %v3631 = vsub.f32 %v2902, %v3542
  %v3632 = vsub.f32 %v2904, %v3544
  %v3633 = vsub.f32 %v2906, %v3546
  %v3634 = vsub.f32 %v2908, %v3548
  %v3635 = vsub.f32 %v2910, %v3550
  %v3636 = vsub.f32 %v2912, %v3552
  %v3637 = vsub.f32 %v2914, %v3554
  %v3638 = vsub.f32 %v2916, %v3556
  %v3639 = vsub.f32 %v2918, %v3558
  %v3640 = vsub.f32 %v2920, %v3560
  %v3641 = vsub.f32 %v2922, %v3562
  %v3642 = vsub.f32 %v2924, %v3564
  %v3643 = vsub.f32 %v2926, %v3566
  %v3644 = vsub.f32 %v2928, %v3568
  %v3645 = vsub.f32 %v2930, %v3570
  %v3646 = vsub.f32 %v2932, %v3572
  %v3647 = vsub.f32 %v2934, %v3574
  %v3648 = vsub.f32 %v2936, %v3576
  %v3649 = vsub.f32 %v2938, %v3578
  %v3650 = vsub.f32 %v2940, %v3580
  %v3651 = vsub.f32 %v2942, %v3582
  %v3652 = vsub.f32 %v2944, %v3584
  %v3653 = vsub.f32 %v2946, %v3586
  %v3654 = vsub.f32 %v2948, %v3588
  %v3655 = vsub.f32 %v2950, %v3590
  %v3656 = vsub.f32 %v2952, %v3592
  %v3657 = vmul.f32 %v3593, %v3593
  %v3658 = vmul.f32 %v3594, %v3594
  %v3659 = vmul.f32 %v3595, %v3595
  %v3660 = vmul.f32 %v3596, %v3596
  %v3661 = vmul.f32 %v3597, %v3597
  %v3662 = vmul.f32 %v3598, %v3598
  %v3663 = vmul.f32 %v3599, %v3599
  %v3664 = vmul.f32 %v3600, %v3600
  %v3665 = vmul.f32 %v3601, %v3601
  %v3666 = vmul.f32 %v3602, %v3602
  %v3667 = vmul.f32 %v3603, %v3603
  %v3668 = vmul.f32 %v3604, %v3604
  %v3669 = vmul.f32 %v3605, %v3605
  %v3670 = vmul.f32 %v3606, %v3606
  %v3671 = vmul.f32 %v3607, %v3607
  %v3672 = vmul.f32 %v3608, %v3608
  %v3673 = vmul.f32 %v3609, %v3609
  %v3674 = vmul.f32 %v3610, %v3610
  %v3675 = vmul.f32 %v3611, %v3611
  %v3676 = vmul.f32 %v3612, %v3612
  %v3677 = vmul.f32 %v3613, %v3613
  %v3678 = vmul.f32 %v3614, %v3614
  %v3679 = vmul.f32 %v3615, %v3615
  %v3680 = vmul.f32 %v3616, %v3616
  %v3681 = vmul.f32 %v3617, %v3617
  %v3682 = vmul.f32 %v3618, %v3618
  %v3683 = vmul.f32 %v3619, %v3619
  %v3684 = vmul.f32 %v3620, %v3620
  %v3685 = vmul.f32 %v3621, %v3621
  %v3686 = vmul.f32 %v3622, %v3622
  %v3687 = vmul.f32 %v3623, %v3623
  %v3688 = vmul.f32 %v3624, %v3624
  %v3689 = vmul.f32 %v3625, %v3625
  %v3690 = vmul.f32 %v3626, %v3626
  %v3691 = vmul.f32 %v3627, %v3627
  %v3692 = vmul.f32 %v3628, %v3628
  %v3693 = vmul.f32 %v3629, %v3629
  %v3694 = vmul.f32 %v3630, %v3630
  %v3695 = vmul.f32 %v3631, %v3631
  %v3696 = vmul.f32 %v3632, %v3632
  %v3697 = vmul.f32 %v3633, %v3633
  %v3698 = vmul.f32 %v3634, %v3634
  %v3699 = vmul.f32 %v3635, %v3635
  %v3700 = vmul.f32 %v3636, %v3636
  %v3701 = vmul.f32 %v3637, %v3637
  %v3702 = vmul.f32 %v3638, %v3638
  %v3703 = vmul.f32 %v3639, %v3639
  %v3704 = vmul.f32 %v3640, %v3640
  %v3705 = vmul.f32 %v3641, %v3641
  %v3706 = vmul.f32 %v3642, %v3642
  %v3707 = vmul.f32 %v3643, %v3643
  %v3708 = vmul.f32 %v3644, %v3644
  %v3709 = vmul.f32 %v3645, %v3645
  %v3710 = vmul.f32 %v3646, %v3646
  %v3711 = vmul.f32 %v3647, %v3647
  %v3712 = vmul.f32 %v3648, %v3648
  %v3713 = vmul.f32 %v3649, %v3649
  %v3714 = vmul.f32 %v3650, %v3650
  %v3715 = vmul.f32 %v3651, %v3651
  %v3716 = vmul.f32 %v3652, %v3652
  %v3717 = vmul.f32 %v3653, %v3653
  %v3718 = vmul.f32 %v3654, %v3654
  %v3719 = vmul.f32 %v3655, %v3655
  %v3720 = vmul.f32 %v3656, %v3656
  %v3721 = vld [vmem:[%s4] sm:$0x1]
  %v3723 = vlaneseq
  %v3724 = vshrl.u32 %v3723, 7
  %v3725 = vsub.s32 0, %v3724
  %v3726 = vrot.slane %v3721, %v3725
  %v3728 = vmul.f32 %v3657, %v3726
  %v3729 = vmul.f32 %v3658, %v3726
  %v3730 = vmul.f32 %v3659, %v3726
  %v3731 = vmul.f32 %v3660, %v3726
  %v3732 = vmul.f32 %v3661, %v3726
  %v3733 = vmul.f32 %v3662, %v3726
  %v3734 = vmul.f32 %v3663, %v3726
  %v3735 = vmul.f32 %v3664, %v3726
  %v3736 = vmul.f32 %v3665, %v3726
  %v3737 = vmul.f32 %v3666, %v3726
  %v3738 = vmul.f32 %v3667, %v3726
  %v3739 = vmul.f32 %v3668, %v3726
  %v3740 = vmul.f32 %v3669, %v3726
  %v3741 = vmul.f32 %v3670, %v3726
  %v3742 = vmul.f32 %v3671, %v3726
  %v3743 = vmul.f32 %v3672, %v3726
  %v3744 = vmul.f32 %v3673, %v3726
  %v3745 = vmul.f32 %v3674, %v3726
  %v3746 = vmul.f32 %v3675, %v3726
  %v3747 = vmul.f32 %v3676, %v3726
  %v3748 = vmul.f32 %v3677, %v3726
  %v3749 = vmul.f32 %v3678, %v3726
  %v3750 = vmul.f32 %v3679, %v3726
  %v3751 = vmul.f32 %v3680, %v3726
  %v3752 = vmul.f32 %v3681, %v3726
  %v3753 = vmul.f32 %v3682, %v3726
  %v3754 = vmul.f32 %v3683, %v3726
  %v3755 = vmul.f32 %v3684, %v3726
  %v3756 = vmul.f32 %v3685, %v3726
  %v3757 = vmul.f32 %v3686, %v3726
  %v3758 = vmul.f32 %v3687, %v3726
  %v3759 = vmul.f32 %v3688, %v3726
  %v3760 = vmul.f32 %v3689, %v3726
  %v3761 = vmul.f32 %v3690, %v3726
  %v3762 = vmul.f32 %v3691, %v3726
  %v3763 = vmul.f32 %v3692, %v3726
  %v3764 = vmul.f32 %v3693, %v3726
  %v3765 = vmul.f32 %v3694, %v3726
  %v3766 = vmul.f32 %v3695, %v3726
  %v3767 = vmul.f32 %v3696, %v3726
  %v3768 = vmul.f32 %v3697, %v3726
  %v3769 = vmul.f32 %v3698, %v3726
  %v3770 = vmul.f32 %v3699, %v3726
  %v3771 = vmul.f32 %v3700, %v3726
  %v3772 = vmul.f32 %v3701, %v3726
  %v3773 = vmul.f32 %v3702, %v3726
  %v3774 = vmul.f32 %v3703, %v3726
  %v3775 = vmul.f32 %v3704, %v3726
  %v3776 = vmul.f32 %v3705, %v3726
  %v3777 = vmul.f32 %v3706, %v3726
  %v3778 = vmul.f32 %v3707, %v3726
  %v3779 = vmul.f32 %v3708, %v3726
  %v3780 = vmul.f32 %v3709, %v3726
  %v3781 = vmul.f32 %v3710, %v3726
  %v3782 = vmul.f32 %v3711, %v3726
  %v3783 = vmul.f32 %v3712, %v3726
  %v3784 = vmul.f32 %v3713, %v3726
  %v3785 = vmul.f32 %v3714, %v3726
  %v3786 = vmul.f32 %v3715, %v3726
  %v3787 = vmul.f32 %v3716, %v3726
  %v3788 = vmul.f32 %v3717, %v3726
  %v3789 = vmul.f32 %v3718, %v3726
  %v3790 = vmul.f32 %v3719, %v3726
  %v3791 = vmul.f32 %v3720, %v3726
  %v3792 = vadd.f32 %v3728, %v3729
  %v3793 = vadd.f32 %v3792, %v3730
  %v3794 = vadd.f32 %v3793, %v3731
  %v3795 = vadd.f32 %v3794, %v3732
  %v3796 = vadd.f32 %v3795, %v3733
  %v3797 = vadd.f32 %v3796, %v3734
  %v3798 = vadd.f32 %v3797, %v3735
  %v3799 = vadd.f32 %v3798, %v3736
  %v3800 = vadd.f32 %v3799, %v3737
  %v3801 = vadd.f32 %v3800, %v3738
  %v3802 = vadd.f32 %v3801, %v3739
  %v3803 = vadd.f32 %v3802, %v3740
  %v3804 = vadd.f32 %v3803, %v3741
  %v3805 = vadd.f32 %v3804, %v3742
  %v3806 = vadd.f32 %v3805, %v3743
  %v3807 = vadd.f32 %v3806, %v3744
  %v3808 = vadd.f32 %v3807, %v3745
  %v3809 = vadd.f32 %v3808, %v3746
  %v3810 = vadd.f32 %v3809, %v3747
  %v3811 = vadd.f32 %v3810, %v3748
  %v3812 = vadd.f32 %v3811, %v3749
  %v3813 = vadd.f32 %v3812, %v3750
  %v3814 = vadd.f32 %v3813, %v3751
  %v3815 = vadd.f32 %v3814, %v3752
  %v3816 = vadd.f32 %v3815, %v3753
  %v3817 = vadd.f32 %v3816, %v3754
  %v3818 = vadd.f32 %v3817, %v3755
  %v3819 = vadd.f32 %v3818, %v3756
  %v3820 = vadd.f32 %v3819, %v3757
  %v3821 = vadd.f32 %v3820, %v3758
  %v3822 = vadd.f32 %v3821, %v3759
  %v3823 = vadd.f32 %v3822, %v3760
  %v3824 = vadd.f32 %v3823, %v3761
  %v3825 = vadd.f32 %v3824, %v3762
  %v3826 = vadd.f32 %v3825, %v3763
  %v3827 = vadd.f32 %v3826, %v3764
  %v3828 = vadd.f32 %v3827, %v3765
  %v3829 = vadd.f32 %v3828, %v3766
  %v3830 = vadd.f32 %v3829, %v3767
  %v3831 = vadd.f32 %v3830, %v3768
  %v3832 = vadd.f32 %v3831, %v3769
  %v3833 = vadd.f32 %v3832, %v3770
  %v3834 = vadd.f32 %v3833, %v3771
  %v3835 = vadd.f32 %v3834, %v3772
  %v3836 = vadd.f32 %v3835, %v3773
  %v3837 = vadd.f32 %v3836, %v3774
  %v3838 = vadd.f32 %v3837, %v3775
  %v3839 = vadd.f32 %v3838, %v3776
  %v3840 = vadd.f32 %v3839, %v3777
  %v3841 = vadd.f32 %v3840, %v3778
  %v3842 = vadd.f32 %v3841, %v3779
  %v3843 = vadd.f32 %v3842, %v3780
  %v3844 = vadd.f32 %v3843, %v3781
  %v3845 = vadd.f32 %v3844, %v3782
  %v3846 = vadd.f32 %v3845, %v3783
  %v3847 = vadd.f32 %v3846, %v3784
  %v3848 = vadd.f32 %v3847, %v3785
  %v3849 = vadd.f32 %v3848, %v3786
  %v3850 = vadd.f32 %v3849, %v3787
  %v3851 = vadd.f32 %v3850, %v3788
  %v3852 = vadd.f32 %v3851, %v3789
  %v3853 = vadd.f32 %v3852, %v3790
  %v3854 = vadd.f32 %v3853, %v3791
  %v3855 = vrot.slane %v3854, 4
  %v3856 = vadd.f32 %v3854, %v3855
  %v3857 = vrot.slane %v3856, 2
  %v3858 = vadd.f32 %v3856, %v3857
  %v3859 = vrot.slane %v3858, 1
  %v3860 = vadd.f32 %v3858, %v3859
  %3861 = vst [vmem:[%s5] sm:$0x1] %v3860
  // Predicated region
  $region22: #{lpips_mse_loss.7} parent=0 // pred_check
    _
  $region23: #{lpips_mse_loss.7} parent=0 // pred_check_branch
    %3863 = sbr.rel (0) target = $region25
  $region24: #{lpips_mse_loss.7} parent=0 // pred_region
    _
  $region25: #{lpips_mse_loss.7} parent=0 // pred_fallthru
    _
  // Predicated region
  $region26: #{lpips_mse_loss.7} parent=0 // pred_check
    _
  $region27: #{lpips_mse_loss.7} parent=0 // pred_check_branch
    %3865 = sbr.rel (0) target = $region29
  $region28: #{lpips_mse_loss.7} parent=0 // pred_region
    _
  $region29: #{lpips_mse_loss.7} parent=0 // pred_fallthru
    _

</llo_original>
